<compile_context>
chip_gen: v6e
topology: v6e:2x2x1
jax: 0.10.0
libtpu: 0.0.40
codegen_flags: <defaults>
</compile_context>

<pallas_src>
import functools
import math

import jax
import jax.numpy as jnp
from jax import lax
from jax.experimental import pallas as pl
from jax.experimental.pallas import tpu as pltpu


# ---------------------------------------------------------------------------
# Fused decoder kernel: one grid step == BB batch elements; all Mamba layers
# and the decoding Linear run back-to-back with activations kept on-chip.
# ---------------------------------------------------------------------------
def _decoder_kernel(x_ref,
                    in_wx_ref, in_wz_ref, conv_w_ref, conv_b_ref,
                    xp_dt_ref, xp_B_ref, xp_C_ref, dt_w_ref, dt_b_ref,
                    A_ref, D_ref, out_w_ref,
                    dec_w_ref, dec_b_ref,
                    cls_ref, dec_ref,
                    xpad_s,
                    *, BB, L):
    n_layers = in_wx_ref.shape[0]
    d_conv = conv_w_ref.shape[1]
    d_state = A_ref.shape[1]
    d_inner = A_ref.shape[2]
    BBL = BB * L
    P = d_conv - 1
    N = L - 1

    def mm(a, w):                                    # (M,K) @ (K,N), no relayout
        return lax.dot_general(a, w, (((1,), (0,)), ((), ())),
                               preferred_element_type=jnp.float32)

    def mm_last(w, a):                               # (S,K)x(M,K) -> (S,M)
        return lax.dot_general(w, a, (((1,), (1,)), ((), ())),
                               preferred_element_type=jnp.float32)

    def silu(v):                                     # EUP exp + EUP approx recip
        return v * pl.reciprocal(1.0 + jnp.exp(-v), approx=True)

    row_ids = lax.broadcasted_iota(jnp.int32, (BBL, 1), 0)

    # zero-pad rows for the causal conv (written once, stays zero all layers)
    if P > 0:
        xpad_s[pl.ds(0, P), :] = jnp.zeros((P, d_inner), jnp.float32)

    feats = x_ref[...]                               # (BB*L, D)

    # NOTE: keep the Python unroll while n_layers is tiny (==2); switch to
    # lax.fori_loop with dynamic layer indexing if decoder_layer grows.
    for li in range(n_layers):
        # ---- in_proj (x half / gate half) ---------------------------------
        xs = mm(feats, in_wx_ref[li])                # (BBL, d_inner)
        res = mm(feats, in_wz_ref[li])               # (BBL, d_inner)

        # ---- causal depthwise conv1d: zero-padded scratch + shifted
        #      multiply-adds on the VPU; batch boundaries masked with compares
        # TODO(synk): conv_w is tap-major (d_conv, d_inner); real PyTorch
        # checkpoints store nn.Conv1d weight as (d_inner, 1, d_conv) and must
        # be transposed on load.
        cw = conv_w_ref[li]                          # (d_conv, d_inner)
        conv = xs * cw[d_conv - 1:d_conv, :]         # tap k=d_conv-1 (shift 0)
        if P > 0:
            xpad_s[pl.ds(P, BBL), :] = xs
            for s in range(1, d_conv):
                shifted = xpad_s[pl.ds(P - s, BBL), :]
                if BB > 1:                           # zero cross-batch rows
                    invalid = (row_ids >= L) & (row_ids < L + s)
                    for bb in range(2, BB):
                        invalid = invalid | ((row_ids >= bb * L) &
                                             (row_ids < bb * L + s))
                    shifted = jnp.where(invalid, 0.0, shifted)
                conv = conv + shifted * cw[d_conv - 1 - s:d_conv - s, :]
        conv = conv + conv_b_ref[li]
        u = silu(conv)                               # (BBL, d_inner)

        # ---- x_proj / dt_proj ----------------------------------------------
        dt_low = mm(u, xp_dt_ref[li])                # (BBL, dt_rank)
        dt = mm(dt_low, dt_w_ref[li]) + dt_b_ref[li]  # (BBL, d_inner)
        dt = jnp.maximum(dt, 0.0) + jnp.log(1.0 + jnp.exp(-jnp.abs(dt)))
        dtu = dt * u

        # B^T / C^T directly in (d_state, BBL) orientation (d_state on
        # sublanes), so the scan never needs a transpose/relayout.
        BtT = mm_last(xp_B_ref[li], u)               # (d_state, BBL)
        CmT = mm_last(xp_C_ref[li], u)               # (d_state, BBL)
        A_li = A_ref[li]                             # (d_state, d_inner)

        # ---- selective scan: unrolled per batch element, VPU/EUP/XLU only ---
        y_acc = jnp.zeros((BBL, d_inner), jnp.float32)
        for bb in range(BB):
            h = jnp.zeros((d_state, d_inner), jnp.float32)
            for l in range(L):
                r = bb * L + l
                dA_r = jnp.exp(dt[r:r + 1, :] * A_li)          # (S, I)
                dBu_r = BtT[:, r:r + 1] * dtu[r:r + 1, :]      # (S, I) outer
                h = dA_r * h + dBu_r                           # 2-vreg FMA
                y_r = jnp.sum(CmT[:, r:r + 1] * h,             # VPU + XLU
                              axis=0, keepdims=True)           # (1, I)
                y_acc = y_acc + jnp.where(row_ids == r, y_r, 0.0)

        # ---- skip term, gate, out_proj ---------------------------------------
        y = y_acc + u * D_ref[li]
        y = y * silu(res)
        feats = mm(y, out_w_ref[li])                 # (BBL, D)

    # ---- split cls / patches and apply the decoding Linear in-kernel --------
    dec_all = mm(feats, dec_w_ref[...]) + dec_b_ref[...]       # (BBL, emb_RNA)
    for bb in range(BB):
        cls_ref[bb:bb + 1, :] = feats[bb * L:bb * L + 1, :]
        dec_ref[bb * N:(bb + 1) * N, :] = dec_all[bb * L + 1:(bb + 1) * L, :]


def fused_rna_decoder(x, params):
    """x: (B, L, emb_dim) f32 -> (cls (B, emb_dim), decoded (B*(L-1), emb_RNA))."""
    B, L, D = x.shape
    stk = params['stacked']
    nl, _, d_inner = stk['in_wx'].shape
    d_conv = stk['conv_w'].shape[1]
    d_state = stk['A'].shape[1]
    dt_rank = stk['xp_dt'].shape[2]
    dec_w, dec_b = params['dec_w'], params['dec_b']
    emb_RNA = dec_w.shape[1]
    N = L - 1

    # Fold batch elements into one grid step (BB*L rows per step).  BB must
    # either equal B or be a multiple of 8 (BlockSpec sublane rule for the
    # flattened row dimension, since L is odd here).
    if B <= 8:
        BB = B
    elif B % 8 == 0:
        BB = 8
    else:
        BB = B
    assert B % BB == 0
    grid = (B // BB,)

    x2d = x.reshape(B * L, D)

    def wspec(shape):
        zeros = (0,) * len(shape)
        return pl.BlockSpec(shape, lambda b, z=zeros: z)

    kernel = functools.partial(_decoder_kernel, BB=BB, L=L)

    grid_spec = pltpu.PrefetchScalarGridSpec(
        num_scalar_prefetch=0,
        grid=grid,
        in_specs=[
            pl.BlockSpec((BB * L, D), lambda b: (b, 0)),
            wspec((nl, D, d_inner)),        # in_proj (x half), (in, out)
            wspec((nl, D, d_inner)),        # in_proj (z half), (in, out)
            wspec((nl, d_conv, d_inner)),   # conv weight (tap-major)
            wspec((nl, 1, d_inner)),        # conv bias
            wspec((nl, d_inner, dt_rank)),  # x_proj -> dt, (in, out)
            wspec((nl, d_state, d_inner)),  # x_proj -> B (kept (S, in))
            wspec((nl, d_state, d_inner)),  # x_proj -> C (kept (S, in))
            wspec((nl, dt_rank, d_inner)),  # dt_proj weight, (in, out)
            wspec((nl, 1, d_inner)),        # dt_proj bias
            wspec((nl, d_state, d_inner)),  # A = -exp(A_log), precomputed
            wspec((nl, 1, d_inner)),        # D (skip)
            wspec((nl, d_inner, D)),        # out_proj, (in, out)
            wspec((D, emb_RNA)),            # decoding Linear weight, (in, out)
            wspec((1, emb_RNA)),            # decoding Linear bias
        ],
        out_specs=(
            pl.BlockSpec((BB, D), lambda b: (b, 0)),
            pl.BlockSpec((BB * N, emb_RNA), lambda b: (b, 0)),
        ),
        scratch_shapes=[
            pltpu.VMEM((BB * L + d_conv - 1, d_inner), jnp.float32),  # conv pad
        ],
    )
    cls_out, dec_out = pl.pallas_call(
        kernel,
        out_shape=(jax.ShapeDtypeStruct((B, D), jnp.float32),
                   jax.ShapeDtypeStruct((B * N, emb_RNA), jnp.float32)),
        grid_spec=grid_spec,
        compiler_params=pltpu.CompilerParams(
            dimension_semantics=("parallel",)),      # independent batch groups
    )(x2d, stk['in_wx'], stk['in_wz'], stk['conv_w'], stk['conv_b'],
      stk['xp_dt'], stk['xp_B'], stk['xp_C'], stk['dt_w'], stk['dt_b'],
      stk['A'], stk['D'], stk['out_w'], dec_w, dec_b)
    return cls_out, dec_out


# ---------------------------------------------------------------------------
# Parameters (synthetic, deterministic) and the full forward pass.
# ---------------------------------------------------------------------------
def init_params(key, emb_dim, emb_RNA, RNA_component, decoder_layer,
                d_state=16, d_conv=4, expand=2):
    d_inner = expand * emb_dim
    dt_rank = math.ceil(emb_dim / 16)
    keys = jax.random.split(key, 3 + decoder_layer)
    scale = 0.05
    layers = []
    for i in range(decoder_layer):
        lk = jax.random.split(keys[3 + i], 9)
        A_log = jnp.log(jnp.broadcast_to(
            jnp.arange(1, d_state + 1, dtype=jnp.float32)[:, None],
            (d_state, d_inner)))
        layers.append(dict(
            # projection weights stored pre-transposed to (in, out) layout
            in_wx=scale * jax.random.normal(lk[0], (emb_dim, d_inner), jnp.float32),
            in_wz=scale * jax.random.normal(lk[1], (emb_dim, d_inner), jnp.float32),
            conv_w=scale * jax.random.normal(lk[2], (d_conv, d_inner), jnp.float32),
            conv_b=jnp.zeros((1, d_inner), jnp.float32),
            xp_dt=scale * jax.random.normal(lk[3], (d_inner, dt_rank), jnp.float32),
            xp_B=scale * jax.random.normal(lk[4], (d_state, d_inner), jnp.float32),
            xp_C=scale * jax.random.normal(lk[5], (d_state, d_inner), jnp.float32),
            dt_w=scale * jax.random.normal(lk[6], (dt_rank, d_inner), jnp.float32),
            dt_b=scale * jax.random.normal(lk[7], (1, d_inner), jnp.float32),
            A=-jnp.exp(A_log),                       # precomputed outside kernel
            D=jnp.ones((1, d_inner), jnp.float32),
            out_w=scale * jax.random.normal(lk[8], (d_inner, emb_dim), jnp.float32),
        ))
    stacked = {k: jnp.stack([lay[k] for lay in layers], axis=0) for k in layers[0]}
    return {
        'config': dict(emb_dim=emb_dim, emb_RNA=emb_RNA,
                       RNA_component=RNA_component, d_state=d_state,
                       d_conv=d_conv, d_inner=d_inner, dt_rank=dt_rank),
        'mask_token': 0.02 * jax.random.normal(keys[0], (1, 1, emb_dim), jnp.float32),
        'pos_embedding': 0.02 * jax.random.normal(
            keys[1], (RNA_component + 1, 1, emb_dim), jnp.float32),
        'dec_w': 0.02 * jax.random.normal(keys[2], (emb_dim, emb_RNA), jnp.float32),
        'dec_b': jnp.zeros((1, emb_RNA), jnp.float32),
        'stacked': stacked,
    }


def rna_decoder_forward(features, backward_indexes, params):
    """features: (T, B, emb_dim) f32, backward_indexes: (RNA_component, B) int32."""
    cfg = params['config']
    T, B = features.shape[0], features.shape[1]

    # TODO(synk): take_indexes gathers + mask-token concat + pos-embedding add
    # stay as JAX glue (could be folded in with scalar-prefetch gathers).
    bi = jnp.concatenate(
        [jnp.zeros((1, B), dtype=backward_indexes.dtype), backward_indexes + 1],
        axis=0)                                                    # (L, B)
    L = bi.shape[0]
    mask_tok = jnp.broadcast_to(params['mask_token'], (L - T, B, cfg['emb_dim']))
    feats = jnp.concatenate([features, mask_tok], axis=0)          # (L, B, C)
    feats = jnp.take_along_axis(feats, bi[:, :, None], axis=0)     # take_indexes
    feats = feats + params['pos_embedding']                        # (L, 1, C) bcast
    feats = jnp.transpose(feats, (1, 0, 2))                        # (B, L, C)

    cls_out, dec_flat = fused_rna_decoder(feats, params)           # single kernel

    all_cls = [cls_out]                                            # (B, C)

    N = L - 1
    emb_RNA = dec_flat.shape[-1]
    dec3 = dec_flat.reshape(B, N, emb_RNA)

    mask = jnp.zeros((N, B, emb_RNA), jnp.float32)                 # t-b-c layout
    mask = mask.at[T - 1:].set(1.0)
    mask = jnp.take_along_axis(mask, (bi[1:] - 1)[:, :, None], axis=0)

    patches = dec3.reshape(B, 1, -1)                               # (B, 1, N*emb_RNA)
    mask = jnp.transpose(mask, (1, 0, 2)).reshape(B, 1, -1)
    return patches, mask, all_cls


if __name__ == "__main__":
    emb_dim, emb_RNA, RNA_component, decoder_layer = 32, 8, 16, 2
    B, T = 2, 5   # T visible tokens (incl. cls), B batch

    key = jax.random.PRNGKey(0)
    kp, kf, ki = jax.random.split(key, 3)

    params = init_params(kp, emb_dim, emb_RNA, RNA_component, decoder_layer)
    features = jax.random.normal(kf, (T, B, emb_dim), jnp.float32)
    perms = [jax.random.permutation(jax.random.fold_in(ki, b), RNA_component)
             for b in range(B)]
    backward_indexes = jnp.stack(perms, axis=1).astype(jnp.int32)   # (RNA_component, B)

    patches, mask, all_cls = rna_decoder_forward(features, backward_indexes, params)
    jax.block_until_ready((patches, mask, all_cls[0]))

    assert patches.shape == (B, 1, RNA_component * emb_RNA)
    assert mask.shape == (B, 1, RNA_component * emb_RNA)
    assert all_cls[0].shape == (B, emb_dim)
    print("KERNEL_OK")
</pallas_src>

<mosaic_0001>
module attributes {stable_mosaic.version = 11 : i64} {
  func.func @_decoder_kernel(%arg0: i32, %arg1: memref<34x32xf32, #tpu.memory_space<vmem>>, %arg2: memref<2x32x64xf32, #tpu.memory_space<vmem>>, %arg3: memref<2x32x64xf32, #tpu.memory_space<vmem>>, %arg4: memref<2x4x64xf32, #tpu.memory_space<vmem>>, %arg5: memref<2x1x64xf32, #tpu.memory_space<vmem>>, %arg6: memref<2x64x2xf32, #tpu.memory_space<vmem>>, %arg7: memref<2x16x64xf32, #tpu.memory_space<vmem>>, %arg8: memref<2x16x64xf32, #tpu.memory_space<vmem>>, %arg9: memref<2x2x64xf32, #tpu.memory_space<vmem>>, %arg10: memref<2x1x64xf32, #tpu.memory_space<vmem>>, %arg11: memref<2x16x64xf32, #tpu.memory_space<vmem>>, %arg12: memref<2x1x64xf32, #tpu.memory_space<vmem>>, %arg13: memref<2x64x32xf32, #tpu.memory_space<vmem>>, %arg14: memref<32x8xf32, #tpu.memory_space<vmem>>, %arg15: memref<1x8xf32, #tpu.memory_space<vmem>>, %arg16: memref<2x32xf32, #tpu.memory_space<vmem>>, %arg17: memref<32x8xf32, #tpu.memory_space<vmem>>, %arg18: memref<37x64xf32, #tpu.memory_space<vmem>>) attributes {dimension_semantics = [#tpu.dimension_semantics<parallel>], iteration_bounds = array<i64: 1>, scalar_prefetch = 0 : i64, scratch_operands = 1 : i64, tpu.core_type = #tpu.core_type<tc>, window_params = [{transform_indices = @transform_0, window_bounds = array<i64: 34, 32>}, {pipeline_mode = #tpu.pipeline_mode<synchronous>, transform_indices = @transform_1, window_bounds = array<i64: 2, 32, 64>}, {pipeline_mode = #tpu.pipeline_mode<synchronous>, transform_indices = @transform_2, window_bounds = array<i64: 2, 32, 64>}, {pipeline_mode = #tpu.pipeline_mode<synchronous>, transform_indices = @transform_3, window_bounds = array<i64: 2, 4, 64>}, {pipeline_mode = #tpu.pipeline_mode<synchronous>, transform_indices = @transform_4, window_bounds = array<i64: 2, 1, 64>}, {pipeline_mode = #tpu.pipeline_mode<synchronous>, transform_indices = @transform_5, window_bounds = array<i64: 2, 64, 2>}, {pipeline_mode = #tpu.pipeline_mode<synchronous>, transform_indices = @transform_6, window_bounds = array<i64: 2, 16, 64>}, {pipeline_mode = #tpu.pipeline_mode<synchronous>, transform_indices = @transform_7, window_bounds = array<i64: 2, 16, 64>}, {pipeline_mode = #tpu.pipeline_mode<synchronous>, transform_indices = @transform_8, window_bounds = array<i64: 2, 2, 64>}, {pipeline_mode = #tpu.pipeline_mode<synchronous>, transform_indices = @transform_9, window_bounds = array<i64: 2, 1, 64>}, {pipeline_mode = #tpu.pipeline_mode<synchronous>, transform_indices = @transform_10, window_bounds = array<i64: 2, 16, 64>}, {pipeline_mode = #tpu.pipeline_mode<synchronous>, transform_indices = @transform_11, window_bounds = array<i64: 2, 1, 64>}, {pipeline_mode = #tpu.pipeline_mode<synchronous>, transform_indices = @transform_12, window_bounds = array<i64: 2, 64, 32>}, {pipeline_mode = #tpu.pipeline_mode<synchronous>, transform_indices = @transform_13, window_bounds = array<i64: 32, 8>}, {pipeline_mode = #tpu.pipeline_mode<synchronous>, transform_indices = @transform_14, window_bounds = array<i64: 1, 8>}, {transform_indices = @transform_15, window_bounds = array<i64: 2, 32>}, {transform_indices = @transform_16, window_bounds = array<i64: 32, 8>}]} {
    %0 = tpu.iota {dimensions = array<i32: 0>} : vector<34x1xi32>
    %cst = arith.constant 0.000000e+00 : f32
    %1 = vector.broadcast %cst : f32 to vector<3x64xf32>
    %c0 = arith.constant 0 : index
    %c0_0 = arith.constant 0 : index
    %2 = vector.load %arg18[%c0, %c0_0] : memref<37x64xf32, #tpu.memory_space<vmem>>, vector<3x64xf32>
    tpu.vector_store %arg18[%c0, %c0_0], %1 {strides = array<i32>} : memref<37x64xf32, #tpu.memory_space<vmem>>, vector<3x64xf32>,
    %c0_1 = arith.constant 0 : index
    %c0_2 = arith.constant 0 : index
    %3 = vector.load %arg1[%c0_1, %c0_2] : memref<34x32xf32, #tpu.memory_space<vmem>>, vector<34x32xf32>
    %c0_3 = arith.constant 0 : index
    %c0_4 = arith.constant 0 : index
    %c0_5 = arith.constant 0 : index
    %4 = vector.load %arg2[%c0_3, %c0_4, %c0_5] : memref<2x32x64xf32, #tpu.memory_space<vmem>>, vector<1x32x64xf32>
    %5 = vector.shape_cast %4 : vector<1x32x64xf32> to vector<32x64xf32>
    %cst_6 = arith.constant dense<0.000000e+00> : vector<34x64xf32>
    %6 = tpu.matmul %3, %5, %cst_6 {dimension_numbers = #tpu.dot_dimension_numbers<[1], [0], [0], [1], [0, 0, 1, 1], [], []>} : vector<34x32xf32>, vector<32x64xf32>, vector<34x64xf32> -> vector<34x64xf32>
    %c0_7 = arith.constant 0 : index
    %c0_8 = arith.constant 0 : index
    %c0_9 = arith.constant 0 : index
    %7 = vector.load %arg3[%c0_7, %c0_8, %c0_9] : memref<2x32x64xf32, #tpu.memory_space<vmem>>, vector<1x32x64xf32>
    %8 = vector.shape_cast %7 : vector<1x32x64xf32> to vector<32x64xf32>
    %cst_10 = arith.constant dense<0.000000e+00> : vector<34x64xf32>
    %9 = tpu.matmul %3, %8, %cst_10 {dimension_numbers = #tpu.dot_dimension_numbers<[1], [0], [0], [1], [0, 0, 1, 1], [], []>} : vector<34x32xf32>, vector<32x64xf32>, vector<34x64xf32> -> vector<34x64xf32>
    %c0_11 = arith.constant 0 : index
    %c0_12 = arith.constant 0 : index
    %c0_13 = arith.constant 0 : index
    %10 = vector.load %arg4[%c0_11, %c0_12, %c0_13] : memref<2x4x64xf32, #tpu.memory_space<vmem>>, vector<1x4x64xf32>
    %11 = vector.shape_cast %10 : vector<1x4x64xf32> to vector<4x64xf32>
    %12 = vector.extract_strided_slice %11 {offsets = [3, 0], sizes = [1, 64], strides = [1, 1]} : vector<4x64xf32> to vector<1x64xf32>
    %13 = vector.broadcast %12 : vector<1x64xf32> to vector<34x64xf32>
    %14 = arith.mulf %6, %13 : vector<34x64xf32>
    %c3 = arith.constant 3 : index
    %c0_14 = arith.constant 0 : index
    %15 = vector.load %arg18[%c3, %c0_14] : memref<37x64xf32, #tpu.memory_space<vmem>>, vector<34x64xf32>
    tpu.vector_store %arg18[%c3, %c0_14], %6 {strides = array<i32>} : memref<37x64xf32, #tpu.memory_space<vmem>>, vector<34x64xf32>,
    %c2 = arith.constant 2 : index
    %c0_15 = arith.constant 0 : index
    %16 = vector.load %arg18[%c2, %c0_15] : memref<37x64xf32, #tpu.memory_space<vmem>>, vector<34x64xf32>
    %c17_i32 = arith.constant 17 : i32
    %17 = vector.broadcast %c17_i32 : i32 to vector<34x1xi32>
    %18 = arith.cmpi sge, %0, %17 : vector<34x1xi32>
    %c18_i32 = arith.constant 18 : i32
    %19 = vector.broadcast %c18_i32 : i32 to vector<34x1xi32>
    %20 = arith.cmpi slt, %0, %19 : vector<34x1xi32>
    %21 = arith.andi %18, %20 : vector<34x1xi1>
    %cst_16 = arith.constant 0.000000e+00 : f32
    %22 = vector.shape_cast %21 : vector<34x1xi1> to vector<34x1xi1>
    %23 = vector.broadcast %22 : vector<34x1xi1> to vector<34x64xi1>
    %24 = vector.broadcast %cst_16 : f32 to vector<34x64xf32>
    %25 = arith.select %23, %24, %16 : vector<34x64xi1>, vector<34x64xf32>
    %26 = vector.extract_strided_slice %11 {offsets = [2, 0], sizes = [1, 64], strides = [1, 1]} : vector<4x64xf32> to vector<1x64xf32>
    %27 = vector.broadcast %26 : vector<1x64xf32> to vector<34x64xf32>
    %28 = arith.mulf %25, %27 : vector<34x64xf32>
    %29 = arith.addf %14, %28 : vector<34x64xf32>
    %c1 = arith.constant 1 : index
    %c0_17 = arith.constant 0 : index
    %30 = vector.load %arg18[%c1, %c0_17] : memref<37x64xf32, #tpu.memory_space<vmem>>, vector<34x64xf32>
    %c17_i32_18 = arith.constant 17 : i32
    %31 = vector.broadcast %c17_i32_18 : i32 to vector<34x1xi32>
    %32 = arith.cmpi sge, %0, %31 : vector<34x1xi32>
    %c19_i32 = arith.constant 19 : i32
    %33 = vector.broadcast %c19_i32 : i32 to vector<34x1xi32>
    %34 = arith.cmpi slt, %0, %33 : vector<34x1xi32>
    %35 = arith.andi %32, %34 : vector<34x1xi1>
    %cst_19 = arith.constant 0.000000e+00 : f32
    %36 = vector.shape_cast %35 : vector<34x1xi1> to vector<34x1xi1>
    %37 = vector.broadcast %36 : vector<34x1xi1> to vector<34x64xi1>
    %38 = vector.broadcast %cst_19 : f32 to vector<34x64xf32>
    %39 = arith.select %37, %38, %30 : vector<34x64xi1>, vector<34x64xf32>
    %40 = vector.extract_strided_slice %11 {offsets = [1, 0], sizes = [1, 64], strides = [1, 1]} : vector<4x64xf32> to vector<1x64xf32>
    %41 = vector.broadcast %40 : vector<1x64xf32> to vector<34x64xf32>
    %42 = arith.mulf %39, %41 : vector<34x64xf32>
    %43 = arith.addf %29, %42 : vector<34x64xf32>
    %c0_20 = arith.constant 0 : index
    %c0_21 = arith.constant 0 : index
    %44 = vector.load %arg18[%c0_20, %c0_21] : memref<37x64xf32, #tpu.memory_space<vmem>>, vector<34x64xf32>
    %c17_i32_22 = arith.constant 17 : i32
    %45 = vector.broadcast %c17_i32_22 : i32 to vector<34x1xi32>
    %46 = arith.cmpi sge, %0, %45 : vector<34x1xi32>
    %c20_i32 = arith.constant 20 : i32
    %47 = vector.broadcast %c20_i32 : i32 to vector<34x1xi32>
    %48 = arith.cmpi slt, %0, %47 : vector<34x1xi32>
    %49 = arith.andi %46, %48 : vector<34x1xi1>
    %cst_23 = arith.constant 0.000000e+00 : f32
    %50 = vector.shape_cast %49 : vector<34x1xi1> to vector<34x1xi1>
    %51 = vector.broadcast %50 : vector<34x1xi1> to vector<34x64xi1>
    %52 = vector.broadcast %cst_23 : f32 to vector<34x64xf32>
    %53 = arith.select %51, %52, %44 : vector<34x64xi1>, vector<34x64xf32>
    %54 = vector.extract_strided_slice %11 {offsets = [0, 0], sizes = [1, 64], strides = [1, 1]} : vector<4x64xf32> to vector<1x64xf32>
    %55 = vector.broadcast %54 : vector<1x64xf32> to vector<34x64xf32>
    %56 = arith.mulf %53, %55 : vector<34x64xf32>
    %57 = arith.addf %43, %56 : vector<34x64xf32>
    %c0_24 = arith.constant 0 : index
    %c0_25 = arith.constant 0 : index
    %c0_26 = arith.constant 0 : index
    %58 = vector.load %arg5[%c0_24, %c0_25, %c0_26] : memref<2x1x64xf32, #tpu.memory_space<vmem>>, vector<1x1x64xf32>
    %59 = vector.shape_cast %58 : vector<1x1x64xf32> to vector<1x64xf32>
    %60 = vector.broadcast %59 : vector<1x64xf32> to vector<34x64xf32>
    %61 = arith.addf %57, %60 : vector<34x64xf32>
    %cst_27 = arith.constant 0.000000e+00 : f32
    %62 = vector.broadcast %cst_27 : f32 to vector<34x64xf32>
    %63 = arith.subf %62, %61 : vector<34x64xf32>
    %64 = math.exp %63 : vector<34x64xf32>
    %cst_28 = arith.constant 1.000000e+00 : f32
    %65 = vector.broadcast %cst_28 : f32 to vector<34x64xf32>
    %66 = arith.addf %65, %64 : vector<34x64xf32>
    %67 = tpu.reciprocal %66 {approx = true} : vector<34x64xf32> -> vector<34x64xf32>
    %68 = arith.mulf %61, %67 : vector<34x64xf32>
    %c0_29 = arith.constant 0 : index
    %c0_30 = arith.constant 0 : index
    %c0_31 = arith.constant 0 : index
    %69 = vector.load %arg6[%c0_29, %c0_30, %c0_31] : memref<2x64x2xf32, #tpu.memory_space<vmem>>, vector<1x64x2xf32>
    %70 = vector.shape_cast %69 : vector<1x64x2xf32> to vector<64x2xf32>
    %cst_32 = arith.constant dense<0.000000e+00> : vector<34x2xf32>
    %71 = tpu.matmul %68, %70, %cst_32 {dimension_numbers = #tpu.dot_dimension_numbers<[1], [0], [0], [1], [0, 0, 1, 1], [], []>} : vector<34x64xf32>, vector<64x2xf32>, vector<34x2xf32> -> vector<34x2xf32>
    %c0_33 = arith.constant 0 : index
    %c0_34 = arith.constant 0 : index
    %c0_35 = arith.constant 0 : index
    %72 = vector.load %arg9[%c0_33, %c0_34, %c0_35] : memref<2x2x64xf32, #tpu.memory_space<vmem>>, vector<1x2x64xf32>
    %73 = vector.shape_cast %72 : vector<1x2x64xf32> to vector<2x64xf32>
    %cst_36 = arith.constant dense<0.000000e+00> : vector<34x64xf32>
    %74 = tpu.matmul %71, %73, %cst_36 {dimension_numbers = #tpu.dot_dimension_numbers<[1], [0], [0], [1], [0, 0, 1, 1], [], []>} : vector<34x2xf32>, vector<2x64xf32>, vector<34x64xf32> -> vector<34x64xf32>
    %c0_37 = arith.constant 0 : index
    %c0_38 = arith.constant 0 : index
    %c0_39 = arith.constant 0 : index
    %75 = vector.load %arg10[%c0_37, %c0_38, %c0_39] : memref<2x1x64xf32, #tpu.memory_space<vmem>>, vector<1x1x64xf32>
    %76 = vector.shape_cast %75 : vector<1x1x64xf32> to vector<1x64xf32>
    %77 = vector.broadcast %76 : vector<1x64xf32> to vector<34x64xf32>
    %78 = arith.addf %74, %77 : vector<34x64xf32>
    %cst_40 = arith.constant 0.000000e+00 : f32
    %79 = vector.broadcast %cst_40 : f32 to vector<34x64xf32>
    %80 = arith.maximumf %78, %79 : vector<34x64xf32>
    %81 = math.absf %78 : vector<34x64xf32>
    %cst_41 = arith.constant 0.000000e+00 : f32
    %82 = vector.broadcast %cst_41 : f32 to vector<34x64xf32>
    %83 = arith.subf %82, %81 : vector<34x64xf32>
    %84 = math.exp %83 : vector<34x64xf32>
    %cst_42 = arith.constant 1.000000e+00 : f32
    %85 = vector.broadcast %cst_42 : f32 to vector<34x64xf32>
    %86 = arith.addf %85, %84 : vector<34x64xf32>
    %87 = math.log %86 : vector<34x64xf32>
    %88 = arith.addf %80, %87 : vector<34x64xf32>
    %89 = arith.mulf %88, %68 : vector<34x64xf32>
    %c0_43 = arith.constant 0 : index
    %c0_44 = arith.constant 0 : index
    %c0_45 = arith.constant 0 : index
    %90 = vector.load %arg7[%c0_43, %c0_44, %c0_45] : memref<2x16x64xf32, #tpu.memory_space<vmem>>, vector<1x16x64xf32>
    %91 = vector.shape_cast %90 : vector<1x16x64xf32> to vector<16x64xf32>
    %cst_46 = arith.constant dense<0.000000e+00> : vector<16x34xf32>
    %92 = tpu.matmul %91, %68, %cst_46 {dimension_numbers = #tpu.dot_dimension_numbers<[1], [1], [0], [0], [0, 0, 1, 0], [], []>} : vector<16x64xf32>, vector<34x64xf32>, vector<16x34xf32> -> vector<16x34xf32>
    %c0_47 = arith.constant 0 : index
    %c0_48 = arith.constant 0 : index
    %c0_49 = arith.constant 0 : index
    %93 = vector.load %arg8[%c0_47, %c0_48, %c0_49] : memref<2x16x64xf32, #tpu.memory_space<vmem>>, vector<1x16x64xf32>
    %94 = vector.shape_cast %93 : vector<1x16x64xf32> to vector<16x64xf32>
    %cst_50 = arith.constant dense<0.000000e+00> : vector<16x34xf32>
    %95 = tpu.matmul %94, %68, %cst_50 {dimension_numbers = #tpu.dot_dimension_numbers<[1], [1], [0], [0], [0, 0, 1, 0], [], []>} : vector<16x64xf32>, vector<34x64xf32>, vector<16x34xf32> -> vector<16x34xf32>
    %c0_51 = arith.constant 0 : index
    %c0_52 = arith.constant 0 : index
    %c0_53 = arith.constant 0 : index
    %96 = vector.load %arg11[%c0_51, %c0_52, %c0_53] : memref<2x16x64xf32, #tpu.memory_space<vmem>>, vector<1x16x64xf32>
    %97 = vector.shape_cast %96 : vector<1x16x64xf32> to vector<16x64xf32>
    %cst_54 = arith.constant 0.000000e+00 : f32
    %98 = vector.broadcast %cst_54 : f32 to vector<34x64xf32>
    %cst_55 = arith.constant 0.000000e+00 : f32
    %99 = vector.broadcast %cst_55 : f32 to vector<16x64xf32>
    %100 = vector.extract_strided_slice %88 {offsets = [0, 0], sizes = [1, 64], strides = [1, 1]} : vector<34x64xf32> to vector<1x64xf32>
    %101 = vector.broadcast %100 : vector<1x64xf32> to vector<16x64xf32>
    %102 = arith.mulf %101, %97 : vector<16x64xf32>
    %103 = math.exp %102 : vector<16x64xf32>
    %104 = vector.extract_strided_slice %92 {offsets = [0, 0], sizes = [16, 1], strides = [1, 1]} : vector<16x34xf32> to vector<16x1xf32>
    %105 = vector.extract_strided_slice %89 {offsets = [0, 0], sizes = [1, 64], strides = [1, 1]} : vector<34x64xf32> to vector<1x64xf32>
    %106 = vector.broadcast %104 : vector<16x1xf32> to vector<16x64xf32>
    %107 = vector.broadcast %105 : vector<1x64xf32> to vector<16x64xf32>
    %108 = arith.mulf %106, %107 : vector<16x64xf32>
    %109 = arith.mulf %103, %99 : vector<16x64xf32>
    %110 = arith.addf %109, %108 : vector<16x64xf32>
    %111 = vector.extract_strided_slice %95 {offsets = [0, 0], sizes = [16, 1], strides = [1, 1]} : vector<16x34xf32> to vector<16x1xf32>
    %112 = vector.broadcast %111 : vector<16x1xf32> to vector<16x64xf32>
    %113 = arith.mulf %112, %110 : vector<16x64xf32>
    %cst_56 = arith.constant dense<0.000000e+00> : vector<64xf32>
    %114 = vector.multi_reduction <add>, %113, %cst_56 [0] : vector<16x64xf32> to vector<64xf32>
    %115 = vector.shape_cast %114 : vector<64xf32> to vector<1x64xf32>
    %c0_i32 = arith.constant 0 : i32
    %116 = vector.broadcast %c0_i32 : i32 to vector<34x1xi32>
    %117 = arith.cmpi eq, %0, %116 : vector<34x1xi32>
    %cst_57 = arith.constant 0.000000e+00 : f32
    %118 = vector.shape_cast %117 : vector<34x1xi1> to vector<34x1xi1>
    %119 = vector.broadcast %118 : vector<34x1xi1> to vector<34x64xi1>
    %120 = vector.shape_cast %115 : vector<1x64xf32> to vector<1x64xf32>
    %121 = vector.broadcast %120 : vector<1x64xf32> to vector<34x64xf32>
    %122 = vector.broadcast %cst_57 : f32 to vector<34x64xf32>
    %123 = arith.select %119, %121, %122 : vector<34x64xi1>, vector<34x64xf32>
    %124 = arith.addf %98, %123 : vector<34x64xf32>
    %125 = vector.extract_strided_slice %88 {offsets = [1, 0], sizes = [1, 64], strides = [1, 1]} : vector<34x64xf32> to vector<1x64xf32>
    %126 = vector.broadcast %125 : vector<1x64xf32> to vector<16x64xf32>
    %127 = arith.mulf %126, %97 : vector<16x64xf32>
    %128 = math.exp %127 : vector<16x64xf32>
    %129 = vector.extract_strided_slice %92 {offsets = [0, 1], sizes = [16, 1], strides = [1, 1]} : vector<16x34xf32> to vector<16x1xf32>
    %130 = vector.extract_strided_slice %89 {offsets = [1, 0], sizes = [1, 64], strides = [1, 1]} : vector<34x64xf32> to vector<1x64xf32>
    %131 = vector.broadcast %129 : vector<16x1xf32> to vector<16x64xf32>
    %132 = vector.broadcast %130 : vector<1x64xf32> to vector<16x64xf32>
    %133 = arith.mulf %131, %132 : vector<16x64xf32>
    %134 = arith.mulf %128, %110 : vector<16x64xf32>
    %135 = arith.addf %134, %133 : vector<16x64xf32>
    %136 = vector.extract_strided_slice %95 {offsets = [0, 1], sizes = [16, 1], strides = [1, 1]} : vector<16x34xf32> to vector<16x1xf32>
    %137 = vector.broadcast %136 : vector<16x1xf32> to vector<16x64xf32>
    %138 = arith.mulf %137, %135 : vector<16x64xf32>
    %cst_58 = arith.constant dense<0.000000e+00> : vector<64xf32>
    %139 = vector.multi_reduction <add>, %138, %cst_58 [0] : vector<16x64xf32> to vector<64xf32>
    %140 = vector.shape_cast %139 : vector<64xf32> to vector<1x64xf32>
    %c1_i32 = arith.constant 1 : i32
    %141 = vector.broadcast %c1_i32 : i32 to vector<34x1xi32>
    %142 = arith.cmpi eq, %0, %141 : vector<34x1xi32>
    %cst_59 = arith.constant 0.000000e+00 : f32
    %143 = vector.shape_cast %142 : vector<34x1xi1> to vector<34x1xi1>
    %144 = vector.broadcast %143 : vector<34x1xi1> to vector<34x64xi1>
    %145 = vector.shape_cast %140 : vector<1x64xf32> to vector<1x64xf32>
    %146 = vector.broadcast %145 : vector<1x64xf32> to vector<34x64xf32>
    %147 = vector.broadcast %cst_59 : f32 to vector<34x64xf32>
    %148 = arith.select %144, %146, %147 : vector<34x64xi1>, vector<34x64xf32>
    %149 = arith.addf %124, %148 : vector<34x64xf32>
    %150 = vector.extract_strided_slice %88 {offsets = [2, 0], sizes = [1, 64], strides = [1, 1]} : vector<34x64xf32> to vector<1x64xf32>
    %151 = vector.broadcast %150 : vector<1x64xf32> to vector<16x64xf32>
    %152 = arith.mulf %151, %97 : vector<16x64xf32>
    %153 = math.exp %152 : vector<16x64xf32>
    %154 = vector.extract_strided_slice %92 {offsets = [0, 2], sizes = [16, 1], strides = [1, 1]} : vector<16x34xf32> to vector<16x1xf32>
    %155 = vector.extract_strided_slice %89 {offsets = [2, 0], sizes = [1, 64], strides = [1, 1]} : vector<34x64xf32> to vector<1x64xf32>
    %156 = vector.broadcast %154 : vector<16x1xf32> to vector<16x64xf32>
    %157 = vector.broadcast %155 : vector<1x64xf32> to vector<16x64xf32>
    %158 = arith.mulf %156, %157 : vector<16x64xf32>
    %159 = arith.mulf %153, %135 : vector<16x64xf32>
    %160 = arith.addf %159, %158 : vector<16x64xf32>
    %161 = vector.extract_strided_slice %95 {offsets = [0, 2], sizes = [16, 1], strides = [1, 1]} : vector<16x34xf32> to vector<16x1xf32>
    %162 = vector.broadcast %161 : vector<16x1xf32> to vector<16x64xf32>
    %163 = arith.mulf %162, %160 : vector<16x64xf32>
    %cst_60 = arith.constant dense<0.000000e+00> : vector<64xf32>
    %164 = vector.multi_reduction <add>, %163, %cst_60 [0] : vector<16x64xf32> to vector<64xf32>
    %165 = vector.shape_cast %164 : vector<64xf32> to vector<1x64xf32>
    %c2_i32 = arith.constant 2 : i32
    %166 = vector.broadcast %c2_i32 : i32 to vector<34x1xi32>
    %167 = arith.cmpi eq, %0, %166 : vector<34x1xi32>
    %cst_61 = arith.constant 0.000000e+00 : f32
    %168 = vector.shape_cast %167 : vector<34x1xi1> to vector<34x1xi1>
    %169 = vector.broadcast %168 : vector<34x1xi1> to vector<34x64xi1>
    %170 = vector.shape_cast %165 : vector<1x64xf32> to vector<1x64xf32>
    %171 = vector.broadcast %170 : vector<1x64xf32> to vector<34x64xf32>
    %172 = vector.broadcast %cst_61 : f32 to vector<34x64xf32>
    %173 = arith.select %169, %171, %172 : vector<34x64xi1>, vector<34x64xf32>
    %174 = arith.addf %149, %173 : vector<34x64xf32>
    %175 = vector.extract_strided_slice %88 {offsets = [3, 0], sizes = [1, 64], strides = [1, 1]} : vector<34x64xf32> to vector<1x64xf32>
    %176 = vector.broadcast %175 : vector<1x64xf32> to vector<16x64xf32>
    %177 = arith.mulf %176, %97 : vector<16x64xf32>
    %178 = math.exp %177 : vector<16x64xf32>
    %179 = vector.extract_strided_slice %92 {offsets = [0, 3], sizes = [16, 1], strides = [1, 1]} : vector<16x34xf32> to vector<16x1xf32>
    %180 = vector.extract_strided_slice %89 {offsets = [3, 0], sizes = [1, 64], strides = [1, 1]} : vector<34x64xf32> to vector<1x64xf32>
    %181 = vector.broadcast %179 : vector<16x1xf32> to vector<16x64xf32>
    %182 = vector.broadcast %180 : vector<1x64xf32> to vector<16x64xf32>
    %183 = arith.mulf %181, %182 : vector<16x64xf32>
    %184 = arith.mulf %178, %160 : vector<16x64xf32>
    %185 = arith.addf %184, %183 : vector<16x64xf32>
    %186 = vector.extract_strided_slice %95 {offsets = [0, 3], sizes = [16, 1], strides = [1, 1]} : vector<16x34xf32> to vector<16x1xf32>
    %187 = vector.broadcast %186 : vector<16x1xf32> to vector<16x64xf32>
    %188 = arith.mulf %187, %185 : vector<16x64xf32>
    %cst_62 = arith.constant dense<0.000000e+00> : vector<64xf32>
    %189 = vector.multi_reduction <add>, %188, %cst_62 [0] : vector<16x64xf32> to vector<64xf32>
    %190 = vector.shape_cast %189 : vector<64xf32> to vector<1x64xf32>
    %c3_i32 = arith.constant 3 : i32
    %191 = vector.broadcast %c3_i32 : i32 to vector<34x1xi32>
    %192 = arith.cmpi eq, %0, %191 : vector<34x1xi32>
    %cst_63 = arith.constant 0.000000e+00 : f32
    %193 = vector.shape_cast %192 : vector<34x1xi1> to vector<34x1xi1>
    %194 = vector.broadcast %193 : vector<34x1xi1> to vector<34x64xi1>
    %195 = vector.shape_cast %190 : vector<1x64xf32> to vector<1x64xf32>
    %196 = vector.broadcast %195 : vector<1x64xf32> to vector<34x64xf32>
    %197 = vector.broadcast %cst_63 : f32 to vector<34x64xf32>
    %198 = arith.select %194, %196, %197 : vector<34x64xi1>, vector<34x64xf32>
    %199 = arith.addf %174, %198 : vector<34x64xf32>
    %200 = vector.extract_strided_slice %88 {offsets = [4, 0], sizes = [1, 64], strides = [1, 1]} : vector<34x64xf32> to vector<1x64xf32>
    %201 = vector.broadcast %200 : vector<1x64xf32> to vector<16x64xf32>
    %202 = arith.mulf %201, %97 : vector<16x64xf32>
    %203 = math.exp %202 : vector<16x64xf32>
    %204 = vector.extract_strided_slice %92 {offsets = [0, 4], sizes = [16, 1], strides = [1, 1]} : vector<16x34xf32> to vector<16x1xf32>
    %205 = vector.extract_strided_slice %89 {offsets = [4, 0], sizes = [1, 64], strides = [1, 1]} : vector<34x64xf32> to vector<1x64xf32>
    %206 = vector.broadcast %204 : vector<16x1xf32> to vector<16x64xf32>
    %207 = vector.broadcast %205 : vector<1x64xf32> to vector<16x64xf32>
    %208 = arith.mulf %206, %207 : vector<16x64xf32>
    %209 = arith.mulf %203, %185 : vector<16x64xf32>
    %210 = arith.addf %209, %208 : vector<16x64xf32>
    %211 = vector.extract_strided_slice %95 {offsets = [0, 4], sizes = [16, 1], strides = [1, 1]} : vector<16x34xf32> to vector<16x1xf32>
    %212 = vector.broadcast %211 : vector<16x1xf32> to vector<16x64xf32>
    %213 = arith.mulf %212, %210 : vector<16x64xf32>
    %cst_64 = arith.constant dense<0.000000e+00> : vector<64xf32>
    %214 = vector.multi_reduction <add>, %213, %cst_64 [0] : vector<16x64xf32> to vector<64xf32>
    %215 = vector.shape_cast %214 : vector<64xf32> to vector<1x64xf32>
    %c4_i32 = arith.constant 4 : i32
    %216 = vector.broadcast %c4_i32 : i32 to vector<34x1xi32>
    %217 = arith.cmpi eq, %0, %216 : vector<34x1xi32>
    %cst_65 = arith.constant 0.000000e+00 : f32
    %218 = vector.shape_cast %217 : vector<34x1xi1> to vector<34x1xi1>
    %219 = vector.broadcast %218 : vector<34x1xi1> to vector<34x64xi1>
    %220 = vector.shape_cast %215 : vector<1x64xf32> to vector<1x64xf32>
    %221 = vector.broadcast %220 : vector<1x64xf32> to vector<34x64xf32>
    %222 = vector.broadcast %cst_65 : f32 to vector<34x64xf32>
    %223 = arith.select %219, %221, %222 : vector<34x64xi1>, vector<34x64xf32>
    %224 = arith.addf %199, %223 : vector<34x64xf32>
    %225 = vector.extract_strided_slice %88 {offsets = [5, 0], sizes = [1, 64], strides = [1, 1]} : vector<34x64xf32> to vector<1x64xf32>
    %226 = vector.broadcast %225 : vector<1x64xf32> to vector<16x64xf32>
    %227 = arith.mulf %226, %97 : vector<16x64xf32>
    %228 = math.exp %227 : vector<16x64xf32>
    %229 = vector.extract_strided_slice %92 {offsets = [0, 5], sizes = [16, 1], strides = [1, 1]} : vector<16x34xf32> to vector<16x1xf32>
    %230 = vector.extract_strided_slice %89 {offsets = [5, 0], sizes = [1, 64], strides = [1, 1]} : vector<34x64xf32> to vector<1x64xf32>
    %231 = vector.broadcast %229 : vector<16x1xf32> to vector<16x64xf32>
    %232 = vector.broadcast %230 : vector<1x64xf32> to vector<16x64xf32>
    %233 = arith.mulf %231, %232 : vector<16x64xf32>
    %234 = arith.mulf %228, %210 : vector<16x64xf32>
    %235 = arith.addf %234, %233 : vector<16x64xf32>
    %236 = vector.extract_strided_slice %95 {offsets = [0, 5], sizes = [16, 1], strides = [1, 1]} : vector<16x34xf32> to vector<16x1xf32>
    %237 = vector.broadcast %236 : vector<16x1xf32> to vector<16x64xf32>
    %238 = arith.mulf %237, %235 : vector<16x64xf32>
    %cst_66 = arith.constant dense<0.000000e+00> : vector<64xf32>
    %239 = vector.multi_reduction <add>, %238, %cst_66 [0] : vector<16x64xf32> to vector<64xf32>
    %240 = vector.shape_cast %239 : vector<64xf32> to vector<1x64xf32>
    %c5_i32 = arith.constant 5 : i32
    %241 = vector.broadcast %c5_i32 : i32 to vector<34x1xi32>
    %242 = arith.cmpi eq, %0, %241 : vector<34x1xi32>
    %cst_67 = arith.constant 0.000000e+00 : f32
    %243 = vector.shape_cast %242 : vector<34x1xi1> to vector<34x1xi1>
    %244 = vector.broadcast %243 : vector<34x1xi1> to vector<34x64xi1>
    %245 = vector.shape_cast %240 : vector<1x64xf32> to vector<1x64xf32>
    %246 = vector.broadcast %245 : vector<1x64xf32> to vector<34x64xf32>
    %247 = vector.broadcast %cst_67 : f32 to vector<34x64xf32>
    %248 = arith.select %244, %246, %247 : vector<34x64xi1>, vector<34x64xf32>
    %249 = arith.addf %224, %248 : vector<34x64xf32>
    %250 = vector.extract_strided_slice %88 {offsets = [6, 0], sizes = [1, 64], strides = [1, 1]} : vector<34x64xf32> to vector<1x64xf32>
    %251 = vector.broadcast %250 : vector<1x64xf32> to vector<16x64xf32>
    %252 = arith.mulf %251, %97 : vector<16x64xf32>
    %253 = math.exp %252 : vector<16x64xf32>
    %254 = vector.extract_strided_slice %92 {offsets = [0, 6], sizes = [16, 1], strides = [1, 1]} : vector<16x34xf32> to vector<16x1xf32>
    %255 = vector.extract_strided_slice %89 {offsets = [6, 0], sizes = [1, 64], strides = [1, 1]} : vector<34x64xf32> to vector<1x64xf32>
    %256 = vector.broadcast %254 : vector<16x1xf32> to vector<16x64xf32>
    %257 = vector.broadcast %255 : vector<1x64xf32> to vector<16x64xf32>
    %258 = arith.mulf %256, %257 : vector<16x64xf32>
    %259 = arith.mulf %253, %235 : vector<16x64xf32>
    %260 = arith.addf %259, %258 : vector<16x64xf32>
    %261 = vector.extract_strided_slice %95 {offsets = [0, 6], sizes = [16, 1], strides = [1, 1]} : vector<16x34xf32> to vector<16x1xf32>
    %262 = vector.broadcast %261 : vector<16x1xf32> to vector<16x64xf32>
    %263 = arith.mulf %262, %260 : vector<16x64xf32>
    %cst_68 = arith.constant dense<0.000000e+00> : vector<64xf32>
    %264 = vector.multi_reduction <add>, %263, %cst_68 [0] : vector<16x64xf32> to vector<64xf32>
    %265 = vector.shape_cast %264 : vector<64xf32> to vector<1x64xf32>
    %c6_i32 = arith.constant 6 : i32
    %266 = vector.broadcast %c6_i32 : i32 to vector<34x1xi32>
    %267 = arith.cmpi eq, %0, %266 : vector<34x1xi32>
    %cst_69 = arith.constant 0.000000e+00 : f32
    %268 = vector.shape_cast %267 : vector<34x1xi1> to vector<34x1xi1>
    %269 = vector.broadcast %268 : vector<34x1xi1> to vector<34x64xi1>
    %270 = vector.shape_cast %265 : vector<1x64xf32> to vector<1x64xf32>
    %271 = vector.broadcast %270 : vector<1x64xf32> to vector<34x64xf32>
    %272 = vector.broadcast %cst_69 : f32 to vector<34x64xf32>
    %273 = arith.select %269, %271, %272 : vector<34x64xi1>, vector<34x64xf32>
    %274 = arith.addf %249, %273 : vector<34x64xf32>
    %275 = vector.extract_strided_slice %88 {offsets = [7, 0], sizes = [1, 64], strides = [1, 1]} : vector<34x64xf32> to vector<1x64xf32>
    %276 = vector.broadcast %275 : vector<1x64xf32> to vector<16x64xf32>
    %277 = arith.mulf %276, %97 : vector<16x64xf32>
    %278 = math.exp %277 : vector<16x64xf32>
    %279 = vector.extract_strided_slice %92 {offsets = [0, 7], sizes = [16, 1], strides = [1, 1]} : vector<16x34xf32> to vector<16x1xf32>
    %280 = vector.extract_strided_slice %89 {offsets = [7, 0], sizes = [1, 64], strides = [1, 1]} : vector<34x64xf32> to vector<1x64xf32>
    %281 = vector.broadcast %279 : vector<16x1xf32> to vector<16x64xf32>
    %282 = vector.broadcast %280 : vector<1x64xf32> to vector<16x64xf32>
    %283 = arith.mulf %281, %282 : vector<16x64xf32>
    %284 = arith.mulf %278, %260 : vector<16x64xf32>
    %285 = arith.addf %284, %283 : vector<16x64xf32>
    %286 = vector.extract_strided_slice %95 {offsets = [0, 7], sizes = [16, 1], strides = [1, 1]} : vector<16x34xf32> to vector<16x1xf32>
    %287 = vector.broadcast %286 : vector<16x1xf32> to vector<16x64xf32>
    %288 = arith.mulf %287, %285 : vector<16x64xf32>
    %cst_70 = arith.constant dense<0.000000e+00> : vector<64xf32>
    %289 = vector.multi_reduction <add>, %288, %cst_70 [0] : vector<16x64xf32> to vector<64xf32>
    %290 = vector.shape_cast %289 : vector<64xf32> to vector<1x64xf32>
    %c7_i32 = arith.constant 7 : i32
    %291 = vector.broadcast %c7_i32 : i32 to vector<34x1xi32>
    %292 = arith.cmpi eq, %0, %291 : vector<34x1xi32>
    %cst_71 = arith.constant 0.000000e+00 : f32
    %293 = vector.shape_cast %292 : vector<34x1xi1> to vector<34x1xi1>
    %294 = vector.broadcast %293 : vector<34x1xi1> to vector<34x64xi1>
    %295 = vector.shape_cast %290 : vector<1x64xf32> to vector<1x64xf32>
    %296 = vector.broadcast %295 : vector<1x64xf32> to vector<34x64xf32>
    %297 = vector.broadcast %cst_71 : f32 to vector<34x64xf32>
    %298 = arith.select %294, %296, %297 : vector<34x64xi1>, vector<34x64xf32>
    %299 = arith.addf %274, %298 : vector<34x64xf32>
    %300 = vector.extract_strided_slice %88 {offsets = [8, 0], sizes = [1, 64], strides = [1, 1]} : vector<34x64xf32> to vector<1x64xf32>
    %301 = vector.broadcast %300 : vector<1x64xf32> to vector<16x64xf32>
    %302 = arith.mulf %301, %97 : vector<16x64xf32>
    %303 = math.exp %302 : vector<16x64xf32>
    %304 = vector.extract_strided_slice %92 {offsets = [0, 8], sizes = [16, 1], strides = [1, 1]} : vector<16x34xf32> to vector<16x1xf32>
    %305 = vector.extract_strided_slice %89 {offsets = [8, 0], sizes = [1, 64], strides = [1, 1]} : vector<34x64xf32> to vector<1x64xf32>
    %306 = vector.broadcast %304 : vector<16x1xf32> to vector<16x64xf32>
    %307 = vector.broadcast %305 : vector<1x64xf32> to vector<16x64xf32>
    %308 = arith.mulf %306, %307 : vector<16x64xf32>
    %309 = arith.mulf %303, %285 : vector<16x64xf32>
    %310 = arith.addf %309, %308 : vector<16x64xf32>
    %311 = vector.extract_strided_slice %95 {offsets = [0, 8], sizes = [16, 1], strides = [1, 1]} : vector<16x34xf32> to vector<16x1xf32>
    %312 = vector.broadcast %311 : vector<16x1xf32> to vector<16x64xf32>
    %313 = arith.mulf %312, %310 : vector<16x64xf32>
    %cst_72 = arith.constant dense<0.000000e+00> : vector<64xf32>
    %314 = vector.multi_reduction <add>, %313, %cst_72 [0] : vector<16x64xf32> to vector<64xf32>
    %315 = vector.shape_cast %314 : vector<64xf32> to vector<1x64xf32>
    %c8_i32 = arith.constant 8 : i32
    %316 = vector.broadcast %c8_i32 : i32 to vector<34x1xi32>
    %317 = arith.cmpi eq, %0, %316 : vector<34x1xi32>
    %cst_73 = arith.constant 0.000000e+00 : f32
    %318 = vector.shape_cast %317 : vector<34x1xi1> to vector<34x1xi1>
    %319 = vector.broadcast %318 : vector<34x1xi1> to vector<34x64xi1>
    %320 = vector.shape_cast %315 : vector<1x64xf32> to vector<1x64xf32>
    %321 = vector.broadcast %320 : vector<1x64xf32> to vector<34x64xf32>
    %322 = vector.broadcast %cst_73 : f32 to vector<34x64xf32>
    %323 = arith.select %319, %321, %322 : vector<34x64xi1>, vector<34x64xf32>
    %324 = arith.addf %299, %323 : vector<34x64xf32>
    %325 = vector.extract_strided_slice %88 {offsets = [9, 0], sizes = [1, 64], strides = [1, 1]} : vector<34x64xf32> to vector<1x64xf32>
    %326 = vector.broadcast %325 : vector<1x64xf32> to vector<16x64xf32>
    %327 = arith.mulf %326, %97 : vector<16x64xf32>
    %328 = math.exp %327 : vector<16x64xf32>
    %329 = vector.extract_strided_slice %92 {offsets = [0, 9], sizes = [16, 1], strides = [1, 1]} : vector<16x34xf32> to vector<16x1xf32>
    %330 = vector.extract_strided_slice %89 {offsets = [9, 0], sizes = [1, 64], strides = [1, 1]} : vector<34x64xf32> to vector<1x64xf32>
    %331 = vector.broadcast %329 : vector<16x1xf32> to vector<16x64xf32>
    %332 = vector.broadcast %330 : vector<1x64xf32> to vector<16x64xf32>
    %333 = arith.mulf %331, %332 : vector<16x64xf32>
    %334 = arith.mulf %328, %310 : vector<16x64xf32>
    %335 = arith.addf %334, %333 : vector<16x64xf32>
    %336 = vector.extract_strided_slice %95 {offsets = [0, 9], sizes = [16, 1], strides = [1, 1]} : vector<16x34xf32> to vector<16x1xf32>
    %337 = vector.broadcast %336 : vector<16x1xf32> to vector<16x64xf32>
    %338 = arith.mulf %337, %335 : vector<16x64xf32>
    %cst_74 = arith.constant dense<0.000000e+00> : vector<64xf32>
    %339 = vector.multi_reduction <add>, %338, %cst_74 [0] : vector<16x64xf32> to vector<64xf32>
    %340 = vector.shape_cast %339 : vector<64xf32> to vector<1x64xf32>
    %c9_i32 = arith.constant 9 : i32
    %341 = vector.broadcast %c9_i32 : i32 to vector<34x1xi32>
    %342 = arith.cmpi eq, %0, %341 : vector<34x1xi32>
    %cst_75 = arith.constant 0.000000e+00 : f32
    %343 = vector.shape_cast %342 : vector<34x1xi1> to vector<34x1xi1>
    %344 = vector.broadcast %343 : vector<34x1xi1> to vector<34x64xi1>
    %345 = vector.shape_cast %340 : vector<1x64xf32> to vector<1x64xf32>
    %346 = vector.broadcast %345 : vector<1x64xf32> to vector<34x64xf32>
    %347 = vector.broadcast %cst_75 : f32 to vector<34x64xf32>
    %348 = arith.select %344, %346, %347 : vector<34x64xi1>, vector<34x64xf32>
    %349 = arith.addf %324, %348 : vector<34x64xf32>
    %350 = vector.extract_strided_slice %88 {offsets = [10, 0], sizes = [1, 64], strides = [1, 1]} : vector<34x64xf32> to vector<1x64xf32>
    %351 = vector.broadcast %350 : vector<1x64xf32> to vector<16x64xf32>
    %352 = arith.mulf %351, %97 : vector<16x64xf32>
    %353 = math.exp %352 : vector<16x64xf32>
    %354 = vector.extract_strided_slice %92 {offsets = [0, 10], sizes = [16, 1], strides = [1, 1]} : vector<16x34xf32> to vector<16x1xf32>
    %355 = vector.extract_strided_slice %89 {offsets = [10, 0], sizes = [1, 64], strides = [1, 1]} : vector<34x64xf32> to vector<1x64xf32>
    %356 = vector.broadcast %354 : vector<16x1xf32> to vector<16x64xf32>
    %357 = vector.broadcast %355 : vector<1x64xf32> to vector<16x64xf32>
    %358 = arith.mulf %356, %357 : vector<16x64xf32>
    %359 = arith.mulf %353, %335 : vector<16x64xf32>
    %360 = arith.addf %359, %358 : vector<16x64xf32>
    %361 = vector.extract_strided_slice %95 {offsets = [0, 10], sizes = [16, 1], strides = [1, 1]} : vector<16x34xf32> to vector<16x1xf32>
    %362 = vector.broadcast %361 : vector<16x1xf32> to vector<16x64xf32>
    %363 = arith.mulf %362, %360 : vector<16x64xf32>
    %cst_76 = arith.constant dense<0.000000e+00> : vector<64xf32>
    %364 = vector.multi_reduction <add>, %363, %cst_76 [0] : vector<16x64xf32> to vector<64xf32>
    %365 = vector.shape_cast %364 : vector<64xf32> to vector<1x64xf32>
    %c10_i32 = arith.constant 10 : i32
    %366 = vector.broadcast %c10_i32 : i32 to vector<34x1xi32>
    %367 = arith.cmpi eq, %0, %366 : vector<34x1xi32>
    %cst_77 = arith.constant 0.000000e+00 : f32
    %368 = vector.shape_cast %367 : vector<34x1xi1> to vector<34x1xi1>
    %369 = vector.broadcast %368 : vector<34x1xi1> to vector<34x64xi1>
    %370 = vector.shape_cast %365 : vector<1x64xf32> to vector<1x64xf32>
    %371 = vector.broadcast %370 : vector<1x64xf32> to vector<34x64xf32>
    %372 = vector.broadcast %cst_77 : f32 to vector<34x64xf32>
    %373 = arith.select %369, %371, %372 : vector<34x64xi1>, vector<34x64xf32>
    %374 = arith.addf %349, %373 : vector<34x64xf32>
    %375 = vector.extract_strided_slice %88 {offsets = [11, 0], sizes = [1, 64], strides = [1, 1]} : vector<34x64xf32> to vector<1x64xf32>
    %376 = vector.broadcast %375 : vector<1x64xf32> to vector<16x64xf32>
    %377 = arith.mulf %376, %97 : vector<16x64xf32>
    %378 = math.exp %377 : vector<16x64xf32>
    %379 = vector.extract_strided_slice %92 {offsets = [0, 11], sizes = [16, 1], strides = [1, 1]} : vector<16x34xf32> to vector<16x1xf32>
    %380 = vector.extract_strided_slice %89 {offsets = [11, 0], sizes = [1, 64], strides = [1, 1]} : vector<34x64xf32> to vector<1x64xf32>
    %381 = vector.broadcast %379 : vector<16x1xf32> to vector<16x64xf32>
    %382 = vector.broadcast %380 : vector<1x64xf32> to vector<16x64xf32>
    %383 = arith.mulf %381, %382 : vector<16x64xf32>
    %384 = arith.mulf %378, %360 : vector<16x64xf32>
    %385 = arith.addf %384, %383 : vector<16x64xf32>
    %386 = vector.extract_strided_slice %95 {offsets = [0, 11], sizes = [16, 1], strides = [1, 1]} : vector<16x34xf32> to vector<16x1xf32>
    %387 = vector.broadcast %386 : vector<16x1xf32> to vector<16x64xf32>
    %388 = arith.mulf %387, %385 : vector<16x64xf32>
    %cst_78 = arith.constant dense<0.000000e+00> : vector<64xf32>
    %389 = vector.multi_reduction <add>, %388, %cst_78 [0] : vector<16x64xf32> to vector<64xf32>
    %390 = vector.shape_cast %389 : vector<64xf32> to vector<1x64xf32>
    %c11_i32 = arith.constant 11 : i32
    %391 = vector.broadcast %c11_i32 : i32 to vector<34x1xi32>
    %392 = arith.cmpi eq, %0, %391 : vector<34x1xi32>
    %cst_79 = arith.constant 0.000000e+00 : f32
    %393 = vector.shape_cast %392 : vector<34x1xi1> to vector<34x1xi1>
    %394 = vector.broadcast %393 : vector<34x1xi1> to vector<34x64xi1>
    %395 = vector.shape_cast %390 : vector<1x64xf32> to vector<1x64xf32>
    %396 = vector.broadcast %395 : vector<1x64xf32> to vector<34x64xf32>
    %397 = vector.broadcast %cst_79 : f32 to vector<34x64xf32>
    %398 = arith.select %394, %396, %397 : vector<34x64xi1>, vector<34x64xf32>
    %399 = arith.addf %374, %398 : vector<34x64xf32>
    %400 = vector.extract_strided_slice %88 {offsets = [12, 0], sizes = [1, 64], strides = [1, 1]} : vector<34x64xf32> to vector<1x64xf32>
    %401 = vector.broadcast %400 : vector<1x64xf32> to vector<16x64xf32>
    %402 = arith.mulf %401, %97 : vector<16x64xf32>
    %403 = math.exp %402 : vector<16x64xf32>
    %404 = vector.extract_strided_slice %92 {offsets = [0, 12], sizes = [16, 1], strides = [1, 1]} : vector<16x34xf32> to vector<16x1xf32>
    %405 = vector.extract_strided_slice %89 {offsets = [12, 0], sizes = [1, 64], strides = [1, 1]} : vector<34x64xf32> to vector<1x64xf32>
    %406 = vector.broadcast %404 : vector<16x1xf32> to vector<16x64xf32>
    %407 = vector.broadcast %405 : vector<1x64xf32> to vector<16x64xf32>
    %408 = arith.mulf %406, %407 : vector<16x64xf32>
    %409 = arith.mulf %403, %385 : vector<16x64xf32>
    %410 = arith.addf %409, %408 : vector<16x64xf32>
    %411 = vector.extract_strided_slice %95 {offsets = [0, 12], sizes = [16, 1], strides = [1, 1]} : vector<16x34xf32> to vector<16x1xf32>
    %412 = vector.broadcast %411 : vector<16x1xf32> to vector<16x64xf32>
    %413 = arith.mulf %412, %410 : vector<16x64xf32>
    %cst_80 = arith.constant dense<0.000000e+00> : vector<64xf32>
    %414 = vector.multi_reduction <add>, %413, %cst_80 [0] : vector<16x64xf32> to vector<64xf32>
    %415 = vector.shape_cast %414 : vector<64xf32> to vector<1x64xf32>
    %c12_i32 = arith.constant 12 : i32
    %416 = vector.broadcast %c12_i32 : i32 to vector<34x1xi32>
    %417 = arith.cmpi eq, %0, %416 : vector<34x1xi32>
    %cst_81 = arith.constant 0.000000e+00 : f32
    %418 = vector.shape_cast %417 : vector<34x1xi1> to vector<34x1xi1>
    %419 = vector.broadcast %418 : vector<34x1xi1> to vector<34x64xi1>
    %420 = vector.shape_cast %415 : vector<1x64xf32> to vector<1x64xf32>
    %421 = vector.broadcast %420 : vector<1x64xf32> to vector<34x64xf32>
    %422 = vector.broadcast %cst_81 : f32 to vector<34x64xf32>
    %423 = arith.select %419, %421, %422 : vector<34x64xi1>, vector<34x64xf32>
    %424 = arith.addf %399, %423 : vector<34x64xf32>
    %425 = vector.extract_strided_slice %88 {offsets = [13, 0], sizes = [1, 64], strides = [1, 1]} : vector<34x64xf32> to vector<1x64xf32>
    %426 = vector.broadcast %425 : vector<1x64xf32> to vector<16x64xf32>
    %427 = arith.mulf %426, %97 : vector<16x64xf32>
    %428 = math.exp %427 : vector<16x64xf32>
    %429 = vector.extract_strided_slice %92 {offsets = [0, 13], sizes = [16, 1], strides = [1, 1]} : vector<16x34xf32> to vector<16x1xf32>
    %430 = vector.extract_strided_slice %89 {offsets = [13, 0], sizes = [1, 64], strides = [1, 1]} : vector<34x64xf32> to vector<1x64xf32>
    %431 = vector.broadcast %429 : vector<16x1xf32> to vector<16x64xf32>
    %432 = vector.broadcast %430 : vector<1x64xf32> to vector<16x64xf32>
    %433 = arith.mulf %431, %432 : vector<16x64xf32>
    %434 = arith.mulf %428, %410 : vector<16x64xf32>
    %435 = arith.addf %434, %433 : vector<16x64xf32>
    %436 = vector.extract_strided_slice %95 {offsets = [0, 13], sizes = [16, 1], strides = [1, 1]} : vector<16x34xf32> to vector<16x1xf32>
    %437 = vector.broadcast %436 : vector<16x1xf32> to vector<16x64xf32>
    %438 = arith.mulf %437, %435 : vector<16x64xf32>
    %cst_82 = arith.constant dense<0.000000e+00> : vector<64xf32>
    %439 = vector.multi_reduction <add>, %438, %cst_82 [0] : vector<16x64xf32> to vector<64xf32>
    %440 = vector.shape_cast %439 : vector<64xf32> to vector<1x64xf32>
    %c13_i32 = arith.constant 13 : i32
    %441 = vector.broadcast %c13_i32 : i32 to vector<34x1xi32>
    %442 = arith.cmpi eq, %0, %441 : vector<34x1xi32>
    %cst_83 = arith.constant 0.000000e+00 : f32
    %443 = vector.shape_cast %442 : vector<34x1xi1> to vector<34x1xi1>
    %444 = vector.broadcast %443 : vector<34x1xi1> to vector<34x64xi1>
    %445 = vector.shape_cast %440 : vector<1x64xf32> to vector<1x64xf32>
    %446 = vector.broadcast %445 : vector<1x64xf32> to vector<34x64xf32>
    %447 = vector.broadcast %cst_83 : f32 to vector<34x64xf32>
    %448 = arith.select %444, %446, %447 : vector<34x64xi1>, vector<34x64xf32>
    %449 = arith.addf %424, %448 : vector<34x64xf32>
    %450 = vector.extract_strided_slice %88 {offsets = [14, 0], sizes = [1, 64], strides = [1, 1]} : vector<34x64xf32> to vector<1x64xf32>
    %451 = vector.broadcast %450 : vector<1x64xf32> to vector<16x64xf32>
    %452 = arith.mulf %451, %97 : vector<16x64xf32>
    %453 = math.exp %452 : vector<16x64xf32>
    %454 = vector.extract_strided_slice %92 {offsets = [0, 14], sizes = [16, 1], strides = [1, 1]} : vector<16x34xf32> to vector<16x1xf32>
    %455 = vector.extract_strided_slice %89 {offsets = [14, 0], sizes = [1, 64], strides = [1, 1]} : vector<34x64xf32> to vector<1x64xf32>
    %456 = vector.broadcast %454 : vector<16x1xf32> to vector<16x64xf32>
    %457 = vector.broadcast %455 : vector<1x64xf32> to vector<16x64xf32>
    %458 = arith.mulf %456, %457 : vector<16x64xf32>
    %459 = arith.mulf %453, %435 : vector<16x64xf32>
    %460 = arith.addf %459, %458 : vector<16x64xf32>
    %461 = vector.extract_strided_slice %95 {offsets = [0, 14], sizes = [16, 1], strides = [1, 1]} : vector<16x34xf32> to vector<16x1xf32>
    %462 = vector.broadcast %461 : vector<16x1xf32> to vector<16x64xf32>
    %463 = arith.mulf %462, %460 : vector<16x64xf32>
    %cst_84 = arith.constant dense<0.000000e+00> : vector<64xf32>
    %464 = vector.multi_reduction <add>, %463, %cst_84 [0] : vector<16x64xf32> to vector<64xf32>
    %465 = vector.shape_cast %464 : vector<64xf32> to vector<1x64xf32>
    %c14_i32 = arith.constant 14 : i32
    %466 = vector.broadcast %c14_i32 : i32 to vector<34x1xi32>
    %467 = arith.cmpi eq, %0, %466 : vector<34x1xi32>
    %cst_85 = arith.constant 0.000000e+00 : f32
    %468 = vector.shape_cast %467 : vector<34x1xi1> to vector<34x1xi1>
    %469 = vector.broadcast %468 : vector<34x1xi1> to vector<34x64xi1>
    %470 = vector.shape_cast %465 : vector<1x64xf32> to vector<1x64xf32>
    %471 = vector.broadcast %470 : vector<1x64xf32> to vector<34x64xf32>
    %472 = vector.broadcast %cst_85 : f32 to vector<34x64xf32>
    %473 = arith.select %469, %471, %472 : vector<34x64xi1>, vector<34x64xf32>
    %474 = arith.addf %449, %473 : vector<34x64xf32>
    %475 = vector.extract_strided_slice %88 {offsets = [15, 0], sizes = [1, 64], strides = [1, 1]} : vector<34x64xf32> to vector<1x64xf32>
    %476 = vector.broadcast %475 : vector<1x64xf32> to vector<16x64xf32>
    %477 = arith.mulf %476, %97 : vector<16x64xf32>
    %478 = math.exp %477 : vector<16x64xf32>
    %479 = vector.extract_strided_slice %92 {offsets = [0, 15], sizes = [16, 1], strides = [1, 1]} : vector<16x34xf32> to vector<16x1xf32>
    %480 = vector.extract_strided_slice %89 {offsets = [15, 0], sizes = [1, 64], strides = [1, 1]} : vector<34x64xf32> to vector<1x64xf32>
    %481 = vector.broadcast %479 : vector<16x1xf32> to vector<16x64xf32>
    %482 = vector.broadcast %480 : vector<1x64xf32> to vector<16x64xf32>
    %483 = arith.mulf %481, %482 : vector<16x64xf32>
    %484 = arith.mulf %478, %460 : vector<16x64xf32>
    %485 = arith.addf %484, %483 : vector<16x64xf32>
    %486 = vector.extract_strided_slice %95 {offsets = [0, 15], sizes = [16, 1], strides = [1, 1]} : vector<16x34xf32> to vector<16x1xf32>
    %487 = vector.broadcast %486 : vector<16x1xf32> to vector<16x64xf32>
    %488 = arith.mulf %487, %485 : vector<16x64xf32>
    %cst_86 = arith.constant dense<0.000000e+00> : vector<64xf32>
    %489 = vector.multi_reduction <add>, %488, %cst_86 [0] : vector<16x64xf32> to vector<64xf32>
    %490 = vector.shape_cast %489 : vector<64xf32> to vector<1x64xf32>
    %c15_i32 = arith.constant 15 : i32
    %491 = vector.broadcast %c15_i32 : i32 to vector<34x1xi32>
    %492 = arith.cmpi eq, %0, %491 : vector<34x1xi32>
    %cst_87 = arith.constant 0.000000e+00 : f32
    %493 = vector.shape_cast %492 : vector<34x1xi1> to vector<34x1xi1>
    %494 = vector.broadcast %493 : vector<34x1xi1> to vector<34x64xi1>
    %495 = vector.shape_cast %490 : vector<1x64xf32> to vector<1x64xf32>
    %496 = vector.broadcast %495 : vector<1x64xf32> to vector<34x64xf32>
    %497 = vector.broadcast %cst_87 : f32 to vector<34x64xf32>
    %498 = arith.select %494, %496, %497 : vector<34x64xi1>, vector<34x64xf32>
    %499 = arith.addf %474, %498 : vector<34x64xf32>
    %500 = vector.extract_strided_slice %88 {offsets = [16, 0], sizes = [1, 64], strides = [1, 1]} : vector<34x64xf32> to vector<1x64xf32>
    %501 = vector.broadcast %500 : vector<1x64xf32> to vector<16x64xf32>
    %502 = arith.mulf %501, %97 : vector<16x64xf32>
    %503 = math.exp %502 : vector<16x64xf32>
    %504 = vector.extract_strided_slice %92 {offsets = [0, 16], sizes = [16, 1], strides = [1, 1]} : vector<16x34xf32> to vector<16x1xf32>
    %505 = vector.extract_strided_slice %89 {offsets = [16, 0], sizes = [1, 64], strides = [1, 1]} : vector<34x64xf32> to vector<1x64xf32>
    %506 = vector.broadcast %504 : vector<16x1xf32> to vector<16x64xf32>
    %507 = vector.broadcast %505 : vector<1x64xf32> to vector<16x64xf32>
    %508 = arith.mulf %506, %507 : vector<16x64xf32>
    %509 = arith.mulf %503, %485 : vector<16x64xf32>
    %510 = arith.addf %509, %508 : vector<16x64xf32>
    %511 = vector.extract_strided_slice %95 {offsets = [0, 16], sizes = [16, 1], strides = [1, 1]} : vector<16x34xf32> to vector<16x1xf32>
    %512 = vector.broadcast %511 : vector<16x1xf32> to vector<16x64xf32>
    %513 = arith.mulf %512, %510 : vector<16x64xf32>
    %cst_88 = arith.constant dense<0.000000e+00> : vector<64xf32>
    %514 = vector.multi_reduction <add>, %513, %cst_88 [0] : vector<16x64xf32> to vector<64xf32>
    %515 = vector.shape_cast %514 : vector<64xf32> to vector<1x64xf32>
    %c16_i32 = arith.constant 16 : i32
    %516 = vector.broadcast %c16_i32 : i32 to vector<34x1xi32>
    %517 = arith.cmpi eq, %0, %516 : vector<34x1xi32>
    %cst_89 = arith.constant 0.000000e+00 : f32
    %518 = vector.shape_cast %517 : vector<34x1xi1> to vector<34x1xi1>
    %519 = vector.broadcast %518 : vector<34x1xi1> to vector<34x64xi1>
    %520 = vector.shape_cast %515 : vector<1x64xf32> to vector<1x64xf32>
    %521 = vector.broadcast %520 : vector<1x64xf32> to vector<34x64xf32>
    %522 = vector.broadcast %cst_89 : f32 to vector<34x64xf32>
    %523 = arith.select %519, %521, %522 : vector<34x64xi1>, vector<34x64xf32>
    %524 = arith.addf %499, %523 : vector<34x64xf32>
    %cst_90 = arith.constant 0.000000e+00 : f32
    %525 = vector.broadcast %cst_90 : f32 to vector<16x64xf32>
    %526 = vector.extract_strided_slice %88 {offsets = [17, 0], sizes = [1, 64], strides = [1, 1]} : vector<34x64xf32> to vector<1x64xf32>
    %527 = vector.broadcast %526 : vector<1x64xf32> to vector<16x64xf32>
    %528 = arith.mulf %527, %97 : vector<16x64xf32>
    %529 = math.exp %528 : vector<16x64xf32>
    %530 = vector.extract_strided_slice %92 {offsets = [0, 17], sizes = [16, 1], strides = [1, 1]} : vector<16x34xf32> to vector<16x1xf32>
    %531 = vector.extract_strided_slice %89 {offsets = [17, 0], sizes = [1, 64], strides = [1, 1]} : vector<34x64xf32> to vector<1x64xf32>
    %532 = vector.broadcast %530 : vector<16x1xf32> to vector<16x64xf32>
    %533 = vector.broadcast %531 : vector<1x64xf32> to vector<16x64xf32>
    %534 = arith.mulf %532, %533 : vector<16x64xf32>
    %535 = arith.mulf %529, %525 : vector<16x64xf32>
    %536 = arith.addf %535, %534 : vector<16x64xf32>
    %537 = vector.extract_strided_slice %95 {offsets = [0, 17], sizes = [16, 1], strides = [1, 1]} : vector<16x34xf32> to vector<16x1xf32>
    %538 = vector.broadcast %537 : vector<16x1xf32> to vector<16x64xf32>
    %539 = arith.mulf %538, %536 : vector<16x64xf32>
    %cst_91 = arith.constant dense<0.000000e+00> : vector<64xf32>
    %540 = vector.multi_reduction <add>, %539, %cst_91 [0] : vector<16x64xf32> to vector<64xf32>
    %541 = vector.shape_cast %540 : vector<64xf32> to vector<1x64xf32>
    %c17_i32_92 = arith.constant 17 : i32
    %542 = vector.broadcast %c17_i32_92 : i32 to vector<34x1xi32>
    %543 = arith.cmpi eq, %0, %542 : vector<34x1xi32>
    %cst_93 = arith.constant 0.000000e+00 : f32
    %544 = vector.shape_cast %543 : vector<34x1xi1> to vector<34x1xi1>
    %545 = vector.broadcast %544 : vector<34x1xi1> to vector<34x64xi1>
    %546 = vector.shape_cast %541 : vector<1x64xf32> to vector<1x64xf32>
    %547 = vector.broadcast %546 : vector<1x64xf32> to vector<34x64xf32>
    %548 = vector.broadcast %cst_93 : f32 to vector<34x64xf32>
    %549 = arith.select %545, %547, %548 : vector<34x64xi1>, vector<34x64xf32>
    %550 = arith.addf %524, %549 : vector<34x64xf32>
    %551 = vector.extract_strided_slice %88 {offsets = [18, 0], sizes = [1, 64], strides = [1, 1]} : vector<34x64xf32> to vector<1x64xf32>
    %552 = vector.broadcast %551 : vector<1x64xf32> to vector<16x64xf32>
    %553 = arith.mulf %552, %97 : vector<16x64xf32>
    %554 = math.exp %553 : vector<16x64xf32>
    %555 = vector.extract_strided_slice %92 {offsets = [0, 18], sizes = [16, 1], strides = [1, 1]} : vector<16x34xf32> to vector<16x1xf32>
    %556 = vector.extract_strided_slice %89 {offsets = [18, 0], sizes = [1, 64], strides = [1, 1]} : vector<34x64xf32> to vector<1x64xf32>
    %557 = vector.broadcast %555 : vector<16x1xf32> to vector<16x64xf32>
    %558 = vector.broadcast %556 : vector<1x64xf32> to vector<16x64xf32>
    %559 = arith.mulf %557, %558 : vector<16x64xf32>
    %560 = arith.mulf %554, %536 : vector<16x64xf32>
    %561 = arith.addf %560, %559 : vector<16x64xf32>
    %562 = vector.extract_strided_slice %95 {offsets = [0, 18], sizes = [16, 1], strides = [1, 1]} : vector<16x34xf32> to vector<16x1xf32>
    %563 = vector.broadcast %562 : vector<16x1xf32> to vector<16x64xf32>
    %564 = arith.mulf %563, %561 : vector<16x64xf32>
    %cst_94 = arith.constant dense<0.000000e+00> : vector<64xf32>
    %565 = vector.multi_reduction <add>, %564, %cst_94 [0] : vector<16x64xf32> to vector<64xf32>
    %566 = vector.shape_cast %565 : vector<64xf32> to vector<1x64xf32>
    %c18_i32_95 = arith.constant 18 : i32
    %567 = vector.broadcast %c18_i32_95 : i32 to vector<34x1xi32>
    %568 = arith.cmpi eq, %0, %567 : vector<34x1xi32>
    %cst_96 = arith.constant 0.000000e+00 : f32
    %569 = vector.shape_cast %568 : vector<34x1xi1> to vector<34x1xi1>
    %570 = vector.broadcast %569 : vector<34x1xi1> to vector<34x64xi1>
    %571 = vector.shape_cast %566 : vector<1x64xf32> to vector<1x64xf32>
    %572 = vector.broadcast %571 : vector<1x64xf32> to vector<34x64xf32>
    %573 = vector.broadcast %cst_96 : f32 to vector<34x64xf32>
    %574 = arith.select %570, %572, %573 : vector<34x64xi1>, vector<34x64xf32>
    %575 = arith.addf %550, %574 : vector<34x64xf32>
    %576 = vector.extract_strided_slice %88 {offsets = [19, 0], sizes = [1, 64], strides = [1, 1]} : vector<34x64xf32> to vector<1x64xf32>
    %577 = vector.broadcast %576 : vector<1x64xf32> to vector<16x64xf32>
    %578 = arith.mulf %577, %97 : vector<16x64xf32>
    %579 = math.exp %578 : vector<16x64xf32>
    %580 = vector.extract_strided_slice %92 {offsets = [0, 19], sizes = [16, 1], strides = [1, 1]} : vector<16x34xf32> to vector<16x1xf32>
    %581 = vector.extract_strided_slice %89 {offsets = [19, 0], sizes = [1, 64], strides = [1, 1]} : vector<34x64xf32> to vector<1x64xf32>
    %582 = vector.broadcast %580 : vector<16x1xf32> to vector<16x64xf32>
    %583 = vector.broadcast %581 : vector<1x64xf32> to vector<16x64xf32>
    %584 = arith.mulf %582, %583 : vector<16x64xf32>
    %585 = arith.mulf %579, %561 : vector<16x64xf32>
    %586 = arith.addf %585, %584 : vector<16x64xf32>
    %587 = vector.extract_strided_slice %95 {offsets = [0, 19], sizes = [16, 1], strides = [1, 1]} : vector<16x34xf32> to vector<16x1xf32>
    %588 = vector.broadcast %587 : vector<16x1xf32> to vector<16x64xf32>
    %589 = arith.mulf %588, %586 : vector<16x64xf32>
    %cst_97 = arith.constant dense<0.000000e+00> : vector<64xf32>
    %590 = vector.multi_reduction <add>, %589, %cst_97 [0] : vector<16x64xf32> to vector<64xf32>
    %591 = vector.shape_cast %590 : vector<64xf32> to vector<1x64xf32>
    %c19_i32_98 = arith.constant 19 : i32
    %592 = vector.broadcast %c19_i32_98 : i32 to vector<34x1xi32>
    %593 = arith.cmpi eq, %0, %592 : vector<34x1xi32>
    %cst_99 = arith.constant 0.000000e+00 : f32
    %594 = vector.shape_cast %593 : vector<34x1xi1> to vector<34x1xi1>
    %595 = vector.broadcast %594 : vector<34x1xi1> to vector<34x64xi1>
    %596 = vector.shape_cast %591 : vector<1x64xf32> to vector<1x64xf32>
    %597 = vector.broadcast %596 : vector<1x64xf32> to vector<34x64xf32>
    %598 = vector.broadcast %cst_99 : f32 to vector<34x64xf32>
    %599 = arith.select %595, %597, %598 : vector<34x64xi1>, vector<34x64xf32>
    %600 = arith.addf %575, %599 : vector<34x64xf32>
    %601 = vector.extract_strided_slice %88 {offsets = [20, 0], sizes = [1, 64], strides = [1, 1]} : vector<34x64xf32> to vector<1x64xf32>
    %602 = vector.broadcast %601 : vector<1x64xf32> to vector<16x64xf32>
    %603 = arith.mulf %602, %97 : vector<16x64xf32>
    %604 = math.exp %603 : vector<16x64xf32>
    %605 = vector.extract_strided_slice %92 {offsets = [0, 20], sizes = [16, 1], strides = [1, 1]} : vector<16x34xf32> to vector<16x1xf32>
    %606 = vector.extract_strided_slice %89 {offsets = [20, 0], sizes = [1, 64], strides = [1, 1]} : vector<34x64xf32> to vector<1x64xf32>
    %607 = vector.broadcast %605 : vector<16x1xf32> to vector<16x64xf32>
    %608 = vector.broadcast %606 : vector<1x64xf32> to vector<16x64xf32>
    %609 = arith.mulf %607, %608 : vector<16x64xf32>
    %610 = arith.mulf %604, %586 : vector<16x64xf32>
    %611 = arith.addf %610, %609 : vector<16x64xf32>
    %612 = vector.extract_strided_slice %95 {offsets = [0, 20], sizes = [16, 1], strides = [1, 1]} : vector<16x34xf32> to vector<16x1xf32>
    %613 = vector.broadcast %612 : vector<16x1xf32> to vector<16x64xf32>
    %614 = arith.mulf %613, %611 : vector<16x64xf32>
    %cst_100 = arith.constant dense<0.000000e+00> : vector<64xf32>
    %615 = vector.multi_reduction <add>, %614, %cst_100 [0] : vector<16x64xf32> to vector<64xf32>
    %616 = vector.shape_cast %615 : vector<64xf32> to vector<1x64xf32>
    %c20_i32_101 = arith.constant 20 : i32
    %617 = vector.broadcast %c20_i32_101 : i32 to vector<34x1xi32>
    %618 = arith.cmpi eq, %0, %617 : vector<34x1xi32>
    %cst_102 = arith.constant 0.000000e+00 : f32
    %619 = vector.shape_cast %618 : vector<34x1xi1> to vector<34x1xi1>
    %620 = vector.broadcast %619 : vector<34x1xi1> to vector<34x64xi1>
    %621 = vector.shape_cast %616 : vector<1x64xf32> to vector<1x64xf32>
    %622 = vector.broadcast %621 : vector<1x64xf32> to vector<34x64xf32>
    %623 = vector.broadcast %cst_102 : f32 to vector<34x64xf32>
    %624 = arith.select %620, %622, %623 : vector<34x64xi1>, vector<34x64xf32>
    %625 = arith.addf %600, %624 : vector<34x64xf32>
    %626 = vector.extract_strided_slice %88 {offsets = [21, 0], sizes = [1, 64], strides = [1, 1]} : vector<34x64xf32> to vector<1x64xf32>
    %627 = vector.broadcast %626 : vector<1x64xf32> to vector<16x64xf32>
    %628 = arith.mulf %627, %97 : vector<16x64xf32>
    %629 = math.exp %628 : vector<16x64xf32>
    %630 = vector.extract_strided_slice %92 {offsets = [0, 21], sizes = [16, 1], strides = [1, 1]} : vector<16x34xf32> to vector<16x1xf32>
    %631 = vector.extract_strided_slice %89 {offsets = [21, 0], sizes = [1, 64], strides = [1, 1]} : vector<34x64xf32> to vector<1x64xf32>
    %632 = vector.broadcast %630 : vector<16x1xf32> to vector<16x64xf32>
    %633 = vector.broadcast %631 : vector<1x64xf32> to vector<16x64xf32>
    %634 = arith.mulf %632, %633 : vector<16x64xf32>
    %635 = arith.mulf %629, %611 : vector<16x64xf32>
    %636 = arith.addf %635, %634 : vector<16x64xf32>
    %637 = vector.extract_strided_slice %95 {offsets = [0, 21], sizes = [16, 1], strides = [1, 1]} : vector<16x34xf32> to vector<16x1xf32>
    %638 = vector.broadcast %637 : vector<16x1xf32> to vector<16x64xf32>
    %639 = arith.mulf %638, %636 : vector<16x64xf32>
    %cst_103 = arith.constant dense<0.000000e+00> : vector<64xf32>
    %640 = vector.multi_reduction <add>, %639, %cst_103 [0] : vector<16x64xf32> to vector<64xf32>
    %641 = vector.shape_cast %640 : vector<64xf32> to vector<1x64xf32>
    %c21_i32 = arith.constant 21 : i32
    %642 = vector.broadcast %c21_i32 : i32 to vector<34x1xi32>
    %643 = arith.cmpi eq, %0, %642 : vector<34x1xi32>
    %cst_104 = arith.constant 0.000000e+00 : f32
    %644 = vector.shape_cast %643 : vector<34x1xi1> to vector<34x1xi1>
    %645 = vector.broadcast %644 : vector<34x1xi1> to vector<34x64xi1>
    %646 = vector.shape_cast %641 : vector<1x64xf32> to vector<1x64xf32>
    %647 = vector.broadcast %646 : vector<1x64xf32> to vector<34x64xf32>
    %648 = vector.broadcast %cst_104 : f32 to vector<34x64xf32>
    %649 = arith.select %645, %647, %648 : vector<34x64xi1>, vector<34x64xf32>
    %650 = arith.addf %625, %649 : vector<34x64xf32>
    %651 = vector.extract_strided_slice %88 {offsets = [22, 0], sizes = [1, 64], strides = [1, 1]} : vector<34x64xf32> to vector<1x64xf32>
    %652 = vector.broadcast %651 : vector<1x64xf32> to vector<16x64xf32>
    %653 = arith.mulf %652, %97 : vector<16x64xf32>
    %654 = math.exp %653 : vector<16x64xf32>
    %655 = vector.extract_strided_slice %92 {offsets = [0, 22], sizes = [16, 1], strides = [1, 1]} : vector<16x34xf32> to vector<16x1xf32>
    %656 = vector.extract_strided_slice %89 {offsets = [22, 0], sizes = [1, 64], strides = [1, 1]} : vector<34x64xf32> to vector<1x64xf32>
    %657 = vector.broadcast %655 : vector<16x1xf32> to vector<16x64xf32>
    %658 = vector.broadcast %656 : vector<1x64xf32> to vector<16x64xf32>
    %659 = arith.mulf %657, %658 : vector<16x64xf32>
    %660 = arith.mulf %654, %636 : vector<16x64xf32>
    %661 = arith.addf %660, %659 : vector<16x64xf32>
    %662 = vector.extract_strided_slice %95 {offsets = [0, 22], sizes = [16, 1], strides = [1, 1]} : vector<16x34xf32> to vector<16x1xf32>
    %663 = vector.broadcast %662 : vector<16x1xf32> to vector<16x64xf32>
    %664 = arith.mulf %663, %661 : vector<16x64xf32>
    %cst_105 = arith.constant dense<0.000000e+00> : vector<64xf32>
    %665 = vector.multi_reduction <add>, %664, %cst_105 [0] : vector<16x64xf32> to vector<64xf32>
    %666 = vector.shape_cast %665 : vector<64xf32> to vector<1x64xf32>
    %c22_i32 = arith.constant 22 : i32
    %667 = vector.broadcast %c22_i32 : i32 to vector<34x1xi32>
    %668 = arith.cmpi eq, %0, %667 : vector<34x1xi32>
    %cst_106 = arith.constant 0.000000e+00 : f32
    %669 = vector.shape_cast %668 : vector<34x1xi1> to vector<34x1xi1>
    %670 = vector.broadcast %669 : vector<34x1xi1> to vector<34x64xi1>
    %671 = vector.shape_cast %666 : vector<1x64xf32> to vector<1x64xf32>
    %672 = vector.broadcast %671 : vector<1x64xf32> to vector<34x64xf32>
    %673 = vector.broadcast %cst_106 : f32 to vector<34x64xf32>
    %674 = arith.select %670, %672, %673 : vector<34x64xi1>, vector<34x64xf32>
    %675 = arith.addf %650, %674 : vector<34x64xf32>
    %676 = vector.extract_strided_slice %88 {offsets = [23, 0], sizes = [1, 64], strides = [1, 1]} : vector<34x64xf32> to vector<1x64xf32>
    %677 = vector.broadcast %676 : vector<1x64xf32> to vector<16x64xf32>
    %678 = arith.mulf %677, %97 : vector<16x64xf32>
    %679 = math.exp %678 : vector<16x64xf32>
    %680 = vector.extract_strided_slice %92 {offsets = [0, 23], sizes = [16, 1], strides = [1, 1]} : vector<16x34xf32> to vector<16x1xf32>
    %681 = vector.extract_strided_slice %89 {offsets = [23, 0], sizes = [1, 64], strides = [1, 1]} : vector<34x64xf32> to vector<1x64xf32>
    %682 = vector.broadcast %680 : vector<16x1xf32> to vector<16x64xf32>
    %683 = vector.broadcast %681 : vector<1x64xf32> to vector<16x64xf32>
    %684 = arith.mulf %682, %683 : vector<16x64xf32>
    %685 = arith.mulf %679, %661 : vector<16x64xf32>
    %686 = arith.addf %685, %684 : vector<16x64xf32>
    %687 = vector.extract_strided_slice %95 {offsets = [0, 23], sizes = [16, 1], strides = [1, 1]} : vector<16x34xf32> to vector<16x1xf32>
    %688 = vector.broadcast %687 : vector<16x1xf32> to vector<16x64xf32>
    %689 = arith.mulf %688, %686 : vector<16x64xf32>
    %cst_107 = arith.constant dense<0.000000e+00> : vector<64xf32>
    %690 = vector.multi_reduction <add>, %689, %cst_107 [0] : vector<16x64xf32> to vector<64xf32>
    %691 = vector.shape_cast %690 : vector<64xf32> to vector<1x64xf32>
    %c23_i32 = arith.constant 23 : i32
    %692 = vector.broadcast %c23_i32 : i32 to vector<34x1xi32>
    %693 = arith.cmpi eq, %0, %692 : vector<34x1xi32>
    %cst_108 = arith.constant 0.000000e+00 : f32
    %694 = vector.shape_cast %693 : vector<34x1xi1> to vector<34x1xi1>
    %695 = vector.broadcast %694 : vector<34x1xi1> to vector<34x64xi1>
    %696 = vector.shape_cast %691 : vector<1x64xf32> to vector<1x64xf32>
    %697 = vector.broadcast %696 : vector<1x64xf32> to vector<34x64xf32>
    %698 = vector.broadcast %cst_108 : f32 to vector<34x64xf32>
    %699 = arith.select %695, %697, %698 : vector<34x64xi1>, vector<34x64xf32>
    %700 = arith.addf %675, %699 : vector<34x64xf32>
    %701 = vector.extract_strided_slice %88 {offsets = [24, 0], sizes = [1, 64], strides = [1, 1]} : vector<34x64xf32> to vector<1x64xf32>
    %702 = vector.broadcast %701 : vector<1x64xf32> to vector<16x64xf32>
    %703 = arith.mulf %702, %97 : vector<16x64xf32>
    %704 = math.exp %703 : vector<16x64xf32>
    %705 = vector.extract_strided_slice %92 {offsets = [0, 24], sizes = [16, 1], strides = [1, 1]} : vector<16x34xf32> to vector<16x1xf32>
    %706 = vector.extract_strided_slice %89 {offsets = [24, 0], sizes = [1, 64], strides = [1, 1]} : vector<34x64xf32> to vector<1x64xf32>
    %707 = vector.broadcast %705 : vector<16x1xf32> to vector<16x64xf32>
    %708 = vector.broadcast %706 : vector<1x64xf32> to vector<16x64xf32>
    %709 = arith.mulf %707, %708 : vector<16x64xf32>
    %710 = arith.mulf %704, %686 : vector<16x64xf32>
    %711 = arith.addf %710, %709 : vector<16x64xf32>
    %712 = vector.extract_strided_slice %95 {offsets = [0, 24], sizes = [16, 1], strides = [1, 1]} : vector<16x34xf32> to vector<16x1xf32>
    %713 = vector.broadcast %712 : vector<16x1xf32> to vector<16x64xf32>
    %714 = arith.mulf %713, %711 : vector<16x64xf32>
    %cst_109 = arith.constant dense<0.000000e+00> : vector<64xf32>
    %715 = vector.multi_reduction <add>, %714, %cst_109 [0] : vector<16x64xf32> to vector<64xf32>
    %716 = vector.shape_cast %715 : vector<64xf32> to vector<1x64xf32>
    %c24_i32 = arith.constant 24 : i32
    %717 = vector.broadcast %c24_i32 : i32 to vector<34x1xi32>
    %718 = arith.cmpi eq, %0, %717 : vector<34x1xi32>
    %cst_110 = arith.constant 0.000000e+00 : f32
    %719 = vector.shape_cast %718 : vector<34x1xi1> to vector<34x1xi1>
    %720 = vector.broadcast %719 : vector<34x1xi1> to vector<34x64xi1>
    %721 = vector.shape_cast %716 : vector<1x64xf32> to vector<1x64xf32>
    %722 = vector.broadcast %721 : vector<1x64xf32> to vector<34x64xf32>
    %723 = vector.broadcast %cst_110 : f32 to vector<34x64xf32>
    %724 = arith.select %720, %722, %723 : vector<34x64xi1>, vector<34x64xf32>
    %725 = arith.addf %700, %724 : vector<34x64xf32>
    %726 = vector.extract_strided_slice %88 {offsets = [25, 0], sizes = [1, 64], strides = [1, 1]} : vector<34x64xf32> to vector<1x64xf32>
    %727 = vector.broadcast %726 : vector<1x64xf32> to vector<16x64xf32>
    %728 = arith.mulf %727, %97 : vector<16x64xf32>
    %729 = math.exp %728 : vector<16x64xf32>
    %730 = vector.extract_strided_slice %92 {offsets = [0, 25], sizes = [16, 1], strides = [1, 1]} : vector<16x34xf32> to vector<16x1xf32>
    %731 = vector.extract_strided_slice %89 {offsets = [25, 0], sizes = [1, 64], strides = [1, 1]} : vector<34x64xf32> to vector<1x64xf32>
    %732 = vector.broadcast %730 : vector<16x1xf32> to vector<16x64xf32>
    %733 = vector.broadcast %731 : vector<1x64xf32> to vector<16x64xf32>
    %734 = arith.mulf %732, %733 : vector<16x64xf32>
    %735 = arith.mulf %729, %711 : vector<16x64xf32>
    %736 = arith.addf %735, %734 : vector<16x64xf32>
    %737 = vector.extract_strided_slice %95 {offsets = [0, 25], sizes = [16, 1], strides = [1, 1]} : vector<16x34xf32> to vector<16x1xf32>
    %738 = vector.broadcast %737 : vector<16x1xf32> to vector<16x64xf32>
    %739 = arith.mulf %738, %736 : vector<16x64xf32>
    %cst_111 = arith.constant dense<0.000000e+00> : vector<64xf32>
    %740 = vector.multi_reduction <add>, %739, %cst_111 [0] : vector<16x64xf32> to vector<64xf32>
    %741 = vector.shape_cast %740 : vector<64xf32> to vector<1x64xf32>
    %c25_i32 = arith.constant 25 : i32
    %742 = vector.broadcast %c25_i32 : i32 to vector<34x1xi32>
    %743 = arith.cmpi eq, %0, %742 : vector<34x1xi32>
    %cst_112 = arith.constant 0.000000e+00 : f32
    %744 = vector.shape_cast %743 : vector<34x1xi1> to vector<34x1xi1>
    %745 = vector.broadcast %744 : vector<34x1xi1> to vector<34x64xi1>
    %746 = vector.shape_cast %741 : vector<1x64xf32> to vector<1x64xf32>
    %747 = vector.broadcast %746 : vector<1x64xf32> to vector<34x64xf32>
    %748 = vector.broadcast %cst_112 : f32 to vector<34x64xf32>
    %749 = arith.select %745, %747, %748 : vector<34x64xi1>, vector<34x64xf32>
    %750 = arith.addf %725, %749 : vector<34x64xf32>
    %751 = vector.extract_strided_slice %88 {offsets = [26, 0], sizes = [1, 64], strides = [1, 1]} : vector<34x64xf32> to vector<1x64xf32>
    %752 = vector.broadcast %751 : vector<1x64xf32> to vector<16x64xf32>
    %753 = arith.mulf %752, %97 : vector<16x64xf32>
    %754 = math.exp %753 : vector<16x64xf32>
    %755 = vector.extract_strided_slice %92 {offsets = [0, 26], sizes = [16, 1], strides = [1, 1]} : vector<16x34xf32> to vector<16x1xf32>
    %756 = vector.extract_strided_slice %89 {offsets = [26, 0], sizes = [1, 64], strides = [1, 1]} : vector<34x64xf32> to vector<1x64xf32>
    %757 = vector.broadcast %755 : vector<16x1xf32> to vector<16x64xf32>
    %758 = vector.broadcast %756 : vector<1x64xf32> to vector<16x64xf32>
    %759 = arith.mulf %757, %758 : vector<16x64xf32>
    %760 = arith.mulf %754, %736 : vector<16x64xf32>
    %761 = arith.addf %760, %759 : vector<16x64xf32>
    %762 = vector.extract_strided_slice %95 {offsets = [0, 26], sizes = [16, 1], strides = [1, 1]} : vector<16x34xf32> to vector<16x1xf32>
    %763 = vector.broadcast %762 : vector<16x1xf32> to vector<16x64xf32>
    %764 = arith.mulf %763, %761 : vector<16x64xf32>
    %cst_113 = arith.constant dense<0.000000e+00> : vector<64xf32>
    %765 = vector.multi_reduction <add>, %764, %cst_113 [0] : vector<16x64xf32> to vector<64xf32>
    %766 = vector.shape_cast %765 : vector<64xf32> to vector<1x64xf32>
    %c26_i32 = arith.constant 26 : i32
    %767 = vector.broadcast %c26_i32 : i32 to vector<34x1xi32>
    %768 = arith.cmpi eq, %0, %767 : vector<34x1xi32>
    %cst_114 = arith.constant 0.000000e+00 : f32
    %769 = vector.shape_cast %768 : vector<34x1xi1> to vector<34x1xi1>
    %770 = vector.broadcast %769 : vector<34x1xi1> to vector<34x64xi1>
    %771 = vector.shape_cast %766 : vector<1x64xf32> to vector<1x64xf32>
    %772 = vector.broadcast %771 : vector<1x64xf32> to vector<34x64xf32>
    %773 = vector.broadcast %cst_114 : f32 to vector<34x64xf32>
    %774 = arith.select %770, %772, %773 : vector<34x64xi1>, vector<34x64xf32>
    %775 = arith.addf %750, %774 : vector<34x64xf32>
    %776 = vector.extract_strided_slice %88 {offsets = [27, 0], sizes = [1, 64], strides = [1, 1]} : vector<34x64xf32> to vector<1x64xf32>
    %777 = vector.broadcast %776 : vector<1x64xf32> to vector<16x64xf32>
    %778 = arith.mulf %777, %97 : vector<16x64xf32>
    %779 = math.exp %778 : vector<16x64xf32>
    %780 = vector.extract_strided_slice %92 {offsets = [0, 27], sizes = [16, 1], strides = [1, 1]} : vector<16x34xf32> to vector<16x1xf32>
    %781 = vector.extract_strided_slice %89 {offsets = [27, 0], sizes = [1, 64], strides = [1, 1]} : vector<34x64xf32> to vector<1x64xf32>
    %782 = vector.broadcast %780 : vector<16x1xf32> to vector<16x64xf32>
    %783 = vector.broadcast %781 : vector<1x64xf32> to vector<16x64xf32>
    %784 = arith.mulf %782, %783 : vector<16x64xf32>
    %785 = arith.mulf %779, %761 : vector<16x64xf32>
    %786 = arith.addf %785, %784 : vector<16x64xf32>
    %787 = vector.extract_strided_slice %95 {offsets = [0, 27], sizes = [16, 1], strides = [1, 1]} : vector<16x34xf32> to vector<16x1xf32>
    %788 = vector.broadcast %787 : vector<16x1xf32> to vector<16x64xf32>
    %789 = arith.mulf %788, %786 : vector<16x64xf32>
    %cst_115 = arith.constant dense<0.000000e+00> : vector<64xf32>
    %790 = vector.multi_reduction <add>, %789, %cst_115 [0] : vector<16x64xf32> to vector<64xf32>
    %791 = vector.shape_cast %790 : vector<64xf32> to vector<1x64xf32>
    %c27_i32 = arith.constant 27 : i32
    %792 = vector.broadcast %c27_i32 : i32 to vector<34x1xi32>
    %793 = arith.cmpi eq, %0, %792 : vector<34x1xi32>
    %cst_116 = arith.constant 0.000000e+00 : f32
    %794 = vector.shape_cast %793 : vector<34x1xi1> to vector<34x1xi1>
    %795 = vector.broadcast %794 : vector<34x1xi1> to vector<34x64xi1>
    %796 = vector.shape_cast %791 : vector<1x64xf32> to vector<1x64xf32>
    %797 = vector.broadcast %796 : vector<1x64xf32> to vector<34x64xf32>
    %798 = vector.broadcast %cst_116 : f32 to vector<34x64xf32>
    %799 = arith.select %795, %797, %798 : vector<34x64xi1>, vector<34x64xf32>
    %800 = arith.addf %775, %799 : vector<34x64xf32>
    %801 = vector.extract_strided_slice %88 {offsets = [28, 0], sizes = [1, 64], strides = [1, 1]} : vector<34x64xf32> to vector<1x64xf32>
    %802 = vector.broadcast %801 : vector<1x64xf32> to vector<16x64xf32>
    %803 = arith.mulf %802, %97 : vector<16x64xf32>
    %804 = math.exp %803 : vector<16x64xf32>
    %805 = vector.extract_strided_slice %92 {offsets = [0, 28], sizes = [16, 1], strides = [1, 1]} : vector<16x34xf32> to vector<16x1xf32>
    %806 = vector.extract_strided_slice %89 {offsets = [28, 0], sizes = [1, 64], strides = [1, 1]} : vector<34x64xf32> to vector<1x64xf32>
    %807 = vector.broadcast %805 : vector<16x1xf32> to vector<16x64xf32>
    %808 = vector.broadcast %806 : vector<1x64xf32> to vector<16x64xf32>
    %809 = arith.mulf %807, %808 : vector<16x64xf32>
    %810 = arith.mulf %804, %786 : vector<16x64xf32>
    %811 = arith.addf %810, %809 : vector<16x64xf32>
    %812 = vector.extract_strided_slice %95 {offsets = [0, 28], sizes = [16, 1], strides = [1, 1]} : vector<16x34xf32> to vector<16x1xf32>
    %813 = vector.broadcast %812 : vector<16x1xf32> to vector<16x64xf32>
    %814 = arith.mulf %813, %811 : vector<16x64xf32>
    %cst_117 = arith.constant dense<0.000000e+00> : vector<64xf32>
    %815 = vector.multi_reduction <add>, %814, %cst_117 [0] : vector<16x64xf32> to vector<64xf32>
    %816 = vector.shape_cast %815 : vector<64xf32> to vector<1x64xf32>
    %c28_i32 = arith.constant 28 : i32
    %817 = vector.broadcast %c28_i32 : i32 to vector<34x1xi32>
    %818 = arith.cmpi eq, %0, %817 : vector<34x1xi32>
    %cst_118 = arith.constant 0.000000e+00 : f32
    %819 = vector.shape_cast %818 : vector<34x1xi1> to vector<34x1xi1>
    %820 = vector.broadcast %819 : vector<34x1xi1> to vector<34x64xi1>
    %821 = vector.shape_cast %816 : vector<1x64xf32> to vector<1x64xf32>
    %822 = vector.broadcast %821 : vector<1x64xf32> to vector<34x64xf32>
    %823 = vector.broadcast %cst_118 : f32 to vector<34x64xf32>
    %824 = arith.select %820, %822, %823 : vector<34x64xi1>, vector<34x64xf32>
    %825 = arith.addf %800, %824 : vector<34x64xf32>
    %826 = vector.extract_strided_slice %88 {offsets = [29, 0], sizes = [1, 64], strides = [1, 1]} : vector<34x64xf32> to vector<1x64xf32>
    %827 = vector.broadcast %826 : vector<1x64xf32> to vector<16x64xf32>
    %828 = arith.mulf %827, %97 : vector<16x64xf32>
    %829 = math.exp %828 : vector<16x64xf32>
    %830 = vector.extract_strided_slice %92 {offsets = [0, 29], sizes = [16, 1], strides = [1, 1]} : vector<16x34xf32> to vector<16x1xf32>
    %831 = vector.extract_strided_slice %89 {offsets = [29, 0], sizes = [1, 64], strides = [1, 1]} : vector<34x64xf32> to vector<1x64xf32>
    %832 = vector.broadcast %830 : vector<16x1xf32> to vector<16x64xf32>
    %833 = vector.broadcast %831 : vector<1x64xf32> to vector<16x64xf32>
    %834 = arith.mulf %832, %833 : vector<16x64xf32>
    %835 = arith.mulf %829, %811 : vector<16x64xf32>
    %836 = arith.addf %835, %834 : vector<16x64xf32>
    %837 = vector.extract_strided_slice %95 {offsets = [0, 29], sizes = [16, 1], strides = [1, 1]} : vector<16x34xf32> to vector<16x1xf32>
    %838 = vector.broadcast %837 : vector<16x1xf32> to vector<16x64xf32>
    %839 = arith.mulf %838, %836 : vector<16x64xf32>
    %cst_119 = arith.constant dense<0.000000e+00> : vector<64xf32>
    %840 = vector.multi_reduction <add>, %839, %cst_119 [0] : vector<16x64xf32> to vector<64xf32>
    %841 = vector.shape_cast %840 : vector<64xf32> to vector<1x64xf32>
    %c29_i32 = arith.constant 29 : i32
    %842 = vector.broadcast %c29_i32 : i32 to vector<34x1xi32>
    %843 = arith.cmpi eq, %0, %842 : vector<34x1xi32>
    %cst_120 = arith.constant 0.000000e+00 : f32
    %844 = vector.shape_cast %843 : vector<34x1xi1> to vector<34x1xi1>
    %845 = vector.broadcast %844 : vector<34x1xi1> to vector<34x64xi1>
    %846 = vector.shape_cast %841 : vector<1x64xf32> to vector<1x64xf32>
    %847 = vector.broadcast %846 : vector<1x64xf32> to vector<34x64xf32>
    %848 = vector.broadcast %cst_120 : f32 to vector<34x64xf32>
    %849 = arith.select %845, %847, %848 : vector<34x64xi1>, vector<34x64xf32>
    %850 = arith.addf %825, %849 : vector<34x64xf32>
    %851 = vector.extract_strided_slice %88 {offsets = [30, 0], sizes = [1, 64], strides = [1, 1]} : vector<34x64xf32> to vector<1x64xf32>
    %852 = vector.broadcast %851 : vector<1x64xf32> to vector<16x64xf32>
    %853 = arith.mulf %852, %97 : vector<16x64xf32>
    %854 = math.exp %853 : vector<16x64xf32>
    %855 = vector.extract_strided_slice %92 {offsets = [0, 30], sizes = [16, 1], strides = [1, 1]} : vector<16x34xf32> to vector<16x1xf32>
    %856 = vector.extract_strided_slice %89 {offsets = [30, 0], sizes = [1, 64], strides = [1, 1]} : vector<34x64xf32> to vector<1x64xf32>
    %857 = vector.broadcast %855 : vector<16x1xf32> to vector<16x64xf32>
    %858 = vector.broadcast %856 : vector<1x64xf32> to vector<16x64xf32>
    %859 = arith.mulf %857, %858 : vector<16x64xf32>
    %860 = arith.mulf %854, %836 : vector<16x64xf32>
    %861 = arith.addf %860, %859 : vector<16x64xf32>
    %862 = vector.extract_strided_slice %95 {offsets = [0, 30], sizes = [16, 1], strides = [1, 1]} : vector<16x34xf32> to vector<16x1xf32>
    %863 = vector.broadcast %862 : vector<16x1xf32> to vector<16x64xf32>
    %864 = arith.mulf %863, %861 : vector<16x64xf32>
    %cst_121 = arith.constant dense<0.000000e+00> : vector<64xf32>
    %865 = vector.multi_reduction <add>, %864, %cst_121 [0] : vector<16x64xf32> to vector<64xf32>
    %866 = vector.shape_cast %865 : vector<64xf32> to vector<1x64xf32>
    %c30_i32 = arith.constant 30 : i32
    %867 = vector.broadcast %c30_i32 : i32 to vector<34x1xi32>
    %868 = arith.cmpi eq, %0, %867 : vector<34x1xi32>
    %cst_122 = arith.constant 0.000000e+00 : f32
    %869 = vector.shape_cast %868 : vector<34x1xi1> to vector<34x1xi1>
    %870 = vector.broadcast %869 : vector<34x1xi1> to vector<34x64xi1>
    %871 = vector.shape_cast %866 : vector<1x64xf32> to vector<1x64xf32>
    %872 = vector.broadcast %871 : vector<1x64xf32> to vector<34x64xf32>
    %873 = vector.broadcast %cst_122 : f32 to vector<34x64xf32>
    %874 = arith.select %870, %872, %873 : vector<34x64xi1>, vector<34x64xf32>
    %875 = arith.addf %850, %874 : vector<34x64xf32>
    %876 = vector.extract_strided_slice %88 {offsets = [31, 0], sizes = [1, 64], strides = [1, 1]} : vector<34x64xf32> to vector<1x64xf32>
    %877 = vector.broadcast %876 : vector<1x64xf32> to vector<16x64xf32>
    %878 = arith.mulf %877, %97 : vector<16x64xf32>
    %879 = math.exp %878 : vector<16x64xf32>
    %880 = vector.extract_strided_slice %92 {offsets = [0, 31], sizes = [16, 1], strides = [1, 1]} : vector<16x34xf32> to vector<16x1xf32>
    %881 = vector.extract_strided_slice %89 {offsets = [31, 0], sizes = [1, 64], strides = [1, 1]} : vector<34x64xf32> to vector<1x64xf32>
    %882 = vector.broadcast %880 : vector<16x1xf32> to vector<16x64xf32>
    %883 = vector.broadcast %881 : vector<1x64xf32> to vector<16x64xf32>
    %884 = arith.mulf %882, %883 : vector<16x64xf32>
    %885 = arith.mulf %879, %861 : vector<16x64xf32>
    %886 = arith.addf %885, %884 : vector<16x64xf32>
    %887 = vector.extract_strided_slice %95 {offsets = [0, 31], sizes = [16, 1], strides = [1, 1]} : vector<16x34xf32> to vector<16x1xf32>
    %888 = vector.broadcast %887 : vector<16x1xf32> to vector<16x64xf32>
    %889 = arith.mulf %888, %886 : vector<16x64xf32>
    %cst_123 = arith.constant dense<0.000000e+00> : vector<64xf32>
    %890 = vector.multi_reduction <add>, %889, %cst_123 [0] : vector<16x64xf32> to vector<64xf32>
    %891 = vector.shape_cast %890 : vector<64xf32> to vector<1x64xf32>
    %c31_i32 = arith.constant 31 : i32
    %892 = vector.broadcast %c31_i32 : i32 to vector<34x1xi32>
    %893 = arith.cmpi eq, %0, %892 : vector<34x1xi32>
    %cst_124 = arith.constant 0.000000e+00 : f32
    %894 = vector.shape_cast %893 : vector<34x1xi1> to vector<34x1xi1>
    %895 = vector.broadcast %894 : vector<34x1xi1> to vector<34x64xi1>
    %896 = vector.shape_cast %891 : vector<1x64xf32> to vector<1x64xf32>
    %897 = vector.broadcast %896 : vector<1x64xf32> to vector<34x64xf32>
    %898 = vector.broadcast %cst_124 : f32 to vector<34x64xf32>
    %899 = arith.select %895, %897, %898 : vector<34x64xi1>, vector<34x64xf32>
    %900 = arith.addf %875, %899 : vector<34x64xf32>
    %901 = vector.extract_strided_slice %88 {offsets = [32, 0], sizes = [1, 64], strides = [1, 1]} : vector<34x64xf32> to vector<1x64xf32>
    %902 = vector.broadcast %901 : vector<1x64xf32> to vector<16x64xf32>
    %903 = arith.mulf %902, %97 : vector<16x64xf32>
    %904 = math.exp %903 : vector<16x64xf32>
    %905 = vector.extract_strided_slice %92 {offsets = [0, 32], sizes = [16, 1], strides = [1, 1]} : vector<16x34xf32> to vector<16x1xf32>
    %906 = vector.extract_strided_slice %89 {offsets = [32, 0], sizes = [1, 64], strides = [1, 1]} : vector<34x64xf32> to vector<1x64xf32>
    %907 = vector.broadcast %905 : vector<16x1xf32> to vector<16x64xf32>
    %908 = vector.broadcast %906 : vector<1x64xf32> to vector<16x64xf32>
    %909 = arith.mulf %907, %908 : vector<16x64xf32>
    %910 = arith.mulf %904, %886 : vector<16x64xf32>
    %911 = arith.addf %910, %909 : vector<16x64xf32>
    %912 = vector.extract_strided_slice %95 {offsets = [0, 32], sizes = [16, 1], strides = [1, 1]} : vector<16x34xf32> to vector<16x1xf32>
    %913 = vector.broadcast %912 : vector<16x1xf32> to vector<16x64xf32>
    %914 = arith.mulf %913, %911 : vector<16x64xf32>
    %cst_125 = arith.constant dense<0.000000e+00> : vector<64xf32>
    %915 = vector.multi_reduction <add>, %914, %cst_125 [0] : vector<16x64xf32> to vector<64xf32>
    %916 = vector.shape_cast %915 : vector<64xf32> to vector<1x64xf32>
    %c32_i32 = arith.constant 32 : i32
    %917 = vector.broadcast %c32_i32 : i32 to vector<34x1xi32>
    %918 = arith.cmpi eq, %0, %917 : vector<34x1xi32>
    %cst_126 = arith.constant 0.000000e+00 : f32
    %919 = vector.shape_cast %918 : vector<34x1xi1> to vector<34x1xi1>
    %920 = vector.broadcast %919 : vector<34x1xi1> to vector<34x64xi1>
    %921 = vector.shape_cast %916 : vector<1x64xf32> to vector<1x64xf32>
    %922 = vector.broadcast %921 : vector<1x64xf32> to vector<34x64xf32>
    %923 = vector.broadcast %cst_126 : f32 to vector<34x64xf32>
    %924 = arith.select %920, %922, %923 : vector<34x64xi1>, vector<34x64xf32>
    %925 = arith.addf %900, %924 : vector<34x64xf32>
    %926 = vector.extract_strided_slice %88 {offsets = [33, 0], sizes = [1, 64], strides = [1, 1]} : vector<34x64xf32> to vector<1x64xf32>
    %927 = vector.broadcast %926 : vector<1x64xf32> to vector<16x64xf32>
    %928 = arith.mulf %927, %97 : vector<16x64xf32>
    %929 = math.exp %928 : vector<16x64xf32>
    %930 = vector.extract_strided_slice %92 {offsets = [0, 33], sizes = [16, 1], strides = [1, 1]} : vector<16x34xf32> to vector<16x1xf32>
    %931 = vector.extract_strided_slice %89 {offsets = [33, 0], sizes = [1, 64], strides = [1, 1]} : vector<34x64xf32> to vector<1x64xf32>
    %932 = vector.broadcast %930 : vector<16x1xf32> to vector<16x64xf32>
    %933 = vector.broadcast %931 : vector<1x64xf32> to vector<16x64xf32>
    %934 = arith.mulf %932, %933 : vector<16x64xf32>
    %935 = arith.mulf %929, %911 : vector<16x64xf32>
    %936 = arith.addf %935, %934 : vector<16x64xf32>
    %937 = vector.extract_strided_slice %95 {offsets = [0, 33], sizes = [16, 1], strides = [1, 1]} : vector<16x34xf32> to vector<16x1xf32>
    %938 = vector.broadcast %937 : vector<16x1xf32> to vector<16x64xf32>
    %939 = arith.mulf %938, %936 : vector<16x64xf32>
    %cst_127 = arith.constant dense<0.000000e+00> : vector<64xf32>
    %940 = vector.multi_reduction <add>, %939, %cst_127 [0] : vector<16x64xf32> to vector<64xf32>
    %941 = vector.shape_cast %940 : vector<64xf32> to vector<1x64xf32>
    %c33_i32 = arith.constant 33 : i32
    %942 = vector.broadcast %c33_i32 : i32 to vector<34x1xi32>
    %943 = arith.cmpi eq, %0, %942 : vector<34x1xi32>
    %cst_128 = arith.constant 0.000000e+00 : f32
    %944 = vector.shape_cast %943 : vector<34x1xi1> to vector<34x1xi1>
    %945 = vector.broadcast %944 : vector<34x1xi1> to vector<34x64xi1>
    %946 = vector.shape_cast %941 : vector<1x64xf32> to vector<1x64xf32>
    %947 = vector.broadcast %946 : vector<1x64xf32> to vector<34x64xf32>
    %948 = vector.broadcast %cst_128 : f32 to vector<34x64xf32>
    %949 = arith.select %945, %947, %948 : vector<34x64xi1>, vector<34x64xf32>
    %950 = arith.addf %925, %949 : vector<34x64xf32>
    %c0_129 = arith.constant 0 : index
    %c0_130 = arith.constant 0 : index
    %c0_131 = arith.constant 0 : index
    %951 = vector.load %arg12[%c0_129, %c0_130, %c0_131] : memref<2x1x64xf32, #tpu.memory_space<vmem>>, vector<1x1x64xf32>
    %952 = vector.shape_cast %951 : vector<1x1x64xf32> to vector<1x64xf32>
    %953 = vector.broadcast %952 : vector<1x64xf32> to vector<34x64xf32>
    %954 = arith.mulf %68, %953 : vector<34x64xf32>
    %955 = arith.addf %950, %954 : vector<34x64xf32>
    %cst_132 = arith.constant 0.000000e+00 : f32
    %956 = vector.broadcast %cst_132 : f32 to vector<34x64xf32>
    %957 = arith.subf %956, %9 : vector<34x64xf32>
    %958 = math.exp %957 : vector<34x64xf32>
    %cst_133 = arith.constant 1.000000e+00 : f32
    %959 = vector.broadcast %cst_133 : f32 to vector<34x64xf32>
    %960 = arith.addf %959, %958 : vector<34x64xf32>
    %961 = tpu.reciprocal %960 {approx = true} : vector<34x64xf32> -> vector<34x64xf32>
    %962 = arith.mulf %9, %961 : vector<34x64xf32>
    %963 = arith.mulf %955, %962 : vector<34x64xf32>
    %c0_134 = arith.constant 0 : index
    %c0_135 = arith.constant 0 : index
    %c0_136 = arith.constant 0 : index
    %964 = vector.load %arg13[%c0_134, %c0_135, %c0_136] : memref<2x64x32xf32, #tpu.memory_space<vmem>>, vector<1x64x32xf32>
    %965 = vector.shape_cast %964 : vector<1x64x32xf32> to vector<64x32xf32>
    %cst_137 = arith.constant dense<0.000000e+00> : vector<34x32xf32>
    %966 = tpu.matmul %963, %965, %cst_137 {dimension_numbers = #tpu.dot_dimension_numbers<[1], [0], [0], [1], [0, 0, 1, 1], [], []>} : vector<34x64xf32>, vector<64x32xf32>, vector<34x32xf32> -> vector<34x32xf32>
    %c1_138 = arith.constant 1 : index
    %c0_139 = arith.constant 0 : index
    %c0_140 = arith.constant 0 : index
    %967 = vector.load %arg2[%c1_138, %c0_139, %c0_140] : memref<2x32x64xf32, #tpu.memory_space<vmem>>, vector<1x32x64xf32>
    %968 = vector.shape_cast %967 : vector<1x32x64xf32> to vector<32x64xf32>
    %cst_141 = arith.constant dense<0.000000e+00> : vector<34x64xf32>
    %969 = tpu.matmul %966, %968, %cst_141 {dimension_numbers = #tpu.dot_dimension_numbers<[1], [0], [0], [1], [0, 0, 1, 1], [], []>} : vector<34x32xf32>, vector<32x64xf32>, vector<34x64xf32> -> vector<34x64xf32>
    %c1_142 = arith.constant 1 : index
    %c0_143 = arith.constant 0 : index
    %c0_144 = arith.constant 0 : index
    %970 = vector.load %arg3[%c1_142, %c0_143, %c0_144] : memref<2x32x64xf32, #tpu.memory_space<vmem>>, vector<1x32x64xf32>
    %971 = vector.shape_cast %970 : vector<1x32x64xf32> to vector<32x64xf32>
    %cst_145 = arith.constant dense<0.000000e+00> : vector<34x64xf32>
    %972 = tpu.matmul %966, %971, %cst_145 {dimension_numbers = #tpu.dot_dimension_numbers<[1], [0], [0], [1], [0, 0, 1, 1], [], []>} : vector<34x32xf32>, vector<32x64xf32>, vector<34x64xf32> -> vector<34x64xf32>
    %c1_146 = arith.constant 1 : index
    %c0_147 = arith.constant 0 : index
    %c0_148 = arith.constant 0 : index
    %973 = vector.load %arg4[%c1_146, %c0_147, %c0_148] : memref<2x4x64xf32, #tpu.memory_space<vmem>>, vector<1x4x64xf32>
    %974 = vector.shape_cast %973 : vector<1x4x64xf32> to vector<4x64xf32>
    %975 = vector.extract_strided_slice %974 {offsets = [3, 0], sizes = [1, 64], strides = [1, 1]} : vector<4x64xf32> to vector<1x64xf32>
    %976 = vector.broadcast %975 : vector<1x64xf32> to vector<34x64xf32>
    %977 = arith.mulf %969, %976 : vector<34x64xf32>
    %c3_149 = arith.constant 3 : index
    %c0_150 = arith.constant 0 : index
    %978 = vector.load %arg18[%c3_149, %c0_150] : memref<37x64xf32, #tpu.memory_space<vmem>>, vector<34x64xf32>
    tpu.vector_store %arg18[%c3_149, %c0_150], %969 {strides = array<i32>} : memref<37x64xf32, #tpu.memory_space<vmem>>, vector<34x64xf32>,
    %c2_151 = arith.constant 2 : index
    %c0_152 = arith.constant 0 : index
    %979 = vector.load %arg18[%c2_151, %c0_152] : memref<37x64xf32, #tpu.memory_space<vmem>>, vector<34x64xf32>
    %c17_i32_153 = arith.constant 17 : i32
    %980 = vector.broadcast %c17_i32_153 : i32 to vector<34x1xi32>
    %981 = arith.cmpi sge, %0, %980 : vector<34x1xi32>
    %c18_i32_154 = arith.constant 18 : i32
    %982 = vector.broadcast %c18_i32_154 : i32 to vector<34x1xi32>
    %983 = arith.cmpi slt, %0, %982 : vector<34x1xi32>
    %984 = arith.andi %981, %983 : vector<34x1xi1>
    %cst_155 = arith.constant 0.000000e+00 : f32
    %985 = vector.shape_cast %984 : vector<34x1xi1> to vector<34x1xi1>
    %986 = vector.broadcast %985 : vector<34x1xi1> to vector<34x64xi1>
    %987 = vector.broadcast %cst_155 : f32 to vector<34x64xf32>
    %988 = arith.select %986, %987, %979 : vector<34x64xi1>, vector<34x64xf32>
    %989 = vector.extract_strided_slice %974 {offsets = [2, 0], sizes = [1, 64], strides = [1, 1]} : vector<4x64xf32> to vector<1x64xf32>
    %990 = vector.broadcast %989 : vector<1x64xf32> to vector<34x64xf32>
    %991 = arith.mulf %988, %990 : vector<34x64xf32>
    %992 = arith.addf %977, %991 : vector<34x64xf32>
    %c1_156 = arith.constant 1 : index
    %c0_157 = arith.constant 0 : index
    %993 = vector.load %arg18[%c1_156, %c0_157] : memref<37x64xf32, #tpu.memory_space<vmem>>, vector<34x64xf32>
    %c17_i32_158 = arith.constant 17 : i32
    %994 = vector.broadcast %c17_i32_158 : i32 to vector<34x1xi32>
    %995 = arith.cmpi sge, %0, %994 : vector<34x1xi32>
    %c19_i32_159 = arith.constant 19 : i32
    %996 = vector.broadcast %c19_i32_159 : i32 to vector<34x1xi32>
    %997 = arith.cmpi slt, %0, %996 : vector<34x1xi32>
    %998 = arith.andi %995, %997 : vector<34x1xi1>
    %cst_160 = arith.constant 0.000000e+00 : f32
    %999 = vector.shape_cast %998 : vector<34x1xi1> to vector<34x1xi1>
    %1000 = vector.broadcast %999 : vector<34x1xi1> to vector<34x64xi1>
    %1001 = vector.broadcast %cst_160 : f32 to vector<34x64xf32>
    %1002 = arith.select %1000, %1001, %993 : vector<34x64xi1>, vector<34x64xf32>
    %1003 = vector.extract_strided_slice %974 {offsets = [1, 0], sizes = [1, 64], strides = [1, 1]} : vector<4x64xf32> to vector<1x64xf32>
    %1004 = vector.broadcast %1003 : vector<1x64xf32> to vector<34x64xf32>
    %1005 = arith.mulf %1002, %1004 : vector<34x64xf32>
    %1006 = arith.addf %992, %1005 : vector<34x64xf32>
    %c0_161 = arith.constant 0 : index
    %c0_162 = arith.constant 0 : index
    %1007 = vector.load %arg18[%c0_161, %c0_162] : memref<37x64xf32, #tpu.memory_space<vmem>>, vector<34x64xf32>
    %c17_i32_163 = arith.constant 17 : i32
    %1008 = vector.broadcast %c17_i32_163 : i32 to vector<34x1xi32>
    %1009 = arith.cmpi sge, %0, %1008 : vector<34x1xi32>
    %c20_i32_164 = arith.constant 20 : i32
    %1010 = vector.broadcast %c20_i32_164 : i32 to vector<34x1xi32>
    %1011 = arith.cmpi slt, %0, %1010 : vector<34x1xi32>
    %1012 = arith.andi %1009, %1011 : vector<34x1xi1>
    %cst_165 = arith.constant 0.000000e+00 : f32
    %1013 = vector.shape_cast %1012 : vector<34x1xi1> to vector<34x1xi1>
    %1014 = vector.broadcast %1013 : vector<34x1xi1> to vector<34x64xi1>
    %1015 = vector.broadcast %cst_165 : f32 to vector<34x64xf32>
    %1016 = arith.select %1014, %1015, %1007 : vector<34x64xi1>, vector<34x64xf32>
    %1017 = vector.extract_strided_slice %974 {offsets = [0, 0], sizes = [1, 64], strides = [1, 1]} : vector<4x64xf32> to vector<1x64xf32>
    %1018 = vector.broadcast %1017 : vector<1x64xf32> to vector<34x64xf32>
    %1019 = arith.mulf %1016, %1018 : vector<34x64xf32>
    %1020 = arith.addf %1006, %1019 : vector<34x64xf32>
    %c1_166 = arith.constant 1 : index
    %c0_167 = arith.constant 0 : index
    %c0_168 = arith.constant 0 : index
    %1021 = vector.load %arg5[%c1_166, %c0_167, %c0_168] : memref<2x1x64xf32, #tpu.memory_space<vmem>>, vector<1x1x64xf32>
    %1022 = vector.shape_cast %1021 : vector<1x1x64xf32> to vector<1x64xf32>
    %1023 = vector.broadcast %1022 : vector<1x64xf32> to vector<34x64xf32>
    %1024 = arith.addf %1020, %1023 : vector<34x64xf32>
    %cst_169 = arith.constant 0.000000e+00 : f32
    %1025 = vector.broadcast %cst_169 : f32 to vector<34x64xf32>
    %1026 = arith.subf %1025, %1024 : vector<34x64xf32>
    %1027 = math.exp %1026 : vector<34x64xf32>
    %cst_170 = arith.constant 1.000000e+00 : f32
    %1028 = vector.broadcast %cst_170 : f32 to vector<34x64xf32>
    %1029 = arith.addf %1028, %1027 : vector<34x64xf32>
    %1030 = tpu.reciprocal %1029 {approx = true} : vector<34x64xf32> -> vector<34x64xf32>
    %1031 = arith.mulf %1024, %1030 : vector<34x64xf32>
    %c1_171 = arith.constant 1 : index
    %c0_172 = arith.constant 0 : index
    %c0_173 = arith.constant 0 : index
    %1032 = vector.load %arg6[%c1_171, %c0_172, %c0_173] : memref<2x64x2xf32, #tpu.memory_space<vmem>>, vector<1x64x2xf32>
    %1033 = vector.shape_cast %1032 : vector<1x64x2xf32> to vector<64x2xf32>
    %cst_174 = arith.constant dense<0.000000e+00> : vector<34x2xf32>
    %1034 = tpu.matmul %1031, %1033, %cst_174 {dimension_numbers = #tpu.dot_dimension_numbers<[1], [0], [0], [1], [0, 0, 1, 1], [], []>} : vector<34x64xf32>, vector<64x2xf32>, vector<34x2xf32> -> vector<34x2xf32>
    %c1_175 = arith.constant 1 : index
    %c0_176 = arith.constant 0 : index
    %c0_177 = arith.constant 0 : index
    %1035 = vector.load %arg9[%c1_175, %c0_176, %c0_177] : memref<2x2x64xf32, #tpu.memory_space<vmem>>, vector<1x2x64xf32>
    %1036 = vector.shape_cast %1035 : vector<1x2x64xf32> to vector<2x64xf32>
    %cst_178 = arith.constant dense<0.000000e+00> : vector<34x64xf32>
    %1037 = tpu.matmul %1034, %1036, %cst_178 {dimension_numbers = #tpu.dot_dimension_numbers<[1], [0], [0], [1], [0, 0, 1, 1], [], []>} : vector<34x2xf32>, vector<2x64xf32>, vector<34x64xf32> -> vector<34x64xf32>
    %c1_179 = arith.constant 1 : index
    %c0_180 = arith.constant 0 : index
    %c0_181 = arith.constant 0 : index
    %1038 = vector.load %arg10[%c1_179, %c0_180, %c0_181] : memref<2x1x64xf32, #tpu.memory_space<vmem>>, vector<1x1x64xf32>
    %1039 = vector.shape_cast %1038 : vector<1x1x64xf32> to vector<1x64xf32>
    %1040 = vector.broadcast %1039 : vector<1x64xf32> to vector<34x64xf32>
    %1041 = arith.addf %1037, %1040 : vector<34x64xf32>
    %cst_182 = arith.constant 0.000000e+00 : f32
    %1042 = vector.broadcast %cst_182 : f32 to vector<34x64xf32>
    %1043 = arith.maximumf %1041, %1042 : vector<34x64xf32>
    %1044 = math.absf %1041 : vector<34x64xf32>
    %cst_183 = arith.constant 0.000000e+00 : f32
    %1045 = vector.broadcast %cst_183 : f32 to vector<34x64xf32>
    %1046 = arith.subf %1045, %1044 : vector<34x64xf32>
    %1047 = math.exp %1046 : vector<34x64xf32>
    %cst_184 = arith.constant 1.000000e+00 : f32
    %1048 = vector.broadcast %cst_184 : f32 to vector<34x64xf32>
    %1049 = arith.addf %1048, %1047 : vector<34x64xf32>
    %1050 = math.log %1049 : vector<34x64xf32>
    %1051 = arith.addf %1043, %1050 : vector<34x64xf32>
    %1052 = arith.mulf %1051, %1031 : vector<34x64xf32>
    %c1_185 = arith.constant 1 : index
    %c0_186 = arith.constant 0 : index
    %c0_187 = arith.constant 0 : index
    %1053 = vector.load %arg7[%c1_185, %c0_186, %c0_187] : memref<2x16x64xf32, #tpu.memory_space<vmem>>, vector<1x16x64xf32>
    %1054 = vector.shape_cast %1053 : vector<1x16x64xf32> to vector<16x64xf32>
    %cst_188 = arith.constant dense<0.000000e+00> : vector<16x34xf32>
    %1055 = tpu.matmul %1054, %1031, %cst_188 {dimension_numbers = #tpu.dot_dimension_numbers<[1], [1], [0], [0], [0, 0, 1, 0], [], []>} : vector<16x64xf32>, vector<34x64xf32>, vector<16x34xf32> -> vector<16x34xf32>
    %c1_189 = arith.constant 1 : index
    %c0_190 = arith.constant 0 : index
    %c0_191 = arith.constant 0 : index
    %1056 = vector.load %arg8[%c1_189, %c0_190, %c0_191] : memref<2x16x64xf32, #tpu.memory_space<vmem>>, vector<1x16x64xf32>
    %1057 = vector.shape_cast %1056 : vector<1x16x64xf32> to vector<16x64xf32>
    %cst_192 = arith.constant dense<0.000000e+00> : vector<16x34xf32>
    %1058 = tpu.matmul %1057, %1031, %cst_192 {dimension_numbers = #tpu.dot_dimension_numbers<[1], [1], [0], [0], [0, 0, 1, 0], [], []>} : vector<16x64xf32>, vector<34x64xf32>, vector<16x34xf32> -> vector<16x34xf32>
    %c1_193 = arith.constant 1 : index
    %c0_194 = arith.constant 0 : index
    %c0_195 = arith.constant 0 : index
    %1059 = vector.load %arg11[%c1_193, %c0_194, %c0_195] : memref<2x16x64xf32, #tpu.memory_space<vmem>>, vector<1x16x64xf32>
    %1060 = vector.shape_cast %1059 : vector<1x16x64xf32> to vector<16x64xf32>
    %cst_196 = arith.constant 0.000000e+00 : f32
    %1061 = vector.broadcast %cst_196 : f32 to vector<34x64xf32>
    %cst_197 = arith.constant 0.000000e+00 : f32
    %1062 = vector.broadcast %cst_197 : f32 to vector<16x64xf32>
    %1063 = vector.extract_strided_slice %1051 {offsets = [0, 0], sizes = [1, 64], strides = [1, 1]} : vector<34x64xf32> to vector<1x64xf32>
    %1064 = vector.broadcast %1063 : vector<1x64xf32> to vector<16x64xf32>
    %1065 = arith.mulf %1064, %1060 : vector<16x64xf32>
    %1066 = math.exp %1065 : vector<16x64xf32>
    %1067 = vector.extract_strided_slice %1055 {offsets = [0, 0], sizes = [16, 1], strides = [1, 1]} : vector<16x34xf32> to vector<16x1xf32>
    %1068 = vector.extract_strided_slice %1052 {offsets = [0, 0], sizes = [1, 64], strides = [1, 1]} : vector<34x64xf32> to vector<1x64xf32>
    %1069 = vector.broadcast %1067 : vector<16x1xf32> to vector<16x64xf32>
    %1070 = vector.broadcast %1068 : vector<1x64xf32> to vector<16x64xf32>
    %1071 = arith.mulf %1069, %1070 : vector<16x64xf32>
    %1072 = arith.mulf %1066, %1062 : vector<16x64xf32>
    %1073 = arith.addf %1072, %1071 : vector<16x64xf32>
    %1074 = vector.extract_strided_slice %1058 {offsets = [0, 0], sizes = [16, 1], strides = [1, 1]} : vector<16x34xf32> to vector<16x1xf32>
    %1075 = vector.broadcast %1074 : vector<16x1xf32> to vector<16x64xf32>
    %1076 = arith.mulf %1075, %1073 : vector<16x64xf32>
    %cst_198 = arith.constant dense<0.000000e+00> : vector<64xf32>
    %1077 = vector.multi_reduction <add>, %1076, %cst_198 [0] : vector<16x64xf32> to vector<64xf32>
    %1078 = vector.shape_cast %1077 : vector<64xf32> to vector<1x64xf32>
    %c0_i32_199 = arith.constant 0 : i32
    %1079 = vector.broadcast %c0_i32_199 : i32 to vector<34x1xi32>
    %1080 = arith.cmpi eq, %0, %1079 : vector<34x1xi32>
    %cst_200 = arith.constant 0.000000e+00 : f32
    %1081 = vector.shape_cast %1080 : vector<34x1xi1> to vector<34x1xi1>
    %1082 = vector.broadcast %1081 : vector<34x1xi1> to vector<34x64xi1>
    %1083 = vector.shape_cast %1078 : vector<1x64xf32> to vector<1x64xf32>
    %1084 = vector.broadcast %1083 : vector<1x64xf32> to vector<34x64xf32>
    %1085 = vector.broadcast %cst_200 : f32 to vector<34x64xf32>
    %1086 = arith.select %1082, %1084, %1085 : vector<34x64xi1>, vector<34x64xf32>
    %1087 = arith.addf %1061, %1086 : vector<34x64xf32>
    %1088 = vector.extract_strided_slice %1051 {offsets = [1, 0], sizes = [1, 64], strides = [1, 1]} : vector<34x64xf32> to vector<1x64xf32>
    %1089 = vector.broadcast %1088 : vector<1x64xf32> to vector<16x64xf32>
    %1090 = arith.mulf %1089, %1060 : vector<16x64xf32>
    %1091 = math.exp %1090 : vector<16x64xf32>
    %1092 = vector.extract_strided_slice %1055 {offsets = [0, 1], sizes = [16, 1], strides = [1, 1]} : vector<16x34xf32> to vector<16x1xf32>
    %1093 = vector.extract_strided_slice %1052 {offsets = [1, 0], sizes = [1, 64], strides = [1, 1]} : vector<34x64xf32> to vector<1x64xf32>
    %1094 = vector.broadcast %1092 : vector<16x1xf32> to vector<16x64xf32>
    %1095 = vector.broadcast %1093 : vector<1x64xf32> to vector<16x64xf32>
    %1096 = arith.mulf %1094, %1095 : vector<16x64xf32>
    %1097 = arith.mulf %1091, %1073 : vector<16x64xf32>
    %1098 = arith.addf %1097, %1096 : vector<16x64xf32>
    %1099 = vector.extract_strided_slice %1058 {offsets = [0, 1], sizes = [16, 1], strides = [1, 1]} : vector<16x34xf32> to vector<16x1xf32>
    %1100 = vector.broadcast %1099 : vector<16x1xf32> to vector<16x64xf32>
    %1101 = arith.mulf %1100, %1098 : vector<16x64xf32>
    %cst_201 = arith.constant dense<0.000000e+00> : vector<64xf32>
    %1102 = vector.multi_reduction <add>, %1101, %cst_201 [0] : vector<16x64xf32> to vector<64xf32>
    %1103 = vector.shape_cast %1102 : vector<64xf32> to vector<1x64xf32>
    %c1_i32_202 = arith.constant 1 : i32
    %1104 = vector.broadcast %c1_i32_202 : i32 to vector<34x1xi32>
    %1105 = arith.cmpi eq, %0, %1104 : vector<34x1xi32>
    %cst_203 = arith.constant 0.000000e+00 : f32
    %1106 = vector.shape_cast %1105 : vector<34x1xi1> to vector<34x1xi1>
    %1107 = vector.broadcast %1106 : vector<34x1xi1> to vector<34x64xi1>
    %1108 = vector.shape_cast %1103 : vector<1x64xf32> to vector<1x64xf32>
    %1109 = vector.broadcast %1108 : vector<1x64xf32> to vector<34x64xf32>
    %1110 = vector.broadcast %cst_203 : f32 to vector<34x64xf32>
    %1111 = arith.select %1107, %1109, %1110 : vector<34x64xi1>, vector<34x64xf32>
    %1112 = arith.addf %1087, %1111 : vector<34x64xf32>
    %1113 = vector.extract_strided_slice %1051 {offsets = [2, 0], sizes = [1, 64], strides = [1, 1]} : vector<34x64xf32> to vector<1x64xf32>
    %1114 = vector.broadcast %1113 : vector<1x64xf32> to vector<16x64xf32>
    %1115 = arith.mulf %1114, %1060 : vector<16x64xf32>
    %1116 = math.exp %1115 : vector<16x64xf32>
    %1117 = vector.extract_strided_slice %1055 {offsets = [0, 2], sizes = [16, 1], strides = [1, 1]} : vector<16x34xf32> to vector<16x1xf32>
    %1118 = vector.extract_strided_slice %1052 {offsets = [2, 0], sizes = [1, 64], strides = [1, 1]} : vector<34x64xf32> to vector<1x64xf32>
    %1119 = vector.broadcast %1117 : vector<16x1xf32> to vector<16x64xf32>
    %1120 = vector.broadcast %1118 : vector<1x64xf32> to vector<16x64xf32>
    %1121 = arith.mulf %1119, %1120 : vector<16x64xf32>
    %1122 = arith.mulf %1116, %1098 : vector<16x64xf32>
    %1123 = arith.addf %1122, %1121 : vector<16x64xf32>
    %1124 = vector.extract_strided_slice %1058 {offsets = [0, 2], sizes = [16, 1], strides = [1, 1]} : vector<16x34xf32> to vector<16x1xf32>
    %1125 = vector.broadcast %1124 : vector<16x1xf32> to vector<16x64xf32>
    %1126 = arith.mulf %1125, %1123 : vector<16x64xf32>
    %cst_204 = arith.constant dense<0.000000e+00> : vector<64xf32>
    %1127 = vector.multi_reduction <add>, %1126, %cst_204 [0] : vector<16x64xf32> to vector<64xf32>
    %1128 = vector.shape_cast %1127 : vector<64xf32> to vector<1x64xf32>
    %c2_i32_205 = arith.constant 2 : i32
    %1129 = vector.broadcast %c2_i32_205 : i32 to vector<34x1xi32>
    %1130 = arith.cmpi eq, %0, %1129 : vector<34x1xi32>
    %cst_206 = arith.constant 0.000000e+00 : f32
    %1131 = vector.shape_cast %1130 : vector<34x1xi1> to vector<34x1xi1>
    %1132 = vector.broadcast %1131 : vector<34x1xi1> to vector<34x64xi1>
    %1133 = vector.shape_cast %1128 : vector<1x64xf32> to vector<1x64xf32>
    %1134 = vector.broadcast %1133 : vector<1x64xf32> to vector<34x64xf32>
    %1135 = vector.broadcast %cst_206 : f32 to vector<34x64xf32>
    %1136 = arith.select %1132, %1134, %1135 : vector<34x64xi1>, vector<34x64xf32>
    %1137 = arith.addf %1112, %1136 : vector<34x64xf32>
    %1138 = vector.extract_strided_slice %1051 {offsets = [3, 0], sizes = [1, 64], strides = [1, 1]} : vector<34x64xf32> to vector<1x64xf32>
    %1139 = vector.broadcast %1138 : vector<1x64xf32> to vector<16x64xf32>
    %1140 = arith.mulf %1139, %1060 : vector<16x64xf32>
    %1141 = math.exp %1140 : vector<16x64xf32>
    %1142 = vector.extract_strided_slice %1055 {offsets = [0, 3], sizes = [16, 1], strides = [1, 1]} : vector<16x34xf32> to vector<16x1xf32>
    %1143 = vector.extract_strided_slice %1052 {offsets = [3, 0], sizes = [1, 64], strides = [1, 1]} : vector<34x64xf32> to vector<1x64xf32>
    %1144 = vector.broadcast %1142 : vector<16x1xf32> to vector<16x64xf32>
    %1145 = vector.broadcast %1143 : vector<1x64xf32> to vector<16x64xf32>
    %1146 = arith.mulf %1144, %1145 : vector<16x64xf32>
    %1147 = arith.mulf %1141, %1123 : vector<16x64xf32>
    %1148 = arith.addf %1147, %1146 : vector<16x64xf32>
    %1149 = vector.extract_strided_slice %1058 {offsets = [0, 3], sizes = [16, 1], strides = [1, 1]} : vector<16x34xf32> to vector<16x1xf32>
    %1150 = vector.broadcast %1149 : vector<16x1xf32> to vector<16x64xf32>
    %1151 = arith.mulf %1150, %1148 : vector<16x64xf32>
    %cst_207 = arith.constant dense<0.000000e+00> : vector<64xf32>
    %1152 = vector.multi_reduction <add>, %1151, %cst_207 [0] : vector<16x64xf32> to vector<64xf32>
    %1153 = vector.shape_cast %1152 : vector<64xf32> to vector<1x64xf32>
    %c3_i32_208 = arith.constant 3 : i32
    %1154 = vector.broadcast %c3_i32_208 : i32 to vector<34x1xi32>
    %1155 = arith.cmpi eq, %0, %1154 : vector<34x1xi32>
    %cst_209 = arith.constant 0.000000e+00 : f32
    %1156 = vector.shape_cast %1155 : vector<34x1xi1> to vector<34x1xi1>
    %1157 = vector.broadcast %1156 : vector<34x1xi1> to vector<34x64xi1>
    %1158 = vector.shape_cast %1153 : vector<1x64xf32> to vector<1x64xf32>
    %1159 = vector.broadcast %1158 : vector<1x64xf32> to vector<34x64xf32>
    %1160 = vector.broadcast %cst_209 : f32 to vector<34x64xf32>
    %1161 = arith.select %1157, %1159, %1160 : vector<34x64xi1>, vector<34x64xf32>
    %1162 = arith.addf %1137, %1161 : vector<34x64xf32>
    %1163 = vector.extract_strided_slice %1051 {offsets = [4, 0], sizes = [1, 64], strides = [1, 1]} : vector<34x64xf32> to vector<1x64xf32>
    %1164 = vector.broadcast %1163 : vector<1x64xf32> to vector<16x64xf32>
    %1165 = arith.mulf %1164, %1060 : vector<16x64xf32>
    %1166 = math.exp %1165 : vector<16x64xf32>
    %1167 = vector.extract_strided_slice %1055 {offsets = [0, 4], sizes = [16, 1], strides = [1, 1]} : vector<16x34xf32> to vector<16x1xf32>
    %1168 = vector.extract_strided_slice %1052 {offsets = [4, 0], sizes = [1, 64], strides = [1, 1]} : vector<34x64xf32> to vector<1x64xf32>
    %1169 = vector.broadcast %1167 : vector<16x1xf32> to vector<16x64xf32>
    %1170 = vector.broadcast %1168 : vector<1x64xf32> to vector<16x64xf32>
    %1171 = arith.mulf %1169, %1170 : vector<16x64xf32>
    %1172 = arith.mulf %1166, %1148 : vector<16x64xf32>
    %1173 = arith.addf %1172, %1171 : vector<16x64xf32>
    %1174 = vector.extract_strided_slice %1058 {offsets = [0, 4], sizes = [16, 1], strides = [1, 1]} : vector<16x34xf32> to vector<16x1xf32>
    %1175 = vector.broadcast %1174 : vector<16x1xf32> to vector<16x64xf32>
    %1176 = arith.mulf %1175, %1173 : vector<16x64xf32>
    %cst_210 = arith.constant dense<0.000000e+00> : vector<64xf32>
    %1177 = vector.multi_reduction <add>, %1176, %cst_210 [0] : vector<16x64xf32> to vector<64xf32>
    %1178 = vector.shape_cast %1177 : vector<64xf32> to vector<1x64xf32>
    %c4_i32_211 = arith.constant 4 : i32
    %1179 = vector.broadcast %c4_i32_211 : i32 to vector<34x1xi32>
    %1180 = arith.cmpi eq, %0, %1179 : vector<34x1xi32>
    %cst_212 = arith.constant 0.000000e+00 : f32
    %1181 = vector.shape_cast %1180 : vector<34x1xi1> to vector<34x1xi1>
    %1182 = vector.broadcast %1181 : vector<34x1xi1> to vector<34x64xi1>
    %1183 = vector.shape_cast %1178 : vector<1x64xf32> to vector<1x64xf32>
    %1184 = vector.broadcast %1183 : vector<1x64xf32> to vector<34x64xf32>
    %1185 = vector.broadcast %cst_212 : f32 to vector<34x64xf32>
    %1186 = arith.select %1182, %1184, %1185 : vector<34x64xi1>, vector<34x64xf32>
    %1187 = arith.addf %1162, %1186 : vector<34x64xf32>
    %1188 = vector.extract_strided_slice %1051 {offsets = [5, 0], sizes = [1, 64], strides = [1, 1]} : vector<34x64xf32> to vector<1x64xf32>
    %1189 = vector.broadcast %1188 : vector<1x64xf32> to vector<16x64xf32>
    %1190 = arith.mulf %1189, %1060 : vector<16x64xf32>
    %1191 = math.exp %1190 : vector<16x64xf32>
    %1192 = vector.extract_strided_slice %1055 {offsets = [0, 5], sizes = [16, 1], strides = [1, 1]} : vector<16x34xf32> to vector<16x1xf32>
    %1193 = vector.extract_strided_slice %1052 {offsets = [5, 0], sizes = [1, 64], strides = [1, 1]} : vector<34x64xf32> to vector<1x64xf32>
    %1194 = vector.broadcast %1192 : vector<16x1xf32> to vector<16x64xf32>
    %1195 = vector.broadcast %1193 : vector<1x64xf32> to vector<16x64xf32>
    %1196 = arith.mulf %1194, %1195 : vector<16x64xf32>
    %1197 = arith.mulf %1191, %1173 : vector<16x64xf32>
    %1198 = arith.addf %1197, %1196 : vector<16x64xf32>
    %1199 = vector.extract_strided_slice %1058 {offsets = [0, 5], sizes = [16, 1], strides = [1, 1]} : vector<16x34xf32> to vector<16x1xf32>
    %1200 = vector.broadcast %1199 : vector<16x1xf32> to vector<16x64xf32>
    %1201 = arith.mulf %1200, %1198 : vector<16x64xf32>
    %cst_213 = arith.constant dense<0.000000e+00> : vector<64xf32>
    %1202 = vector.multi_reduction <add>, %1201, %cst_213 [0] : vector<16x64xf32> to vector<64xf32>
    %1203 = vector.shape_cast %1202 : vector<64xf32> to vector<1x64xf32>
    %c5_i32_214 = arith.constant 5 : i32
    %1204 = vector.broadcast %c5_i32_214 : i32 to vector<34x1xi32>
    %1205 = arith.cmpi eq, %0, %1204 : vector<34x1xi32>
    %cst_215 = arith.constant 0.000000e+00 : f32
    %1206 = vector.shape_cast %1205 : vector<34x1xi1> to vector<34x1xi1>
    %1207 = vector.broadcast %1206 : vector<34x1xi1> to vector<34x64xi1>
    %1208 = vector.shape_cast %1203 : vector<1x64xf32> to vector<1x64xf32>
    %1209 = vector.broadcast %1208 : vector<1x64xf32> to vector<34x64xf32>
    %1210 = vector.broadcast %cst_215 : f32 to vector<34x64xf32>
    %1211 = arith.select %1207, %1209, %1210 : vector<34x64xi1>, vector<34x64xf32>
    %1212 = arith.addf %1187, %1211 : vector<34x64xf32>
    %1213 = vector.extract_strided_slice %1051 {offsets = [6, 0], sizes = [1, 64], strides = [1, 1]} : vector<34x64xf32> to vector<1x64xf32>
    %1214 = vector.broadcast %1213 : vector<1x64xf32> to vector<16x64xf32>
    %1215 = arith.mulf %1214, %1060 : vector<16x64xf32>
    %1216 = math.exp %1215 : vector<16x64xf32>
    %1217 = vector.extract_strided_slice %1055 {offsets = [0, 6], sizes = [16, 1], strides = [1, 1]} : vector<16x34xf32> to vector<16x1xf32>
    %1218 = vector.extract_strided_slice %1052 {offsets = [6, 0], sizes = [1, 64], strides = [1, 1]} : vector<34x64xf32> to vector<1x64xf32>
    %1219 = vector.broadcast %1217 : vector<16x1xf32> to vector<16x64xf32>
    %1220 = vector.broadcast %1218 : vector<1x64xf32> to vector<16x64xf32>
    %1221 = arith.mulf %1219, %1220 : vector<16x64xf32>
    %1222 = arith.mulf %1216, %1198 : vector<16x64xf32>
    %1223 = arith.addf %1222, %1221 : vector<16x64xf32>
    %1224 = vector.extract_strided_slice %1058 {offsets = [0, 6], sizes = [16, 1], strides = [1, 1]} : vector<16x34xf32> to vector<16x1xf32>
    %1225 = vector.broadcast %1224 : vector<16x1xf32> to vector<16x64xf32>
    %1226 = arith.mulf %1225, %1223 : vector<16x64xf32>
    %cst_216 = arith.constant dense<0.000000e+00> : vector<64xf32>
    %1227 = vector.multi_reduction <add>, %1226, %cst_216 [0] : vector<16x64xf32> to vector<64xf32>
    %1228 = vector.shape_cast %1227 : vector<64xf32> to vector<1x64xf32>
    %c6_i32_217 = arith.constant 6 : i32
    %1229 = vector.broadcast %c6_i32_217 : i32 to vector<34x1xi32>
    %1230 = arith.cmpi eq, %0, %1229 : vector<34x1xi32>
    %cst_218 = arith.constant 0.000000e+00 : f32
    %1231 = vector.shape_cast %1230 : vector<34x1xi1> to vector<34x1xi1>
    %1232 = vector.broadcast %1231 : vector<34x1xi1> to vector<34x64xi1>
    %1233 = vector.shape_cast %1228 : vector<1x64xf32> to vector<1x64xf32>
    %1234 = vector.broadcast %1233 : vector<1x64xf32> to vector<34x64xf32>
    %1235 = vector.broadcast %cst_218 : f32 to vector<34x64xf32>
    %1236 = arith.select %1232, %1234, %1235 : vector<34x64xi1>, vector<34x64xf32>
    %1237 = arith.addf %1212, %1236 : vector<34x64xf32>
    %1238 = vector.extract_strided_slice %1051 {offsets = [7, 0], sizes = [1, 64], strides = [1, 1]} : vector<34x64xf32> to vector<1x64xf32>
    %1239 = vector.broadcast %1238 : vector<1x64xf32> to vector<16x64xf32>
    %1240 = arith.mulf %1239, %1060 : vector<16x64xf32>
    %1241 = math.exp %1240 : vector<16x64xf32>
    %1242 = vector.extract_strided_slice %1055 {offsets = [0, 7], sizes = [16, 1], strides = [1, 1]} : vector<16x34xf32> to vector<16x1xf32>
    %1243 = vector.extract_strided_slice %1052 {offsets = [7, 0], sizes = [1, 64], strides = [1, 1]} : vector<34x64xf32> to vector<1x64xf32>
    %1244 = vector.broadcast %1242 : vector<16x1xf32> to vector<16x64xf32>
    %1245 = vector.broadcast %1243 : vector<1x64xf32> to vector<16x64xf32>
    %1246 = arith.mulf %1244, %1245 : vector<16x64xf32>
    %1247 = arith.mulf %1241, %1223 : vector<16x64xf32>
    %1248 = arith.addf %1247, %1246 : vector<16x64xf32>
    %1249 = vector.extract_strided_slice %1058 {offsets = [0, 7], sizes = [16, 1], strides = [1, 1]} : vector<16x34xf32> to vector<16x1xf32>
    %1250 = vector.broadcast %1249 : vector<16x1xf32> to vector<16x64xf32>
    %1251 = arith.mulf %1250, %1248 : vector<16x64xf32>
    %cst_219 = arith.constant dense<0.000000e+00> : vector<64xf32>
    %1252 = vector.multi_reduction <add>, %1251, %cst_219 [0] : vector<16x64xf32> to vector<64xf32>
    %1253 = vector.shape_cast %1252 : vector<64xf32> to vector<1x64xf32>
    %c7_i32_220 = arith.constant 7 : i32
    %1254 = vector.broadcast %c7_i32_220 : i32 to vector<34x1xi32>
    %1255 = arith.cmpi eq, %0, %1254 : vector<34x1xi32>
    %cst_221 = arith.constant 0.000000e+00 : f32
    %1256 = vector.shape_cast %1255 : vector<34x1xi1> to vector<34x1xi1>
    %1257 = vector.broadcast %1256 : vector<34x1xi1> to vector<34x64xi1>
    %1258 = vector.shape_cast %1253 : vector<1x64xf32> to vector<1x64xf32>
    %1259 = vector.broadcast %1258 : vector<1x64xf32> to vector<34x64xf32>
    %1260 = vector.broadcast %cst_221 : f32 to vector<34x64xf32>
    %1261 = arith.select %1257, %1259, %1260 : vector<34x64xi1>, vector<34x64xf32>
    %1262 = arith.addf %1237, %1261 : vector<34x64xf32>
    %1263 = vector.extract_strided_slice %1051 {offsets = [8, 0], sizes = [1, 64], strides = [1, 1]} : vector<34x64xf32> to vector<1x64xf32>
    %1264 = vector.broadcast %1263 : vector<1x64xf32> to vector<16x64xf32>
    %1265 = arith.mulf %1264, %1060 : vector<16x64xf32>
    %1266 = math.exp %1265 : vector<16x64xf32>
    %1267 = vector.extract_strided_slice %1055 {offsets = [0, 8], sizes = [16, 1], strides = [1, 1]} : vector<16x34xf32> to vector<16x1xf32>
    %1268 = vector.extract_strided_slice %1052 {offsets = [8, 0], sizes = [1, 64], strides = [1, 1]} : vector<34x64xf32> to vector<1x64xf32>
    %1269 = vector.broadcast %1267 : vector<16x1xf32> to vector<16x64xf32>
    %1270 = vector.broadcast %1268 : vector<1x64xf32> to vector<16x64xf32>
    %1271 = arith.mulf %1269, %1270 : vector<16x64xf32>
    %1272 = arith.mulf %1266, %1248 : vector<16x64xf32>
    %1273 = arith.addf %1272, %1271 : vector<16x64xf32>
    %1274 = vector.extract_strided_slice %1058 {offsets = [0, 8], sizes = [16, 1], strides = [1, 1]} : vector<16x34xf32> to vector<16x1xf32>
    %1275 = vector.broadcast %1274 : vector<16x1xf32> to vector<16x64xf32>
    %1276 = arith.mulf %1275, %1273 : vector<16x64xf32>
    %cst_222 = arith.constant dense<0.000000e+00> : vector<64xf32>
    %1277 = vector.multi_reduction <add>, %1276, %cst_222 [0] : vector<16x64xf32> to vector<64xf32>
    %1278 = vector.shape_cast %1277 : vector<64xf32> to vector<1x64xf32>
    %c8_i32_223 = arith.constant 8 : i32
    %1279 = vector.broadcast %c8_i32_223 : i32 to vector<34x1xi32>
    %1280 = arith.cmpi eq, %0, %1279 : vector<34x1xi32>
    %cst_224 = arith.constant 0.000000e+00 : f32
    %1281 = vector.shape_cast %1280 : vector<34x1xi1> to vector<34x1xi1>
    %1282 = vector.broadcast %1281 : vector<34x1xi1> to vector<34x64xi1>
    %1283 = vector.shape_cast %1278 : vector<1x64xf32> to vector<1x64xf32>
    %1284 = vector.broadcast %1283 : vector<1x64xf32> to vector<34x64xf32>
    %1285 = vector.broadcast %cst_224 : f32 to vector<34x64xf32>
    %1286 = arith.select %1282, %1284, %1285 : vector<34x64xi1>, vector<34x64xf32>
    %1287 = arith.addf %1262, %1286 : vector<34x64xf32>
    %1288 = vector.extract_strided_slice %1051 {offsets = [9, 0], sizes = [1, 64], strides = [1, 1]} : vector<34x64xf32> to vector<1x64xf32>
    %1289 = vector.broadcast %1288 : vector<1x64xf32> to vector<16x64xf32>
    %1290 = arith.mulf %1289, %1060 : vector<16x64xf32>
    %1291 = math.exp %1290 : vector<16x64xf32>
    %1292 = vector.extract_strided_slice %1055 {offsets = [0, 9], sizes = [16, 1], strides = [1, 1]} : vector<16x34xf32> to vector<16x1xf32>
    %1293 = vector.extract_strided_slice %1052 {offsets = [9, 0], sizes = [1, 64], strides = [1, 1]} : vector<34x64xf32> to vector<1x64xf32>
    %1294 = vector.broadcast %1292 : vector<16x1xf32> to vector<16x64xf32>
    %1295 = vector.broadcast %1293 : vector<1x64xf32> to vector<16x64xf32>
    %1296 = arith.mulf %1294, %1295 : vector<16x64xf32>
    %1297 = arith.mulf %1291, %1273 : vector<16x64xf32>
    %1298 = arith.addf %1297, %1296 : vector<16x64xf32>
    %1299 = vector.extract_strided_slice %1058 {offsets = [0, 9], sizes = [16, 1], strides = [1, 1]} : vector<16x34xf32> to vector<16x1xf32>
    %1300 = vector.broadcast %1299 : vector<16x1xf32> to vector<16x64xf32>
    %1301 = arith.mulf %1300, %1298 : vector<16x64xf32>
    %cst_225 = arith.constant dense<0.000000e+00> : vector<64xf32>
    %1302 = vector.multi_reduction <add>, %1301, %cst_225 [0] : vector<16x64xf32> to vector<64xf32>
    %1303 = vector.shape_cast %1302 : vector<64xf32> to vector<1x64xf32>
    %c9_i32_226 = arith.constant 9 : i32
    %1304 = vector.broadcast %c9_i32_226 : i32 to vector<34x1xi32>
    %1305 = arith.cmpi eq, %0, %1304 : vector<34x1xi32>
    %cst_227 = arith.constant 0.000000e+00 : f32
    %1306 = vector.shape_cast %1305 : vector<34x1xi1> to vector<34x1xi1>
    %1307 = vector.broadcast %1306 : vector<34x1xi1> to vector<34x64xi1>
    %1308 = vector.shape_cast %1303 : vector<1x64xf32> to vector<1x64xf32>
    %1309 = vector.broadcast %1308 : vector<1x64xf32> to vector<34x64xf32>
    %1310 = vector.broadcast %cst_227 : f32 to vector<34x64xf32>
    %1311 = arith.select %1307, %1309, %1310 : vector<34x64xi1>, vector<34x64xf32>
    %1312 = arith.addf %1287, %1311 : vector<34x64xf32>
    %1313 = vector.extract_strided_slice %1051 {offsets = [10, 0], sizes = [1, 64], strides = [1, 1]} : vector<34x64xf32> to vector<1x64xf32>
    %1314 = vector.broadcast %1313 : vector<1x64xf32> to vector<16x64xf32>
    %1315 = arith.mulf %1314, %1060 : vector<16x64xf32>
    %1316 = math.exp %1315 : vector<16x64xf32>
    %1317 = vector.extract_strided_slice %1055 {offsets = [0, 10], sizes = [16, 1], strides = [1, 1]} : vector<16x34xf32> to vector<16x1xf32>
    %1318 = vector.extract_strided_slice %1052 {offsets = [10, 0], sizes = [1, 64], strides = [1, 1]} : vector<34x64xf32> to vector<1x64xf32>
    %1319 = vector.broadcast %1317 : vector<16x1xf32> to vector<16x64xf32>
    %1320 = vector.broadcast %1318 : vector<1x64xf32> to vector<16x64xf32>
    %1321 = arith.mulf %1319, %1320 : vector<16x64xf32>
    %1322 = arith.mulf %1316, %1298 : vector<16x64xf32>
    %1323 = arith.addf %1322, %1321 : vector<16x64xf32>
    %1324 = vector.extract_strided_slice %1058 {offsets = [0, 10], sizes = [16, 1], strides = [1, 1]} : vector<16x34xf32> to vector<16x1xf32>
    %1325 = vector.broadcast %1324 : vector<16x1xf32> to vector<16x64xf32>
    %1326 = arith.mulf %1325, %1323 : vector<16x64xf32>
    %cst_228 = arith.constant dense<0.000000e+00> : vector<64xf32>
    %1327 = vector.multi_reduction <add>, %1326, %cst_228 [0] : vector<16x64xf32> to vector<64xf32>
    %1328 = vector.shape_cast %1327 : vector<64xf32> to vector<1x64xf32>
    %c10_i32_229 = arith.constant 10 : i32
    %1329 = vector.broadcast %c10_i32_229 : i32 to vector<34x1xi32>
    %1330 = arith.cmpi eq, %0, %1329 : vector<34x1xi32>
    %cst_230 = arith.constant 0.000000e+00 : f32
    %1331 = vector.shape_cast %1330 : vector<34x1xi1> to vector<34x1xi1>
    %1332 = vector.broadcast %1331 : vector<34x1xi1> to vector<34x64xi1>
    %1333 = vector.shape_cast %1328 : vector<1x64xf32> to vector<1x64xf32>
    %1334 = vector.broadcast %1333 : vector<1x64xf32> to vector<34x64xf32>
    %1335 = vector.broadcast %cst_230 : f32 to vector<34x64xf32>
    %1336 = arith.select %1332, %1334, %1335 : vector<34x64xi1>, vector<34x64xf32>
    %1337 = arith.addf %1312, %1336 : vector<34x64xf32>
    %1338 = vector.extract_strided_slice %1051 {offsets = [11, 0], sizes = [1, 64], strides = [1, 1]} : vector<34x64xf32> to vector<1x64xf32>
    %1339 = vector.broadcast %1338 : vector<1x64xf32> to vector<16x64xf32>
    %1340 = arith.mulf %1339, %1060 : vector<16x64xf32>
    %1341 = math.exp %1340 : vector<16x64xf32>
    %1342 = vector.extract_strided_slice %1055 {offsets = [0, 11], sizes = [16, 1], strides = [1, 1]} : vector<16x34xf32> to vector<16x1xf32>
    %1343 = vector.extract_strided_slice %1052 {offsets = [11, 0], sizes = [1, 64], strides = [1, 1]} : vector<34x64xf32> to vector<1x64xf32>
    %1344 = vector.broadcast %1342 : vector<16x1xf32> to vector<16x64xf32>
    %1345 = vector.broadcast %1343 : vector<1x64xf32> to vector<16x64xf32>
    %1346 = arith.mulf %1344, %1345 : vector<16x64xf32>
    %1347 = arith.mulf %1341, %1323 : vector<16x64xf32>
    %1348 = arith.addf %1347, %1346 : vector<16x64xf32>
    %1349 = vector.extract_strided_slice %1058 {offsets = [0, 11], sizes = [16, 1], strides = [1, 1]} : vector<16x34xf32> to vector<16x1xf32>
    %1350 = vector.broadcast %1349 : vector<16x1xf32> to vector<16x64xf32>
    %1351 = arith.mulf %1350, %1348 : vector<16x64xf32>
    %cst_231 = arith.constant dense<0.000000e+00> : vector<64xf32>
    %1352 = vector.multi_reduction <add>, %1351, %cst_231 [0] : vector<16x64xf32> to vector<64xf32>
    %1353 = vector.shape_cast %1352 : vector<64xf32> to vector<1x64xf32>
    %c11_i32_232 = arith.constant 11 : i32
    %1354 = vector.broadcast %c11_i32_232 : i32 to vector<34x1xi32>
    %1355 = arith.cmpi eq, %0, %1354 : vector<34x1xi32>
    %cst_233 = arith.constant 0.000000e+00 : f32
    %1356 = vector.shape_cast %1355 : vector<34x1xi1> to vector<34x1xi1>
    %1357 = vector.broadcast %1356 : vector<34x1xi1> to vector<34x64xi1>
    %1358 = vector.shape_cast %1353 : vector<1x64xf32> to vector<1x64xf32>
    %1359 = vector.broadcast %1358 : vector<1x64xf32> to vector<34x64xf32>
    %1360 = vector.broadcast %cst_233 : f32 to vector<34x64xf32>
    %1361 = arith.select %1357, %1359, %1360 : vector<34x64xi1>, vector<34x64xf32>
    %1362 = arith.addf %1337, %1361 : vector<34x64xf32>
    %1363 = vector.extract_strided_slice %1051 {offsets = [12, 0], sizes = [1, 64], strides = [1, 1]} : vector<34x64xf32> to vector<1x64xf32>
    %1364 = vector.broadcast %1363 : vector<1x64xf32> to vector<16x64xf32>
    %1365 = arith.mulf %1364, %1060 : vector<16x64xf32>
    %1366 = math.exp %1365 : vector<16x64xf32>
    %1367 = vector.extract_strided_slice %1055 {offsets = [0, 12], sizes = [16, 1], strides = [1, 1]} : vector<16x34xf32> to vector<16x1xf32>
    %1368 = vector.extract_strided_slice %1052 {offsets = [12, 0], sizes = [1, 64], strides = [1, 1]} : vector<34x64xf32> to vector<1x64xf32>
    %1369 = vector.broadcast %1367 : vector<16x1xf32> to vector<16x64xf32>
    %1370 = vector.broadcast %1368 : vector<1x64xf32> to vector<16x64xf32>
    %1371 = arith.mulf %1369, %1370 : vector<16x64xf32>
    %1372 = arith.mulf %1366, %1348 : vector<16x64xf32>
    %1373 = arith.addf %1372, %1371 : vector<16x64xf32>
    %1374 = vector.extract_strided_slice %1058 {offsets = [0, 12], sizes = [16, 1], strides = [1, 1]} : vector<16x34xf32> to vector<16x1xf32>
    %1375 = vector.broadcast %1374 : vector<16x1xf32> to vector<16x64xf32>
    %1376 = arith.mulf %1375, %1373 : vector<16x64xf32>
    %cst_234 = arith.constant dense<0.000000e+00> : vector<64xf32>
    %1377 = vector.multi_reduction <add>, %1376, %cst_234 [0] : vector<16x64xf32> to vector<64xf32>
    %1378 = vector.shape_cast %1377 : vector<64xf32> to vector<1x64xf32>
    %c12_i32_235 = arith.constant 12 : i32
    %1379 = vector.broadcast %c12_i32_235 : i32 to vector<34x1xi32>
    %1380 = arith.cmpi eq, %0, %1379 : vector<34x1xi32>
    %cst_236 = arith.constant 0.000000e+00 : f32
    %1381 = vector.shape_cast %1380 : vector<34x1xi1> to vector<34x1xi1>
    %1382 = vector.broadcast %1381 : vector<34x1xi1> to vector<34x64xi1>
    %1383 = vector.shape_cast %1378 : vector<1x64xf32> to vector<1x64xf32>
    %1384 = vector.broadcast %1383 : vector<1x64xf32> to vector<34x64xf32>
    %1385 = vector.broadcast %cst_236 : f32 to vector<34x64xf32>
    %1386 = arith.select %1382, %1384, %1385 : vector<34x64xi1>, vector<34x64xf32>
    %1387 = arith.addf %1362, %1386 : vector<34x64xf32>
    %1388 = vector.extract_strided_slice %1051 {offsets = [13, 0], sizes = [1, 64], strides = [1, 1]} : vector<34x64xf32> to vector<1x64xf32>
    %1389 = vector.broadcast %1388 : vector<1x64xf32> to vector<16x64xf32>
    %1390 = arith.mulf %1389, %1060 : vector<16x64xf32>
    %1391 = math.exp %1390 : vector<16x64xf32>
    %1392 = vector.extract_strided_slice %1055 {offsets = [0, 13], sizes = [16, 1], strides = [1, 1]} : vector<16x34xf32> to vector<16x1xf32>
    %1393 = vector.extract_strided_slice %1052 {offsets = [13, 0], sizes = [1, 64], strides = [1, 1]} : vector<34x64xf32> to vector<1x64xf32>
    %1394 = vector.broadcast %1392 : vector<16x1xf32> to vector<16x64xf32>
    %1395 = vector.broadcast %1393 : vector<1x64xf32> to vector<16x64xf32>
    %1396 = arith.mulf %1394, %1395 : vector<16x64xf32>
    %1397 = arith.mulf %1391, %1373 : vector<16x64xf32>
    %1398 = arith.addf %1397, %1396 : vector<16x64xf32>
    %1399 = vector.extract_strided_slice %1058 {offsets = [0, 13], sizes = [16, 1], strides = [1, 1]} : vector<16x34xf32> to vector<16x1xf32>
    %1400 = vector.broadcast %1399 : vector<16x1xf32> to vector<16x64xf32>
    %1401 = arith.mulf %1400, %1398 : vector<16x64xf32>
    %cst_237 = arith.constant dense<0.000000e+00> : vector<64xf32>
    %1402 = vector.multi_reduction <add>, %1401, %cst_237 [0] : vector<16x64xf32> to vector<64xf32>
    %1403 = vector.shape_cast %1402 : vector<64xf32> to vector<1x64xf32>
    %c13_i32_238 = arith.constant 13 : i32
    %1404 = vector.broadcast %c13_i32_238 : i32 to vector<34x1xi32>
    %1405 = arith.cmpi eq, %0, %1404 : vector<34x1xi32>
    %cst_239 = arith.constant 0.000000e+00 : f32
    %1406 = vector.shape_cast %1405 : vector<34x1xi1> to vector<34x1xi1>
    %1407 = vector.broadcast %1406 : vector<34x1xi1> to vector<34x64xi1>
    %1408 = vector.shape_cast %1403 : vector<1x64xf32> to vector<1x64xf32>
    %1409 = vector.broadcast %1408 : vector<1x64xf32> to vector<34x64xf32>
    %1410 = vector.broadcast %cst_239 : f32 to vector<34x64xf32>
    %1411 = arith.select %1407, %1409, %1410 : vector<34x64xi1>, vector<34x64xf32>
    %1412 = arith.addf %1387, %1411 : vector<34x64xf32>
    %1413 = vector.extract_strided_slice %1051 {offsets = [14, 0], sizes = [1, 64], strides = [1, 1]} : vector<34x64xf32> to vector<1x64xf32>
    %1414 = vector.broadcast %1413 : vector<1x64xf32> to vector<16x64xf32>
    %1415 = arith.mulf %1414, %1060 : vector<16x64xf32>
    %1416 = math.exp %1415 : vector<16x64xf32>
    %1417 = vector.extract_strided_slice %1055 {offsets = [0, 14], sizes = [16, 1], strides = [1, 1]} : vector<16x34xf32> to vector<16x1xf32>
    %1418 = vector.extract_strided_slice %1052 {offsets = [14, 0], sizes = [1, 64], strides = [1, 1]} : vector<34x64xf32> to vector<1x64xf32>
    %1419 = vector.broadcast %1417 : vector<16x1xf32> to vector<16x64xf32>
    %1420 = vector.broadcast %1418 : vector<1x64xf32> to vector<16x64xf32>
    %1421 = arith.mulf %1419, %1420 : vector<16x64xf32>
    %1422 = arith.mulf %1416, %1398 : vector<16x64xf32>
    %1423 = arith.addf %1422, %1421 : vector<16x64xf32>
    %1424 = vector.extract_strided_slice %1058 {offsets = [0, 14], sizes = [16, 1], strides = [1, 1]} : vector<16x34xf32> to vector<16x1xf32>
    %1425 = vector.broadcast %1424 : vector<16x1xf32> to vector<16x64xf32>
    %1426 = arith.mulf %1425, %1423 : vector<16x64xf32>
    %cst_240 = arith.constant dense<0.000000e+00> : vector<64xf32>
    %1427 = vector.multi_reduction <add>, %1426, %cst_240 [0] : vector<16x64xf32> to vector<64xf32>
    %1428 = vector.shape_cast %1427 : vector<64xf32> to vector<1x64xf32>
    %c14_i32_241 = arith.constant 14 : i32
    %1429 = vector.broadcast %c14_i32_241 : i32 to vector<34x1xi32>
    %1430 = arith.cmpi eq, %0, %1429 : vector<34x1xi32>
    %cst_242 = arith.constant 0.000000e+00 : f32
    %1431 = vector.shape_cast %1430 : vector<34x1xi1> to vector<34x1xi1>
    %1432 = vector.broadcast %1431 : vector<34x1xi1> to vector<34x64xi1>
    %1433 = vector.shape_cast %1428 : vector<1x64xf32> to vector<1x64xf32>
    %1434 = vector.broadcast %1433 : vector<1x64xf32> to vector<34x64xf32>
    %1435 = vector.broadcast %cst_242 : f32 to vector<34x64xf32>
    %1436 = arith.select %1432, %1434, %1435 : vector<34x64xi1>, vector<34x64xf32>
    %1437 = arith.addf %1412, %1436 : vector<34x64xf32>
    %1438 = vector.extract_strided_slice %1051 {offsets = [15, 0], sizes = [1, 64], strides = [1, 1]} : vector<34x64xf32> to vector<1x64xf32>
    %1439 = vector.broadcast %1438 : vector<1x64xf32> to vector<16x64xf32>
    %1440 = arith.mulf %1439, %1060 : vector<16x64xf32>
    %1441 = math.exp %1440 : vector<16x64xf32>
    %1442 = vector.extract_strided_slice %1055 {offsets = [0, 15], sizes = [16, 1], strides = [1, 1]} : vector<16x34xf32> to vector<16x1xf32>
    %1443 = vector.extract_strided_slice %1052 {offsets = [15, 0], sizes = [1, 64], strides = [1, 1]} : vector<34x64xf32> to vector<1x64xf32>
    %1444 = vector.broadcast %1442 : vector<16x1xf32> to vector<16x64xf32>
    %1445 = vector.broadcast %1443 : vector<1x64xf32> to vector<16x64xf32>
    %1446 = arith.mulf %1444, %1445 : vector<16x64xf32>
    %1447 = arith.mulf %1441, %1423 : vector<16x64xf32>
    %1448 = arith.addf %1447, %1446 : vector<16x64xf32>
    %1449 = vector.extract_strided_slice %1058 {offsets = [0, 15], sizes = [16, 1], strides = [1, 1]} : vector<16x34xf32> to vector<16x1xf32>
    %1450 = vector.broadcast %1449 : vector<16x1xf32> to vector<16x64xf32>
    %1451 = arith.mulf %1450, %1448 : vector<16x64xf32>
    %cst_243 = arith.constant dense<0.000000e+00> : vector<64xf32>
    %1452 = vector.multi_reduction <add>, %1451, %cst_243 [0] : vector<16x64xf32> to vector<64xf32>
    %1453 = vector.shape_cast %1452 : vector<64xf32> to vector<1x64xf32>
    %c15_i32_244 = arith.constant 15 : i32
    %1454 = vector.broadcast %c15_i32_244 : i32 to vector<34x1xi32>
    %1455 = arith.cmpi eq, %0, %1454 : vector<34x1xi32>
    %cst_245 = arith.constant 0.000000e+00 : f32
    %1456 = vector.shape_cast %1455 : vector<34x1xi1> to vector<34x1xi1>
    %1457 = vector.broadcast %1456 : vector<34x1xi1> to vector<34x64xi1>
    %1458 = vector.shape_cast %1453 : vector<1x64xf32> to vector<1x64xf32>
    %1459 = vector.broadcast %1458 : vector<1x64xf32> to vector<34x64xf32>
    %1460 = vector.broadcast %cst_245 : f32 to vector<34x64xf32>
    %1461 = arith.select %1457, %1459, %1460 : vector<34x64xi1>, vector<34x64xf32>
    %1462 = arith.addf %1437, %1461 : vector<34x64xf32>
    %1463 = vector.extract_strided_slice %1051 {offsets = [16, 0], sizes = [1, 64], strides = [1, 1]} : vector<34x64xf32> to vector<1x64xf32>
    %1464 = vector.broadcast %1463 : vector<1x64xf32> to vector<16x64xf32>
    %1465 = arith.mulf %1464, %1060 : vector<16x64xf32>
    %1466 = math.exp %1465 : vector<16x64xf32>
    %1467 = vector.extract_strided_slice %1055 {offsets = [0, 16], sizes = [16, 1], strides = [1, 1]} : vector<16x34xf32> to vector<16x1xf32>
    %1468 = vector.extract_strided_slice %1052 {offsets = [16, 0], sizes = [1, 64], strides = [1, 1]} : vector<34x64xf32> to vector<1x64xf32>
    %1469 = vector.broadcast %1467 : vector<16x1xf32> to vector<16x64xf32>
    %1470 = vector.broadcast %1468 : vector<1x64xf32> to vector<16x64xf32>
    %1471 = arith.mulf %1469, %1470 : vector<16x64xf32>
    %1472 = arith.mulf %1466, %1448 : vector<16x64xf32>
    %1473 = arith.addf %1472, %1471 : vector<16x64xf32>
    %1474 = vector.extract_strided_slice %1058 {offsets = [0, 16], sizes = [16, 1], strides = [1, 1]} : vector<16x34xf32> to vector<16x1xf32>
    %1475 = vector.broadcast %1474 : vector<16x1xf32> to vector<16x64xf32>
    %1476 = arith.mulf %1475, %1473 : vector<16x64xf32>
    %cst_246 = arith.constant dense<0.000000e+00> : vector<64xf32>
    %1477 = vector.multi_reduction <add>, %1476, %cst_246 [0] : vector<16x64xf32> to vector<64xf32>
    %1478 = vector.shape_cast %1477 : vector<64xf32> to vector<1x64xf32>
    %c16_i32_247 = arith.constant 16 : i32
    %1479 = vector.broadcast %c16_i32_247 : i32 to vector<34x1xi32>
    %1480 = arith.cmpi eq, %0, %1479 : vector<34x1xi32>
    %cst_248 = arith.constant 0.000000e+00 : f32
    %1481 = vector.shape_cast %1480 : vector<34x1xi1> to vector<34x1xi1>
    %1482 = vector.broadcast %1481 : vector<34x1xi1> to vector<34x64xi1>
    %1483 = vector.shape_cast %1478 : vector<1x64xf32> to vector<1x64xf32>
    %1484 = vector.broadcast %1483 : vector<1x64xf32> to vector<34x64xf32>
    %1485 = vector.broadcast %cst_248 : f32 to vector<34x64xf32>
    %1486 = arith.select %1482, %1484, %1485 : vector<34x64xi1>, vector<34x64xf32>
    %1487 = arith.addf %1462, %1486 : vector<34x64xf32>
    %cst_249 = arith.constant 0.000000e+00 : f32
    %1488 = vector.broadcast %cst_249 : f32 to vector<16x64xf32>
    %1489 = vector.extract_strided_slice %1051 {offsets = [17, 0], sizes = [1, 64], strides = [1, 1]} : vector<34x64xf32> to vector<1x64xf32>
    %1490 = vector.broadcast %1489 : vector<1x64xf32> to vector<16x64xf32>
    %1491 = arith.mulf %1490, %1060 : vector<16x64xf32>
    %1492 = math.exp %1491 : vector<16x64xf32>
    %1493 = vector.extract_strided_slice %1055 {offsets = [0, 17], sizes = [16, 1], strides = [1, 1]} : vector<16x34xf32> to vector<16x1xf32>
    %1494 = vector.extract_strided_slice %1052 {offsets = [17, 0], sizes = [1, 64], strides = [1, 1]} : vector<34x64xf32> to vector<1x64xf32>
    %1495 = vector.broadcast %1493 : vector<16x1xf32> to vector<16x64xf32>
    %1496 = vector.broadcast %1494 : vector<1x64xf32> to vector<16x64xf32>
    %1497 = arith.mulf %1495, %1496 : vector<16x64xf32>
    %1498 = arith.mulf %1492, %1488 : vector<16x64xf32>
    %1499 = arith.addf %1498, %1497 : vector<16x64xf32>
    %1500 = vector.extract_strided_slice %1058 {offsets = [0, 17], sizes = [16, 1], strides = [1, 1]} : vector<16x34xf32> to vector<16x1xf32>
    %1501 = vector.broadcast %1500 : vector<16x1xf32> to vector<16x64xf32>
    %1502 = arith.mulf %1501, %1499 : vector<16x64xf32>
    %cst_250 = arith.constant dense<0.000000e+00> : vector<64xf32>
    %1503 = vector.multi_reduction <add>, %1502, %cst_250 [0] : vector<16x64xf32> to vector<64xf32>
    %1504 = vector.shape_cast %1503 : vector<64xf32> to vector<1x64xf32>
    %c17_i32_251 = arith.constant 17 : i32
    %1505 = vector.broadcast %c17_i32_251 : i32 to vector<34x1xi32>
    %1506 = arith.cmpi eq, %0, %1505 : vector<34x1xi32>
    %cst_252 = arith.constant 0.000000e+00 : f32
    %1507 = vector.shape_cast %1506 : vector<34x1xi1> to vector<34x1xi1>
    %1508 = vector.broadcast %1507 : vector<34x1xi1> to vector<34x64xi1>
    %1509 = vector.shape_cast %1504 : vector<1x64xf32> to vector<1x64xf32>
    %1510 = vector.broadcast %1509 : vector<1x64xf32> to vector<34x64xf32>
    %1511 = vector.broadcast %cst_252 : f32 to vector<34x64xf32>
    %1512 = arith.select %1508, %1510, %1511 : vector<34x64xi1>, vector<34x64xf32>
    %1513 = arith.addf %1487, %1512 : vector<34x64xf32>
    %1514 = vector.extract_strided_slice %1051 {offsets = [18, 0], sizes = [1, 64], strides = [1, 1]} : vector<34x64xf32> to vector<1x64xf32>
    %1515 = vector.broadcast %1514 : vector<1x64xf32> to vector<16x64xf32>
    %1516 = arith.mulf %1515, %1060 : vector<16x64xf32>
    %1517 = math.exp %1516 : vector<16x64xf32>
    %1518 = vector.extract_strided_slice %1055 {offsets = [0, 18], sizes = [16, 1], strides = [1, 1]} : vector<16x34xf32> to vector<16x1xf32>
    %1519 = vector.extract_strided_slice %1052 {offsets = [18, 0], sizes = [1, 64], strides = [1, 1]} : vector<34x64xf32> to vector<1x64xf32>
    %1520 = vector.broadcast %1518 : vector<16x1xf32> to vector<16x64xf32>
    %1521 = vector.broadcast %1519 : vector<1x64xf32> to vector<16x64xf32>
    %1522 = arith.mulf %1520, %1521 : vector<16x64xf32>
    %1523 = arith.mulf %1517, %1499 : vector<16x64xf32>
    %1524 = arith.addf %1523, %1522 : vector<16x64xf32>
    %1525 = vector.extract_strided_slice %1058 {offsets = [0, 18], sizes = [16, 1], strides = [1, 1]} : vector<16x34xf32> to vector<16x1xf32>
    %1526 = vector.broadcast %1525 : vector<16x1xf32> to vector<16x64xf32>
    %1527 = arith.mulf %1526, %1524 : vector<16x64xf32>
    %cst_253 = arith.constant dense<0.000000e+00> : vector<64xf32>
    %1528 = vector.multi_reduction <add>, %1527, %cst_253 [0] : vector<16x64xf32> to vector<64xf32>
    %1529 = vector.shape_cast %1528 : vector<64xf32> to vector<1x64xf32>
    %c18_i32_254 = arith.constant 18 : i32
    %1530 = vector.broadcast %c18_i32_254 : i32 to vector<34x1xi32>
    %1531 = arith.cmpi eq, %0, %1530 : vector<34x1xi32>
    %cst_255 = arith.constant 0.000000e+00 : f32
    %1532 = vector.shape_cast %1531 : vector<34x1xi1> to vector<34x1xi1>
    %1533 = vector.broadcast %1532 : vector<34x1xi1> to vector<34x64xi1>
    %1534 = vector.shape_cast %1529 : vector<1x64xf32> to vector<1x64xf32>
    %1535 = vector.broadcast %1534 : vector<1x64xf32> to vector<34x64xf32>
    %1536 = vector.broadcast %cst_255 : f32 to vector<34x64xf32>
    %1537 = arith.select %1533, %1535, %1536 : vector<34x64xi1>, vector<34x64xf32>
    %1538 = arith.addf %1513, %1537 : vector<34x64xf32>
    %1539 = vector.extract_strided_slice %1051 {offsets = [19, 0], sizes = [1, 64], strides = [1, 1]} : vector<34x64xf32> to vector<1x64xf32>
    %1540 = vector.broadcast %1539 : vector<1x64xf32> to vector<16x64xf32>
    %1541 = arith.mulf %1540, %1060 : vector<16x64xf32>
    %1542 = math.exp %1541 : vector<16x64xf32>
    %1543 = vector.extract_strided_slice %1055 {offsets = [0, 19], sizes = [16, 1], strides = [1, 1]} : vector<16x34xf32> to vector<16x1xf32>
    %1544 = vector.extract_strided_slice %1052 {offsets = [19, 0], sizes = [1, 64], strides = [1, 1]} : vector<34x64xf32> to vector<1x64xf32>
    %1545 = vector.broadcast %1543 : vector<16x1xf32> to vector<16x64xf32>
    %1546 = vector.broadcast %1544 : vector<1x64xf32> to vector<16x64xf32>
    %1547 = arith.mulf %1545, %1546 : vector<16x64xf32>
    %1548 = arith.mulf %1542, %1524 : vector<16x64xf32>
    %1549 = arith.addf %1548, %1547 : vector<16x64xf32>
    %1550 = vector.extract_strided_slice %1058 {offsets = [0, 19], sizes = [16, 1], strides = [1, 1]} : vector<16x34xf32> to vector<16x1xf32>
    %1551 = vector.broadcast %1550 : vector<16x1xf32> to vector<16x64xf32>
    %1552 = arith.mulf %1551, %1549 : vector<16x64xf32>
    %cst_256 = arith.constant dense<0.000000e+00> : vector<64xf32>
    %1553 = vector.multi_reduction <add>, %1552, %cst_256 [0] : vector<16x64xf32> to vector<64xf32>
    %1554 = vector.shape_cast %1553 : vector<64xf32> to vector<1x64xf32>
    %c19_i32_257 = arith.constant 19 : i32
    %1555 = vector.broadcast %c19_i32_257 : i32 to vector<34x1xi32>
    %1556 = arith.cmpi eq, %0, %1555 : vector<34x1xi32>
    %cst_258 = arith.constant 0.000000e+00 : f32
    %1557 = vector.shape_cast %1556 : vector<34x1xi1> to vector<34x1xi1>
    %1558 = vector.broadcast %1557 : vector<34x1xi1> to vector<34x64xi1>
    %1559 = vector.shape_cast %1554 : vector<1x64xf32> to vector<1x64xf32>
    %1560 = vector.broadcast %1559 : vector<1x64xf32> to vector<34x64xf32>
    %1561 = vector.broadcast %cst_258 : f32 to vector<34x64xf32>
    %1562 = arith.select %1558, %1560, %1561 : vector<34x64xi1>, vector<34x64xf32>
    %1563 = arith.addf %1538, %1562 : vector<34x64xf32>
    %1564 = vector.extract_strided_slice %1051 {offsets = [20, 0], sizes = [1, 64], strides = [1, 1]} : vector<34x64xf32> to vector<1x64xf32>
    %1565 = vector.broadcast %1564 : vector<1x64xf32> to vector<16x64xf32>
    %1566 = arith.mulf %1565, %1060 : vector<16x64xf32>
    %1567 = math.exp %1566 : vector<16x64xf32>
    %1568 = vector.extract_strided_slice %1055 {offsets = [0, 20], sizes = [16, 1], strides = [1, 1]} : vector<16x34xf32> to vector<16x1xf32>
    %1569 = vector.extract_strided_slice %1052 {offsets = [20, 0], sizes = [1, 64], strides = [1, 1]} : vector<34x64xf32> to vector<1x64xf32>
    %1570 = vector.broadcast %1568 : vector<16x1xf32> to vector<16x64xf32>
    %1571 = vector.broadcast %1569 : vector<1x64xf32> to vector<16x64xf32>
    %1572 = arith.mulf %1570, %1571 : vector<16x64xf32>
    %1573 = arith.mulf %1567, %1549 : vector<16x64xf32>
    %1574 = arith.addf %1573, %1572 : vector<16x64xf32>
    %1575 = vector.extract_strided_slice %1058 {offsets = [0, 20], sizes = [16, 1], strides = [1, 1]} : vector<16x34xf32> to vector<16x1xf32>
    %1576 = vector.broadcast %1575 : vector<16x1xf32> to vector<16x64xf32>
    %1577 = arith.mulf %1576, %1574 : vector<16x64xf32>
    %cst_259 = arith.constant dense<0.000000e+00> : vector<64xf32>
    %1578 = vector.multi_reduction <add>, %1577, %cst_259 [0] : vector<16x64xf32> to vector<64xf32>
    %1579 = vector.shape_cast %1578 : vector<64xf32> to vector<1x64xf32>
    %c20_i32_260 = arith.constant 20 : i32
    %1580 = vector.broadcast %c20_i32_260 : i32 to vector<34x1xi32>
    %1581 = arith.cmpi eq, %0, %1580 : vector<34x1xi32>
    %cst_261 = arith.constant 0.000000e+00 : f32
    %1582 = vector.shape_cast %1581 : vector<34x1xi1> to vector<34x1xi1>
    %1583 = vector.broadcast %1582 : vector<34x1xi1> to vector<34x64xi1>
    %1584 = vector.shape_cast %1579 : vector<1x64xf32> to vector<1x64xf32>
    %1585 = vector.broadcast %1584 : vector<1x64xf32> to vector<34x64xf32>
    %1586 = vector.broadcast %cst_261 : f32 to vector<34x64xf32>
    %1587 = arith.select %1583, %1585, %1586 : vector<34x64xi1>, vector<34x64xf32>
    %1588 = arith.addf %1563, %1587 : vector<34x64xf32>
    %1589 = vector.extract_strided_slice %1051 {offsets = [21, 0], sizes = [1, 64], strides = [1, 1]} : vector<34x64xf32> to vector<1x64xf32>
    %1590 = vector.broadcast %1589 : vector<1x64xf32> to vector<16x64xf32>
    %1591 = arith.mulf %1590, %1060 : vector<16x64xf32>
    %1592 = math.exp %1591 : vector<16x64xf32>
    %1593 = vector.extract_strided_slice %1055 {offsets = [0, 21], sizes = [16, 1], strides = [1, 1]} : vector<16x34xf32> to vector<16x1xf32>
    %1594 = vector.extract_strided_slice %1052 {offsets = [21, 0], sizes = [1, 64], strides = [1, 1]} : vector<34x64xf32> to vector<1x64xf32>
    %1595 = vector.broadcast %1593 : vector<16x1xf32> to vector<16x64xf32>
    %1596 = vector.broadcast %1594 : vector<1x64xf32> to vector<16x64xf32>
    %1597 = arith.mulf %1595, %1596 : vector<16x64xf32>
    %1598 = arith.mulf %1592, %1574 : vector<16x64xf32>
    %1599 = arith.addf %1598, %1597 : vector<16x64xf32>
    %1600 = vector.extract_strided_slice %1058 {offsets = [0, 21], sizes = [16, 1], strides = [1, 1]} : vector<16x34xf32> to vector<16x1xf32>
    %1601 = vector.broadcast %1600 : vector<16x1xf32> to vector<16x64xf32>
    %1602 = arith.mulf %1601, %1599 : vector<16x64xf32>
    %cst_262 = arith.constant dense<0.000000e+00> : vector<64xf32>
    %1603 = vector.multi_reduction <add>, %1602, %cst_262 [0] : vector<16x64xf32> to vector<64xf32>
    %1604 = vector.shape_cast %1603 : vector<64xf32> to vector<1x64xf32>
    %c21_i32_263 = arith.constant 21 : i32
    %1605 = vector.broadcast %c21_i32_263 : i32 to vector<34x1xi32>
    %1606 = arith.cmpi eq, %0, %1605 : vector<34x1xi32>
    %cst_264 = arith.constant 0.000000e+00 : f32
    %1607 = vector.shape_cast %1606 : vector<34x1xi1> to vector<34x1xi1>
    %1608 = vector.broadcast %1607 : vector<34x1xi1> to vector<34x64xi1>
    %1609 = vector.shape_cast %1604 : vector<1x64xf32> to vector<1x64xf32>
    %1610 = vector.broadcast %1609 : vector<1x64xf32> to vector<34x64xf32>
    %1611 = vector.broadcast %cst_264 : f32 to vector<34x64xf32>
    %1612 = arith.select %1608, %1610, %1611 : vector<34x64xi1>, vector<34x64xf32>
    %1613 = arith.addf %1588, %1612 : vector<34x64xf32>
    %1614 = vector.extract_strided_slice %1051 {offsets = [22, 0], sizes = [1, 64], strides = [1, 1]} : vector<34x64xf32> to vector<1x64xf32>
    %1615 = vector.broadcast %1614 : vector<1x64xf32> to vector<16x64xf32>
    %1616 = arith.mulf %1615, %1060 : vector<16x64xf32>
    %1617 = math.exp %1616 : vector<16x64xf32>
    %1618 = vector.extract_strided_slice %1055 {offsets = [0, 22], sizes = [16, 1], strides = [1, 1]} : vector<16x34xf32> to vector<16x1xf32>
    %1619 = vector.extract_strided_slice %1052 {offsets = [22, 0], sizes = [1, 64], strides = [1, 1]} : vector<34x64xf32> to vector<1x64xf32>
    %1620 = vector.broadcast %1618 : vector<16x1xf32> to vector<16x64xf32>
    %1621 = vector.broadcast %1619 : vector<1x64xf32> to vector<16x64xf32>
    %1622 = arith.mulf %1620, %1621 : vector<16x64xf32>
    %1623 = arith.mulf %1617, %1599 : vector<16x64xf32>
    %1624 = arith.addf %1623, %1622 : vector<16x64xf32>
    %1625 = vector.extract_strided_slice %1058 {offsets = [0, 22], sizes = [16, 1], strides = [1, 1]} : vector<16x34xf32> to vector<16x1xf32>
    %1626 = vector.broadcast %1625 : vector<16x1xf32> to vector<16x64xf32>
    %1627 = arith.mulf %1626, %1624 : vector<16x64xf32>
    %cst_265 = arith.constant dense<0.000000e+00> : vector<64xf32>
    %1628 = vector.multi_reduction <add>, %1627, %cst_265 [0] : vector<16x64xf32> to vector<64xf32>
    %1629 = vector.shape_cast %1628 : vector<64xf32> to vector<1x64xf32>
    %c22_i32_266 = arith.constant 22 : i32
    %1630 = vector.broadcast %c22_i32_266 : i32 to vector<34x1xi32>
    %1631 = arith.cmpi eq, %0, %1630 : vector<34x1xi32>
    %cst_267 = arith.constant 0.000000e+00 : f32
    %1632 = vector.shape_cast %1631 : vector<34x1xi1> to vector<34x1xi1>
    %1633 = vector.broadcast %1632 : vector<34x1xi1> to vector<34x64xi1>
    %1634 = vector.shape_cast %1629 : vector<1x64xf32> to vector<1x64xf32>
    %1635 = vector.broadcast %1634 : vector<1x64xf32> to vector<34x64xf32>
    %1636 = vector.broadcast %cst_267 : f32 to vector<34x64xf32>
    %1637 = arith.select %1633, %1635, %1636 : vector<34x64xi1>, vector<34x64xf32>
    %1638 = arith.addf %1613, %1637 : vector<34x64xf32>
    %1639 = vector.extract_strided_slice %1051 {offsets = [23, 0], sizes = [1, 64], strides = [1, 1]} : vector<34x64xf32> to vector<1x64xf32>
    %1640 = vector.broadcast %1639 : vector<1x64xf32> to vector<16x64xf32>
    %1641 = arith.mulf %1640, %1060 : vector<16x64xf32>
    %1642 = math.exp %1641 : vector<16x64xf32>
    %1643 = vector.extract_strided_slice %1055 {offsets = [0, 23], sizes = [16, 1], strides = [1, 1]} : vector<16x34xf32> to vector<16x1xf32>
    %1644 = vector.extract_strided_slice %1052 {offsets = [23, 0], sizes = [1, 64], strides = [1, 1]} : vector<34x64xf32> to vector<1x64xf32>
    %1645 = vector.broadcast %1643 : vector<16x1xf32> to vector<16x64xf32>
    %1646 = vector.broadcast %1644 : vector<1x64xf32> to vector<16x64xf32>
    %1647 = arith.mulf %1645, %1646 : vector<16x64xf32>
    %1648 = arith.mulf %1642, %1624 : vector<16x64xf32>
    %1649 = arith.addf %1648, %1647 : vector<16x64xf32>
    %1650 = vector.extract_strided_slice %1058 {offsets = [0, 23], sizes = [16, 1], strides = [1, 1]} : vector<16x34xf32> to vector<16x1xf32>
    %1651 = vector.broadcast %1650 : vector<16x1xf32> to vector<16x64xf32>
    %1652 = arith.mulf %1651, %1649 : vector<16x64xf32>
    %cst_268 = arith.constant dense<0.000000e+00> : vector<64xf32>
    %1653 = vector.multi_reduction <add>, %1652, %cst_268 [0] : vector<16x64xf32> to vector<64xf32>
    %1654 = vector.shape_cast %1653 : vector<64xf32> to vector<1x64xf32>
    %c23_i32_269 = arith.constant 23 : i32
    %1655 = vector.broadcast %c23_i32_269 : i32 to vector<34x1xi32>
    %1656 = arith.cmpi eq, %0, %1655 : vector<34x1xi32>
    %cst_270 = arith.constant 0.000000e+00 : f32
    %1657 = vector.shape_cast %1656 : vector<34x1xi1> to vector<34x1xi1>
    %1658 = vector.broadcast %1657 : vector<34x1xi1> to vector<34x64xi1>
    %1659 = vector.shape_cast %1654 : vector<1x64xf32> to vector<1x64xf32>
    %1660 = vector.broadcast %1659 : vector<1x64xf32> to vector<34x64xf32>
    %1661 = vector.broadcast %cst_270 : f32 to vector<34x64xf32>
    %1662 = arith.select %1658, %1660, %1661 : vector<34x64xi1>, vector<34x64xf32>
    %1663 = arith.addf %1638, %1662 : vector<34x64xf32>
    %1664 = vector.extract_strided_slice %1051 {offsets = [24, 0], sizes = [1, 64], strides = [1, 1]} : vector<34x64xf32> to vector<1x64xf32>
    %1665 = vector.broadcast %1664 : vector<1x64xf32> to vector<16x64xf32>
    %1666 = arith.mulf %1665, %1060 : vector<16x64xf32>
    %1667 = math.exp %1666 : vector<16x64xf32>
    %1668 = vector.extract_strided_slice %1055 {offsets = [0, 24], sizes = [16, 1], strides = [1, 1]} : vector<16x34xf32> to vector<16x1xf32>
    %1669 = vector.extract_strided_slice %1052 {offsets = [24, 0], sizes = [1, 64], strides = [1, 1]} : vector<34x64xf32> to vector<1x64xf32>
    %1670 = vector.broadcast %1668 : vector<16x1xf32> to vector<16x64xf32>
    %1671 = vector.broadcast %1669 : vector<1x64xf32> to vector<16x64xf32>
    %1672 = arith.mulf %1670, %1671 : vector<16x64xf32>
    %1673 = arith.mulf %1667, %1649 : vector<16x64xf32>
    %1674 = arith.addf %1673, %1672 : vector<16x64xf32>
    %1675 = vector.extract_strided_slice %1058 {offsets = [0, 24], sizes = [16, 1], strides = [1, 1]} : vector<16x34xf32> to vector<16x1xf32>
    %1676 = vector.broadcast %1675 : vector<16x1xf32> to vector<16x64xf32>
    %1677 = arith.mulf %1676, %1674 : vector<16x64xf32>
    %cst_271 = arith.constant dense<0.000000e+00> : vector<64xf32>
    %1678 = vector.multi_reduction <add>, %1677, %cst_271 [0] : vector<16x64xf32> to vector<64xf32>
    %1679 = vector.shape_cast %1678 : vector<64xf32> to vector<1x64xf32>
    %c24_i32_272 = arith.constant 24 : i32
    %1680 = vector.broadcast %c24_i32_272 : i32 to vector<34x1xi32>
    %1681 = arith.cmpi eq, %0, %1680 : vector<34x1xi32>
    %cst_273 = arith.constant 0.000000e+00 : f32
    %1682 = vector.shape_cast %1681 : vector<34x1xi1> to vector<34x1xi1>
    %1683 = vector.broadcast %1682 : vector<34x1xi1> to vector<34x64xi1>
    %1684 = vector.shape_cast %1679 : vector<1x64xf32> to vector<1x64xf32>
    %1685 = vector.broadcast %1684 : vector<1x64xf32> to vector<34x64xf32>
    %1686 = vector.broadcast %cst_273 : f32 to vector<34x64xf32>
    %1687 = arith.select %1683, %1685, %1686 : vector<34x64xi1>, vector<34x64xf32>
    %1688 = arith.addf %1663, %1687 : vector<34x64xf32>
    %1689 = vector.extract_strided_slice %1051 {offsets = [25, 0], sizes = [1, 64], strides = [1, 1]} : vector<34x64xf32> to vector<1x64xf32>
    %1690 = vector.broadcast %1689 : vector<1x64xf32> to vector<16x64xf32>
    %1691 = arith.mulf %1690, %1060 : vector<16x64xf32>
    %1692 = math.exp %1691 : vector<16x64xf32>
    %1693 = vector.extract_strided_slice %1055 {offsets = [0, 25], sizes = [16, 1], strides = [1, 1]} : vector<16x34xf32> to vector<16x1xf32>
    %1694 = vector.extract_strided_slice %1052 {offsets = [25, 0], sizes = [1, 64], strides = [1, 1]} : vector<34x64xf32> to vector<1x64xf32>
    %1695 = vector.broadcast %1693 : vector<16x1xf32> to vector<16x64xf32>
    %1696 = vector.broadcast %1694 : vector<1x64xf32> to vector<16x64xf32>
    %1697 = arith.mulf %1695, %1696 : vector<16x64xf32>
    %1698 = arith.mulf %1692, %1674 : vector<16x64xf32>
    %1699 = arith.addf %1698, %1697 : vector<16x64xf32>
    %1700 = vector.extract_strided_slice %1058 {offsets = [0, 25], sizes = [16, 1], strides = [1, 1]} : vector<16x34xf32> to vector<16x1xf32>
    %1701 = vector.broadcast %1700 : vector<16x1xf32> to vector<16x64xf32>
    %1702 = arith.mulf %1701, %1699 : vector<16x64xf32>
    %cst_274 = arith.constant dense<0.000000e+00> : vector<64xf32>
    %1703 = vector.multi_reduction <add>, %1702, %cst_274 [0] : vector<16x64xf32> to vector<64xf32>
    %1704 = vector.shape_cast %1703 : vector<64xf32> to vector<1x64xf32>
    %c25_i32_275 = arith.constant 25 : i32
    %1705 = vector.broadcast %c25_i32_275 : i32 to vector<34x1xi32>
    %1706 = arith.cmpi eq, %0, %1705 : vector<34x1xi32>
    %cst_276 = arith.constant 0.000000e+00 : f32
    %1707 = vector.shape_cast %1706 : vector<34x1xi1> to vector<34x1xi1>
    %1708 = vector.broadcast %1707 : vector<34x1xi1> to vector<34x64xi1>
    %1709 = vector.shape_cast %1704 : vector<1x64xf32> to vector<1x64xf32>
    %1710 = vector.broadcast %1709 : vector<1x64xf32> to vector<34x64xf32>
    %1711 = vector.broadcast %cst_276 : f32 to vector<34x64xf32>
    %1712 = arith.select %1708, %1710, %1711 : vector<34x64xi1>, vector<34x64xf32>
    %1713 = arith.addf %1688, %1712 : vector<34x64xf32>
    %1714 = vector.extract_strided_slice %1051 {offsets = [26, 0], sizes = [1, 64], strides = [1, 1]} : vector<34x64xf32> to vector<1x64xf32>
    %1715 = vector.broadcast %1714 : vector<1x64xf32> to vector<16x64xf32>
    %1716 = arith.mulf %1715, %1060 : vector<16x64xf32>
    %1717 = math.exp %1716 : vector<16x64xf32>
    %1718 = vector.extract_strided_slice %1055 {offsets = [0, 26], sizes = [16, 1], strides = [1, 1]} : vector<16x34xf32> to vector<16x1xf32>
    %1719 = vector.extract_strided_slice %1052 {offsets = [26, 0], sizes = [1, 64], strides = [1, 1]} : vector<34x64xf32> to vector<1x64xf32>
    %1720 = vector.broadcast %1718 : vector<16x1xf32> to vector<16x64xf32>
    %1721 = vector.broadcast %1719 : vector<1x64xf32> to vector<16x64xf32>
    %1722 = arith.mulf %1720, %1721 : vector<16x64xf32>
    %1723 = arith.mulf %1717, %1699 : vector<16x64xf32>
    %1724 = arith.addf %1723, %1722 : vector<16x64xf32>
    %1725 = vector.extract_strided_slice %1058 {offsets = [0, 26], sizes = [16, 1], strides = [1, 1]} : vector<16x34xf32> to vector<16x1xf32>
    %1726 = vector.broadcast %1725 : vector<16x1xf32> to vector<16x64xf32>
    %1727 = arith.mulf %1726, %1724 : vector<16x64xf32>
    %cst_277 = arith.constant dense<0.000000e+00> : vector<64xf32>
    %1728 = vector.multi_reduction <add>, %1727, %cst_277 [0] : vector<16x64xf32> to vector<64xf32>
    %1729 = vector.shape_cast %1728 : vector<64xf32> to vector<1x64xf32>
    %c26_i32_278 = arith.constant 26 : i32
    %1730 = vector.broadcast %c26_i32_278 : i32 to vector<34x1xi32>
    %1731 = arith.cmpi eq, %0, %1730 : vector<34x1xi32>
    %cst_279 = arith.constant 0.000000e+00 : f32
    %1732 = vector.shape_cast %1731 : vector<34x1xi1> to vector<34x1xi1>
    %1733 = vector.broadcast %1732 : vector<34x1xi1> to vector<34x64xi1>
    %1734 = vector.shape_cast %1729 : vector<1x64xf32> to vector<1x64xf32>
    %1735 = vector.broadcast %1734 : vector<1x64xf32> to vector<34x64xf32>
    %1736 = vector.broadcast %cst_279 : f32 to vector<34x64xf32>
    %1737 = arith.select %1733, %1735, %1736 : vector<34x64xi1>, vector<34x64xf32>
    %1738 = arith.addf %1713, %1737 : vector<34x64xf32>
    %1739 = vector.extract_strided_slice %1051 {offsets = [27, 0], sizes = [1, 64], strides = [1, 1]} : vector<34x64xf32> to vector<1x64xf32>
    %1740 = vector.broadcast %1739 : vector<1x64xf32> to vector<16x64xf32>
    %1741 = arith.mulf %1740, %1060 : vector<16x64xf32>
    %1742 = math.exp %1741 : vector<16x64xf32>
    %1743 = vector.extract_strided_slice %1055 {offsets = [0, 27], sizes = [16, 1], strides = [1, 1]} : vector<16x34xf32> to vector<16x1xf32>
    %1744 = vector.extract_strided_slice %1052 {offsets = [27, 0], sizes = [1, 64], strides = [1, 1]} : vector<34x64xf32> to vector<1x64xf32>
    %1745 = vector.broadcast %1743 : vector<16x1xf32> to vector<16x64xf32>
    %1746 = vector.broadcast %1744 : vector<1x64xf32> to vector<16x64xf32>
    %1747 = arith.mulf %1745, %1746 : vector<16x64xf32>
    %1748 = arith.mulf %1742, %1724 : vector<16x64xf32>
    %1749 = arith.addf %1748, %1747 : vector<16x64xf32>
    %1750 = vector.extract_strided_slice %1058 {offsets = [0, 27], sizes = [16, 1], strides = [1, 1]} : vector<16x34xf32> to vector<16x1xf32>
    %1751 = vector.broadcast %1750 : vector<16x1xf32> to vector<16x64xf32>
    %1752 = arith.mulf %1751, %1749 : vector<16x64xf32>
    %cst_280 = arith.constant dense<0.000000e+00> : vector<64xf32>
    %1753 = vector.multi_reduction <add>, %1752, %cst_280 [0] : vector<16x64xf32> to vector<64xf32>
    %1754 = vector.shape_cast %1753 : vector<64xf32> to vector<1x64xf32>
    %c27_i32_281 = arith.constant 27 : i32
    %1755 = vector.broadcast %c27_i32_281 : i32 to vector<34x1xi32>
    %1756 = arith.cmpi eq, %0, %1755 : vector<34x1xi32>
    %cst_282 = arith.constant 0.000000e+00 : f32
    %1757 = vector.shape_cast %1756 : vector<34x1xi1> to vector<34x1xi1>
    %1758 = vector.broadcast %1757 : vector<34x1xi1> to vector<34x64xi1>
    %1759 = vector.shape_cast %1754 : vector<1x64xf32> to vector<1x64xf32>
    %1760 = vector.broadcast %1759 : vector<1x64xf32> to vector<34x64xf32>
    %1761 = vector.broadcast %cst_282 : f32 to vector<34x64xf32>
    %1762 = arith.select %1758, %1760, %1761 : vector<34x64xi1>, vector<34x64xf32>
    %1763 = arith.addf %1738, %1762 : vector<34x64xf32>
    %1764 = vector.extract_strided_slice %1051 {offsets = [28, 0], sizes = [1, 64], strides = [1, 1]} : vector<34x64xf32> to vector<1x64xf32>
    %1765 = vector.broadcast %1764 : vector<1x64xf32> to vector<16x64xf32>
    %1766 = arith.mulf %1765, %1060 : vector<16x64xf32>
    %1767 = math.exp %1766 : vector<16x64xf32>
    %1768 = vector.extract_strided_slice %1055 {offsets = [0, 28], sizes = [16, 1], strides = [1, 1]} : vector<16x34xf32> to vector<16x1xf32>
    %1769 = vector.extract_strided_slice %1052 {offsets = [28, 0], sizes = [1, 64], strides = [1, 1]} : vector<34x64xf32> to vector<1x64xf32>
    %1770 = vector.broadcast %1768 : vector<16x1xf32> to vector<16x64xf32>
    %1771 = vector.broadcast %1769 : vector<1x64xf32> to vector<16x64xf32>
    %1772 = arith.mulf %1770, %1771 : vector<16x64xf32>
    %1773 = arith.mulf %1767, %1749 : vector<16x64xf32>
    %1774 = arith.addf %1773, %1772 : vector<16x64xf32>
    %1775 = vector.extract_strided_slice %1058 {offsets = [0, 28], sizes = [16, 1], strides = [1, 1]} : vector<16x34xf32> to vector<16x1xf32>
    %1776 = vector.broadcast %1775 : vector<16x1xf32> to vector<16x64xf32>
    %1777 = arith.mulf %1776, %1774 : vector<16x64xf32>
    %cst_283 = arith.constant dense<0.000000e+00> : vector<64xf32>
    %1778 = vector.multi_reduction <add>, %1777, %cst_283 [0] : vector<16x64xf32> to vector<64xf32>
    %1779 = vector.shape_cast %1778 : vector<64xf32> to vector<1x64xf32>
    %c28_i32_284 = arith.constant 28 : i32
    %1780 = vector.broadcast %c28_i32_284 : i32 to vector<34x1xi32>
    %1781 = arith.cmpi eq, %0, %1780 : vector<34x1xi32>
    %cst_285 = arith.constant 0.000000e+00 : f32
    %1782 = vector.shape_cast %1781 : vector<34x1xi1> to vector<34x1xi1>
    %1783 = vector.broadcast %1782 : vector<34x1xi1> to vector<34x64xi1>
    %1784 = vector.shape_cast %1779 : vector<1x64xf32> to vector<1x64xf32>
    %1785 = vector.broadcast %1784 : vector<1x64xf32> to vector<34x64xf32>
    %1786 = vector.broadcast %cst_285 : f32 to vector<34x64xf32>
    %1787 = arith.select %1783, %1785, %1786 : vector<34x64xi1>, vector<34x64xf32>
    %1788 = arith.addf %1763, %1787 : vector<34x64xf32>
    %1789 = vector.extract_strided_slice %1051 {offsets = [29, 0], sizes = [1, 64], strides = [1, 1]} : vector<34x64xf32> to vector<1x64xf32>
    %1790 = vector.broadcast %1789 : vector<1x64xf32> to vector<16x64xf32>
    %1791 = arith.mulf %1790, %1060 : vector<16x64xf32>
    %1792 = math.exp %1791 : vector<16x64xf32>
    %1793 = vector.extract_strided_slice %1055 {offsets = [0, 29], sizes = [16, 1], strides = [1, 1]} : vector<16x34xf32> to vector<16x1xf32>
    %1794 = vector.extract_strided_slice %1052 {offsets = [29, 0], sizes = [1, 64], strides = [1, 1]} : vector<34x64xf32> to vector<1x64xf32>
    %1795 = vector.broadcast %1793 : vector<16x1xf32> to vector<16x64xf32>
    %1796 = vector.broadcast %1794 : vector<1x64xf32> to vector<16x64xf32>
    %1797 = arith.mulf %1795, %1796 : vector<16x64xf32>
    %1798 = arith.mulf %1792, %1774 : vector<16x64xf32>
    %1799 = arith.addf %1798, %1797 : vector<16x64xf32>
    %1800 = vector.extract_strided_slice %1058 {offsets = [0, 29], sizes = [16, 1], strides = [1, 1]} : vector<16x34xf32> to vector<16x1xf32>
    %1801 = vector.broadcast %1800 : vector<16x1xf32> to vector<16x64xf32>
    %1802 = arith.mulf %1801, %1799 : vector<16x64xf32>
    %cst_286 = arith.constant dense<0.000000e+00> : vector<64xf32>
    %1803 = vector.multi_reduction <add>, %1802, %cst_286 [0] : vector<16x64xf32> to vector<64xf32>
    %1804 = vector.shape_cast %1803 : vector<64xf32> to vector<1x64xf32>
    %c29_i32_287 = arith.constant 29 : i32
    %1805 = vector.broadcast %c29_i32_287 : i32 to vector<34x1xi32>
    %1806 = arith.cmpi eq, %0, %1805 : vector<34x1xi32>
    %cst_288 = arith.constant 0.000000e+00 : f32
    %1807 = vector.shape_cast %1806 : vector<34x1xi1> to vector<34x1xi1>
    %1808 = vector.broadcast %1807 : vector<34x1xi1> to vector<34x64xi1>
    %1809 = vector.shape_cast %1804 : vector<1x64xf32> to vector<1x64xf32>
    %1810 = vector.broadcast %1809 : vector<1x64xf32> to vector<34x64xf32>
    %1811 = vector.broadcast %cst_288 : f32 to vector<34x64xf32>
    %1812 = arith.select %1808, %1810, %1811 : vector<34x64xi1>, vector<34x64xf32>
    %1813 = arith.addf %1788, %1812 : vector<34x64xf32>
    %1814 = vector.extract_strided_slice %1051 {offsets = [30, 0], sizes = [1, 64], strides = [1, 1]} : vector<34x64xf32> to vector<1x64xf32>
    %1815 = vector.broadcast %1814 : vector<1x64xf32> to vector<16x64xf32>
    %1816 = arith.mulf %1815, %1060 : vector<16x64xf32>
    %1817 = math.exp %1816 : vector<16x64xf32>
    %1818 = vector.extract_strided_slice %1055 {offsets = [0, 30], sizes = [16, 1], strides = [1, 1]} : vector<16x34xf32> to vector<16x1xf32>
    %1819 = vector.extract_strided_slice %1052 {offsets = [30, 0], sizes = [1, 64], strides = [1, 1]} : vector<34x64xf32> to vector<1x64xf32>
    %1820 = vector.broadcast %1818 : vector<16x1xf32> to vector<16x64xf32>
    %1821 = vector.broadcast %1819 : vector<1x64xf32> to vector<16x64xf32>
    %1822 = arith.mulf %1820, %1821 : vector<16x64xf32>
    %1823 = arith.mulf %1817, %1799 : vector<16x64xf32>
    %1824 = arith.addf %1823, %1822 : vector<16x64xf32>
    %1825 = vector.extract_strided_slice %1058 {offsets = [0, 30], sizes = [16, 1], strides = [1, 1]} : vector<16x34xf32> to vector<16x1xf32>
    %1826 = vector.broadcast %1825 : vector<16x1xf32> to vector<16x64xf32>
    %1827 = arith.mulf %1826, %1824 : vector<16x64xf32>
    %cst_289 = arith.constant dense<0.000000e+00> : vector<64xf32>
    %1828 = vector.multi_reduction <add>, %1827, %cst_289 [0] : vector<16x64xf32> to vector<64xf32>
    %1829 = vector.shape_cast %1828 : vector<64xf32> to vector<1x64xf32>
    %c30_i32_290 = arith.constant 30 : i32
    %1830 = vector.broadcast %c30_i32_290 : i32 to vector<34x1xi32>
    %1831 = arith.cmpi eq, %0, %1830 : vector<34x1xi32>
    %cst_291 = arith.constant 0.000000e+00 : f32
    %1832 = vector.shape_cast %1831 : vector<34x1xi1> to vector<34x1xi1>
    %1833 = vector.broadcast %1832 : vector<34x1xi1> to vector<34x64xi1>
    %1834 = vector.shape_cast %1829 : vector<1x64xf32> to vector<1x64xf32>
    %1835 = vector.broadcast %1834 : vector<1x64xf32> to vector<34x64xf32>
    %1836 = vector.broadcast %cst_291 : f32 to vector<34x64xf32>
    %1837 = arith.select %1833, %1835, %1836 : vector<34x64xi1>, vector<34x64xf32>
    %1838 = arith.addf %1813, %1837 : vector<34x64xf32>
    %1839 = vector.extract_strided_slice %1051 {offsets = [31, 0], sizes = [1, 64], strides = [1, 1]} : vector<34x64xf32> to vector<1x64xf32>
    %1840 = vector.broadcast %1839 : vector<1x64xf32> to vector<16x64xf32>
    %1841 = arith.mulf %1840, %1060 : vector<16x64xf32>
    %1842 = math.exp %1841 : vector<16x64xf32>
    %1843 = vector.extract_strided_slice %1055 {offsets = [0, 31], sizes = [16, 1], strides = [1, 1]} : vector<16x34xf32> to vector<16x1xf32>
    %1844 = vector.extract_strided_slice %1052 {offsets = [31, 0], sizes = [1, 64], strides = [1, 1]} : vector<34x64xf32> to vector<1x64xf32>
    %1845 = vector.broadcast %1843 : vector<16x1xf32> to vector<16x64xf32>
    %1846 = vector.broadcast %1844 : vector<1x64xf32> to vector<16x64xf32>
    %1847 = arith.mulf %1845, %1846 : vector<16x64xf32>
    %1848 = arith.mulf %1842, %1824 : vector<16x64xf32>
    %1849 = arith.addf %1848, %1847 : vector<16x64xf32>
    %1850 = vector.extract_strided_slice %1058 {offsets = [0, 31], sizes = [16, 1], strides = [1, 1]} : vector<16x34xf32> to vector<16x1xf32>
    %1851 = vector.broadcast %1850 : vector<16x1xf32> to vector<16x64xf32>
    %1852 = arith.mulf %1851, %1849 : vector<16x64xf32>
    %cst_292 = arith.constant dense<0.000000e+00> : vector<64xf32>
    %1853 = vector.multi_reduction <add>, %1852, %cst_292 [0] : vector<16x64xf32> to vector<64xf32>
    %1854 = vector.shape_cast %1853 : vector<64xf32> to vector<1x64xf32>
    %c31_i32_293 = arith.constant 31 : i32
    %1855 = vector.broadcast %c31_i32_293 : i32 to vector<34x1xi32>
    %1856 = arith.cmpi eq, %0, %1855 : vector<34x1xi32>
    %cst_294 = arith.constant 0.000000e+00 : f32
    %1857 = vector.shape_cast %1856 : vector<34x1xi1> to vector<34x1xi1>
    %1858 = vector.broadcast %1857 : vector<34x1xi1> to vector<34x64xi1>
    %1859 = vector.shape_cast %1854 : vector<1x64xf32> to vector<1x64xf32>
    %1860 = vector.broadcast %1859 : vector<1x64xf32> to vector<34x64xf32>
    %1861 = vector.broadcast %cst_294 : f32 to vector<34x64xf32>
    %1862 = arith.select %1858, %1860, %1861 : vector<34x64xi1>, vector<34x64xf32>
    %1863 = arith.addf %1838, %1862 : vector<34x64xf32>
    %1864 = vector.extract_strided_slice %1051 {offsets = [32, 0], sizes = [1, 64], strides = [1, 1]} : vector<34x64xf32> to vector<1x64xf32>
    %1865 = vector.broadcast %1864 : vector<1x64xf32> to vector<16x64xf32>
    %1866 = arith.mulf %1865, %1060 : vector<16x64xf32>
    %1867 = math.exp %1866 : vector<16x64xf32>
    %1868 = vector.extract_strided_slice %1055 {offsets = [0, 32], sizes = [16, 1], strides = [1, 1]} : vector<16x34xf32> to vector<16x1xf32>
    %1869 = vector.extract_strided_slice %1052 {offsets = [32, 0], sizes = [1, 64], strides = [1, 1]} : vector<34x64xf32> to vector<1x64xf32>
    %1870 = vector.broadcast %1868 : vector<16x1xf32> to vector<16x64xf32>
    %1871 = vector.broadcast %1869 : vector<1x64xf32> to vector<16x64xf32>
    %1872 = arith.mulf %1870, %1871 : vector<16x64xf32>
    %1873 = arith.mulf %1867, %1849 : vector<16x64xf32>
    %1874 = arith.addf %1873, %1872 : vector<16x64xf32>
    %1875 = vector.extract_strided_slice %1058 {offsets = [0, 32], sizes = [16, 1], strides = [1, 1]} : vector<16x34xf32> to vector<16x1xf32>
    %1876 = vector.broadcast %1875 : vector<16x1xf32> to vector<16x64xf32>
    %1877 = arith.mulf %1876, %1874 : vector<16x64xf32>
    %cst_295 = arith.constant dense<0.000000e+00> : vector<64xf32>
    %1878 = vector.multi_reduction <add>, %1877, %cst_295 [0] : vector<16x64xf32> to vector<64xf32>
    %1879 = vector.shape_cast %1878 : vector<64xf32> to vector<1x64xf32>
    %c32_i32_296 = arith.constant 32 : i32
    %1880 = vector.broadcast %c32_i32_296 : i32 to vector<34x1xi32>
    %1881 = arith.cmpi eq, %0, %1880 : vector<34x1xi32>
    %cst_297 = arith.constant 0.000000e+00 : f32
    %1882 = vector.shape_cast %1881 : vector<34x1xi1> to vector<34x1xi1>
    %1883 = vector.broadcast %1882 : vector<34x1xi1> to vector<34x64xi1>
    %1884 = vector.shape_cast %1879 : vector<1x64xf32> to vector<1x64xf32>
    %1885 = vector.broadcast %1884 : vector<1x64xf32> to vector<34x64xf32>
    %1886 = vector.broadcast %cst_297 : f32 to vector<34x64xf32>
    %1887 = arith.select %1883, %1885, %1886 : vector<34x64xi1>, vector<34x64xf32>
    %1888 = arith.addf %1863, %1887 : vector<34x64xf32>
    %1889 = vector.extract_strided_slice %1051 {offsets = [33, 0], sizes = [1, 64], strides = [1, 1]} : vector<34x64xf32> to vector<1x64xf32>
    %1890 = vector.broadcast %1889 : vector<1x64xf32> to vector<16x64xf32>
    %1891 = arith.mulf %1890, %1060 : vector<16x64xf32>
    %1892 = math.exp %1891 : vector<16x64xf32>
    %1893 = vector.extract_strided_slice %1055 {offsets = [0, 33], sizes = [16, 1], strides = [1, 1]} : vector<16x34xf32> to vector<16x1xf32>
    %1894 = vector.extract_strided_slice %1052 {offsets = [33, 0], sizes = [1, 64], strides = [1, 1]} : vector<34x64xf32> to vector<1x64xf32>
    %1895 = vector.broadcast %1893 : vector<16x1xf32> to vector<16x64xf32>
    %1896 = vector.broadcast %1894 : vector<1x64xf32> to vector<16x64xf32>
    %1897 = arith.mulf %1895, %1896 : vector<16x64xf32>
    %1898 = arith.mulf %1892, %1874 : vector<16x64xf32>
    %1899 = arith.addf %1898, %1897 : vector<16x64xf32>
    %1900 = vector.extract_strided_slice %1058 {offsets = [0, 33], sizes = [16, 1], strides = [1, 1]} : vector<16x34xf32> to vector<16x1xf32>
    %1901 = vector.broadcast %1900 : vector<16x1xf32> to vector<16x64xf32>
    %1902 = arith.mulf %1901, %1899 : vector<16x64xf32>
    %cst_298 = arith.constant dense<0.000000e+00> : vector<64xf32>
    %1903 = vector.multi_reduction <add>, %1902, %cst_298 [0] : vector<16x64xf32> to vector<64xf32>
    %1904 = vector.shape_cast %1903 : vector<64xf32> to vector<1x64xf32>
    %c33_i32_299 = arith.constant 33 : i32
    %1905 = vector.broadcast %c33_i32_299 : i32 to vector<34x1xi32>
    %1906 = arith.cmpi eq, %0, %1905 : vector<34x1xi32>
    %cst_300 = arith.constant 0.000000e+00 : f32
    %1907 = vector.shape_cast %1906 : vector<34x1xi1> to vector<34x1xi1>
    %1908 = vector.broadcast %1907 : vector<34x1xi1> to vector<34x64xi1>
    %1909 = vector.shape_cast %1904 : vector<1x64xf32> to vector<1x64xf32>
    %1910 = vector.broadcast %1909 : vector<1x64xf32> to vector<34x64xf32>
    %1911 = vector.broadcast %cst_300 : f32 to vector<34x64xf32>
    %1912 = arith.select %1908, %1910, %1911 : vector<34x64xi1>, vector<34x64xf32>
    %1913 = arith.addf %1888, %1912 : vector<34x64xf32>
    %c1_301 = arith.constant 1 : index
    %c0_302 = arith.constant 0 : index
    %c0_303 = arith.constant 0 : index
    %1914 = vector.load %arg12[%c1_301, %c0_302, %c0_303] : memref<2x1x64xf32, #tpu.memory_space<vmem>>, vector<1x1x64xf32>
    %1915 = vector.shape_cast %1914 : vector<1x1x64xf32> to vector<1x64xf32>
    %1916 = vector.broadcast %1915 : vector<1x64xf32> to vector<34x64xf32>
    %1917 = arith.mulf %1031, %1916 : vector<34x64xf32>
    %1918 = arith.addf %1913, %1917 : vector<34x64xf32>
    %cst_304 = arith.constant 0.000000e+00 : f32
    %1919 = vector.broadcast %cst_304 : f32 to vector<34x64xf32>
    %1920 = arith.subf %1919, %972 : vector<34x64xf32>
    %1921 = math.exp %1920 : vector<34x64xf32>
    %cst_305 = arith.constant 1.000000e+00 : f32
    %1922 = vector.broadcast %cst_305 : f32 to vector<34x64xf32>
    %1923 = arith.addf %1922, %1921 : vector<34x64xf32>
    %1924 = tpu.reciprocal %1923 {approx = true} : vector<34x64xf32> -> vector<34x64xf32>
    %1925 = arith.mulf %972, %1924 : vector<34x64xf32>
    %1926 = arith.mulf %1918, %1925 : vector<34x64xf32>
    %c1_306 = arith.constant 1 : index
    %c0_307 = arith.constant 0 : index
    %c0_308 = arith.constant 0 : index
    %1927 = vector.load %arg13[%c1_306, %c0_307, %c0_308] : memref<2x64x32xf32, #tpu.memory_space<vmem>>, vector<1x64x32xf32>
    %1928 = vector.shape_cast %1927 : vector<1x64x32xf32> to vector<64x32xf32>
    %cst_309 = arith.constant dense<0.000000e+00> : vector<34x32xf32>
    %1929 = tpu.matmul %1926, %1928, %cst_309 {dimension_numbers = #tpu.dot_dimension_numbers<[1], [0], [0], [1], [0, 0, 1, 1], [], []>} : vector<34x64xf32>, vector<64x32xf32>, vector<34x32xf32> -> vector<34x32xf32>
    %c0_310 = arith.constant 0 : index
    %c0_311 = arith.constant 0 : index
    %1930 = vector.load %arg14[%c0_310, %c0_311] : memref<32x8xf32, #tpu.memory_space<vmem>>, vector<32x8xf32>
    %cst_312 = arith.constant dense<0.000000e+00> : vector<34x8xf32>
    %1931 = tpu.matmul %1929, %1930, %cst_312 {dimension_numbers = #tpu.dot_dimension_numbers<[1], [0], [0], [1], [0, 0, 1, 1], [], []>} : vector<34x32xf32>, vector<32x8xf32>, vector<34x8xf32> -> vector<34x8xf32>
    %c0_313 = arith.constant 0 : index
    %c0_314 = arith.constant 0 : index
    %1932 = vector.load %arg15[%c0_313, %c0_314] : memref<1x8xf32, #tpu.memory_space<vmem>>, vector<1x8xf32>
    %1933 = vector.broadcast %1932 : vector<1x8xf32> to vector<34x8xf32>
    %1934 = arith.addf %1931, %1933 : vector<34x8xf32>
    %1935 = vector.extract_strided_slice %1929 {offsets = [0, 0], sizes = [1, 32], strides = [1, 1]} : vector<34x32xf32> to vector<1x32xf32>
    %c0_315 = arith.constant 0 : index
    %c0_316 = arith.constant 0 : index
    %1936 = vector.load %arg16[%c0_315, %c0_316] : memref<2x32xf32, #tpu.memory_space<vmem>>, vector<1x32xf32>
    tpu.vector_store %arg16[%c0_315, %c0_316], %1935 {strides = array<i32>} : memref<2x32xf32, #tpu.memory_space<vmem>>, vector<1x32xf32>,
    %1937 = vector.extract_strided_slice %1934 {offsets = [1, 0], sizes = [16, 8], strides = [1, 1]} : vector<34x8xf32> to vector<16x8xf32>
    %c0_317 = arith.constant 0 : index
    %c0_318 = arith.constant 0 : index
    %1938 = vector.load %arg17[%c0_317, %c0_318] : memref<32x8xf32, #tpu.memory_space<vmem>>, vector<16x8xf32>
    tpu.vector_store %arg17[%c0_317, %c0_318], %1937 {strides = array<i32>} : memref<32x8xf32, #tpu.memory_space<vmem>>, vector<16x8xf32>,
    %1939 = vector.extract_strided_slice %1929 {offsets = [17, 0], sizes = [1, 32], strides = [1, 1]} : vector<34x32xf32> to vector<1x32xf32>
    %c1_319 = arith.constant 1 : index
    %c0_320 = arith.constant 0 : index
    %1940 = vector.load %arg16[%c1_319, %c0_320] : memref<2x32xf32, #tpu.memory_space<vmem>>, vector<1x32xf32>
    tpu.vector_store %arg16[%c1_319, %c0_320], %1939 {strides = array<i32>} : memref<2x32xf32, #tpu.memory_space<vmem>>, vector<1x32xf32>,
    %1941 = vector.extract_strided_slice %1934 {offsets = [18, 0], sizes = [16, 8], strides = [1, 1]} : vector<34x8xf32> to vector<16x8xf32>
    %c16 = arith.constant 16 : index
    %c0_321 = arith.constant 0 : index
    %1942 = vector.load %arg17[%c16, %c0_321] : memref<32x8xf32, #tpu.memory_space<vmem>>, vector<16x8xf32>
    tpu.vector_store %arg17[%c16, %c0_321], %1941 {strides = array<i32>} : memref<32x8xf32, #tpu.memory_space<vmem>>, vector<16x8xf32>,
    return
  }
  func.func @transform_0(%arg0: i32) -> (i32, i32) {
    %c0_i32 = arith.constant 0 : i32
    %c0_i32_0 = arith.constant 0 : i32
    return %arg0, %c0_i32 : i32, i32
  }
  func.func @transform_1(%arg0: i32) -> (i32, i32, i32) {
    %c0_i32 = arith.constant 0 : i32
    %c0_i32_0 = arith.constant 0 : i32
    %c0_i32_1 = arith.constant 0 : i32
    %c0_i32_2 = arith.constant 0 : i32
    return %c0_i32, %c0_i32_0, %c0_i32_1 : i32, i32, i32
  }
  func.func @transform_2(%arg0: i32) -> (i32, i32, i32) {
    %c0_i32 = arith.constant 0 : i32
    %c0_i32_0 = arith.constant 0 : i32
    %c0_i32_1 = arith.constant 0 : i32
    %c0_i32_2 = arith.constant 0 : i32
    return %c0_i32, %c0_i32_0, %c0_i32_1 : i32, i32, i32
  }
  func.func @transform_3(%arg0: i32) -> (i32, i32, i32) {
    %c0_i32 = arith.constant 0 : i32
    %c0_i32_0 = arith.constant 0 : i32
    %c0_i32_1 = arith.constant 0 : i32
    %c0_i32_2 = arith.constant 0 : i32
    return %c0_i32, %c0_i32_0, %c0_i32_1 : i32, i32, i32
  }
  func.func @transform_4(%arg0: i32) -> (i32, i32, i32) {
    %c0_i32 = arith.constant 0 : i32
    %c0_i32_0 = arith.constant 0 : i32
    %c0_i32_1 = arith.constant 0 : i32
    %c0_i32_2 = arith.constant 0 : i32
    return %c0_i32, %c0_i32_0, %c0_i32_1 : i32, i32, i32
  }
  func.func @transform_5(%arg0: i32) -> (i32, i32, i32) {
    %c0_i32 = arith.constant 0 : i32
    %c0_i32_0 = arith.constant 0 : i32
    %c0_i32_1 = arith.constant 0 : i32
    %c0_i32_2 = arith.constant 0 : i32
    return %c0_i32, %c0_i32_0, %c0_i32_1 : i32, i32, i32
  }
  func.func @transform_6(%arg0: i32) -> (i32, i32, i32) {
    %c0_i32 = arith.constant 0 : i32
    %c0_i32_0 = arith.constant 0 : i32
    %c0_i32_1 = arith.constant 0 : i32
    %c0_i32_2 = arith.constant 0 : i32
    return %c0_i32, %c0_i32_0, %c0_i32_1 : i32, i32, i32
  }
  func.func @transform_7(%arg0: i32) -> (i32, i32, i32) {
    %c0_i32 = arith.constant 0 : i32
    %c0_i32_0 = arith.constant 0 : i32
    %c0_i32_1 = arith.constant 0 : i32
    %c0_i32_2 = arith.constant 0 : i32
    return %c0_i32, %c0_i32_0, %c0_i32_1 : i32, i32, i32
  }
  func.func @transform_8(%arg0: i32) -> (i32, i32, i32) {
    %c0_i32 = arith.constant 0 : i32
    %c0_i32_0 = arith.constant 0 : i32
    %c0_i32_1 = arith.constant 0 : i32
    %c0_i32_2 = arith.constant 0 : i32
    return %c0_i32, %c0_i32_0, %c0_i32_1 : i32, i32, i32
  }
  func.func @transform_9(%arg0: i32) -> (i32, i32, i32) {
    %c0_i32 = arith.constant 0 : i32
    %c0_i32_0 = arith.constant 0 : i32
    %c0_i32_1 = arith.constant 0 : i32
    %c0_i32_2 = arith.constant 0 : i32
    return %c0_i32, %c0_i32_0, %c0_i32_1 : i32, i32, i32
  }
  func.func @transform_10(%arg0: i32) -> (i32, i32, i32) {
    %c0_i32 = arith.constant 0 : i32
    %c0_i32_0 = arith.constant 0 : i32
    %c0_i32_1 = arith.constant 0 : i32
    %c0_i32_2 = arith.constant 0 : i32
    return %c0_i32, %c0_i32_0, %c0_i32_1 : i32, i32, i32
  }
  func.func @transform_11(%arg0: i32) -> (i32, i32, i32) {
    %c0_i32 = arith.constant 0 : i32
    %c0_i32_0 = arith.constant 0 : i32
    %c0_i32_1 = arith.constant 0 : i32
    %c0_i32_2 = arith.constant 0 : i32
    return %c0_i32, %c0_i32_0, %c0_i32_1 : i32, i32, i32
  }
  func.func @transform_12(%arg0: i32) -> (i32, i32, i32) {
    %c0_i32 = arith.constant 0 : i32
    %c0_i32_0 = arith.constant 0 : i32
    %c0_i32_1 = arith.constant 0 : i32
    %c0_i32_2 = arith.constant 0 : i32
    return %c0_i32, %c0_i32_0, %c0_i32_1 : i32, i32, i32
  }
  func.func @transform_13(%arg0: i32) -> (i32, i32) {
    %c0_i32 = arith.constant 0 : i32
    %c0_i32_0 = arith.constant 0 : i32
    %c0_i32_1 = arith.constant 0 : i32
    return %c0_i32, %c0_i32_0 : i32, i32
  }
  func.func @transform_14(%arg0: i32) -> (i32, i32) {
    %c0_i32 = arith.constant 0 : i32
    %c0_i32_0 = arith.constant 0 : i32
    %c0_i32_1 = arith.constant 0 : i32
    return %c0_i32, %c0_i32_0 : i32, i32
  }
  func.func @transform_15(%arg0: i32) -> (i32, i32) {
    %c0_i32 = arith.constant 0 : i32
    %c0_i32_0 = arith.constant 0 : i32
    return %arg0, %c0_i32 : i32, i32
  }
  func.func @transform_16(%arg0: i32) -> (i32, i32) {
    %c0_i32 = arith.constant 0 : i32
    %c0_i32_0 = arith.constant 0 : i32
    return %arg0, %c0_i32 : i32, i32
  }
}

</mosaic_0001>

<llo_original>
// kernel: tpu_custom_call.1
$region0: #{tpu_custom_call.1}
  #allocation0 [shape = 'u32[]', space=smem, size = 0x4, offset = 0x4, fixed_abs, tag = 'smem constant byte address 0x4 - core index']
  #allocation1 [shape = 'u32[144,128]{1,0:T(1,128)}', space=vmem, size = 0x12000, scoped, tag = 'internal scratch']
  #allocation2 [shape = 'f32[37,64]{1,0:T(8,128)}', space=vmem, size = 0x5000, scoped, tag = 'scratch operand']
  %s0 = inlined_call_operand.vmem [shape: f32[34,32], index: 0, kind: input, shape index: {}]
  %s1 = inlined_call_operand.vmem [shape: f32[2,32,64], index: 1, kind: input, shape index: {}]
  %s2 = inlined_call_operand.vmem [shape: f32[2,32,64], index: 2, kind: input, shape index: {}]
  %s3 = inlined_call_operand.vmem [shape: f32[2,4,64], index: 3, kind: input, shape index: {}]
  %s4 = inlined_call_operand.vmem [shape: f32[2,1,64], index: 4, kind: input, shape index: {}]
  %s5 = inlined_call_operand.vmem [shape: f32[2,64,2], index: 5, kind: input, shape index: {}]
  %s6 = inlined_call_operand.vmem [shape: f32[2,16,64], index: 6, kind: input, shape index: {}]
  %s7 = inlined_call_operand.vmem [shape: f32[2,16,64], index: 7, kind: input, shape index: {}]
  %s8 = inlined_call_operand.vmem [shape: f32[2,2,64], index: 8, kind: input, shape index: {}]
  %s9 = inlined_call_operand.vmem [shape: f32[2,1,64], index: 9, kind: input, shape index: {}]
  %s10 = inlined_call_operand.vmem [shape: f32[2,16,64], index: 10, kind: input, shape index: {}]
  %s11 = inlined_call_operand.vmem [shape: f32[2,1,64], index: 11, kind: input, shape index: {}]
  %s12 = inlined_call_operand.vmem [shape: f32[2,64,32], index: 12, kind: input, shape index: {}]
  %s13 = inlined_call_operand.vmem [shape: f32[32,8], index: 13, kind: input, shape index: {}]
  %s14 = inlined_call_operand.vmem [shape: f32[1,8], index: 14, kind: input, shape index: {}]
  %s15 = inlined_call_operand.hbm [shape: f32[2,32], index: 15, kind: output, shape index: {0}]
  %s16 = inlined_call_operand.vmem [shape: f32[32,8], index: 16, kind: output, shape index: {1}]
  %17 = xla_tuple %s15, %s16
  %s18 = sld [smem:[#allocation0]]
  $region78: #{tpu_custom_call.1} parent=0
    _
  %s20 = ssub.s32 1, %s18
  %s21 = scalar_select 0, %s20, %s18
  $region1: #{tpu_custom_call.1} parent=0
    #allocation3 [shape = 'u8[1024]{0}', space=vmem, size = 0x400, scoped, tag = 'output window, operand 0, single buffered']
    #allocation4 [shape = 's32[1]{0}', space=sflag, size = 0x4, scoped, tag = 'scoped memory for tpu_custom_call.1']
    %22 = vsyncpa [#allocation4], 0
    // Predicated region
    $region2: #{tpu_custom_call.1} parent=1 // pred_check
      _
    $region3: #{tpu_custom_call.1} parent=1 // pred_check_branch
      %24 = sbr.rel (0) target = $region5
    $region4: #{tpu_custom_call.1} parent=1 // pred_region
      _
    $region5: #{tpu_custom_call.1} parent=1 // pred_fallthru
      _
    // Predicated region
    $region6: #{tpu_custom_call.1} parent=1 // pred_check
      _
    $region7: #{tpu_custom_call.1} parent=1 // pred_check_branch
      %26 = sbr.rel (0) target = $region9
    $region8: #{tpu_custom_call.1} parent=1 // pred_region
      _
    $region9: #{tpu_custom_call.1} parent=1 // pred_fallthru
      _
    // Predicated region
    $region10: #{tpu_custom_call.1} parent=1 // pred_check
      _
    $region11: #{tpu_custom_call.1} parent=1 // pred_check_branch
      %28 = sbr.rel (0) target = $region13
    $region12: #{tpu_custom_call.1} parent=1 // pred_region
      _
    $region13: #{tpu_custom_call.1} parent=1 // pred_fallthru
      _
    // Predicated region
    $region14: #{tpu_custom_call.1} parent=1 // pred_check
      _
    $region15: #{tpu_custom_call.1} parent=1 // pred_check_branch
      %30 = sbr.rel (0) target = $region17
    $region16: #{tpu_custom_call.1} parent=1 // pred_region
      _
    $region17: #{tpu_custom_call.1} parent=1 // pred_fallthru
      _
    // Predicated region
    $region18: #{tpu_custom_call.1} parent=1 // pred_check
      _
    $region19: #{tpu_custom_call.1} parent=1 // pred_check_branch
      %32 = sbr.rel (0) target = $region21
    $region20: #{tpu_custom_call.1} parent=1 // pred_region
      _
    $region21: #{tpu_custom_call.1} parent=1 // pred_fallthru
      _
    // Predicated region
    $region22: #{tpu_custom_call.1} parent=1 // pred_check
      _
    $region23: #{tpu_custom_call.1} parent=1 // pred_check_branch
      %34 = sbr.rel (0) target = $region25
    $region24: #{tpu_custom_call.1} parent=1 // pred_region
      _
    $region25: #{tpu_custom_call.1} parent=1 // pred_fallthru
      _
    // Predicated region
    $region26: #{tpu_custom_call.1} parent=1 // pred_check
      _
    $region27: #{tpu_custom_call.1} parent=1 // pred_check_branch
      %36 = sbr.rel (0) target = $region29
    $region28: #{tpu_custom_call.1} parent=1 // pred_region
      _
    $region29: #{tpu_custom_call.1} parent=1 // pred_fallthru
      _
    // Predicated region
    $region30: #{tpu_custom_call.1} parent=1 // pred_check
      _
    $region31: #{tpu_custom_call.1} parent=1 // pred_check_branch
      %38 = sbr.rel (0) target = $region33
    $region32: #{tpu_custom_call.1} parent=1 // pred_region
      _
    $region33: #{tpu_custom_call.1} parent=1 // pred_fallthru
      _
    // Predicated region
    $region34: #{tpu_custom_call.1} parent=1 // pred_check
      _
    $region35: #{tpu_custom_call.1} parent=1 // pred_check_branch
      %40 = sbr.rel (0) target = $region37
    $region36: #{tpu_custom_call.1} parent=1 // pred_region
      _
    $region37: #{tpu_custom_call.1} parent=1 // pred_fallthru
      _
    // Predicated region
    $region38: #{tpu_custom_call.1} parent=1 // pred_check
      _
    $region39: #{tpu_custom_call.1} parent=1 // pred_check_branch
      %42 = sbr.rel (0) target = $region41
    $region40: #{tpu_custom_call.1} parent=1 // pred_region
      _
    $region41: #{tpu_custom_call.1} parent=1 // pred_fallthru
      _
    // Predicated region
    $region42: #{tpu_custom_call.1} parent=1 // pred_check
      _
    $region43: #{tpu_custom_call.1} parent=1 // pred_check_branch
      %44 = sbr.rel (0) target = $region45
    $region44: #{tpu_custom_call.1} parent=1 // pred_region
      _
    $region45: #{tpu_custom_call.1} parent=1 // pred_fallthru
      _
    // Predicated region
    $region46: #{tpu_custom_call.1} parent=1 // pred_check
      _
    $region47: #{tpu_custom_call.1} parent=1 // pred_check_branch
      %46 = sbr.rel (0) target = $region49
    $region48: #{tpu_custom_call.1} parent=1 // pred_region
      _
    $region49: #{tpu_custom_call.1} parent=1 // pred_fallthru
      _
    // Predicated region
    $region50: #{tpu_custom_call.1} parent=1 // pred_check
      _
    $region51: #{tpu_custom_call.1} parent=1 // pred_check_branch
      %48 = sbr.rel (0) target = $region53
    $region52: #{tpu_custom_call.1} parent=1 // pred_region
      _
    $region53: #{tpu_custom_call.1} parent=1 // pred_fallthru
      _
    // Predicated region
    $region54: #{tpu_custom_call.1} parent=1 // pred_check
      _
    $region55: #{tpu_custom_call.1} parent=1 // pred_check_branch
      %50 = sbr.rel (0) target = $region57
    $region56: #{tpu_custom_call.1} parent=1 // pred_region
      _
    $region57: #{tpu_custom_call.1} parent=1 // pred_fallthru
      _
    // Predicated region
    $region58: #{tpu_custom_call.1} parent=1 // pred_check
      _
    $region59: #{tpu_custom_call.1} parent=1 // pred_check_branch
      %52 = sbr.rel (0) target = $region61
    $region60: #{tpu_custom_call.1} parent=1 // pred_region
      _
    $region61: #{tpu_custom_call.1} parent=1 // pred_fallthru
      _
    %v53 = vlaneseq
    %v54 = vshrl.u32 %v53, 7
    %v55 = vadd.s32 %v54, 8
    %v56 = vadd.s32 %v54, 16
    %v57 = vadd.s32 %v54, 24
    %v58 = vadd.s32 %v54, 32
    %vm59 = vcmask 518144
    %60 = vst.msk [vmem:[#allocation2] sm:$0x7] %vm59, 0.0
    %v61 = vld [vmem:[%s0] sm:$0xff]
    %v62 = vld [vmem:[%s0 + $0x8] sm:$0xff]
    %v63 = vld [vmem:[%s0 + $0x10] sm:$0xff]
    %v64 = vld [vmem:[%s0 + $0x18] sm:$0xff]
    %v65 = vld [vmem:[%s0 + $0x20] sm:$0x3]
    %v66 = vld [vmem:[%s1] sm:$0xff]
    %v67 = vld [vmem:[%s1 + $0x8] sm:$0xff]
    %v68 = vld [vmem:[%s1 + $0x10] sm:$0xff]
    %v69 = vld [vmem:[%s1 + $0x18] sm:$0xff]
    %vm70 = vcmask 261120
    %v72 = vsel %vm70, %v61, 0
    %v75 = vsel %vm70, %v62, 0
    %v78 = vsel %vm70, %v63, 0
    %v81 = vsel %vm70, %v64, 0
    %v84 = vsel %vm70, %v65, 0
    %86 = vmatprep.subr.mxu0 0.0
    %87 = vmatpush1.msra.mxu0 0.0
    %88 = vmatprep.subr.mxu0 0.0
    %89 = vmatpush1.msra.mxu0 0.0
    %90 = vmatprep.subr.mxu0 0.0
    %91 = vmatpush1.msra.mxu0 0.0
    %92 = vmatprep.subr.mxu0 0.0
    %93 = vmatpush1.msra.mxu0 0.0
    %94 = vmatprep.subr.mxu0 0.0
    %95 = vmatpush1.msra.mxu0 0.0
    %96 = vmatprep.subr.mxu0 0.0
    %97 = vmatpush1.msra.mxu0 0.0
    %98 = vmatprep.subr.mxu0 0.0
    %99 = vmatpush1.msra.mxu0 0.0
    %100 = vmatprep.subr.mxu0 0.0
    %101 = vmatpush1.msra.mxu0 0.0
    %102 = vmatprep.subr.mxu0 0.0
    %103 = vmatpush1.msra.mxu0 0.0
    %104 = vmatprep.subr.mxu0 0.0
    %105 = vmatpush1.msra.mxu0 0.0
    %106 = vmatprep.subr.mxu0 0.0
    %107 = vmatpush1.msra.mxu0 0.0
    %108 = vmatprep.subr.mxu0 0.0
    %109 = vmatpush1.msra.mxu0 0.0
    %110 = vmatprep.subr.mxu0 0.0
    %111 = vmatpush1.msra.mxu0 %v69
    %112 = vmatprep.subr.mxu0 0.0
    %113 = vmatpush1.msra.mxu0 %v68
    %114 = vmatprep.subr.mxu0 0.0
    %115 = vmatpush1.msra.mxu0 %v67
    %116 = vmatprep.subr.mxu0 0.0
    %117 = vmatpush1.msra.mxu0 %v66
    %118 = vmatprep.subr.mxu0 0.0
    %119 = vmatpush2.msra.mxu0 0.0
    %120 = vmatprep.subr.mxu0 0.0
    %121 = vmatpush2.msra.mxu0 0.0
    %122 = vmatprep.subr.mxu0 0.0
    %123 = vmatpush2.msra.mxu0 0.0
    %124 = vmatprep.subr.mxu0 0.0
    %125 = vmatpush2.msra.mxu0 0.0
    %126 = vmatprep.subr.mxu0 0.0
    %127 = vmatpush2.msra.mxu0 0.0
    %128 = vmatprep.subr.mxu0 0.0
    %129 = vmatpush2.msra.mxu0 0.0
    %130 = vmatprep.subr.mxu0 0.0
    %131 = vmatpush2.msra.mxu0 0.0
    %132 = vmatprep.subr.mxu0 0.0
    %133 = vmatpush2.msra.mxu0 0.0
    %134 = vmatprep.subr.mxu0 0.0
    %135 = vmatpush2.msra.mxu0 0.0
    %136 = vmatprep.subr.mxu0 0.0
    %137 = vmatpush2.msra.mxu0 0.0
    %138 = vmatprep.subr.mxu0 0.0
    %139 = vmatpush2.msra.mxu0 0.0
    %140 = vmatprep.subr.mxu0 0.0
    %141 = vmatpush2.msra.mxu0 0.0
    %142 = vmatprep.subr.mxu0 0.0
    %143 = vmatpush2.msra.mxu0 0.0
    %144 = vmatprep.subr.mxu0 0.0
    %145 = vmatpush2.msra.mxu0 0.0
    %146 = vmatprep.subr.mxu0 0.0
    %147 = vmatpush2.msra.mxu0 0.0
    %148 = vmatprep.subr.mxu0 0.0
    %149 = vmatpush2.msra.mxu0 0.0
    %150 = vmatprep.mubr.f32.mxu0 0.0
    %151 = vmatmul.mubr.f32.gmra.mxu0 %v72
    %v152 = vpop.f32.mrf.mxu0
    %v153 = vadd.f32 0.0, %v152
    %v154 = vpop.f32.mrf.mxu0
    %155 = vmatprep.mubr.f32.mxu0 0.0
    %156 = vmatmul.mubr.f32.gmra.mxu0 %v75
    %v157 = vpop.f32.mrf.mxu0
    %v158 = vadd.f32 0.0, %v157
    %v159 = vpop.f32.mrf.mxu0
    %160 = vmatprep.mubr.f32.mxu0 0.0
    %161 = vmatmul.mubr.f32.gmra.mxu0 %v78
    %v162 = vpop.f32.mrf.mxu0
    %v163 = vadd.f32 0.0, %v162
    %v164 = vpop.f32.mrf.mxu0
    %165 = vmatprep.mubr.f32.mxu0 0.0
    %166 = vmatmul.mubr.f32.gmra.mxu0 %v81
    %v167 = vpop.f32.mrf.mxu0
    %v168 = vadd.f32 0.0, %v167
    %v169 = vpop.f32.mrf.mxu0
    %170 = vmatprep.mubr.f32.mxu0 0.0
    %171 = vmatmul.mubr.f32.gmra.mxu0 %v84
    %v172 = vpop.f32.mrf.mxu0
    %v173 = vadd.f32 0.0, %v172
    %v174 = vpop.f32.mrf.mxu0
    %175 = vdwg.mxu0
    %v176 = vld [vmem:[%s2] sm:$0xff]
    %v177 = vld [vmem:[%s2 + $0x8] sm:$0xff]
    %v178 = vld [vmem:[%s2 + $0x10] sm:$0xff]
    %v179 = vld [vmem:[%s2 + $0x18] sm:$0xff]
    %180 = vmatprep.subr.mxu0 0.0
    %181 = vmatpush1.msra.mxu0 0.0
    %182 = vmatprep.subr.mxu0 0.0
    %183 = vmatpush1.msra.mxu0 0.0
    %184 = vmatprep.subr.mxu0 0.0
    %185 = vmatpush1.msra.mxu0 0.0
    %186 = vmatprep.subr.mxu0 0.0
    %187 = vmatpush1.msra.mxu0 0.0
    %188 = vmatprep.subr.mxu0 0.0
    %189 = vmatpush1.msra.mxu0 0.0
    %190 = vmatprep.subr.mxu0 0.0
    %191 = vmatpush1.msra.mxu0 0.0
    %192 = vmatprep.subr.mxu0 0.0
    %193 = vmatpush1.msra.mxu0 0.0
    %194 = vmatprep.subr.mxu0 0.0
    %195 = vmatpush1.msra.mxu0 0.0
    %196 = vmatprep.subr.mxu0 0.0
    %197 = vmatpush1.msra.mxu0 0.0
    %198 = vmatprep.subr.mxu0 0.0
    %199 = vmatpush1.msra.mxu0 0.0
    %200 = vmatprep.subr.mxu0 0.0
    %201 = vmatpush1.msra.mxu0 0.0
    %202 = vmatprep.subr.mxu0 0.0
    %203 = vmatpush1.msra.mxu0 0.0
    %204 = vmatprep.subr.mxu0 0.0
    %205 = vmatpush1.msra.mxu0 %v179
    %206 = vmatprep.subr.mxu0 0.0
    %207 = vmatpush1.msra.mxu0 %v178
    %208 = vmatprep.subr.mxu0 0.0
    %209 = vmatpush1.msra.mxu0 %v177
    %210 = vmatprep.subr.mxu0 0.0
    %211 = vmatpush1.msra.mxu0 %v176
    %212 = vmatprep.subr.mxu0 0.0
    %213 = vmatpush2.msra.mxu0 0.0
    %214 = vmatprep.subr.mxu0 0.0
    %215 = vmatpush2.msra.mxu0 0.0
    %216 = vmatprep.subr.mxu0 0.0
    %217 = vmatpush2.msra.mxu0 0.0
    %218 = vmatprep.subr.mxu0 0.0
    %219 = vmatpush2.msra.mxu0 0.0
    %220 = vmatprep.subr.mxu0 0.0
    %221 = vmatpush2.msra.mxu0 0.0
    %222 = vmatprep.subr.mxu0 0.0
    %223 = vmatpush2.msra.mxu0 0.0
    %224 = vmatprep.subr.mxu0 0.0
    %225 = vmatpush2.msra.mxu0 0.0
    %226 = vmatprep.subr.mxu0 0.0
    %227 = vmatpush2.msra.mxu0 0.0
    %228 = vmatprep.subr.mxu0 0.0
    %229 = vmatpush2.msra.mxu0 0.0
    %230 = vmatprep.subr.mxu0 0.0
    %231 = vmatpush2.msra.mxu0 0.0
    %232 = vmatprep.subr.mxu0 0.0
    %233 = vmatpush2.msra.mxu0 0.0
    %234 = vmatprep.subr.mxu0 0.0
    %235 = vmatpush2.msra.mxu0 0.0
    %236 = vmatprep.subr.mxu0 0.0
    %237 = vmatpush2.msra.mxu0 0.0
    %238 = vmatprep.subr.mxu0 0.0
    %239 = vmatpush2.msra.mxu0 0.0
    %240 = vmatprep.subr.mxu0 0.0
    %241 = vmatpush2.msra.mxu0 0.0
    %242 = vmatprep.subr.mxu0 0.0
    %243 = vmatpush2.msra.mxu0 0.0
    %244 = vmatprep.mubr.f32.mxu0 0.0
    %245 = vmatmul.mubr.f32.gmra.mxu0 %v72
    %v246 = vpop.f32.mrf.mxu0
    %v247 = vadd.f32 0.0, %v246
    %v248 = vpop.f32.mrf.mxu0
    %249 = vmatprep.mubr.f32.mxu0 0.0
    %250 = vmatmul.mubr.f32.gmra.mxu0 %v75
    %v251 = vpop.f32.mrf.mxu0
    %v252 = vadd.f32 0.0, %v251
    %v253 = vpop.f32.mrf.mxu0
    %254 = vmatprep.mubr.f32.mxu0 0.0
    %255 = vmatmul.mubr.f32.gmra.mxu0 %v78
    %v256 = vpop.f32.mrf.mxu0
    %v257 = vadd.f32 0.0, %v256
    %v258 = vpop.f32.mrf.mxu0
    %259 = vmatprep.mubr.f32.mxu0 0.0
    %260 = vmatmul.mubr.f32.gmra.mxu0 %v81
    %v261 = vpop.f32.mrf.mxu0
    %v262 = vadd.f32 0.0, %v261
    %v263 = vpop.f32.mrf.mxu0
    %264 = vmatprep.mubr.f32.mxu0 0.0
    %265 = vmatmul.mubr.f32.gmra.mxu0 %v84
    %v266 = vpop.f32.mrf.mxu0
    %v267 = vadd.f32 0.0, %v266
    %v268 = vpop.f32.mrf.mxu0
    %269 = vdwg.mxu0
    %v270 = vld [vmem:[%s3] sm:$0xf]
    %v271 = vlaneseq
    %v272 = vshrl.u32 %v271, 7
    %v273 = vsub.s32 3, %v272
    %v274 = vrot.slane %v270, %v273
    %v275 = vmul.f32 %v153, %v274
    %v276 = vmul.f32 %v158, %v274
    %v277 = vmul.f32 %v163, %v274
    %v278 = vmul.f32 %v168, %v274
    %v279 = vmul.f32 %v173, %v274
    %vm280 = vcmask 523264
    %281 = vst.msk [vmem:[#allocation2 + $0x3] sm:$0xff] %vm280, %v153
    %282 = vst.msk [vmem:[#allocation2 + $0xb] sm:$0xff] %vm280, %v158
    %283 = vst.msk [vmem:[#allocation2 + $0x13] sm:$0xff] %vm280, %v163
    %284 = vst.msk [vmem:[#allocation2 + $0x1b] sm:$0xff] %vm280, %v168
    %vm285 = vcmask 517120
    %286 = vst.msk [vmem:[#allocation2 + $0x23] sm:$0x3] %vm285, %v173
    %v287 = vld [vmem:[#allocation2 + $0x2] sm:$0xff]
    %v288 = vld [vmem:[#allocation2 + $0xa] sm:$0xff]
    %v289 = vld [vmem:[#allocation2 + $0x12] sm:$0xff]
    %v290 = vld [vmem:[#allocation2 + $0x1a] sm:$0xff]
    %v291 = vld [vmem:[#allocation2 + $0x22] sm:$0x3]
    %vm292 = vcmp.ge.s32.totalorder %v54, 17
    %vm293 = vcmp.ge.s32.totalorder %v55, 17
    %vm294 = vcmp.ge.s32.totalorder %v56, 17
    %vm295 = vcmp.ge.s32.totalorder %v57, 17
    %vm296 = vcmp.ge.s32.totalorder %v58, 17
    %vm297 = vcmp.lt.s32.totalorder %v54, 18
    %vm298 = vcmp.lt.s32.totalorder %v55, 18
    %vm299 = vcmp.lt.s32.totalorder %v56, 18
    %vm300 = vcmp.lt.s32.totalorder %v57, 18
    %vm301 = vcmp.lt.s32.totalorder %v58, 18
    %vm302 = vmand %vm292, %vm297
    %vm303 = vmand %vm293, %vm298
    %vm304 = vmand %vm294, %vm299
    %vm305 = vmand %vm295, %vm300
    %vm306 = vmand %vm296, %vm301
    %v307 = vsel %vm302, 1, 0
    %v308 = vsel %vm303, 1, 0
    %v309 = vsel %vm304, 1, 0
    %v310 = vsel %vm305, 1, 0
    %v311 = vsel %vm306, 1, 0
    %vm312 = vcmp.eq.s32.totalorder %v307, 1
    %vm313 = vcmp.eq.s32.totalorder %v308, 1
    %vm314 = vcmp.eq.s32.totalorder %v309, 1
    %vm315 = vcmp.eq.s32.totalorder %v310, 1
    %vm316 = vcmp.eq.s32.totalorder %v311, 1
    %v317 = vsel %vm312, 0.0, %v287
    %v318 = vsel %vm313, 0.0, %v288
    %v319 = vsel %vm314, 0.0, %v289
    %v320 = vsel %vm315, 0.0, %v290
    %v321 = vsel %vm316, 0.0, %v291
    %v322 = vlaneseq
    %v323 = vshrl.u32 %v322, 7
    %v324 = vsub.s32 2, %v323
    %v325 = vrot.slane %v270, %v324
    %v326 = vmul.f32 %v317, %v325
    %v327 = vmul.f32 %v318, %v325
    %v328 = vmul.f32 %v319, %v325
    %v329 = vmul.f32 %v320, %v325
    %v330 = vmul.f32 %v321, %v325
    %v331 = vadd.f32 %v275, %v326
    %v332 = vadd.f32 %v276, %v327
    %v333 = vadd.f32 %v277, %v328
    %v334 = vadd.f32 %v278, %v329
    %v335 = vadd.f32 %v279, %v330
    %v336 = vld [vmem:[#allocation2 + $0x1] sm:$0xff]
    %v337 = vld [vmem:[#allocation2 + $0x9] sm:$0xff]
    %v338 = vld [vmem:[#allocation2 + $0x11] sm:$0xff]
    %v339 = vld [vmem:[#allocation2 + $0x19] sm:$0xff]
    %v340 = vld [vmem:[#allocation2 + $0x21] sm:$0x3]
    %vm341 = vcmp.lt.s32.totalorder %v54, 19
    %vm342 = vcmp.lt.s32.totalorder %v55, 19
    %vm343 = vcmp.lt.s32.totalorder %v56, 19
    %vm344 = vcmp.lt.s32.totalorder %v57, 19
    %vm345 = vcmp.lt.s32.totalorder %v58, 19
    %vm346 = vmand %vm292, %vm341
    %vm347 = vmand %vm293, %vm342
    %vm348 = vmand %vm294, %vm343
    %vm349 = vmand %vm295, %vm344
    %vm350 = vmand %vm296, %vm345
    %v351 = vsel %vm346, 1, 0
    %v352 = vsel %vm347, 1, 0
    %v353 = vsel %vm348, 1, 0
    %v354 = vsel %vm349, 1, 0
    %v355 = vsel %vm350, 1, 0
    %vm356 = vcmp.eq.s32.totalorder %v351, 1
    %vm357 = vcmp.eq.s32.totalorder %v352, 1
    %vm358 = vcmp.eq.s32.totalorder %v353, 1
    %vm359 = vcmp.eq.s32.totalorder %v354, 1
    %vm360 = vcmp.eq.s32.totalorder %v355, 1
    %v361 = vsel %vm356, 0.0, %v336
    %v362 = vsel %vm357, 0.0, %v337
    %v363 = vsel %vm358, 0.0, %v338
    %v364 = vsel %vm359, 0.0, %v339
    %v365 = vsel %vm360, 0.0, %v340
    %v366 = vlaneseq
    %v367 = vshrl.u32 %v366, 7
    %v368 = vsub.s32 1, %v367
    %v369 = vrot.slane %v270, %v368
    %v370 = vmul.f32 %v361, %v369
    %v371 = vmul.f32 %v362, %v369
    %v372 = vmul.f32 %v363, %v369
    %v373 = vmul.f32 %v364, %v369
    %v374 = vmul.f32 %v365, %v369
    %v375 = vadd.f32 %v331, %v370
    %v376 = vadd.f32 %v332, %v371
    %v377 = vadd.f32 %v333, %v372
    %v378 = vadd.f32 %v334, %v373
    %v379 = vadd.f32 %v335, %v374
    %v380 = vld [vmem:[#allocation2] sm:$0xff]
    %v381 = vld [vmem:[#allocation2 + $0x8] sm:$0xff]
    %v382 = vld [vmem:[#allocation2 + $0x10] sm:$0xff]
    %v383 = vld [vmem:[#allocation2 + $0x18] sm:$0xff]
    %v384 = vld [vmem:[#allocation2 + $0x20] sm:$0x3]
    %vm385 = vcmp.lt.s32.totalorder %v54, 20
    %vm386 = vcmp.lt.s32.totalorder %v55, 20
    %vm387 = vcmp.lt.s32.totalorder %v56, 20
    %vm388 = vcmp.lt.s32.totalorder %v57, 20
    %vm389 = vcmp.lt.s32.totalorder %v58, 20
    %vm390 = vmand %vm292, %vm385
    %vm391 = vmand %vm293, %vm386
    %vm392 = vmand %vm294, %vm387
    %vm393 = vmand %vm295, %vm388
    %vm394 = vmand %vm296, %vm389
    %v395 = vsel %vm390, 1, 0
    %v396 = vsel %vm391, 1, 0
    %v397 = vsel %vm392, 1, 0
    %v398 = vsel %vm393, 1, 0
    %v399 = vsel %vm394, 1, 0
    %vm400 = vcmp.eq.s32.totalorder %v395, 1
    %vm401 = vcmp.eq.s32.totalorder %v396, 1
    %vm402 = vcmp.eq.s32.totalorder %v397, 1
    %vm403 = vcmp.eq.s32.totalorder %v398, 1
    %vm404 = vcmp.eq.s32.totalorder %v399, 1
    %v405 = vsel %vm400, 0.0, %v380
    %v406 = vsel %vm401, 0.0, %v381
    %v407 = vsel %vm402, 0.0, %v382
    %v408 = vsel %vm403, 0.0, %v383
    %v409 = vsel %vm404, 0.0, %v384
    %v410 = vlaneseq
    %v411 = vshrl.u32 %v410, 7
    %v412 = vsub.s32 0, %v411
    %v413 = vrot.slane %v270, %v412
    %v414 = vmul.f32 %v405, %v413
    %v415 = vmul.f32 %v406, %v413
    %v416 = vmul.f32 %v407, %v413
    %v417 = vmul.f32 %v408, %v413
    %v418 = vmul.f32 %v409, %v413
    %v419 = vadd.f32 %v375, %v414
    %v420 = vadd.f32 %v376, %v415
    %v421 = vadd.f32 %v377, %v416
    %v422 = vadd.f32 %v378, %v417
    %v423 = vadd.f32 %v379, %v418
    %v424 = vld [vmem:[%s4] sm:$0x1]
    %v426 = vlaneseq
    %v427 = vshrl.u32 %v426, 7
    %v428 = vsub.s32 0, %v427
    %v429 = vrot.slane %v424, %v428
    %v431 = vadd.f32 %v419, %v429
    %v432 = vadd.f32 %v420, %v429
    %v433 = vadd.f32 %v421, %v429
    %v434 = vadd.f32 %v422, %v429
    %v435 = vadd.f32 %v423, %v429
    %v436 = vsub.f32 0.0, %v431
    %v437 = vsub.f32 0.0, %v432
    %v438 = vsub.f32 0.0, %v433
    %v439 = vsub.f32 0.0, %v434
    %v440 = vsub.f32 0.0, %v435
    %v441 = vmul.f32 %v436, 1.442695
    %v442 = vpow.pop %v441
    %v443 = vmul.f32 %v437, 1.442695
    %v444 = vpow.pop %v443
    %v445 = vmul.f32 %v438, 1.442695
    %v446 = vpow.pop %v445
    %v447 = vmul.f32 %v439, 1.442695
    %v448 = vpow.pop %v447
    %v449 = vmul.f32 %v440, 1.442695
    %v450 = vpow.pop %v449
    %v451 = vadd.f32 %v442, 1.0
    %v452 = vadd.f32 %v444, 1.0
    %v453 = vadd.f32 %v446, 1.0
    %v454 = vadd.f32 %v448, 1.0
    %v455 = vadd.f32 %v450, 1.0
    %v456 = vrcp.pop %v451
    %v457 = vrcp.pop %v452
    %v458 = vrcp.pop %v453
    %v459 = vrcp.pop %v454
    %v460 = vrcp.pop %v455
    %v461 = vmul.f32 %v431, %v456
    %v462 = vmul.f32 %v432, %v457
    %v463 = vmul.f32 %v433, %v458
    %v464 = vmul.f32 %v434, %v459
    %v465 = vmul.f32 %v435, %v460
    %v466 = vld [vmem:[%s5] sm:$0xff]
    %v467 = vld [vmem:[%s5 + $0x8] sm:$0xff]
    %v468 = vld [vmem:[%s5 + $0x10] sm:$0xff]
    %v469 = vld [vmem:[%s5 + $0x18] sm:$0xff]
    %v470 = vld [vmem:[%s5 + $0x20] sm:$0xff]
    %v471 = vld [vmem:[%s5 + $0x28] sm:$0xff]
    %v472 = vld [vmem:[%s5 + $0x30] sm:$0xff]
    %v473 = vld [vmem:[%s5 + $0x38] sm:$0xff]
    %v475 = vsel %vm280, %v461, 0
    %v478 = vsel %vm280, %v462, 0
    %v481 = vsel %vm280, %v463, 0
    %v484 = vsel %vm280, %v464, 0
    %v487 = vsel %vm280, %v465, 0
    %489 = vmatprep.subr.mxu0 0.0
    %490 = vmatpush1.msra.mxu0 0.0
    %491 = vmatprep.subr.mxu0 0.0
    %492 = vmatpush1.msra.mxu0 0.0
    %493 = vmatprep.subr.mxu0 0.0
    %494 = vmatpush1.msra.mxu0 0.0
    %495 = vmatprep.subr.mxu0 0.0
    %496 = vmatpush1.msra.mxu0 0.0
    %497 = vmatprep.subr.mxu0 0.0
    %498 = vmatpush1.msra.mxu0 0.0
    %499 = vmatprep.subr.mxu0 0.0
    %500 = vmatpush1.msra.mxu0 0.0
    %501 = vmatprep.subr.mxu0 0.0
    %502 = vmatpush1.msra.mxu0 0.0
    %503 = vmatprep.subr.mxu0 0.0
    %504 = vmatpush1.msra.mxu0 0.0
    %505 = vmatprep.subr.mxu0 0.0
    %506 = vmatpush1.msra.mxu0 %v473
    %507 = vmatprep.subr.mxu0 0.0
    %508 = vmatpush1.msra.mxu0 %v472
    %509 = vmatprep.subr.mxu0 0.0
    %510 = vmatpush1.msra.mxu0 %v471
    %511 = vmatprep.subr.mxu0 0.0
    %512 = vmatpush1.msra.mxu0 %v470
    %513 = vmatprep.subr.mxu0 0.0
    %514 = vmatpush1.msra.mxu0 %v469
    %515 = vmatprep.subr.mxu0 0.0
    %516 = vmatpush1.msra.mxu0 %v468
    %517 = vmatprep.subr.mxu0 0.0
    %518 = vmatpush1.msra.mxu0 %v467
    %519 = vmatprep.subr.mxu0 0.0
    %520 = vmatpush1.msra.mxu0 %v466
    %521 = vmatprep.subr.mxu0 0.0
    %522 = vmatpush2.msra.mxu0 0.0
    %523 = vmatprep.subr.mxu0 0.0
    %524 = vmatpush2.msra.mxu0 0.0
    %525 = vmatprep.subr.mxu0 0.0
    %526 = vmatpush2.msra.mxu0 0.0
    %527 = vmatprep.subr.mxu0 0.0
    %528 = vmatpush2.msra.mxu0 0.0
    %529 = vmatprep.subr.mxu0 0.0
    %530 = vmatpush2.msra.mxu0 0.0
    %531 = vmatprep.subr.mxu0 0.0
    %532 = vmatpush2.msra.mxu0 0.0
    %533 = vmatprep.subr.mxu0 0.0
    %534 = vmatpush2.msra.mxu0 0.0
    %535 = vmatprep.subr.mxu0 0.0
    %536 = vmatpush2.msra.mxu0 0.0
    %537 = vmatprep.subr.mxu0 0.0
    %538 = vmatpush2.msra.mxu0 0.0
    %539 = vmatprep.subr.mxu0 0.0
    %540 = vmatpush2.msra.mxu0 0.0
    %541 = vmatprep.subr.mxu0 0.0
    %542 = vmatpush2.msra.mxu0 0.0
    %543 = vmatprep.subr.mxu0 0.0
    %544 = vmatpush2.msra.mxu0 0.0
    %545 = vmatprep.subr.mxu0 0.0
    %546 = vmatpush2.msra.mxu0 0.0
    %547 = vmatprep.subr.mxu0 0.0
    %548 = vmatpush2.msra.mxu0 0.0
    %549 = vmatprep.subr.mxu0 0.0
    %550 = vmatpush2.msra.mxu0 0.0
    %551 = vmatprep.subr.mxu0 0.0
    %552 = vmatpush2.msra.mxu0 0.0
    %553 = vmatprep.mubr.f32.mxu0 0.0
    %554 = vmatmul.mubr.f32.gmra.mxu0 %v475
    %v555 = vpop.f32.mrf.mxu0
    %v556 = vadd.f32 0.0, %v555
    %v557 = vpop.f32.mrf.mxu0
    %558 = vmatprep.mubr.f32.mxu0 0.0
    %559 = vmatmul.mubr.f32.gmra.mxu0 %v478
    %v560 = vpop.f32.mrf.mxu0
    %v561 = vadd.f32 0.0, %v560
    %v562 = vpop.f32.mrf.mxu0
    %563 = vmatprep.mubr.f32.mxu0 0.0
    %564 = vmatmul.mubr.f32.gmra.mxu0 %v481
    %v565 = vpop.f32.mrf.mxu0
    %v566 = vadd.f32 0.0, %v565
    %v567 = vpop.f32.mrf.mxu0
    %568 = vmatprep.mubr.f32.mxu0 0.0
    %569 = vmatmul.mubr.f32.gmra.mxu0 %v484
    %v570 = vpop.f32.mrf.mxu0
    %v571 = vadd.f32 0.0, %v570
    %v572 = vpop.f32.mrf.mxu0
    %573 = vmatprep.mubr.f32.mxu0 0.0
    %574 = vmatmul.mubr.f32.gmra.mxu0 %v487
    %v575 = vpop.f32.mrf.mxu0
    %v576 = vadd.f32 0.0, %v575
    %v577 = vpop.f32.mrf.mxu0
    %578 = vdwg.mxu0
    %v579 = vld [vmem:[%s8] sm:$0x3]
    %v580 = vld [vmem:[%s9] sm:$0x1]
    %v582 = vlaneseq
    %v583 = vshrl.u32 %v582, 7
    %v584 = vsub.s32 0, %v583
    %v585 = vrot.slane %v580, %v584
    %vm587 = vcmask 15360
    %v589 = vsel %vm587, %v556, 0
    %v592 = vsel %vm587, %v561, 0
    %v595 = vsel %vm587, %v566, 0
    %v598 = vsel %vm587, %v571, 0
    %v601 = vsel %vm587, %v576, 0
    %vm603 = vcmask 1041408
    %v605 = vsel %vm603, %v579, 0
    %607 = vmatprep.subr.mxu0 0.0
    %608 = vmatpush1.msra.mxu0 0.0
    %609 = vmatprep.subr.mxu0 0.0
    %610 = vmatpush1.msra.mxu0 0.0
    %611 = vmatprep.subr.mxu0 0.0
    %612 = vmatpush1.msra.mxu0 0.0
    %613 = vmatprep.subr.mxu0 0.0
    %614 = vmatpush1.msra.mxu0 0.0
    %615 = vmatprep.subr.mxu0 0.0
    %616 = vmatpush1.msra.mxu0 0.0
    %617 = vmatprep.subr.mxu0 0.0
    %618 = vmatpush1.msra.mxu0 0.0
    %619 = vmatprep.subr.mxu0 0.0
    %620 = vmatpush1.msra.mxu0 0.0
    %621 = vmatprep.subr.mxu0 0.0
    %622 = vmatpush1.msra.mxu0 0.0
    %623 = vmatprep.subr.mxu0 0.0
    %624 = vmatpush1.msra.mxu0 0.0
    %625 = vmatprep.subr.mxu0 0.0
    %626 = vmatpush1.msra.mxu0 0.0
    %627 = vmatprep.subr.mxu0 0.0
    %628 = vmatpush1.msra.mxu0 0.0
    %629 = vmatprep.subr.mxu0 0.0
    %630 = vmatpush1.msra.mxu0 0.0
    %631 = vmatprep.subr.mxu0 0.0
    %632 = vmatpush1.msra.mxu0 0.0
    %633 = vmatprep.subr.mxu0 0.0
    %634 = vmatpush1.msra.mxu0 0.0
    %635 = vmatprep.subr.mxu0 0.0
    %636 = vmatpush1.msra.mxu0 0.0
    %637 = vmatprep.subr.mxu0 0.0
    %638 = vmatpush1.msra.mxu0 %v605
    %639 = vmatprep.subr.mxu0 0.0
    %640 = vmatpush2.msra.mxu0 0.0
    %641 = vmatprep.subr.mxu0 0.0
    %642 = vmatpush2.msra.mxu0 0.0
    %643 = vmatprep.subr.mxu0 0.0
    %644 = vmatpush2.msra.mxu0 0.0
    %645 = vmatprep.subr.mxu0 0.0
    %646 = vmatpush2.msra.mxu0 0.0
    %647 = vmatprep.subr.mxu0 0.0
    %648 = vmatpush2.msra.mxu0 0.0
    %649 = vmatprep.subr.mxu0 0.0
    %650 = vmatpush2.msra.mxu0 0.0
    %651 = vmatprep.subr.mxu0 0.0
    %652 = vmatpush2.msra.mxu0 0.0
    %653 = vmatprep.subr.mxu0 0.0
    %654 = vmatpush2.msra.mxu0 0.0
    %655 = vmatprep.subr.mxu0 0.0
    %656 = vmatpush2.msra.mxu0 0.0
    %657 = vmatprep.subr.mxu0 0.0
    %658 = vmatpush2.msra.mxu0 0.0
    %659 = vmatprep.subr.mxu0 0.0
    %660 = vmatpush2.msra.mxu0 0.0
    %661 = vmatprep.subr.mxu0 0.0
    %662 = vmatpush2.msra.mxu0 0.0
    %663 = vmatprep.subr.mxu0 0.0
    %664 = vmatpush2.msra.mxu0 0.0
    %665 = vmatprep.subr.mxu0 0.0
    %666 = vmatpush2.msra.mxu0 0.0
    %667 = vmatprep.subr.mxu0 0.0
    %668 = vmatpush2.msra.mxu0 0.0
    %669 = vmatprep.subr.mxu0 0.0
    %670 = vmatpush2.msra.mxu0 0.0
    %671 = vmatprep.mubr.f32.mxu0 0.0
    %672 = vmatmul.mubr.f32.gmra.mxu0 %v589
    %v673 = vpop.f32.mrf.mxu0
    %v674 = vadd.f32 %v585, %v673
    %v675 = vpop.f32.mrf.mxu0
    %676 = vmatprep.mubr.f32.mxu0 0.0
    %677 = vmatmul.mubr.f32.gmra.mxu0 %v592
    %v678 = vpop.f32.mrf.mxu0
    %v679 = vadd.f32 %v585, %v678
    %v680 = vpop.f32.mrf.mxu0
    %681 = vmatprep.mubr.f32.mxu0 0.0
    %682 = vmatmul.mubr.f32.gmra.mxu0 %v595
    %v683 = vpop.f32.mrf.mxu0
    %v684 = vadd.f32 %v585, %v683
    %v685 = vpop.f32.mrf.mxu0
    %686 = vmatprep.mubr.f32.mxu0 0.0
    %687 = vmatmul.mubr.f32.gmra.mxu0 %v598
    %v688 = vpop.f32.mrf.mxu0
    %v689 = vadd.f32 %v585, %v688
    %v690 = vpop.f32.mrf.mxu0
    %691 = vmatprep.mubr.f32.mxu0 0.0
    %692 = vmatmul.mubr.f32.gmra.mxu0 %v601
    %v693 = vpop.f32.mrf.mxu0
    %v694 = vadd.f32 %v585, %v693
    %v695 = vpop.f32.mrf.mxu0
    %696 = vdwg.mxu0
    %v697 = vmax.f32 %v674, 0.0
    %v698 = vmax.f32 %v679, 0.0
    %v699 = vmax.f32 %v684, 0.0
    %v700 = vmax.f32 %v689, 0.0
    %v701 = vmax.f32 %v694, 0.0
    %v702 = vand.u32 2147483647, %v674
    %v703 = vand.u32 2147483647, %v679
    %v704 = vand.u32 2147483647, %v684
    %v705 = vand.u32 2147483647, %v689
    %v706 = vand.u32 2147483647, %v694
    %v707 = vsub.f32 0.0, %v702
    %v708 = vsub.f32 0.0, %v703
    %v709 = vsub.f32 0.0, %v704
    %v710 = vsub.f32 0.0, %v705
    %v711 = vsub.f32 0.0, %v706
    %v712 = vmul.f32 %v707, 1.442695
    %v713 = vpow.pop %v712
    %v714 = vmul.f32 %v708, 1.442695
    %v715 = vpow.pop %v714
    %v716 = vmul.f32 %v709, 1.442695
    %v717 = vpow.pop %v716
    %v718 = vmul.f32 %v710, 1.442695
    %v719 = vpow.pop %v718
    %v720 = vmul.f32 %v711, 1.442695
    %v721 = vpow.pop %v720
    %v722 = vadd.f32 %v713, 1.0
    %v723 = vadd.f32 %v715, 1.0
    %v724 = vadd.f32 %v717, 1.0
    %v725 = vadd.f32 %v719, 1.0
    %v726 = vadd.f32 %v721, 1.0
    %v727 = vlog2.pop %v722
    %v728 = vmul.f32 %v727, 0.6931472
    %v729 = vlog2.pop %v723
    %v730 = vmul.f32 %v729, 0.6931472
    %v731 = vlog2.pop %v724
    %v732 = vmul.f32 %v731, 0.6931472
    %v733 = vlog2.pop %v725
    %v734 = vmul.f32 %v733, 0.6931472
    %v735 = vlog2.pop %v726
    %v736 = vmul.f32 %v735, 0.6931472
    %v737 = vadd.f32 %v697, %v728
    %v738 = vadd.f32 %v698, %v730
    %v739 = vadd.f32 %v699, %v732
    %v740 = vadd.f32 %v700, %v734
    %v741 = vadd.f32 %v701, %v736
    %v742 = vmul.f32 %v737, %v461
    %v743 = vmul.f32 %v738, %v462
    %v744 = vmul.f32 %v739, %v463
    %v745 = vmul.f32 %v740, %v464
    %v746 = vmul.f32 %v741, %v465
    %v747 = vld [vmem:[%s6] sm:$0xff]
    %v748 = vld [vmem:[%s6 + $0x8] sm:$0xff]
    %v750 = vsel %vm280, %v747, 0
    %v753 = vsel %vm280, %v748, 0
    %755 = vmatprep.subr.mxu0 0.0
    %756 = vmatpush1.xpose.msra.mxu0 0.0
    %757 = vmatprep.subr.mxu0 0.0
    %758 = vmatpush1.xpose.msra.mxu0 0.0
    %759 = vmatprep.subr.mxu0 0.0
    %760 = vmatpush1.xpose.msra.mxu0 0.0
    %761 = vmatprep.subr.mxu0 0.0
    %762 = vmatpush1.xpose.msra.mxu0 0.0
    %763 = vmatprep.subr.mxu0 0.0
    %764 = vmatpush1.xpose.msra.mxu0 0.0
    %765 = vmatprep.subr.mxu0 0.0
    %766 = vmatpush1.xpose.msra.mxu0 0.0
    %767 = vmatprep.subr.mxu0 0.0
    %768 = vmatpush1.xpose.msra.mxu0 0.0
    %769 = vmatprep.subr.mxu0 0.0
    %770 = vmatpush1.xpose.msra.mxu0 0.0
    %771 = vmatprep.subr.mxu0 0.0
    %772 = vmatpush1.xpose.msra.mxu0 0.0
    %773 = vmatprep.subr.mxu0 0.0
    %774 = vmatpush1.xpose.msra.mxu0 0.0
    %775 = vmatprep.subr.mxu0 0.0
    %776 = vmatpush1.xpose.msra.mxu0 0.0
    %777 = vmatprep.subr.mxu0 0.0
    %778 = vmatpush1.xpose.msra.mxu0 %v487
    %779 = vmatprep.subr.mxu0 0.0
    %780 = vmatpush1.xpose.msra.mxu0 %v484
    %781 = vmatprep.subr.mxu0 0.0
    %782 = vmatpush1.xpose.msra.mxu0 %v481
    %783 = vmatprep.subr.mxu0 0.0
    %784 = vmatpush1.xpose.msra.mxu0 %v478
    %785 = vmatprep.subr.mxu0 0.0
    %786 = vmatpush1.xpose.msra.mxu0 %v475
    %787 = vmatprep.subr.mxu0 0.0
    %788 = vmatpush2.xpose.msra.mxu0 0.0
    %789 = vmatprep.subr.mxu0 0.0
    %790 = vmatpush2.xpose.msra.mxu0 0.0
    %791 = vmatprep.subr.mxu0 0.0
    %792 = vmatpush2.xpose.msra.mxu0 0.0
    %793 = vmatprep.subr.mxu0 0.0
    %794 = vmatpush2.xpose.msra.mxu0 0.0
    %795 = vmatprep.subr.mxu0 0.0
    %796 = vmatpush2.xpose.msra.mxu0 0.0
    %797 = vmatprep.subr.mxu0 0.0
    %798 = vmatpush2.xpose.msra.mxu0 0.0
    %799 = vmatprep.subr.mxu0 0.0
    %800 = vmatpush2.xpose.msra.mxu0 0.0
    %801 = vmatprep.subr.mxu0 0.0
    %802 = vmatpush2.xpose.msra.mxu0 0.0
    %803 = vmatprep.subr.mxu0 0.0
    %804 = vmatpush2.xpose.msra.mxu0 0.0
    %805 = vmatprep.subr.mxu0 0.0
    %806 = vmatpush2.xpose.msra.mxu0 0.0
    %807 = vmatprep.subr.mxu0 0.0
    %808 = vmatpush2.xpose.msra.mxu0 0.0
    %809 = vmatprep.subr.mxu0 0.0
    %810 = vmatpush2.xpose.msra.mxu0 0.0
    %811 = vmatprep.subr.mxu0 0.0
    %812 = vmatpush2.xpose.msra.mxu0 0.0
    %813 = vmatprep.subr.mxu0 0.0
    %814 = vmatpush2.xpose.msra.mxu0 0.0
    %815 = vmatprep.subr.mxu0 0.0
    %816 = vmatpush2.xpose.msra.mxu0 0.0
    %817 = vmatprep.subr.mxu0 0.0
    %818 = vmatpush2.xpose.msra.mxu0 0.0
    %819 = vmatprep.mubr.f32.mxu0 0.0
    %820 = vmatmul.mubr.f32.gmra.mxu0 %v750
    %v821 = vpop.f32.mrf.mxu0
    %v822 = vadd.f32 0.0, %v821
    %v823 = vpop.f32.mrf.mxu0
    %824 = vmatprep.mubr.f32.mxu0 0.0
    %825 = vmatmul.mubr.f32.gmra.mxu0 %v753
    %v826 = vpop.f32.mrf.mxu0
    %v827 = vadd.f32 0.0, %v826
    %v828 = vpop.f32.mrf.mxu0
    %829 = vdwg.mxu0
    %v830 = vld [vmem:[%s7] sm:$0xff]
    %v831 = vld [vmem:[%s7 + $0x8] sm:$0xff]
    %v833 = vsel %vm280, %v830, 0
    %v836 = vsel %vm280, %v831, 0
    %838 = vmatprep.subr.mxu0 0.0
    %839 = vmatpush1.xpose.msra.mxu0 0.0
    %840 = vmatprep.subr.mxu0 0.0
    %841 = vmatpush1.xpose.msra.mxu0 0.0
    %842 = vmatprep.subr.mxu0 0.0
    %843 = vmatpush1.xpose.msra.mxu0 0.0
    %844 = vmatprep.subr.mxu0 0.0
    %845 = vmatpush1.xpose.msra.mxu0 0.0
    %846 = vmatprep.subr.mxu0 0.0
    %847 = vmatpush1.xpose.msra.mxu0 0.0
    %848 = vmatprep.subr.mxu0 0.0
    %849 = vmatpush1.xpose.msra.mxu0 0.0
    %850 = vmatprep.subr.mxu0 0.0
    %851 = vmatpush1.xpose.msra.mxu0 0.0
    %852 = vmatprep.subr.mxu0 0.0
    %853 = vmatpush1.xpose.msra.mxu0 0.0
    %854 = vmatprep.subr.mxu0 0.0
    %855 = vmatpush1.xpose.msra.mxu0 0.0
    %856 = vmatprep.subr.mxu0 0.0
    %857 = vmatpush1.xpose.msra.mxu0 0.0
    %858 = vmatprep.subr.mxu0 0.0
    %859 = vmatpush1.xpose.msra.mxu0 0.0
    %860 = vmatprep.subr.mxu0 0.0
    %861 = vmatpush1.xpose.msra.mxu0 %v487
    %862 = vmatprep.subr.mxu0 0.0
    %863 = vmatpush1.xpose.msra.mxu0 %v484
    %864 = vmatprep.subr.mxu0 0.0
    %865 = vmatpush1.xpose.msra.mxu0 %v481
    %866 = vmatprep.subr.mxu0 0.0
    %867 = vmatpush1.xpose.msra.mxu0 %v478
    %868 = vmatprep.subr.mxu0 0.0
    %869 = vmatpush1.xpose.msra.mxu0 %v475
    %870 = vmatprep.subr.mxu0 0.0
    %871 = vmatpush2.xpose.msra.mxu0 0.0
    %872 = vmatprep.subr.mxu0 0.0
    %873 = vmatpush2.xpose.msra.mxu0 0.0
    %874 = vmatprep.subr.mxu0 0.0
    %875 = vmatpush2.xpose.msra.mxu0 0.0
    %876 = vmatprep.subr.mxu0 0.0
    %877 = vmatpush2.xpose.msra.mxu0 0.0
    %878 = vmatprep.subr.mxu0 0.0
    %879 = vmatpush2.xpose.msra.mxu0 0.0
    %880 = vmatprep.subr.mxu0 0.0
    %881 = vmatpush2.xpose.msra.mxu0 0.0
    %882 = vmatprep.subr.mxu0 0.0
    %883 = vmatpush2.xpose.msra.mxu0 0.0
    %884 = vmatprep.subr.mxu0 0.0
    %885 = vmatpush2.xpose.msra.mxu0 0.0
    %886 = vmatprep.subr.mxu0 0.0
    %887 = vmatpush2.xpose.msra.mxu0 0.0
    %888 = vmatprep.subr.mxu0 0.0
    %889 = vmatpush2.xpose.msra.mxu0 0.0
    %890 = vmatprep.subr.mxu0 0.0
    %891 = vmatpush2.xpose.msra.mxu0 0.0
    %892 = vmatprep.subr.mxu0 0.0
    %893 = vmatpush2.xpose.msra.mxu0 0.0
    %894 = vmatprep.subr.mxu0 0.0
    %895 = vmatpush2.xpose.msra.mxu0 0.0
    %896 = vmatprep.subr.mxu0 0.0
    %897 = vmatpush2.xpose.msra.mxu0 0.0
    %898 = vmatprep.subr.mxu0 0.0
    %899 = vmatpush2.xpose.msra.mxu0 0.0
    %900 = vmatprep.subr.mxu0 0.0
    %901 = vmatpush2.xpose.msra.mxu0 0.0
    %902 = vmatprep.mubr.f32.mxu0 0.0
    %903 = vmatmul.mubr.f32.gmra.mxu0 %v833
    %v904 = vpop.f32.mrf.mxu0
    %v905 = vadd.f32 0.0, %v904
    %v906 = vpop.f32.mrf.mxu0
    %907 = vmatprep.mubr.f32.mxu0 0.0
    %908 = vmatmul.mubr.f32.gmra.mxu0 %v836
    %v909 = vpop.f32.mrf.mxu0
    %v910 = vadd.f32 0.0, %v909
    %v911 = vpop.f32.mrf.mxu0
    %912 = vdwg.mxu0
    %v913 = vld [vmem:[%s10] sm:$0xff]
    %v914 = vld [vmem:[%s10 + $0x8] sm:$0xff]
    %v915 = vlaneseq
    %v916 = vshrl.u32 %v915, 7
    %v917 = vsub.s32 0, %v916
    %v918 = vrot.slane %v737, %v917
    %v919 = vmul.f32 %v918, %v913
    %v920 = vmul.f32 %v918, %v914
    %v921 = vmul.f32 %v919, 1.442695
    %v922 = vpow.pop %v921
    %v923 = vmul.f32 %v920, 1.442695
    %v924 = vpow.pop %v923
    %926 = vset.pattern.permute.xlu0 0
    %927 = vperm.xlu0 %926, %v822
    %v928 = vpop.permute.xlu0 %927
    %931 = vset.pattern.permute.xlu0 0
    %932 = vperm.xlu0 %931, %v827
    %v933 = vpop.permute.xlu0 %932
    %v935 = vlaneseq
    %v936 = vshrl.u32 %v935, 7
    %v937 = vsub.s32 0, %v936
    %v938 = vrot.slane %v742, %v937
    %v939 = vmul.f32 %v928, %v938
    %v940 = vmul.f32 %v933, %v938
    %v941 = vmul.f32 %v922, 0.0
    %v942 = vmul.f32 %v924, 0.0
    %v943 = vadd.f32 %v941, %v939
    %v944 = vadd.f32 %v942, %v940
    %946 = vset.pattern.permute.xlu0 0
    %947 = vperm.xlu0 %946, %v905
    %v948 = vpop.permute.xlu0 %947
    %951 = vset.pattern.permute.xlu0 0
    %952 = vperm.xlu0 %951, %v910
    %v953 = vpop.permute.xlu0 %952
    %v955 = vmul.f32 %v948, %v943
    %v956 = vmul.f32 %v953, %v944
    %v957 = vsel %vm280, %v955, 0.0
    %v958 = vsel %vm280, %v956, 0.0
    %v959 = vadd.f32 %v957, %v958
    %v960 = vrot.slane %v959, 4
    %v961 = vadd.f32 %v959, %v960
    %v962 = vrot.slane %v961, 2
    %v963 = vadd.f32 %v961, %v962
    %v964 = vrot.slane %v963, 1
    %v965 = vadd.f32 %v963, %v964
    %vm966 = vcmp.eq.s32.totalorder %v54, 0
    %vm967 = vcmp.eq.s32.totalorder %v55, 0
    %vm968 = vcmp.eq.s32.totalorder %v56, 0
    %vm969 = vcmp.eq.s32.totalorder %v57, 0
    %vm970 = vcmp.eq.s32.totalorder %v58, 0
    %v971 = vsel %vm966, 1, 0
    %v972 = vsel %vm967, 1, 0
    %v973 = vsel %vm968, 1, 0
    %v974 = vsel %vm969, 1, 0
    %v975 = vsel %vm970, 1, 0
    %vm976 = vcmp.eq.s32.totalorder %v971, 1
    %vm977 = vcmp.eq.s32.totalorder %v972, 1
    %vm978 = vcmp.eq.s32.totalorder %v973, 1
    %vm979 = vcmp.eq.s32.totalorder %v974, 1
    %vm980 = vcmp.eq.s32.totalorder %v975, 1
    %v981 = vsel %vm976, %v965, 0.0
    %v982 = vsel %vm977, %v965, 0.0
    %v983 = vsel %vm978, %v965, 0.0
    %v984 = vsel %vm979, %v965, 0.0
    %v985 = vsel %vm980, %v965, 0.0
    %v986 = vadd.f32 %v981, 0.0
    %v987 = vadd.f32 %v982, 0.0
    %v988 = vadd.f32 %v983, 0.0
    %v989 = vadd.f32 %v984, 0.0
    %v990 = vadd.f32 %v985, 0.0
    %v991 = vlaneseq
    %v992 = vshrl.u32 %v991, 7
    %v993 = vsub.s32 1, %v992
    %v994 = vrot.slane %v737, %v993
    %v995 = vmul.f32 %v994, %v913
    %v996 = vmul.f32 %v994, %v914
    %v997 = vmul.f32 %v995, 1.442695
    %v998 = vpow.pop %v997
    %v999 = vmul.f32 %v996, 1.442695
    %v1000 = vpow.pop %v999
    %1001 = vset.pattern.permute.xlu0 1
    %1002 = vperm.xlu0 %1001, %v822
    %v1003 = vpop.permute.xlu0 %1002
    %1005 = vset.pattern.permute.xlu0 1
    %1006 = vperm.xlu0 %1005, %v827
    %v1007 = vpop.permute.xlu0 %1006
    %v1009 = vlaneseq
    %v1010 = vshrl.u32 %v1009, 7
    %v1011 = vsub.s32 1, %v1010
    %v1012 = vrot.slane %v742, %v1011
    %v1013 = vmul.f32 %v1003, %v1012
    %v1014 = vmul.f32 %v1007, %v1012
    %v1015 = vmul.f32 %v998, %v943
    %v1016 = vmul.f32 %v1000, %v944
    %v1017 = vadd.f32 %v1015, %v1013
    %v1018 = vadd.f32 %v1016, %v1014
    %1019 = vset.pattern.permute.xlu0 1
    %1020 = vperm.xlu0 %1019, %v905
    %v1021 = vpop.permute.xlu0 %1020
    %1023 = vset.pattern.permute.xlu0 1
    %1024 = vperm.xlu0 %1023, %v910
    %v1025 = vpop.permute.xlu0 %1024
    %v1027 = vmul.f32 %v1021, %v1017
    %v1028 = vmul.f32 %v1025, %v1018
    %v1029 = vsel %vm280, %v1027, 0.0
    %v1030 = vsel %vm280, %v1028, 0.0
    %v1031 = vadd.f32 %v1029, %v1030
    %v1032 = vrot.slane %v1031, 4
    %v1033 = vadd.f32 %v1031, %v1032
    %v1034 = vrot.slane %v1033, 2
    %v1035 = vadd.f32 %v1033, %v1034
    %v1036 = vrot.slane %v1035, 1
    %v1037 = vadd.f32 %v1035, %v1036
    %vm1038 = vcmp.eq.s32.totalorder %v54, 1
    %vm1039 = vcmp.eq.s32.totalorder %v55, 1
    %vm1040 = vcmp.eq.s32.totalorder %v56, 1
    %vm1041 = vcmp.eq.s32.totalorder %v57, 1
    %vm1042 = vcmp.eq.s32.totalorder %v58, 1
    %v1043 = vsel %vm1038, 1, 0
    %v1044 = vsel %vm1039, 1, 0
    %v1045 = vsel %vm1040, 1, 0
    %v1046 = vsel %vm1041, 1, 0
    %v1047 = vsel %vm1042, 1, 0
    %vm1048 = vcmp.eq.s32.totalorder %v1043, 1
    %vm1049 = vcmp.eq.s32.totalorder %v1044, 1
    %vm1050 = vcmp.eq.s32.totalorder %v1045, 1
    %vm1051 = vcmp.eq.s32.totalorder %v1046, 1
    %vm1052 = vcmp.eq.s32.totalorder %v1047, 1
    %v1053 = vsel %vm1048, %v1037, 0.0
    %v1054 = vsel %vm1049, %v1037, 0.0
    %v1055 = vsel %vm1050, %v1037, 0.0
    %v1056 = vsel %vm1051, %v1037, 0.0
    %v1057 = vsel %vm1052, %v1037, 0.0
    %v1058 = vadd.f32 %v986, %v1053
    %v1059 = vadd.f32 %v987, %v1054
    %v1060 = vadd.f32 %v988, %v1055
    %v1061 = vadd.f32 %v989, %v1056
    %v1062 = vadd.f32 %v990, %v1057
    %v1063 = vlaneseq
    %v1064 = vshrl.u32 %v1063, 7
    %v1065 = vsub.s32 2, %v1064
    %v1066 = vrot.slane %v737, %v1065
    %v1067 = vmul.f32 %v1066, %v913
    %v1068 = vmul.f32 %v1066, %v914
    %v1069 = vmul.f32 %v1067, 1.442695
    %v1070 = vpow.pop %v1069
    %v1071 = vmul.f32 %v1068, 1.442695
    %v1072 = vpow.pop %v1071
    %1073 = vset.pattern.permute.xlu0 2
    %1074 = vperm.xlu0 %1073, %v822
    %v1075 = vpop.permute.xlu0 %1074
    %1077 = vset.pattern.permute.xlu0 2
    %1078 = vperm.xlu0 %1077, %v827
    %v1079 = vpop.permute.xlu0 %1078
    %v1081 = vlaneseq
    %v1082 = vshrl.u32 %v1081, 7
    %v1083 = vsub.s32 2, %v1082
    %v1084 = vrot.slane %v742, %v1083
    %v1085 = vmul.f32 %v1075, %v1084
    %v1086 = vmul.f32 %v1079, %v1084
    %v1087 = vmul.f32 %v1070, %v1017
    %v1088 = vmul.f32 %v1072, %v1018
    %v1089 = vadd.f32 %v1087, %v1085
    %v1090 = vadd.f32 %v1088, %v1086
    %1091 = vset.pattern.permute.xlu0 2
    %1092 = vperm.xlu0 %1091, %v905
    %v1093 = vpop.permute.xlu0 %1092
    %1095 = vset.pattern.permute.xlu0 2
    %1096 = vperm.xlu0 %1095, %v910
    %v1097 = vpop.permute.xlu0 %1096
    %v1099 = vmul.f32 %v1093, %v1089
    %v1100 = vmul.f32 %v1097, %v1090
    %v1101 = vsel %vm280, %v1099, 0.0
    %v1102 = vsel %vm280, %v1100, 0.0
    %v1103 = vadd.f32 %v1101, %v1102
    %v1104 = vrot.slane %v1103, 4
    %v1105 = vadd.f32 %v1103, %v1104
    %v1106 = vrot.slane %v1105, 2
    %v1107 = vadd.f32 %v1105, %v1106
    %v1108 = vrot.slane %v1107, 1
    %v1109 = vadd.f32 %v1107, %v1108
    %vm1110 = vcmp.eq.s32.totalorder %v54, 2
    %vm1111 = vcmp.eq.s32.totalorder %v55, 2
    %vm1112 = vcmp.eq.s32.totalorder %v56, 2
    %vm1113 = vcmp.eq.s32.totalorder %v57, 2
    %vm1114 = vcmp.eq.s32.totalorder %v58, 2
    %v1115 = vsel %vm1110, 1, 0
    %v1116 = vsel %vm1111, 1, 0
    %v1117 = vsel %vm1112, 1, 0
    %v1118 = vsel %vm1113, 1, 0
    %v1119 = vsel %vm1114, 1, 0
    %vm1120 = vcmp.eq.s32.totalorder %v1115, 1
    %vm1121 = vcmp.eq.s32.totalorder %v1116, 1
    %vm1122 = vcmp.eq.s32.totalorder %v1117, 1
    %vm1123 = vcmp.eq.s32.totalorder %v1118, 1
    %vm1124 = vcmp.eq.s32.totalorder %v1119, 1
    %v1125 = vsel %vm1120, %v1109, 0.0
    %v1126 = vsel %vm1121, %v1109, 0.0
    %v1127 = vsel %vm1122, %v1109, 0.0
    %v1128 = vsel %vm1123, %v1109, 0.0
    %v1129 = vsel %vm1124, %v1109, 0.0
    %v1130 = vadd.f32 %v1058, %v1125
    %v1131 = vadd.f32 %v1059, %v1126
    %v1132 = vadd.f32 %v1060, %v1127
    %v1133 = vadd.f32 %v1061, %v1128
    %v1134 = vadd.f32 %v1062, %v1129
    %v1135 = vlaneseq
    %v1136 = vshrl.u32 %v1135, 7
    %v1137 = vsub.s32 3, %v1136
    %v1138 = vrot.slane %v737, %v1137
    %v1139 = vmul.f32 %v1138, %v913
    %v1140 = vmul.f32 %v1138, %v914
    %v1141 = vmul.f32 %v1139, 1.442695
    %v1142 = vpow.pop %v1141
    %v1143 = vmul.f32 %v1140, 1.442695
    %v1144 = vpow.pop %v1143
    %1145 = vset.pattern.permute.xlu0 3
    %1146 = vperm.xlu0 %1145, %v822
    %v1147 = vpop.permute.xlu0 %1146
    %1149 = vset.pattern.permute.xlu0 3
    %1150 = vperm.xlu0 %1149, %v827
    %v1151 = vpop.permute.xlu0 %1150
    %v1153 = vlaneseq
    %v1154 = vshrl.u32 %v1153, 7
    %v1155 = vsub.s32 3, %v1154
    %v1156 = vrot.slane %v742, %v1155
    %v1157 = vmul.f32 %v1147, %v1156
    %v1158 = vmul.f32 %v1151, %v1156
    %v1159 = vmul.f32 %v1142, %v1089
    %v1160 = vmul.f32 %v1144, %v1090
    %v1161 = vadd.f32 %v1159, %v1157
    %v1162 = vadd.f32 %v1160, %v1158
    %1163 = vset.pattern.permute.xlu0 3
    %1164 = vperm.xlu0 %1163, %v905
    %v1165 = vpop.permute.xlu0 %1164
    %1167 = vset.pattern.permute.xlu0 3
    %1168 = vperm.xlu0 %1167, %v910
    %v1169 = vpop.permute.xlu0 %1168
    %v1171 = vmul.f32 %v1165, %v1161
    %v1172 = vmul.f32 %v1169, %v1162
    %v1173 = vsel %vm280, %v1171, 0.0
    %v1174 = vsel %vm280, %v1172, 0.0
    %v1175 = vadd.f32 %v1173, %v1174
    %v1176 = vrot.slane %v1175, 4
    %v1177 = vadd.f32 %v1175, %v1176
    %v1178 = vrot.slane %v1177, 2
    %v1179 = vadd.f32 %v1177, %v1178
    %v1180 = vrot.slane %v1179, 1
    %v1181 = vadd.f32 %v1179, %v1180
    %vm1182 = vcmp.eq.s32.totalorder %v54, 3
    %vm1183 = vcmp.eq.s32.totalorder %v55, 3
    %vm1184 = vcmp.eq.s32.totalorder %v56, 3
    %vm1185 = vcmp.eq.s32.totalorder %v57, 3
    %vm1186 = vcmp.eq.s32.totalorder %v58, 3
    %v1187 = vsel %vm1182, 1, 0
    %v1188 = vsel %vm1183, 1, 0
    %v1189 = vsel %vm1184, 1, 0
    %v1190 = vsel %vm1185, 1, 0
    %v1191 = vsel %vm1186, 1, 0
    %vm1192 = vcmp.eq.s32.totalorder %v1187, 1
    %vm1193 = vcmp.eq.s32.totalorder %v1188, 1
    %vm1194 = vcmp.eq.s32.totalorder %v1189, 1
    %vm1195 = vcmp.eq.s32.totalorder %v1190, 1
    %vm1196 = vcmp.eq.s32.totalorder %v1191, 1
    %v1197 = vsel %vm1192, %v1181, 0.0
    %v1198 = vsel %vm1193, %v1181, 0.0
    %v1199 = vsel %vm1194, %v1181, 0.0
    %v1200 = vsel %vm1195, %v1181, 0.0
    %v1201 = vsel %vm1196, %v1181, 0.0
    %v1202 = vadd.f32 %v1130, %v1197
    %v1203 = vadd.f32 %v1131, %v1198
    %v1204 = vadd.f32 %v1132, %v1199
    %v1205 = vadd.f32 %v1133, %v1200
    %v1206 = vadd.f32 %v1134, %v1201
    %v1207 = vlaneseq
    %v1208 = vshrl.u32 %v1207, 7
    %v1209 = vsub.s32 4, %v1208
    %v1210 = vrot.slane %v737, %v1209
    %v1211 = vmul.f32 %v1210, %v913
    %v1212 = vmul.f32 %v1210, %v914
    %v1213 = vmul.f32 %v1211, 1.442695
    %v1214 = vpow.pop %v1213
    %v1215 = vmul.f32 %v1212, 1.442695
    %v1216 = vpow.pop %v1215
    %1217 = vset.pattern.permute.xlu0 4
    %1218 = vperm.xlu0 %1217, %v822
    %v1219 = vpop.permute.xlu0 %1218
    %1221 = vset.pattern.permute.xlu0 4
    %1222 = vperm.xlu0 %1221, %v827
    %v1223 = vpop.permute.xlu0 %1222
    %v1225 = vlaneseq
    %v1226 = vshrl.u32 %v1225, 7
    %v1227 = vsub.s32 4, %v1226
    %v1228 = vrot.slane %v742, %v1227
    %v1229 = vmul.f32 %v1219, %v1228
    %v1230 = vmul.f32 %v1223, %v1228
    %v1231 = vmul.f32 %v1214, %v1161
    %v1232 = vmul.f32 %v1216, %v1162
    %v1233 = vadd.f32 %v1231, %v1229
    %v1234 = vadd.f32 %v1232, %v1230
    %1235 = vset.pattern.permute.xlu0 4
    %1236 = vperm.xlu0 %1235, %v905
    %v1237 = vpop.permute.xlu0 %1236
    %1239 = vset.pattern.permute.xlu0 4
    %1240 = vperm.xlu0 %1239, %v910
    %v1241 = vpop.permute.xlu0 %1240
    %v1243 = vmul.f32 %v1237, %v1233
    %v1244 = vmul.f32 %v1241, %v1234
    %v1245 = vsel %vm280, %v1243, 0.0
    %v1246 = vsel %vm280, %v1244, 0.0
    %v1247 = vadd.f32 %v1245, %v1246
    %v1248 = vrot.slane %v1247, 4
    %v1249 = vadd.f32 %v1247, %v1248
    %v1250 = vrot.slane %v1249, 2
    %v1251 = vadd.f32 %v1249, %v1250
    %v1252 = vrot.slane %v1251, 1
    %v1253 = vadd.f32 %v1251, %v1252
    %vm1254 = vcmp.eq.s32.totalorder %v54, 4
    %vm1255 = vcmp.eq.s32.totalorder %v55, 4
    %vm1256 = vcmp.eq.s32.totalorder %v56, 4
    %vm1257 = vcmp.eq.s32.totalorder %v57, 4
    %vm1258 = vcmp.eq.s32.totalorder %v58, 4
    %v1259 = vsel %vm1254, 1, 0
    %v1260 = vsel %vm1255, 1, 0
    %v1261 = vsel %vm1256, 1, 0
    %v1262 = vsel %vm1257, 1, 0
    %v1263 = vsel %vm1258, 1, 0
    %vm1264 = vcmp.eq.s32.totalorder %v1259, 1
    %vm1265 = vcmp.eq.s32.totalorder %v1260, 1
    %vm1266 = vcmp.eq.s32.totalorder %v1261, 1
    %vm1267 = vcmp.eq.s32.totalorder %v1262, 1
    %vm1268 = vcmp.eq.s32.totalorder %v1263, 1
    %v1269 = vsel %vm1264, %v1253, 0.0
    %v1270 = vsel %vm1265, %v1253, 0.0
    %v1271 = vsel %vm1266, %v1253, 0.0
    %v1272 = vsel %vm1267, %v1253, 0.0
    %v1273 = vsel %vm1268, %v1253, 0.0
    %v1274 = vadd.f32 %v1202, %v1269
    %v1275 = vadd.f32 %v1203, %v1270
    %v1276 = vadd.f32 %v1204, %v1271
    %v1277 = vadd.f32 %v1205, %v1272
    %v1278 = vadd.f32 %v1206, %v1273
    %v1279 = vlaneseq
    %v1280 = vshrl.u32 %v1279, 7
    %v1281 = vsub.s32 5, %v1280
    %v1282 = vrot.slane %v737, %v1281
    %v1283 = vmul.f32 %v1282, %v913
    %v1284 = vmul.f32 %v1282, %v914
    %v1285 = vmul.f32 %v1283, 1.442695
    %v1286 = vpow.pop %v1285
    %v1287 = vmul.f32 %v1284, 1.442695
    %v1288 = vpow.pop %v1287
    %1289 = vset.pattern.permute.xlu0 5
    %1290 = vperm.xlu0 %1289, %v822
    %v1291 = vpop.permute.xlu0 %1290
    %1293 = vset.pattern.permute.xlu0 5
    %1294 = vperm.xlu0 %1293, %v827
    %v1295 = vpop.permute.xlu0 %1294
    %v1297 = vlaneseq
    %v1298 = vshrl.u32 %v1297, 7
    %v1299 = vsub.s32 5, %v1298
    %v1300 = vrot.slane %v742, %v1299
    %v1301 = vmul.f32 %v1291, %v1300
    %v1302 = vmul.f32 %v1295, %v1300
    %v1303 = vmul.f32 %v1286, %v1233
    %v1304 = vmul.f32 %v1288, %v1234
    %v1305 = vadd.f32 %v1303, %v1301
    %v1306 = vadd.f32 %v1304, %v1302
    %1307 = vset.pattern.permute.xlu0 5
    %1308 = vperm.xlu0 %1307, %v905
    %v1309 = vpop.permute.xlu0 %1308
    %1311 = vset.pattern.permute.xlu0 5
    %1312 = vperm.xlu0 %1311, %v910
    %v1313 = vpop.permute.xlu0 %1312
    %v1315 = vmul.f32 %v1309, %v1305
    %v1316 = vmul.f32 %v1313, %v1306
    %v1317 = vsel %vm280, %v1315, 0.0
    %v1318 = vsel %vm280, %v1316, 0.0
    %v1319 = vadd.f32 %v1317, %v1318
    %v1320 = vrot.slane %v1319, 4
    %v1321 = vadd.f32 %v1319, %v1320
    %v1322 = vrot.slane %v1321, 2
    %v1323 = vadd.f32 %v1321, %v1322
    %v1324 = vrot.slane %v1323, 1
    %v1325 = vadd.f32 %v1323, %v1324
    %vm1326 = vcmp.eq.s32.totalorder %v54, 5
    %vm1327 = vcmp.eq.s32.totalorder %v55, 5
    %vm1328 = vcmp.eq.s32.totalorder %v56, 5
    %vm1329 = vcmp.eq.s32.totalorder %v57, 5
    %vm1330 = vcmp.eq.s32.totalorder %v58, 5
    %v1331 = vsel %vm1326, 1, 0
    %v1332 = vsel %vm1327, 1, 0
    %v1333 = vsel %vm1328, 1, 0
    %v1334 = vsel %vm1329, 1, 0
    %v1335 = vsel %vm1330, 1, 0
    %vm1336 = vcmp.eq.s32.totalorder %v1331, 1
    %vm1337 = vcmp.eq.s32.totalorder %v1332, 1
    %vm1338 = vcmp.eq.s32.totalorder %v1333, 1
    %vm1339 = vcmp.eq.s32.totalorder %v1334, 1
    %vm1340 = vcmp.eq.s32.totalorder %v1335, 1
    %v1341 = vsel %vm1336, %v1325, 0.0
    %v1342 = vsel %vm1337, %v1325, 0.0
    %v1343 = vsel %vm1338, %v1325, 0.0
    %v1344 = vsel %vm1339, %v1325, 0.0
    %v1345 = vsel %vm1340, %v1325, 0.0
    %v1346 = vadd.f32 %v1274, %v1341
    %v1347 = vadd.f32 %v1275, %v1342
    %v1348 = vadd.f32 %v1276, %v1343
    %v1349 = vadd.f32 %v1277, %v1344
    %v1350 = vadd.f32 %v1278, %v1345
    %v1351 = vlaneseq
    %v1352 = vshrl.u32 %v1351, 7
    %v1353 = vsub.s32 6, %v1352
    %v1354 = vrot.slane %v737, %v1353
    %v1355 = vmul.f32 %v1354, %v913
    %v1356 = vmul.f32 %v1354, %v914
    %v1357 = vmul.f32 %v1355, 1.442695
    %v1358 = vpow.pop %v1357
    %v1359 = vmul.f32 %v1356, 1.442695
    %v1360 = vpow.pop %v1359
    %1361 = vset.pattern.permute.xlu0 6
    %1362 = vperm.xlu0 %1361, %v822
    %v1363 = vpop.permute.xlu0 %1362
    %1365 = vset.pattern.permute.xlu0 6
    %1366 = vperm.xlu0 %1365, %v827
    %v1367 = vpop.permute.xlu0 %1366
    %v1369 = vlaneseq
    %v1370 = vshrl.u32 %v1369, 7
    %v1371 = vsub.s32 6, %v1370
    %v1372 = vrot.slane %v742, %v1371
    %v1373 = vmul.f32 %v1363, %v1372
    %v1374 = vmul.f32 %v1367, %v1372
    %v1375 = vmul.f32 %v1358, %v1305
    %v1376 = vmul.f32 %v1360, %v1306
    %v1377 = vadd.f32 %v1375, %v1373
    %v1378 = vadd.f32 %v1376, %v1374
    %1379 = vset.pattern.permute.xlu0 6
    %1380 = vperm.xlu0 %1379, %v905
    %v1381 = vpop.permute.xlu0 %1380
    %1383 = vset.pattern.permute.xlu0 6
    %1384 = vperm.xlu0 %1383, %v910
    %v1385 = vpop.permute.xlu0 %1384
    %v1387 = vmul.f32 %v1381, %v1377
    %v1388 = vmul.f32 %v1385, %v1378
    %v1389 = vsel %vm280, %v1387, 0.0
    %v1390 = vsel %vm280, %v1388, 0.0
    %v1391 = vadd.f32 %v1389, %v1390
    %v1392 = vrot.slane %v1391, 4
    %v1393 = vadd.f32 %v1391, %v1392
    %v1394 = vrot.slane %v1393, 2
    %v1395 = vadd.f32 %v1393, %v1394
    %v1396 = vrot.slane %v1395, 1
    %v1397 = vadd.f32 %v1395, %v1396
    %vm1398 = vcmp.eq.s32.totalorder %v54, 6
    %vm1399 = vcmp.eq.s32.totalorder %v55, 6
    %vm1400 = vcmp.eq.s32.totalorder %v56, 6
    %vm1401 = vcmp.eq.s32.totalorder %v57, 6
    %vm1402 = vcmp.eq.s32.totalorder %v58, 6
    %v1403 = vsel %vm1398, 1, 0
    %v1404 = vsel %vm1399, 1, 0
    %v1405 = vsel %vm1400, 1, 0
    %v1406 = vsel %vm1401, 1, 0
    %v1407 = vsel %vm1402, 1, 0
    %vm1408 = vcmp.eq.s32.totalorder %v1403, 1
    %vm1409 = vcmp.eq.s32.totalorder %v1404, 1
    %vm1410 = vcmp.eq.s32.totalorder %v1405, 1
    %vm1411 = vcmp.eq.s32.totalorder %v1406, 1
    %vm1412 = vcmp.eq.s32.totalorder %v1407, 1
    %v1413 = vsel %vm1408, %v1397, 0.0
    %v1414 = vsel %vm1409, %v1397, 0.0
    %v1415 = vsel %vm1410, %v1397, 0.0
    %v1416 = vsel %vm1411, %v1397, 0.0
    %v1417 = vsel %vm1412, %v1397, 0.0
    %v1418 = vadd.f32 %v1346, %v1413
    %v1419 = vadd.f32 %v1347, %v1414
    %v1420 = vadd.f32 %v1348, %v1415
    %v1421 = vadd.f32 %v1349, %v1416
    %v1422 = vadd.f32 %v1350, %v1417
    %v1423 = vlaneseq
    %v1424 = vshrl.u32 %v1423, 7
    %v1425 = vsub.s32 7, %v1424
    %v1426 = vrot.slane %v737, %v1425
    %v1427 = vmul.f32 %v1426, %v913
    %v1428 = vmul.f32 %v1426, %v914
    %v1429 = vmul.f32 %v1427, 1.442695
    %v1430 = vpow.pop %v1429
    %v1431 = vmul.f32 %v1428, 1.442695
    %v1432 = vpow.pop %v1431
    %1433 = vset.pattern.permute.xlu0 7
    %1434 = vperm.xlu0 %1433, %v822
    %v1435 = vpop.permute.xlu0 %1434
    %1437 = vset.pattern.permute.xlu0 7
    %1438 = vperm.xlu0 %1437, %v827
    %v1439 = vpop.permute.xlu0 %1438
    %v1441 = vlaneseq
    %v1442 = vshrl.u32 %v1441, 7
    %v1443 = vsub.s32 7, %v1442
    %v1444 = vrot.slane %v742, %v1443
    %v1445 = vmul.f32 %v1435, %v1444
    %v1446 = vmul.f32 %v1439, %v1444
    %v1447 = vmul.f32 %v1430, %v1377
    %v1448 = vmul.f32 %v1432, %v1378
    %v1449 = vadd.f32 %v1447, %v1445
    %v1450 = vadd.f32 %v1448, %v1446
    %1451 = vset.pattern.permute.xlu0 7
    %1452 = vperm.xlu0 %1451, %v905
    %v1453 = vpop.permute.xlu0 %1452
    %1455 = vset.pattern.permute.xlu0 7
    %1456 = vperm.xlu0 %1455, %v910
    %v1457 = vpop.permute.xlu0 %1456
    %v1459 = vmul.f32 %v1453, %v1449
    %v1460 = vmul.f32 %v1457, %v1450
    %v1461 = vsel %vm280, %v1459, 0.0
    %v1462 = vsel %vm280, %v1460, 0.0
    %v1463 = vadd.f32 %v1461, %v1462
    %v1464 = vrot.slane %v1463, 4
    %v1465 = vadd.f32 %v1463, %v1464
    %v1466 = vrot.slane %v1465, 2
    %v1467 = vadd.f32 %v1465, %v1466
    %v1468 = vrot.slane %v1467, 1
    %v1469 = vadd.f32 %v1467, %v1468
    %vm1470 = vcmp.eq.s32.totalorder %v54, 7
    %vm1471 = vcmp.eq.s32.totalorder %v55, 7
    %vm1472 = vcmp.eq.s32.totalorder %v56, 7
    %vm1473 = vcmp.eq.s32.totalorder %v57, 7
    %vm1474 = vcmp.eq.s32.totalorder %v58, 7
    %v1475 = vsel %vm1470, 1, 0
    %v1476 = vsel %vm1471, 1, 0
    %v1477 = vsel %vm1472, 1, 0
    %v1478 = vsel %vm1473, 1, 0
    %v1479 = vsel %vm1474, 1, 0
    %vm1480 = vcmp.eq.s32.totalorder %v1475, 1
    %vm1481 = vcmp.eq.s32.totalorder %v1476, 1
    %vm1482 = vcmp.eq.s32.totalorder %v1477, 1
    %vm1483 = vcmp.eq.s32.totalorder %v1478, 1
    %vm1484 = vcmp.eq.s32.totalorder %v1479, 1
    %v1485 = vsel %vm1480, %v1469, 0.0
    %v1486 = vsel %vm1481, %v1469, 0.0
    %v1487 = vsel %vm1482, %v1469, 0.0
    %v1488 = vsel %vm1483, %v1469, 0.0
    %v1489 = vsel %vm1484, %v1469, 0.0
    %v1490 = vadd.f32 %v1418, %v1485
    %v1491 = vadd.f32 %v1419, %v1486
    %v1492 = vadd.f32 %v1420, %v1487
    %v1493 = vadd.f32 %v1421, %v1488
    %v1494 = vadd.f32 %v1422, %v1489
    %v1495 = vlaneseq
    %v1496 = vshrl.u32 %v1495, 7
    %v1497 = vsub.s32 0, %v1496
    %v1498 = vrot.slane %v738, %v1497
    %v1499 = vmul.f32 %v1498, %v913
    %v1500 = vmul.f32 %v1498, %v914
    %v1501 = vmul.f32 %v1499, 1.442695
    %v1502 = vpow.pop %v1501
    %v1503 = vmul.f32 %v1500, 1.442695
    %v1504 = vpow.pop %v1503
    %1505 = vset.pattern.permute.xlu0 8
    %1506 = vperm.xlu0 %1505, %v822
    %v1507 = vpop.permute.xlu0 %1506
    %1509 = vset.pattern.permute.xlu0 8
    %1510 = vperm.xlu0 %1509, %v827
    %v1511 = vpop.permute.xlu0 %1510
    %v1513 = vlaneseq
    %v1514 = vshrl.u32 %v1513, 7
    %v1515 = vsub.s32 0, %v1514
    %v1516 = vrot.slane %v743, %v1515
    %v1517 = vmul.f32 %v1507, %v1516
    %v1518 = vmul.f32 %v1511, %v1516
    %v1519 = vmul.f32 %v1502, %v1449
    %v1520 = vmul.f32 %v1504, %v1450
    %v1521 = vadd.f32 %v1519, %v1517
    %v1522 = vadd.f32 %v1520, %v1518
    %1523 = vset.pattern.permute.xlu0 8
    %1524 = vperm.xlu0 %1523, %v905
    %v1525 = vpop.permute.xlu0 %1524
    %1527 = vset.pattern.permute.xlu0 8
    %1528 = vperm.xlu0 %1527, %v910
    %v1529 = vpop.permute.xlu0 %1528
    %v1531 = vmul.f32 %v1525, %v1521
    %v1532 = vmul.f32 %v1529, %v1522
    %v1533 = vsel %vm280, %v1531, 0.0
    %v1534 = vsel %vm280, %v1532, 0.0
    %v1535 = vadd.f32 %v1533, %v1534
    %v1536 = vrot.slane %v1535, 4
    %v1537 = vadd.f32 %v1535, %v1536
    %v1538 = vrot.slane %v1537, 2
    %v1539 = vadd.f32 %v1537, %v1538
    %v1540 = vrot.slane %v1539, 1
    %v1541 = vadd.f32 %v1539, %v1540
    %vm1542 = vcmp.eq.s32.totalorder %v54, 8
    %vm1543 = vcmp.eq.s32.totalorder %v55, 8
    %vm1544 = vcmp.eq.s32.totalorder %v56, 8
    %vm1545 = vcmp.eq.s32.totalorder %v57, 8
    %vm1546 = vcmp.eq.s32.totalorder %v58, 8
    %v1547 = vsel %vm1542, 1, 0
    %v1548 = vsel %vm1543, 1, 0
    %v1549 = vsel %vm1544, 1, 0
    %v1550 = vsel %vm1545, 1, 0
    %v1551 = vsel %vm1546, 1, 0
    %vm1552 = vcmp.eq.s32.totalorder %v1547, 1
    %vm1553 = vcmp.eq.s32.totalorder %v1548, 1
    %vm1554 = vcmp.eq.s32.totalorder %v1549, 1
    %vm1555 = vcmp.eq.s32.totalorder %v1550, 1
    %vm1556 = vcmp.eq.s32.totalorder %v1551, 1
    %v1557 = vsel %vm1552, %v1541, 0.0
    %v1558 = vsel %vm1553, %v1541, 0.0
    %v1559 = vsel %vm1554, %v1541, 0.0
    %v1560 = vsel %vm1555, %v1541, 0.0
    %v1561 = vsel %vm1556, %v1541, 0.0
    %v1562 = vadd.f32 %v1490, %v1557
    %v1563 = vadd.f32 %v1491, %v1558
    %v1564 = vadd.f32 %v1492, %v1559
    %v1565 = vadd.f32 %v1493, %v1560
    %v1566 = vadd.f32 %v1494, %v1561
    %v1567 = vlaneseq
    %v1568 = vshrl.u32 %v1567, 7
    %v1569 = vsub.s32 1, %v1568
    %v1570 = vrot.slane %v738, %v1569
    %v1571 = vmul.f32 %v1570, %v913
    %v1572 = vmul.f32 %v1570, %v914
    %v1573 = vmul.f32 %v1571, 1.442695
    %v1574 = vpow.pop %v1573
    %v1575 = vmul.f32 %v1572, 1.442695
    %v1576 = vpow.pop %v1575
    %1577 = vset.pattern.permute.xlu0 9
    %1578 = vperm.xlu0 %1577, %v822
    %v1579 = vpop.permute.xlu0 %1578
    %1581 = vset.pattern.permute.xlu0 9
    %1582 = vperm.xlu0 %1581, %v827
    %v1583 = vpop.permute.xlu0 %1582
    %v1585 = vlaneseq
    %v1586 = vshrl.u32 %v1585, 7
    %v1587 = vsub.s32 1, %v1586
    %v1588 = vrot.slane %v743, %v1587
    %v1589 = vmul.f32 %v1579, %v1588
    %v1590 = vmul.f32 %v1583, %v1588
    %v1591 = vmul.f32 %v1574, %v1521
    %v1592 = vmul.f32 %v1576, %v1522
    %v1593 = vadd.f32 %v1591, %v1589
    %v1594 = vadd.f32 %v1592, %v1590
    %1595 = vset.pattern.permute.xlu0 9
    %1596 = vperm.xlu0 %1595, %v905
    %v1597 = vpop.permute.xlu0 %1596
    %1599 = vset.pattern.permute.xlu0 9
    %1600 = vperm.xlu0 %1599, %v910
    %v1601 = vpop.permute.xlu0 %1600
    %v1603 = vmul.f32 %v1597, %v1593
    %v1604 = vmul.f32 %v1601, %v1594
    %v1605 = vsel %vm280, %v1603, 0.0
    %v1606 = vsel %vm280, %v1604, 0.0
    %v1607 = vadd.f32 %v1605, %v1606
    %v1608 = vrot.slane %v1607, 4
    %v1609 = vadd.f32 %v1607, %v1608
    %v1610 = vrot.slane %v1609, 2
    %v1611 = vadd.f32 %v1609, %v1610
    %v1612 = vrot.slane %v1611, 1
    %v1613 = vadd.f32 %v1611, %v1612
    %vm1614 = vcmp.eq.s32.totalorder %v54, 9
    %vm1615 = vcmp.eq.s32.totalorder %v55, 9
    %vm1616 = vcmp.eq.s32.totalorder %v56, 9
    %vm1617 = vcmp.eq.s32.totalorder %v57, 9
    %vm1618 = vcmp.eq.s32.totalorder %v58, 9
    %v1619 = vsel %vm1614, 1, 0
    %v1620 = vsel %vm1615, 1, 0
    %v1621 = vsel %vm1616, 1, 0
    %v1622 = vsel %vm1617, 1, 0
    %v1623 = vsel %vm1618, 1, 0
    %vm1624 = vcmp.eq.s32.totalorder %v1619, 1
    %vm1625 = vcmp.eq.s32.totalorder %v1620, 1
    %vm1626 = vcmp.eq.s32.totalorder %v1621, 1
    %vm1627 = vcmp.eq.s32.totalorder %v1622, 1
    %vm1628 = vcmp.eq.s32.totalorder %v1623, 1
    %v1629 = vsel %vm1624, %v1613, 0.0
    %v1630 = vsel %vm1625, %v1613, 0.0
    %v1631 = vsel %vm1626, %v1613, 0.0
    %v1632 = vsel %vm1627, %v1613, 0.0
    %v1633 = vsel %vm1628, %v1613, 0.0
    %v1634 = vadd.f32 %v1562, %v1629
    %v1635 = vadd.f32 %v1563, %v1630
    %v1636 = vadd.f32 %v1564, %v1631
    %v1637 = vadd.f32 %v1565, %v1632
    %v1638 = vadd.f32 %v1566, %v1633
    %v1639 = vlaneseq
    %v1640 = vshrl.u32 %v1639, 7
    %v1641 = vsub.s32 2, %v1640
    %v1642 = vrot.slane %v738, %v1641
    %v1643 = vmul.f32 %v1642, %v913
    %v1644 = vmul.f32 %v1642, %v914
    %v1645 = vmul.f32 %v1643, 1.442695
    %v1646 = vpow.pop %v1645
    %v1647 = vmul.f32 %v1644, 1.442695
    %v1648 = vpow.pop %v1647
    %1649 = vset.pattern.permute.xlu0 10
    %1650 = vperm.xlu0 %1649, %v822
    %v1651 = vpop.permute.xlu0 %1650
    %1653 = vset.pattern.permute.xlu0 10
    %1654 = vperm.xlu0 %1653, %v827
    %v1655 = vpop.permute.xlu0 %1654
    %v1657 = vlaneseq
    %v1658 = vshrl.u32 %v1657, 7
    %v1659 = vsub.s32 2, %v1658
    %v1660 = vrot.slane %v743, %v1659
    %v1661 = vmul.f32 %v1651, %v1660
    %v1662 = vmul.f32 %v1655, %v1660
    %v1663 = vmul.f32 %v1646, %v1593
    %v1664 = vmul.f32 %v1648, %v1594
    %v1665 = vadd.f32 %v1663, %v1661
    %v1666 = vadd.f32 %v1664, %v1662
    %1667 = vset.pattern.permute.xlu0 10
    %1668 = vperm.xlu0 %1667, %v905
    %v1669 = vpop.permute.xlu0 %1668
    %1671 = vset.pattern.permute.xlu0 10
    %1672 = vperm.xlu0 %1671, %v910
    %v1673 = vpop.permute.xlu0 %1672
    %v1675 = vmul.f32 %v1669, %v1665
    %v1676 = vmul.f32 %v1673, %v1666
    %v1677 = vsel %vm280, %v1675, 0.0
    %v1678 = vsel %vm280, %v1676, 0.0
    %v1679 = vadd.f32 %v1677, %v1678
    %v1680 = vrot.slane %v1679, 4
    %v1681 = vadd.f32 %v1679, %v1680
    %v1682 = vrot.slane %v1681, 2
    %v1683 = vadd.f32 %v1681, %v1682
    %v1684 = vrot.slane %v1683, 1
    %v1685 = vadd.f32 %v1683, %v1684
    %vm1686 = vcmp.eq.s32.totalorder %v54, 10
    %vm1687 = vcmp.eq.s32.totalorder %v55, 10
    %vm1688 = vcmp.eq.s32.totalorder %v56, 10
    %vm1689 = vcmp.eq.s32.totalorder %v57, 10
    %vm1690 = vcmp.eq.s32.totalorder %v58, 10
    %v1691 = vsel %vm1686, 1, 0
    %v1692 = vsel %vm1687, 1, 0
    %v1693 = vsel %vm1688, 1, 0
    %v1694 = vsel %vm1689, 1, 0
    %v1695 = vsel %vm1690, 1, 0
    %vm1696 = vcmp.eq.s32.totalorder %v1691, 1
    %vm1697 = vcmp.eq.s32.totalorder %v1692, 1
    %vm1698 = vcmp.eq.s32.totalorder %v1693, 1
    %vm1699 = vcmp.eq.s32.totalorder %v1694, 1
    %vm1700 = vcmp.eq.s32.totalorder %v1695, 1
    %v1701 = vsel %vm1696, %v1685, 0.0
    %v1702 = vsel %vm1697, %v1685, 0.0
    %v1703 = vsel %vm1698, %v1685, 0.0
    %v1704 = vsel %vm1699, %v1685, 0.0
    %v1705 = vsel %vm1700, %v1685, 0.0
    %v1706 = vadd.f32 %v1634, %v1701
    %v1707 = vadd.f32 %v1635, %v1702
    %v1708 = vadd.f32 %v1636, %v1703
    %v1709 = vadd.f32 %v1637, %v1704
    %v1710 = vadd.f32 %v1638, %v1705
    %v1711 = vlaneseq
    %v1712 = vshrl.u32 %v1711, 7
    %v1713 = vsub.s32 3, %v1712
    %v1714 = vrot.slane %v738, %v1713
    %v1715 = vmul.f32 %v1714, %v913
    %v1716 = vmul.f32 %v1714, %v914
    %v1717 = vmul.f32 %v1715, 1.442695
    %v1718 = vpow.pop %v1717
    %v1719 = vmul.f32 %v1716, 1.442695
    %v1720 = vpow.pop %v1719
    %1721 = vset.pattern.permute.xlu0 11
    %1722 = vperm.xlu0 %1721, %v822
    %v1723 = vpop.permute.xlu0 %1722
    %1725 = vset.pattern.permute.xlu0 11
    %1726 = vperm.xlu0 %1725, %v827
    %v1727 = vpop.permute.xlu0 %1726
    %v1729 = vlaneseq
    %v1730 = vshrl.u32 %v1729, 7
    %v1731 = vsub.s32 3, %v1730
    %v1732 = vrot.slane %v743, %v1731
    %v1733 = vmul.f32 %v1723, %v1732
    %v1734 = vmul.f32 %v1727, %v1732
    %v1735 = vmul.f32 %v1718, %v1665
    %v1736 = vmul.f32 %v1720, %v1666
    %v1737 = vadd.f32 %v1735, %v1733
    %v1738 = vadd.f32 %v1736, %v1734
    %1739 = vset.pattern.permute.xlu0 11
    %1740 = vperm.xlu0 %1739, %v905
    %v1741 = vpop.permute.xlu0 %1740
    %1743 = vset.pattern.permute.xlu0 11
    %1744 = vperm.xlu0 %1743, %v910
    %v1745 = vpop.permute.xlu0 %1744
    %v1747 = vmul.f32 %v1741, %v1737
    %v1748 = vmul.f32 %v1745, %v1738
    %v1749 = vsel %vm280, %v1747, 0.0
    %v1750 = vsel %vm280, %v1748, 0.0
    %v1751 = vadd.f32 %v1749, %v1750
    %v1752 = vrot.slane %v1751, 4
    %v1753 = vadd.f32 %v1751, %v1752
    %v1754 = vrot.slane %v1753, 2
    %v1755 = vadd.f32 %v1753, %v1754
    %v1756 = vrot.slane %v1755, 1
    %v1757 = vadd.f32 %v1755, %v1756
    %vm1758 = vcmp.eq.s32.totalorder %v54, 11
    %vm1759 = vcmp.eq.s32.totalorder %v55, 11
    %vm1760 = vcmp.eq.s32.totalorder %v56, 11
    %vm1761 = vcmp.eq.s32.totalorder %v57, 11
    %vm1762 = vcmp.eq.s32.totalorder %v58, 11
    %v1763 = vsel %vm1758, 1, 0
    %v1764 = vsel %vm1759, 1, 0
    %v1765 = vsel %vm1760, 1, 0
    %v1766 = vsel %vm1761, 1, 0
    %v1767 = vsel %vm1762, 1, 0
    %vm1768 = vcmp.eq.s32.totalorder %v1763, 1
    %vm1769 = vcmp.eq.s32.totalorder %v1764, 1
    %vm1770 = vcmp.eq.s32.totalorder %v1765, 1
    %vm1771 = vcmp.eq.s32.totalorder %v1766, 1
    %vm1772 = vcmp.eq.s32.totalorder %v1767, 1
    %v1773 = vsel %vm1768, %v1757, 0.0
    %v1774 = vsel %vm1769, %v1757, 0.0
    %v1775 = vsel %vm1770, %v1757, 0.0
    %v1776 = vsel %vm1771, %v1757, 0.0
    %v1777 = vsel %vm1772, %v1757, 0.0
    %v1778 = vadd.f32 %v1706, %v1773
    %v1779 = vadd.f32 %v1707, %v1774
    %v1780 = vadd.f32 %v1708, %v1775
    %v1781 = vadd.f32 %v1709, %v1776
    %v1782 = vadd.f32 %v1710, %v1777
    %v1783 = vlaneseq
    %v1784 = vshrl.u32 %v1783, 7
    %v1785 = vsub.s32 4, %v1784
    %v1786 = vrot.slane %v738, %v1785
    %v1787 = vmul.f32 %v1786, %v913
    %v1788 = vmul.f32 %v1786, %v914
    %v1789 = vmul.f32 %v1787, 1.442695
    %v1790 = vpow.pop %v1789
    %v1791 = vmul.f32 %v1788, 1.442695
    %v1792 = vpow.pop %v1791
    %1793 = vset.pattern.permute.xlu0 12
    %1794 = vperm.xlu0 %1793, %v822
    %v1795 = vpop.permute.xlu0 %1794
    %1797 = vset.pattern.permute.xlu0 12
    %1798 = vperm.xlu0 %1797, %v827
    %v1799 = vpop.permute.xlu0 %1798
    %v1801 = vlaneseq
    %v1802 = vshrl.u32 %v1801, 7
    %v1803 = vsub.s32 4, %v1802
    %v1804 = vrot.slane %v743, %v1803
    %v1805 = vmul.f32 %v1795, %v1804
    %v1806 = vmul.f32 %v1799, %v1804
    %v1807 = vmul.f32 %v1790, %v1737
    %v1808 = vmul.f32 %v1792, %v1738
    %v1809 = vadd.f32 %v1807, %v1805
    %v1810 = vadd.f32 %v1808, %v1806
    %1811 = vset.pattern.permute.xlu0 12
    %1812 = vperm.xlu0 %1811, %v905
    %v1813 = vpop.permute.xlu0 %1812
    %1815 = vset.pattern.permute.xlu0 12
    %1816 = vperm.xlu0 %1815, %v910
    %v1817 = vpop.permute.xlu0 %1816
    %v1819 = vmul.f32 %v1813, %v1809
    %v1820 = vmul.f32 %v1817, %v1810
    %v1821 = vsel %vm280, %v1819, 0.0
    %v1822 = vsel %vm280, %v1820, 0.0
    %v1823 = vadd.f32 %v1821, %v1822
    %v1824 = vrot.slane %v1823, 4
    %v1825 = vadd.f32 %v1823, %v1824
    %v1826 = vrot.slane %v1825, 2
    %v1827 = vadd.f32 %v1825, %v1826
    %v1828 = vrot.slane %v1827, 1
    %v1829 = vadd.f32 %v1827, %v1828
    %vm1830 = vcmp.eq.s32.totalorder %v54, 12
    %vm1831 = vcmp.eq.s32.totalorder %v55, 12
    %vm1832 = vcmp.eq.s32.totalorder %v56, 12
    %vm1833 = vcmp.eq.s32.totalorder %v57, 12
    %vm1834 = vcmp.eq.s32.totalorder %v58, 12
    %v1835 = vsel %vm1830, 1, 0
    %v1836 = vsel %vm1831, 1, 0
    %v1837 = vsel %vm1832, 1, 0
    %v1838 = vsel %vm1833, 1, 0
    %v1839 = vsel %vm1834, 1, 0
    %vm1840 = vcmp.eq.s32.totalorder %v1835, 1
    %vm1841 = vcmp.eq.s32.totalorder %v1836, 1
    %vm1842 = vcmp.eq.s32.totalorder %v1837, 1
    %vm1843 = vcmp.eq.s32.totalorder %v1838, 1
    %vm1844 = vcmp.eq.s32.totalorder %v1839, 1
    %v1845 = vsel %vm1840, %v1829, 0.0
    %v1846 = vsel %vm1841, %v1829, 0.0
    %v1847 = vsel %vm1842, %v1829, 0.0
    %v1848 = vsel %vm1843, %v1829, 0.0
    %v1849 = vsel %vm1844, %v1829, 0.0
    %v1850 = vadd.f32 %v1778, %v1845
    %v1851 = vadd.f32 %v1779, %v1846
    %v1852 = vadd.f32 %v1780, %v1847
    %v1853 = vadd.f32 %v1781, %v1848
    %v1854 = vadd.f32 %v1782, %v1849
    %v1855 = vlaneseq
    %v1856 = vshrl.u32 %v1855, 7
    %v1857 = vsub.s32 5, %v1856
    %v1858 = vrot.slane %v738, %v1857
    %v1859 = vmul.f32 %v1858, %v913
    %v1860 = vmul.f32 %v1858, %v914
    %v1861 = vmul.f32 %v1859, 1.442695
    %v1862 = vpow.pop %v1861
    %v1863 = vmul.f32 %v1860, 1.442695
    %v1864 = vpow.pop %v1863
    %1865 = vset.pattern.permute.xlu0 13
    %1866 = vperm.xlu0 %1865, %v822
    %v1867 = vpop.permute.xlu0 %1866
    %1869 = vset.pattern.permute.xlu0 13
    %1870 = vperm.xlu0 %1869, %v827
    %v1871 = vpop.permute.xlu0 %1870
    %v1873 = vlaneseq
    %v1874 = vshrl.u32 %v1873, 7
    %v1875 = vsub.s32 5, %v1874
    %v1876 = vrot.slane %v743, %v1875
    %v1877 = vmul.f32 %v1867, %v1876
    %v1878 = vmul.f32 %v1871, %v1876
    %v1879 = vmul.f32 %v1862, %v1809
    %v1880 = vmul.f32 %v1864, %v1810
    %v1881 = vadd.f32 %v1879, %v1877
    %v1882 = vadd.f32 %v1880, %v1878
    %1883 = vset.pattern.permute.xlu0 13
    %1884 = vperm.xlu0 %1883, %v905
    %v1885 = vpop.permute.xlu0 %1884
    %1887 = vset.pattern.permute.xlu0 13
    %1888 = vperm.xlu0 %1887, %v910
    %v1889 = vpop.permute.xlu0 %1888
    %v1891 = vmul.f32 %v1885, %v1881
    %v1892 = vmul.f32 %v1889, %v1882
    %v1893 = vsel %vm280, %v1891, 0.0
    %v1894 = vsel %vm280, %v1892, 0.0
    %v1895 = vadd.f32 %v1893, %v1894
    %v1896 = vrot.slane %v1895, 4
    %v1897 = vadd.f32 %v1895, %v1896
    %v1898 = vrot.slane %v1897, 2
    %v1899 = vadd.f32 %v1897, %v1898
    %v1900 = vrot.slane %v1899, 1
    %v1901 = vadd.f32 %v1899, %v1900
    %vm1902 = vcmp.eq.s32.totalorder %v54, 13
    %vm1903 = vcmp.eq.s32.totalorder %v55, 13
    %vm1904 = vcmp.eq.s32.totalorder %v56, 13
    %vm1905 = vcmp.eq.s32.totalorder %v57, 13
    %vm1906 = vcmp.eq.s32.totalorder %v58, 13
    %v1907 = vsel %vm1902, 1, 0
    %v1908 = vsel %vm1903, 1, 0
    %v1909 = vsel %vm1904, 1, 0
    %v1910 = vsel %vm1905, 1, 0
    %v1911 = vsel %vm1906, 1, 0
    %vm1912 = vcmp.eq.s32.totalorder %v1907, 1
    %vm1913 = vcmp.eq.s32.totalorder %v1908, 1
    %vm1914 = vcmp.eq.s32.totalorder %v1909, 1
    %vm1915 = vcmp.eq.s32.totalorder %v1910, 1
    %vm1916 = vcmp.eq.s32.totalorder %v1911, 1
    %v1917 = vsel %vm1912, %v1901, 0.0
    %v1918 = vsel %vm1913, %v1901, 0.0
    %v1919 = vsel %vm1914, %v1901, 0.0
    %v1920 = vsel %vm1915, %v1901, 0.0
    %v1921 = vsel %vm1916, %v1901, 0.0
    %v1922 = vadd.f32 %v1850, %v1917
    %v1923 = vadd.f32 %v1851, %v1918
    %v1924 = vadd.f32 %v1852, %v1919
    %v1925 = vadd.f32 %v1853, %v1920
    %v1926 = vadd.f32 %v1854, %v1921
    %v1927 = vlaneseq
    %v1928 = vshrl.u32 %v1927, 7
    %v1929 = vsub.s32 6, %v1928
    %v1930 = vrot.slane %v738, %v1929
    %v1931 = vmul.f32 %v1930, %v913
    %v1932 = vmul.f32 %v1930, %v914
    %v1933 = vmul.f32 %v1931, 1.442695
    %v1934 = vpow.pop %v1933
    %v1935 = vmul.f32 %v1932, 1.442695
    %v1936 = vpow.pop %v1935
    %1937 = vset.pattern.permute.xlu0 14
    %1938 = vperm.xlu0 %1937, %v822
    %v1939 = vpop.permute.xlu0 %1938
    %1941 = vset.pattern.permute.xlu0 14
    %1942 = vperm.xlu0 %1941, %v827
    %v1943 = vpop.permute.xlu0 %1942
    %v1945 = vlaneseq
    %v1946 = vshrl.u32 %v1945, 7
    %v1947 = vsub.s32 6, %v1946
    %v1948 = vrot.slane %v743, %v1947
    %v1949 = vmul.f32 %v1939, %v1948
    %v1950 = vmul.f32 %v1943, %v1948
    %v1951 = vmul.f32 %v1934, %v1881
    %v1952 = vmul.f32 %v1936, %v1882
    %v1953 = vadd.f32 %v1951, %v1949
    %v1954 = vadd.f32 %v1952, %v1950
    %1955 = vset.pattern.permute.xlu0 14
    %1956 = vperm.xlu0 %1955, %v905
    %v1957 = vpop.permute.xlu0 %1956
    %1959 = vset.pattern.permute.xlu0 14
    %1960 = vperm.xlu0 %1959, %v910
    %v1961 = vpop.permute.xlu0 %1960
    %v1963 = vmul.f32 %v1957, %v1953
    %v1964 = vmul.f32 %v1961, %v1954
    %v1965 = vsel %vm280, %v1963, 0.0
    %v1966 = vsel %vm280, %v1964, 0.0
    %v1967 = vadd.f32 %v1965, %v1966
    %v1968 = vrot.slane %v1967, 4
    %v1969 = vadd.f32 %v1967, %v1968
    %v1970 = vrot.slane %v1969, 2
    %v1971 = vadd.f32 %v1969, %v1970
    %v1972 = vrot.slane %v1971, 1
    %v1973 = vadd.f32 %v1971, %v1972
    %vm1974 = vcmp.eq.s32.totalorder %v54, 14
    %vm1975 = vcmp.eq.s32.totalorder %v55, 14
    %vm1976 = vcmp.eq.s32.totalorder %v56, 14
    %vm1977 = vcmp.eq.s32.totalorder %v57, 14
    %vm1978 = vcmp.eq.s32.totalorder %v58, 14
    %v1979 = vsel %vm1974, 1, 0
    %v1980 = vsel %vm1975, 1, 0
    %v1981 = vsel %vm1976, 1, 0
    %v1982 = vsel %vm1977, 1, 0
    %v1983 = vsel %vm1978, 1, 0
    %vm1984 = vcmp.eq.s32.totalorder %v1979, 1
    %vm1985 = vcmp.eq.s32.totalorder %v1980, 1
    %vm1986 = vcmp.eq.s32.totalorder %v1981, 1
    %vm1987 = vcmp.eq.s32.totalorder %v1982, 1
    %vm1988 = vcmp.eq.s32.totalorder %v1983, 1
    %v1989 = vsel %vm1984, %v1973, 0.0
    %v1990 = vsel %vm1985, %v1973, 0.0
    %v1991 = vsel %vm1986, %v1973, 0.0
    %v1992 = vsel %vm1987, %v1973, 0.0
    %v1993 = vsel %vm1988, %v1973, 0.0
    %v1994 = vadd.f32 %v1922, %v1989
    %v1995 = vadd.f32 %v1923, %v1990
    %v1996 = vadd.f32 %v1924, %v1991
    %v1997 = vadd.f32 %v1925, %v1992
    %v1998 = vadd.f32 %v1926, %v1993
    %v1999 = vlaneseq
    %v2000 = vshrl.u32 %v1999, 7
    %v2001 = vsub.s32 7, %v2000
    %v2002 = vrot.slane %v738, %v2001
    %v2003 = vmul.f32 %v2002, %v913
    %v2004 = vmul.f32 %v2002, %v914
    %v2005 = vmul.f32 %v2003, 1.442695
    %v2006 = vpow.pop %v2005
    %v2007 = vmul.f32 %v2004, 1.442695
    %v2008 = vpow.pop %v2007
    %2009 = vset.pattern.permute.xlu0 15
    %2010 = vperm.xlu0 %2009, %v822
    %v2011 = vpop.permute.xlu0 %2010
    %2013 = vset.pattern.permute.xlu0 15
    %2014 = vperm.xlu0 %2013, %v827
    %v2015 = vpop.permute.xlu0 %2014
    %v2017 = vlaneseq
    %v2018 = vshrl.u32 %v2017, 7
    %v2019 = vsub.s32 7, %v2018
    %v2020 = vrot.slane %v743, %v2019
    %v2021 = vmul.f32 %v2011, %v2020
    %v2022 = vmul.f32 %v2015, %v2020
    %v2023 = vmul.f32 %v2006, %v1953
    %v2024 = vmul.f32 %v2008, %v1954
    %v2025 = vadd.f32 %v2023, %v2021
    %v2026 = vadd.f32 %v2024, %v2022
    %2027 = vset.pattern.permute.xlu0 15
    %2028 = vperm.xlu0 %2027, %v905
    %v2029 = vpop.permute.xlu0 %2028
    %2031 = vset.pattern.permute.xlu0 15
    %2032 = vperm.xlu0 %2031, %v910
    %v2033 = vpop.permute.xlu0 %2032
    %v2035 = vmul.f32 %v2029, %v2025
    %v2036 = vmul.f32 %v2033, %v2026
    %v2037 = vsel %vm280, %v2035, 0.0
    %v2038 = vsel %vm280, %v2036, 0.0
    %v2039 = vadd.f32 %v2037, %v2038
    %v2040 = vrot.slane %v2039, 4
    %v2041 = vadd.f32 %v2039, %v2040
    %v2042 = vrot.slane %v2041, 2
    %v2043 = vadd.f32 %v2041, %v2042
    %v2044 = vrot.slane %v2043, 1
    %v2045 = vadd.f32 %v2043, %v2044
    %vm2046 = vcmp.eq.s32.totalorder %v54, 15
    %vm2047 = vcmp.eq.s32.totalorder %v55, 15
    %vm2048 = vcmp.eq.s32.totalorder %v56, 15
    %vm2049 = vcmp.eq.s32.totalorder %v57, 15
    %vm2050 = vcmp.eq.s32.totalorder %v58, 15
    %v2051 = vsel %vm2046, 1, 0
    %v2052 = vsel %vm2047, 1, 0
    %v2053 = vsel %vm2048, 1, 0
    %v2054 = vsel %vm2049, 1, 0
    %v2055 = vsel %vm2050, 1, 0
    %vm2056 = vcmp.eq.s32.totalorder %v2051, 1
    %vm2057 = vcmp.eq.s32.totalorder %v2052, 1
    %vm2058 = vcmp.eq.s32.totalorder %v2053, 1
    %vm2059 = vcmp.eq.s32.totalorder %v2054, 1
    %vm2060 = vcmp.eq.s32.totalorder %v2055, 1
    %v2061 = vsel %vm2056, %v2045, 0.0
    %v2062 = vsel %vm2057, %v2045, 0.0
    %v2063 = vsel %vm2058, %v2045, 0.0
    %v2064 = vsel %vm2059, %v2045, 0.0
    %v2065 = vsel %vm2060, %v2045, 0.0
    %v2066 = vadd.f32 %v1994, %v2061
    %v2067 = vadd.f32 %v1995, %v2062
    %v2068 = vadd.f32 %v1996, %v2063
    %v2069 = vadd.f32 %v1997, %v2064
    %v2070 = vadd.f32 %v1998, %v2065
    %v2071 = vlaneseq
    %v2072 = vshrl.u32 %v2071, 7
    %v2073 = vsub.s32 0, %v2072
    %v2074 = vrot.slane %v739, %v2073
    %v2075 = vmul.f32 %v2074, %v913
    %v2076 = vmul.f32 %v2074, %v914
    %v2077 = vmul.f32 %v2075, 1.442695
    %v2078 = vpow.pop %v2077
    %v2079 = vmul.f32 %v2076, 1.442695
    %v2080 = vpow.pop %v2079
    %2081 = vset.pattern.permute.xlu0 16
    %2082 = vperm.xlu0 %2081, %v822
    %v2083 = vpop.permute.xlu0 %2082
    %2085 = vset.pattern.permute.xlu0 16
    %2086 = vperm.xlu0 %2085, %v827
    %v2087 = vpop.permute.xlu0 %2086
    %v2089 = vlaneseq
    %v2090 = vshrl.u32 %v2089, 7
    %v2091 = vsub.s32 0, %v2090
    %v2092 = vrot.slane %v744, %v2091
    %v2093 = vmul.f32 %v2083, %v2092
    %v2094 = vmul.f32 %v2087, %v2092
    %v2095 = vmul.f32 %v2078, %v2025
    %v2096 = vmul.f32 %v2080, %v2026
    %v2097 = vadd.f32 %v2095, %v2093
    %v2098 = vadd.f32 %v2096, %v2094
    %2099 = vset.pattern.permute.xlu0 16
    %2100 = vperm.xlu0 %2099, %v905
    %v2101 = vpop.permute.xlu0 %2100
    %2103 = vset.pattern.permute.xlu0 16
    %2104 = vperm.xlu0 %2103, %v910
    %v2105 = vpop.permute.xlu0 %2104
    %v2107 = vmul.f32 %v2101, %v2097
    %v2108 = vmul.f32 %v2105, %v2098
    %v2109 = vsel %vm280, %v2107, 0.0
    %v2110 = vsel %vm280, %v2108, 0.0
    %v2111 = vadd.f32 %v2109, %v2110
    %v2112 = vrot.slane %v2111, 4
    %v2113 = vadd.f32 %v2111, %v2112
    %v2114 = vrot.slane %v2113, 2
    %v2115 = vadd.f32 %v2113, %v2114
    %v2116 = vrot.slane %v2115, 1
    %v2117 = vadd.f32 %v2115, %v2116
    %vm2118 = vcmp.eq.s32.totalorder %v54, 16
    %vm2119 = vcmp.eq.s32.totalorder %v55, 16
    %vm2120 = vcmp.eq.s32.totalorder %v56, 16
    %vm2121 = vcmp.eq.s32.totalorder %v57, 16
    %vm2122 = vcmp.eq.s32.totalorder %v58, 16
    %v2123 = vsel %vm2118, 1, 0
    %v2124 = vsel %vm2119, 1, 0
    %v2125 = vsel %vm2120, 1, 0
    %v2126 = vsel %vm2121, 1, 0
    %v2127 = vsel %vm2122, 1, 0
    %vm2128 = vcmp.eq.s32.totalorder %v2123, 1
    %vm2129 = vcmp.eq.s32.totalorder %v2124, 1
    %vm2130 = vcmp.eq.s32.totalorder %v2125, 1
    %vm2131 = vcmp.eq.s32.totalorder %v2126, 1
    %vm2132 = vcmp.eq.s32.totalorder %v2127, 1
    %v2133 = vsel %vm2128, %v2117, 0.0
    %v2134 = vsel %vm2129, %v2117, 0.0
    %v2135 = vsel %vm2130, %v2117, 0.0
    %v2136 = vsel %vm2131, %v2117, 0.0
    %v2137 = vsel %vm2132, %v2117, 0.0
    %v2138 = vadd.f32 %v2066, %v2133
    %v2139 = vadd.f32 %v2067, %v2134
    %v2140 = vadd.f32 %v2068, %v2135
    %v2141 = vadd.f32 %v2069, %v2136
    %v2142 = vadd.f32 %v2070, %v2137
    %v2143 = vlaneseq
    %v2144 = vshrl.u32 %v2143, 7
    %v2145 = vsub.s32 1, %v2144
    %v2146 = vrot.slane %v739, %v2145
    %v2147 = vmul.f32 %v2146, %v913
    %v2148 = vmul.f32 %v2146, %v914
    %v2149 = vmul.f32 %v2147, 1.442695
    %v2150 = vpow.pop %v2149
    %v2151 = vmul.f32 %v2148, 1.442695
    %v2152 = vpow.pop %v2151
    %2153 = vset.pattern.permute.xlu0 17
    %2154 = vperm.xlu0 %2153, %v822
    %v2155 = vpop.permute.xlu0 %2154
    %2157 = vset.pattern.permute.xlu0 17
    %2158 = vperm.xlu0 %2157, %v827
    %v2159 = vpop.permute.xlu0 %2158
    %v2161 = vlaneseq
    %v2162 = vshrl.u32 %v2161, 7
    %v2163 = vsub.s32 1, %v2162
    %v2164 = vrot.slane %v744, %v2163
    %v2165 = vmul.f32 %v2155, %v2164
    %v2166 = vmul.f32 %v2159, %v2164
    %v2167 = vmul.f32 %v2150, 0.0
    %v2168 = vmul.f32 %v2152, 0.0
    %v2169 = vadd.f32 %v2167, %v2165
    %v2170 = vadd.f32 %v2168, %v2166
    %2171 = vset.pattern.permute.xlu0 17
    %2172 = vperm.xlu0 %2171, %v905
    %v2173 = vpop.permute.xlu0 %2172
    %2175 = vset.pattern.permute.xlu0 17
    %2176 = vperm.xlu0 %2175, %v910
    %v2177 = vpop.permute.xlu0 %2176
    %v2179 = vmul.f32 %v2173, %v2169
    %v2180 = vmul.f32 %v2177, %v2170
    %v2181 = vsel %vm280, %v2179, 0.0
    %v2182 = vsel %vm280, %v2180, 0.0
    %v2183 = vadd.f32 %v2181, %v2182
    %v2184 = vrot.slane %v2183, 4
    %v2185 = vadd.f32 %v2183, %v2184
    %v2186 = vrot.slane %v2185, 2
    %v2187 = vadd.f32 %v2185, %v2186
    %v2188 = vrot.slane %v2187, 1
    %v2189 = vadd.f32 %v2187, %v2188
    %vm2190 = vcmp.eq.s32.totalorder %v54, 17
    %vm2191 = vcmp.eq.s32.totalorder %v55, 17
    %vm2192 = vcmp.eq.s32.totalorder %v56, 17
    %vm2193 = vcmp.eq.s32.totalorder %v57, 17
    %vm2194 = vcmp.eq.s32.totalorder %v58, 17
    %v2195 = vsel %vm2190, 1, 0
    %v2196 = vsel %vm2191, 1, 0
    %v2197 = vsel %vm2192, 1, 0
    %v2198 = vsel %vm2193, 1, 0
    %v2199 = vsel %vm2194, 1, 0
    %vm2200 = vcmp.eq.s32.totalorder %v2195, 1
    %vm2201 = vcmp.eq.s32.totalorder %v2196, 1
    %vm2202 = vcmp.eq.s32.totalorder %v2197, 1
    %vm2203 = vcmp.eq.s32.totalorder %v2198, 1
    %vm2204 = vcmp.eq.s32.totalorder %v2199, 1
    %v2205 = vsel %vm2200, %v2189, 0.0
    %v2206 = vsel %vm2201, %v2189, 0.0
    %v2207 = vsel %vm2202, %v2189, 0.0
    %v2208 = vsel %vm2203, %v2189, 0.0
    %v2209 = vsel %vm2204, %v2189, 0.0
    %v2210 = vadd.f32 %v2138, %v2205
    %v2211 = vadd.f32 %v2139, %v2206
    %v2212 = vadd.f32 %v2140, %v2207
    %v2213 = vadd.f32 %v2141, %v2208
    %v2214 = vadd.f32 %v2142, %v2209
    %v2215 = vlaneseq
    %v2216 = vshrl.u32 %v2215, 7
    %v2217 = vsub.s32 2, %v2216
    %v2218 = vrot.slane %v739, %v2217
    %v2219 = vmul.f32 %v2218, %v913
    %v2220 = vmul.f32 %v2218, %v914
    %v2221 = vmul.f32 %v2219, 1.442695
    %v2222 = vpow.pop %v2221
    %v2223 = vmul.f32 %v2220, 1.442695
    %v2224 = vpow.pop %v2223
    %2225 = vset.pattern.permute.xlu0 18
    %2226 = vperm.xlu0 %2225, %v822
    %v2227 = vpop.permute.xlu0 %2226
    %2229 = vset.pattern.permute.xlu0 18
    %2230 = vperm.xlu0 %2229, %v827
    %v2231 = vpop.permute.xlu0 %2230
    %v2233 = vlaneseq
    %v2234 = vshrl.u32 %v2233, 7
    %v2235 = vsub.s32 2, %v2234
    %v2236 = vrot.slane %v744, %v2235
    %v2237 = vmul.f32 %v2227, %v2236
    %v2238 = vmul.f32 %v2231, %v2236
    %v2239 = vmul.f32 %v2222, %v2169
    %v2240 = vmul.f32 %v2224, %v2170
    %v2241 = vadd.f32 %v2239, %v2237
    %v2242 = vadd.f32 %v2240, %v2238
    %2243 = vset.pattern.permute.xlu0 18
    %2244 = vperm.xlu0 %2243, %v905
    %v2245 = vpop.permute.xlu0 %2244
    %2247 = vset.pattern.permute.xlu0 18
    %2248 = vperm.xlu0 %2247, %v910
    %v2249 = vpop.permute.xlu0 %2248
    %v2251 = vmul.f32 %v2245, %v2241
    %v2252 = vmul.f32 %v2249, %v2242
    %v2253 = vsel %vm280, %v2251, 0.0
    %v2254 = vsel %vm280, %v2252, 0.0
    %v2255 = vadd.f32 %v2253, %v2254
    %v2256 = vrot.slane %v2255, 4
    %v2257 = vadd.f32 %v2255, %v2256
    %v2258 = vrot.slane %v2257, 2
    %v2259 = vadd.f32 %v2257, %v2258
    %v2260 = vrot.slane %v2259, 1
    %v2261 = vadd.f32 %v2259, %v2260
    %vm2262 = vcmp.eq.s32.totalorder %v54, 18
    %vm2263 = vcmp.eq.s32.totalorder %v55, 18
    %vm2264 = vcmp.eq.s32.totalorder %v56, 18
    %vm2265 = vcmp.eq.s32.totalorder %v57, 18
    %vm2266 = vcmp.eq.s32.totalorder %v58, 18
    %v2267 = vsel %vm2262, 1, 0
    %v2268 = vsel %vm2263, 1, 0
    %v2269 = vsel %vm2264, 1, 0
    %v2270 = vsel %vm2265, 1, 0
    %v2271 = vsel %vm2266, 1, 0
    %vm2272 = vcmp.eq.s32.totalorder %v2267, 1
    %vm2273 = vcmp.eq.s32.totalorder %v2268, 1
    %vm2274 = vcmp.eq.s32.totalorder %v2269, 1
    %vm2275 = vcmp.eq.s32.totalorder %v2270, 1
    %vm2276 = vcmp.eq.s32.totalorder %v2271, 1
    %v2277 = vsel %vm2272, %v2261, 0.0
    %v2278 = vsel %vm2273, %v2261, 0.0
    %v2279 = vsel %vm2274, %v2261, 0.0
    %v2280 = vsel %vm2275, %v2261, 0.0
    %v2281 = vsel %vm2276, %v2261, 0.0
    %v2282 = vadd.f32 %v2210, %v2277
    %v2283 = vadd.f32 %v2211, %v2278
    %v2284 = vadd.f32 %v2212, %v2279
    %v2285 = vadd.f32 %v2213, %v2280
    %v2286 = vadd.f32 %v2214, %v2281
    %v2287 = vlaneseq
    %v2288 = vshrl.u32 %v2287, 7
    %v2289 = vsub.s32 3, %v2288
    %v2290 = vrot.slane %v739, %v2289
    %v2291 = vmul.f32 %v2290, %v913
    %v2292 = vmul.f32 %v2290, %v914
    %v2293 = vmul.f32 %v2291, 1.442695
    %v2294 = vpow.pop %v2293
    %v2295 = vmul.f32 %v2292, 1.442695
    %v2296 = vpow.pop %v2295
    %2297 = vset.pattern.permute.xlu0 19
    %2298 = vperm.xlu0 %2297, %v822
    %v2299 = vpop.permute.xlu0 %2298
    %2301 = vset.pattern.permute.xlu0 19
    %2302 = vperm.xlu0 %2301, %v827
    %v2303 = vpop.permute.xlu0 %2302
    %v2305 = vlaneseq
    %v2306 = vshrl.u32 %v2305, 7
    %v2307 = vsub.s32 3, %v2306
    %v2308 = vrot.slane %v744, %v2307
    %v2309 = vmul.f32 %v2299, %v2308
    %v2310 = vmul.f32 %v2303, %v2308
    %v2311 = vmul.f32 %v2294, %v2241
    %v2312 = vmul.f32 %v2296, %v2242
    %v2313 = vadd.f32 %v2311, %v2309
    %v2314 = vadd.f32 %v2312, %v2310
    %2315 = vset.pattern.permute.xlu0 19
    %2316 = vperm.xlu0 %2315, %v905
    %v2317 = vpop.permute.xlu0 %2316
    %2319 = vset.pattern.permute.xlu0 19
    %2320 = vperm.xlu0 %2319, %v910
    %v2321 = vpop.permute.xlu0 %2320
    %v2323 = vmul.f32 %v2317, %v2313
    %v2324 = vmul.f32 %v2321, %v2314
    %v2325 = vsel %vm280, %v2323, 0.0
    %v2326 = vsel %vm280, %v2324, 0.0
    %v2327 = vadd.f32 %v2325, %v2326
    %v2328 = vrot.slane %v2327, 4
    %v2329 = vadd.f32 %v2327, %v2328
    %v2330 = vrot.slane %v2329, 2
    %v2331 = vadd.f32 %v2329, %v2330
    %v2332 = vrot.slane %v2331, 1
    %v2333 = vadd.f32 %v2331, %v2332
    %vm2334 = vcmp.eq.s32.totalorder %v54, 19
    %vm2335 = vcmp.eq.s32.totalorder %v55, 19
    %vm2336 = vcmp.eq.s32.totalorder %v56, 19
    %vm2337 = vcmp.eq.s32.totalorder %v57, 19
    %vm2338 = vcmp.eq.s32.totalorder %v58, 19
    %v2339 = vsel %vm2334, 1, 0
    %v2340 = vsel %vm2335, 1, 0
    %v2341 = vsel %vm2336, 1, 0
    %v2342 = vsel %vm2337, 1, 0
    %v2343 = vsel %vm2338, 1, 0
    %vm2344 = vcmp.eq.s32.totalorder %v2339, 1
    %vm2345 = vcmp.eq.s32.totalorder %v2340, 1
    %vm2346 = vcmp.eq.s32.totalorder %v2341, 1
    %vm2347 = vcmp.eq.s32.totalorder %v2342, 1
    %vm2348 = vcmp.eq.s32.totalorder %v2343, 1
    %v2349 = vsel %vm2344, %v2333, 0.0
    %v2350 = vsel %vm2345, %v2333, 0.0
    %v2351 = vsel %vm2346, %v2333, 0.0
    %v2352 = vsel %vm2347, %v2333, 0.0
    %v2353 = vsel %vm2348, %v2333, 0.0
    %v2354 = vadd.f32 %v2282, %v2349
    %v2355 = vadd.f32 %v2283, %v2350
    %v2356 = vadd.f32 %v2284, %v2351
    %v2357 = vadd.f32 %v2285, %v2352
    %v2358 = vadd.f32 %v2286, %v2353
    %v2359 = vlaneseq
    %v2360 = vshrl.u32 %v2359, 7
    %v2361 = vsub.s32 4, %v2360
    %v2362 = vrot.slane %v739, %v2361
    %v2363 = vmul.f32 %v2362, %v913
    %v2364 = vmul.f32 %v2362, %v914
    %v2365 = vmul.f32 %v2363, 1.442695
    %v2366 = vpow.pop %v2365
    %v2367 = vmul.f32 %v2364, 1.442695
    %v2368 = vpow.pop %v2367
    %2369 = vset.pattern.permute.xlu0 20
    %2370 = vperm.xlu0 %2369, %v822
    %v2371 = vpop.permute.xlu0 %2370
    %2373 = vset.pattern.permute.xlu0 20
    %2374 = vperm.xlu0 %2373, %v827
    %v2375 = vpop.permute.xlu0 %2374
    %v2377 = vlaneseq
    %v2378 = vshrl.u32 %v2377, 7
    %v2379 = vsub.s32 4, %v2378
    %v2380 = vrot.slane %v744, %v2379
    %v2381 = vmul.f32 %v2371, %v2380
    %v2382 = vmul.f32 %v2375, %v2380
    %v2383 = vmul.f32 %v2366, %v2313
    %v2384 = vmul.f32 %v2368, %v2314
    %v2385 = vadd.f32 %v2383, %v2381
    %v2386 = vadd.f32 %v2384, %v2382
    %2387 = vset.pattern.permute.xlu0 20
    %2388 = vperm.xlu0 %2387, %v905
    %v2389 = vpop.permute.xlu0 %2388
    %2391 = vset.pattern.permute.xlu0 20
    %2392 = vperm.xlu0 %2391, %v910
    %v2393 = vpop.permute.xlu0 %2392
    %v2395 = vmul.f32 %v2389, %v2385
    %v2396 = vmul.f32 %v2393, %v2386
    %v2397 = vsel %vm280, %v2395, 0.0
    %v2398 = vsel %vm280, %v2396, 0.0
    %v2399 = vadd.f32 %v2397, %v2398
    %v2400 = vrot.slane %v2399, 4
    %v2401 = vadd.f32 %v2399, %v2400
    %v2402 = vrot.slane %v2401, 2
    %v2403 = vadd.f32 %v2401, %v2402
    %v2404 = vrot.slane %v2403, 1
    %v2405 = vadd.f32 %v2403, %v2404
    %vm2406 = vcmp.eq.s32.totalorder %v54, 20
    %vm2407 = vcmp.eq.s32.totalorder %v55, 20
    %vm2408 = vcmp.eq.s32.totalorder %v56, 20
    %vm2409 = vcmp.eq.s32.totalorder %v57, 20
    %vm2410 = vcmp.eq.s32.totalorder %v58, 20
    %v2411 = vsel %vm2406, 1, 0
    %v2412 = vsel %vm2407, 1, 0
    %v2413 = vsel %vm2408, 1, 0
    %v2414 = vsel %vm2409, 1, 0
    %v2415 = vsel %vm2410, 1, 0
    %vm2416 = vcmp.eq.s32.totalorder %v2411, 1
    %vm2417 = vcmp.eq.s32.totalorder %v2412, 1
    %vm2418 = vcmp.eq.s32.totalorder %v2413, 1
    %vm2419 = vcmp.eq.s32.totalorder %v2414, 1
    %vm2420 = vcmp.eq.s32.totalorder %v2415, 1
    %v2421 = vsel %vm2416, %v2405, 0.0
    %v2422 = vsel %vm2417, %v2405, 0.0
    %v2423 = vsel %vm2418, %v2405, 0.0
    %v2424 = vsel %vm2419, %v2405, 0.0
    %v2425 = vsel %vm2420, %v2405, 0.0
    %v2426 = vadd.f32 %v2354, %v2421
    %v2427 = vadd.f32 %v2355, %v2422
    %v2428 = vadd.f32 %v2356, %v2423
    %v2429 = vadd.f32 %v2357, %v2424
    %v2430 = vadd.f32 %v2358, %v2425
    %v2431 = vlaneseq
    %v2432 = vshrl.u32 %v2431, 7
    %v2433 = vsub.s32 5, %v2432
    %v2434 = vrot.slane %v739, %v2433
    %v2435 = vmul.f32 %v2434, %v913
    %v2436 = vmul.f32 %v2434, %v914
    %v2437 = vmul.f32 %v2435, 1.442695
    %v2438 = vpow.pop %v2437
    %v2439 = vmul.f32 %v2436, 1.442695
    %v2440 = vpow.pop %v2439
    %2441 = vset.pattern.permute.xlu0 21
    %2442 = vperm.xlu0 %2441, %v822
    %v2443 = vpop.permute.xlu0 %2442
    %2445 = vset.pattern.permute.xlu0 21
    %2446 = vperm.xlu0 %2445, %v827
    %v2447 = vpop.permute.xlu0 %2446
    %v2449 = vlaneseq
    %v2450 = vshrl.u32 %v2449, 7
    %v2451 = vsub.s32 5, %v2450
    %v2452 = vrot.slane %v744, %v2451
    %v2453 = vmul.f32 %v2443, %v2452
    %v2454 = vmul.f32 %v2447, %v2452
    %v2455 = vmul.f32 %v2438, %v2385
    %v2456 = vmul.f32 %v2440, %v2386
    %v2457 = vadd.f32 %v2455, %v2453
    %v2458 = vadd.f32 %v2456, %v2454
    %2459 = vset.pattern.permute.xlu0 21
    %2460 = vperm.xlu0 %2459, %v905
    %v2461 = vpop.permute.xlu0 %2460
    %2463 = vset.pattern.permute.xlu0 21
    %2464 = vperm.xlu0 %2463, %v910
    %v2465 = vpop.permute.xlu0 %2464
    %v2467 = vmul.f32 %v2461, %v2457
    %v2468 = vmul.f32 %v2465, %v2458
    %v2469 = vsel %vm280, %v2467, 0.0
    %v2470 = vsel %vm280, %v2468, 0.0
    %v2471 = vadd.f32 %v2469, %v2470
    %v2472 = vrot.slane %v2471, 4
    %v2473 = vadd.f32 %v2471, %v2472
    %v2474 = vrot.slane %v2473, 2
    %v2475 = vadd.f32 %v2473, %v2474
    %v2476 = vrot.slane %v2475, 1
    %v2477 = vadd.f32 %v2475, %v2476
    %vm2478 = vcmp.eq.s32.totalorder %v54, 21
    %vm2479 = vcmp.eq.s32.totalorder %v55, 21
    %vm2480 = vcmp.eq.s32.totalorder %v56, 21
    %vm2481 = vcmp.eq.s32.totalorder %v57, 21
    %vm2482 = vcmp.eq.s32.totalorder %v58, 21
    %v2483 = vsel %vm2478, 1, 0
    %v2484 = vsel %vm2479, 1, 0
    %v2485 = vsel %vm2480, 1, 0
    %v2486 = vsel %vm2481, 1, 0
    %v2487 = vsel %vm2482, 1, 0
    %vm2488 = vcmp.eq.s32.totalorder %v2483, 1
    %vm2489 = vcmp.eq.s32.totalorder %v2484, 1
    %vm2490 = vcmp.eq.s32.totalorder %v2485, 1
    %vm2491 = vcmp.eq.s32.totalorder %v2486, 1
    %vm2492 = vcmp.eq.s32.totalorder %v2487, 1
    %v2493 = vsel %vm2488, %v2477, 0.0
    %v2494 = vsel %vm2489, %v2477, 0.0
    %v2495 = vsel %vm2490, %v2477, 0.0
    %v2496 = vsel %vm2491, %v2477, 0.0
    %v2497 = vsel %vm2492, %v2477, 0.0
    %v2498 = vadd.f32 %v2426, %v2493
    %v2499 = vadd.f32 %v2427, %v2494
    %v2500 = vadd.f32 %v2428, %v2495
    %v2501 = vadd.f32 %v2429, %v2496
    %v2502 = vadd.f32 %v2430, %v2497
    %v2503 = vlaneseq
    %v2504 = vshrl.u32 %v2503, 7
    %v2505 = vsub.s32 6, %v2504
    %v2506 = vrot.slane %v739, %v2505
    %v2507 = vmul.f32 %v2506, %v913
    %v2508 = vmul.f32 %v2506, %v914
    %v2509 = vmul.f32 %v2507, 1.442695
    %v2510 = vpow.pop %v2509
    %v2511 = vmul.f32 %v2508, 1.442695
    %v2512 = vpow.pop %v2511
    %2513 = vset.pattern.permute.xlu0 22
    %2514 = vperm.xlu0 %2513, %v822
    %v2515 = vpop.permute.xlu0 %2514
    %2517 = vset.pattern.permute.xlu0 22
    %2518 = vperm.xlu0 %2517, %v827
    %v2519 = vpop.permute.xlu0 %2518
    %v2521 = vlaneseq
    %v2522 = vshrl.u32 %v2521, 7
    %v2523 = vsub.s32 6, %v2522
    %v2524 = vrot.slane %v744, %v2523
    %v2525 = vmul.f32 %v2515, %v2524
    %v2526 = vmul.f32 %v2519, %v2524
    %v2527 = vmul.f32 %v2510, %v2457
    %v2528 = vmul.f32 %v2512, %v2458
    %v2529 = vadd.f32 %v2527, %v2525
    %v2530 = vadd.f32 %v2528, %v2526
    %2531 = vset.pattern.permute.xlu0 22
    %2532 = vperm.xlu0 %2531, %v905
    %v2533 = vpop.permute.xlu0 %2532
    %2535 = vset.pattern.permute.xlu0 22
    %2536 = vperm.xlu0 %2535, %v910
    %v2537 = vpop.permute.xlu0 %2536
    %v2539 = vmul.f32 %v2533, %v2529
    %v2540 = vmul.f32 %v2537, %v2530
    %v2541 = vsel %vm280, %v2539, 0.0
    %v2542 = vsel %vm280, %v2540, 0.0
    %v2543 = vadd.f32 %v2541, %v2542
    %v2544 = vrot.slane %v2543, 4
    %v2545 = vadd.f32 %v2543, %v2544
    %v2546 = vrot.slane %v2545, 2
    %v2547 = vadd.f32 %v2545, %v2546
    %v2548 = vrot.slane %v2547, 1
    %v2549 = vadd.f32 %v2547, %v2548
    %vm2550 = vcmp.eq.s32.totalorder %v54, 22
    %vm2551 = vcmp.eq.s32.totalorder %v55, 22
    %vm2552 = vcmp.eq.s32.totalorder %v56, 22
    %vm2553 = vcmp.eq.s32.totalorder %v57, 22
    %vm2554 = vcmp.eq.s32.totalorder %v58, 22
    %v2555 = vsel %vm2550, 1, 0
    %v2556 = vsel %vm2551, 1, 0
    %v2557 = vsel %vm2552, 1, 0
    %v2558 = vsel %vm2553, 1, 0
    %v2559 = vsel %vm2554, 1, 0
    %vm2560 = vcmp.eq.s32.totalorder %v2555, 1
    %vm2561 = vcmp.eq.s32.totalorder %v2556, 1
    %vm2562 = vcmp.eq.s32.totalorder %v2557, 1
    %vm2563 = vcmp.eq.s32.totalorder %v2558, 1
    %vm2564 = vcmp.eq.s32.totalorder %v2559, 1
    %v2565 = vsel %vm2560, %v2549, 0.0
    %v2566 = vsel %vm2561, %v2549, 0.0
    %v2567 = vsel %vm2562, %v2549, 0.0
    %v2568 = vsel %vm2563, %v2549, 0.0
    %v2569 = vsel %vm2564, %v2549, 0.0
    %v2570 = vadd.f32 %v2498, %v2565
    %v2571 = vadd.f32 %v2499, %v2566
    %v2572 = vadd.f32 %v2500, %v2567
    %v2573 = vadd.f32 %v2501, %v2568
    %v2574 = vadd.f32 %v2502, %v2569
    %v2575 = vlaneseq
    %v2576 = vshrl.u32 %v2575, 7
    %v2577 = vsub.s32 7, %v2576
    %v2578 = vrot.slane %v739, %v2577
    %v2579 = vmul.f32 %v2578, %v913
    %v2580 = vmul.f32 %v2578, %v914
    %v2581 = vmul.f32 %v2579, 1.442695
    %v2582 = vpow.pop %v2581
    %v2583 = vmul.f32 %v2580, 1.442695
    %v2584 = vpow.pop %v2583
    %2585 = vset.pattern.permute.xlu0 23
    %2586 = vperm.xlu0 %2585, %v822
    %v2587 = vpop.permute.xlu0 %2586
    %2589 = vset.pattern.permute.xlu0 23
    %2590 = vperm.xlu0 %2589, %v827
    %v2591 = vpop.permute.xlu0 %2590
    %v2593 = vlaneseq
    %v2594 = vshrl.u32 %v2593, 7
    %v2595 = vsub.s32 7, %v2594
    %v2596 = vrot.slane %v744, %v2595
    %v2597 = vmul.f32 %v2587, %v2596
    %v2598 = vmul.f32 %v2591, %v2596
    %v2599 = vmul.f32 %v2582, %v2529
    %v2600 = vmul.f32 %v2584, %v2530
    %v2601 = vadd.f32 %v2599, %v2597
    %v2602 = vadd.f32 %v2600, %v2598
    %2603 = vset.pattern.permute.xlu0 23
    %2604 = vperm.xlu0 %2603, %v905
    %v2605 = vpop.permute.xlu0 %2604
    %2607 = vset.pattern.permute.xlu0 23
    %2608 = vperm.xlu0 %2607, %v910
    %v2609 = vpop.permute.xlu0 %2608
    %v2611 = vmul.f32 %v2605, %v2601
    %v2612 = vmul.f32 %v2609, %v2602
    %v2613 = vsel %vm280, %v2611, 0.0
    %v2614 = vsel %vm280, %v2612, 0.0
    %v2615 = vadd.f32 %v2613, %v2614
    %v2616 = vrot.slane %v2615, 4
    %v2617 = vadd.f32 %v2615, %v2616
    %v2618 = vrot.slane %v2617, 2
    %v2619 = vadd.f32 %v2617, %v2618
    %v2620 = vrot.slane %v2619, 1
    %v2621 = vadd.f32 %v2619, %v2620
    %vm2622 = vcmp.eq.s32.totalorder %v54, 23
    %vm2623 = vcmp.eq.s32.totalorder %v55, 23
    %vm2624 = vcmp.eq.s32.totalorder %v56, 23
    %vm2625 = vcmp.eq.s32.totalorder %v57, 23
    %vm2626 = vcmp.eq.s32.totalorder %v58, 23
    %v2627 = vsel %vm2622, 1, 0
    %v2628 = vsel %vm2623, 1, 0
    %v2629 = vsel %vm2624, 1, 0
    %v2630 = vsel %vm2625, 1, 0
    %v2631 = vsel %vm2626, 1, 0
    %vm2632 = vcmp.eq.s32.totalorder %v2627, 1
    %vm2633 = vcmp.eq.s32.totalorder %v2628, 1
    %vm2634 = vcmp.eq.s32.totalorder %v2629, 1
    %vm2635 = vcmp.eq.s32.totalorder %v2630, 1
    %vm2636 = vcmp.eq.s32.totalorder %v2631, 1
    %v2637 = vsel %vm2632, %v2621, 0.0
    %v2638 = vsel %vm2633, %v2621, 0.0
    %v2639 = vsel %vm2634, %v2621, 0.0
    %v2640 = vsel %vm2635, %v2621, 0.0
    %v2641 = vsel %vm2636, %v2621, 0.0
    %v2642 = vadd.f32 %v2570, %v2637
    %v2643 = vadd.f32 %v2571, %v2638
    %v2644 = vadd.f32 %v2572, %v2639
    %v2645 = vadd.f32 %v2573, %v2640
    %v2646 = vadd.f32 %v2574, %v2641
    %v2647 = vlaneseq
    %v2648 = vshrl.u32 %v2647, 7
    %v2649 = vsub.s32 0, %v2648
    %v2650 = vrot.slane %v740, %v2649
    %v2651 = vmul.f32 %v2650, %v913
    %v2652 = vmul.f32 %v2650, %v914
    %v2653 = vmul.f32 %v2651, 1.442695
    %v2654 = vpow.pop %v2653
    %v2655 = vmul.f32 %v2652, 1.442695
    %v2656 = vpow.pop %v2655
    %2657 = vset.pattern.permute.xlu0 24
    %2658 = vperm.xlu0 %2657, %v822
    %v2659 = vpop.permute.xlu0 %2658
    %2661 = vset.pattern.permute.xlu0 24
    %2662 = vperm.xlu0 %2661, %v827
    %v2663 = vpop.permute.xlu0 %2662
    %v2665 = vlaneseq
    %v2666 = vshrl.u32 %v2665, 7
    %v2667 = vsub.s32 0, %v2666
    %v2668 = vrot.slane %v745, %v2667
    %v2669 = vmul.f32 %v2659, %v2668
    %v2670 = vmul.f32 %v2663, %v2668
    %v2671 = vmul.f32 %v2654, %v2601
    %v2672 = vmul.f32 %v2656, %v2602
    %v2673 = vadd.f32 %v2671, %v2669
    %v2674 = vadd.f32 %v2672, %v2670
    %2675 = vset.pattern.permute.xlu0 24
    %2676 = vperm.xlu0 %2675, %v905
    %v2677 = vpop.permute.xlu0 %2676
    %2679 = vset.pattern.permute.xlu0 24
    %2680 = vperm.xlu0 %2679, %v910
    %v2681 = vpop.permute.xlu0 %2680
    %v2683 = vmul.f32 %v2677, %v2673
    %v2684 = vmul.f32 %v2681, %v2674
    %v2685 = vsel %vm280, %v2683, 0.0
    %v2686 = vsel %vm280, %v2684, 0.0
    %v2687 = vadd.f32 %v2685, %v2686
    %v2688 = vrot.slane %v2687, 4
    %v2689 = vadd.f32 %v2687, %v2688
    %v2690 = vrot.slane %v2689, 2
    %v2691 = vadd.f32 %v2689, %v2690
    %v2692 = vrot.slane %v2691, 1
    %v2693 = vadd.f32 %v2691, %v2692
    %vm2694 = vcmp.eq.s32.totalorder %v54, 24
    %vm2695 = vcmp.eq.s32.totalorder %v55, 24
    %vm2696 = vcmp.eq.s32.totalorder %v56, 24
    %vm2697 = vcmp.eq.s32.totalorder %v57, 24
    %vm2698 = vcmp.eq.s32.totalorder %v58, 24
    %v2699 = vsel %vm2694, 1, 0
    %v2700 = vsel %vm2695, 1, 0
    %v2701 = vsel %vm2696, 1, 0
    %v2702 = vsel %vm2697, 1, 0
    %v2703 = vsel %vm2698, 1, 0
    %vm2704 = vcmp.eq.s32.totalorder %v2699, 1
    %vm2705 = vcmp.eq.s32.totalorder %v2700, 1
    %vm2706 = vcmp.eq.s32.totalorder %v2701, 1
    %vm2707 = vcmp.eq.s32.totalorder %v2702, 1
    %vm2708 = vcmp.eq.s32.totalorder %v2703, 1
    %v2709 = vsel %vm2704, %v2693, 0.0
    %v2710 = vsel %vm2705, %v2693, 0.0
    %v2711 = vsel %vm2706, %v2693, 0.0
    %v2712 = vsel %vm2707, %v2693, 0.0
    %v2713 = vsel %vm2708, %v2693, 0.0
    %v2714 = vadd.f32 %v2642, %v2709
    %v2715 = vadd.f32 %v2643, %v2710
    %v2716 = vadd.f32 %v2644, %v2711
    %v2717 = vadd.f32 %v2645, %v2712
    %v2718 = vadd.f32 %v2646, %v2713
    %v2719 = vlaneseq
    %v2720 = vshrl.u32 %v2719, 7
    %v2721 = vsub.s32 1, %v2720
    %v2722 = vrot.slane %v740, %v2721
    %v2723 = vmul.f32 %v2722, %v913
    %v2724 = vmul.f32 %v2722, %v914
    %v2725 = vmul.f32 %v2723, 1.442695
    %v2726 = vpow.pop %v2725
    %v2727 = vmul.f32 %v2724, 1.442695
    %v2728 = vpow.pop %v2727
    %2729 = vset.pattern.permute.xlu0 25
    %2730 = vperm.xlu0 %2729, %v822
    %v2731 = vpop.permute.xlu0 %2730
    %2733 = vset.pattern.permute.xlu0 25
    %2734 = vperm.xlu0 %2733, %v827
    %v2735 = vpop.permute.xlu0 %2734
    %v2737 = vlaneseq
    %v2738 = vshrl.u32 %v2737, 7
    %v2739 = vsub.s32 1, %v2738
    %v2740 = vrot.slane %v745, %v2739
    %v2741 = vmul.f32 %v2731, %v2740
    %v2742 = vmul.f32 %v2735, %v2740
    %v2743 = vmul.f32 %v2726, %v2673
    %v2744 = vmul.f32 %v2728, %v2674
    %v2745 = vadd.f32 %v2743, %v2741
    %v2746 = vadd.f32 %v2744, %v2742
    %2747 = vset.pattern.permute.xlu0 25
    %2748 = vperm.xlu0 %2747, %v905
    %v2749 = vpop.permute.xlu0 %2748
    %2751 = vset.pattern.permute.xlu0 25
    %2752 = vperm.xlu0 %2751, %v910
    %v2753 = vpop.permute.xlu0 %2752
    %v2755 = vmul.f32 %v2749, %v2745
    %v2756 = vmul.f32 %v2753, %v2746
    %v2757 = vsel %vm280, %v2755, 0.0
    %v2758 = vsel %vm280, %v2756, 0.0
    %v2759 = vadd.f32 %v2757, %v2758
    %v2760 = vrot.slane %v2759, 4
    %v2761 = vadd.f32 %v2759, %v2760
    %v2762 = vrot.slane %v2761, 2
    %v2763 = vadd.f32 %v2761, %v2762
    %v2764 = vrot.slane %v2763, 1
    %v2765 = vadd.f32 %v2763, %v2764
    %vm2766 = vcmp.eq.s32.totalorder %v54, 25
    %vm2767 = vcmp.eq.s32.totalorder %v55, 25
    %vm2768 = vcmp.eq.s32.totalorder %v56, 25
    %vm2769 = vcmp.eq.s32.totalorder %v57, 25
    %vm2770 = vcmp.eq.s32.totalorder %v58, 25
    %v2771 = vsel %vm2766, 1, 0
    %v2772 = vsel %vm2767, 1, 0
    %v2773 = vsel %vm2768, 1, 0
    %v2774 = vsel %vm2769, 1, 0
    %v2775 = vsel %vm2770, 1, 0
    %vm2776 = vcmp.eq.s32.totalorder %v2771, 1
    %vm2777 = vcmp.eq.s32.totalorder %v2772, 1
    %vm2778 = vcmp.eq.s32.totalorder %v2773, 1
    %vm2779 = vcmp.eq.s32.totalorder %v2774, 1
    %vm2780 = vcmp.eq.s32.totalorder %v2775, 1
    %v2781 = vsel %vm2776, %v2765, 0.0
    %v2782 = vsel %vm2777, %v2765, 0.0
    %v2783 = vsel %vm2778, %v2765, 0.0
    %v2784 = vsel %vm2779, %v2765, 0.0
    %v2785 = vsel %vm2780, %v2765, 0.0
    %v2786 = vadd.f32 %v2714, %v2781
    %v2787 = vadd.f32 %v2715, %v2782
    %v2788 = vadd.f32 %v2716, %v2783
    %v2789 = vadd.f32 %v2717, %v2784
    %v2790 = vadd.f32 %v2718, %v2785
    %v2791 = vlaneseq
    %v2792 = vshrl.u32 %v2791, 7
    %v2793 = vsub.s32 2, %v2792
    %v2794 = vrot.slane %v740, %v2793
    %v2795 = vmul.f32 %v2794, %v913
    %v2796 = vmul.f32 %v2794, %v914
    %v2797 = vmul.f32 %v2795, 1.442695
    %v2798 = vpow.pop %v2797
    %v2799 = vmul.f32 %v2796, 1.442695
    %v2800 = vpow.pop %v2799
    %2801 = vset.pattern.permute.xlu0 26
    %2802 = vperm.xlu0 %2801, %v822
    %v2803 = vpop.permute.xlu0 %2802
    %2805 = vset.pattern.permute.xlu0 26
    %2806 = vperm.xlu0 %2805, %v827
    %v2807 = vpop.permute.xlu0 %2806
    %v2809 = vlaneseq
    %v2810 = vshrl.u32 %v2809, 7
    %v2811 = vsub.s32 2, %v2810
    %v2812 = vrot.slane %v745, %v2811
    %v2813 = vmul.f32 %v2803, %v2812
    %v2814 = vmul.f32 %v2807, %v2812
    %v2815 = vmul.f32 %v2798, %v2745
    %v2816 = vmul.f32 %v2800, %v2746
    %v2817 = vadd.f32 %v2815, %v2813
    %v2818 = vadd.f32 %v2816, %v2814
    %2819 = vset.pattern.permute.xlu0 26
    %2820 = vperm.xlu0 %2819, %v905
    %v2821 = vpop.permute.xlu0 %2820
    %2823 = vset.pattern.permute.xlu0 26
    %2824 = vperm.xlu0 %2823, %v910
    %v2825 = vpop.permute.xlu0 %2824
    %v2827 = vmul.f32 %v2821, %v2817
    %v2828 = vmul.f32 %v2825, %v2818
    %v2829 = vsel %vm280, %v2827, 0.0
    %v2830 = vsel %vm280, %v2828, 0.0
    %v2831 = vadd.f32 %v2829, %v2830
    %v2832 = vrot.slane %v2831, 4
    %v2833 = vadd.f32 %v2831, %v2832
    %v2834 = vrot.slane %v2833, 2
    %v2835 = vadd.f32 %v2833, %v2834
    %v2836 = vrot.slane %v2835, 1
    %v2837 = vadd.f32 %v2835, %v2836
    %vm2838 = vcmp.eq.s32.totalorder %v54, 26
    %vm2839 = vcmp.eq.s32.totalorder %v55, 26
    %vm2840 = vcmp.eq.s32.totalorder %v56, 26
    %vm2841 = vcmp.eq.s32.totalorder %v57, 26
    %vm2842 = vcmp.eq.s32.totalorder %v58, 26
    %v2843 = vsel %vm2838, 1, 0
    %v2844 = vsel %vm2839, 1, 0
    %v2845 = vsel %vm2840, 1, 0
    %v2846 = vsel %vm2841, 1, 0
    %v2847 = vsel %vm2842, 1, 0
    %vm2848 = vcmp.eq.s32.totalorder %v2843, 1
    %vm2849 = vcmp.eq.s32.totalorder %v2844, 1
    %vm2850 = vcmp.eq.s32.totalorder %v2845, 1
    %vm2851 = vcmp.eq.s32.totalorder %v2846, 1
    %vm2852 = vcmp.eq.s32.totalorder %v2847, 1
    %v2853 = vsel %vm2848, %v2837, 0.0
    %v2854 = vsel %vm2849, %v2837, 0.0
    %v2855 = vsel %vm2850, %v2837, 0.0
    %v2856 = vsel %vm2851, %v2837, 0.0
    %v2857 = vsel %vm2852, %v2837, 0.0
    %v2858 = vadd.f32 %v2786, %v2853
    %v2859 = vadd.f32 %v2787, %v2854
    %v2860 = vadd.f32 %v2788, %v2855
    %v2861 = vadd.f32 %v2789, %v2856
    %v2862 = vadd.f32 %v2790, %v2857
    %v2863 = vlaneseq
    %v2864 = vshrl.u32 %v2863, 7
    %v2865 = vsub.s32 3, %v2864
    %v2866 = vrot.slane %v740, %v2865
    %v2867 = vmul.f32 %v2866, %v913
    %v2868 = vmul.f32 %v2866, %v914
    %v2869 = vmul.f32 %v2867, 1.442695
    %v2870 = vpow.pop %v2869
    %v2871 = vmul.f32 %v2868, 1.442695
    %v2872 = vpow.pop %v2871
    %2873 = vset.pattern.permute.xlu0 27
    %2874 = vperm.xlu0 %2873, %v822
    %v2875 = vpop.permute.xlu0 %2874
    %2877 = vset.pattern.permute.xlu0 27
    %2878 = vperm.xlu0 %2877, %v827
    %v2879 = vpop.permute.xlu0 %2878
    %v2881 = vlaneseq
    %v2882 = vshrl.u32 %v2881, 7
    %v2883 = vsub.s32 3, %v2882
    %v2884 = vrot.slane %v745, %v2883
    %v2885 = vmul.f32 %v2875, %v2884
    %v2886 = vmul.f32 %v2879, %v2884
    %v2887 = vmul.f32 %v2870, %v2817
    %v2888 = vmul.f32 %v2872, %v2818
    %v2889 = vadd.f32 %v2887, %v2885
    %v2890 = vadd.f32 %v2888, %v2886
    %2891 = vset.pattern.permute.xlu0 27
    %2892 = vperm.xlu0 %2891, %v905
    %v2893 = vpop.permute.xlu0 %2892
    %2895 = vset.pattern.permute.xlu0 27
    %2896 = vperm.xlu0 %2895, %v910
    %v2897 = vpop.permute.xlu0 %2896
    %v2899 = vmul.f32 %v2893, %v2889
    %v2900 = vmul.f32 %v2897, %v2890
    %v2901 = vsel %vm280, %v2899, 0.0
    %v2902 = vsel %vm280, %v2900, 0.0
    %v2903 = vadd.f32 %v2901, %v2902
    %v2904 = vrot.slane %v2903, 4
    %v2905 = vadd.f32 %v2903, %v2904
    %v2906 = vrot.slane %v2905, 2
    %v2907 = vadd.f32 %v2905, %v2906
    %v2908 = vrot.slane %v2907, 1
    %v2909 = vadd.f32 %v2907, %v2908
    %vm2910 = vcmp.eq.s32.totalorder %v54, 27
    %vm2911 = vcmp.eq.s32.totalorder %v55, 27
    %vm2912 = vcmp.eq.s32.totalorder %v56, 27
    %vm2913 = vcmp.eq.s32.totalorder %v57, 27
    %vm2914 = vcmp.eq.s32.totalorder %v58, 27
    %v2915 = vsel %vm2910, 1, 0
    %v2916 = vsel %vm2911, 1, 0
    %v2917 = vsel %vm2912, 1, 0
    %v2918 = vsel %vm2913, 1, 0
    %v2919 = vsel %vm2914, 1, 0
    %vm2920 = vcmp.eq.s32.totalorder %v2915, 1
    %vm2921 = vcmp.eq.s32.totalorder %v2916, 1
    %vm2922 = vcmp.eq.s32.totalorder %v2917, 1
    %vm2923 = vcmp.eq.s32.totalorder %v2918, 1
    %vm2924 = vcmp.eq.s32.totalorder %v2919, 1
    %v2925 = vsel %vm2920, %v2909, 0.0
    %v2926 = vsel %vm2921, %v2909, 0.0
    %v2927 = vsel %vm2922, %v2909, 0.0
    %v2928 = vsel %vm2923, %v2909, 0.0
    %v2929 = vsel %vm2924, %v2909, 0.0
    %v2930 = vadd.f32 %v2858, %v2925
    %v2931 = vadd.f32 %v2859, %v2926
    %v2932 = vadd.f32 %v2860, %v2927
    %v2933 = vadd.f32 %v2861, %v2928
    %v2934 = vadd.f32 %v2862, %v2929
    %v2935 = vlaneseq
    %v2936 = vshrl.u32 %v2935, 7
    %v2937 = vsub.s32 4, %v2936
    %v2938 = vrot.slane %v740, %v2937
    %v2939 = vmul.f32 %v2938, %v913
    %v2940 = vmul.f32 %v2938, %v914
    %v2941 = vmul.f32 %v2939, 1.442695
    %v2942 = vpow.pop %v2941
    %v2943 = vmul.f32 %v2940, 1.442695
    %v2944 = vpow.pop %v2943
    %2945 = vset.pattern.permute.xlu0 28
    %2946 = vperm.xlu0 %2945, %v822
    %v2947 = vpop.permute.xlu0 %2946
    %2949 = vset.pattern.permute.xlu0 28
    %2950 = vperm.xlu0 %2949, %v827
    %v2951 = vpop.permute.xlu0 %2950
    %v2953 = vlaneseq
    %v2954 = vshrl.u32 %v2953, 7
    %v2955 = vsub.s32 4, %v2954
    %v2956 = vrot.slane %v745, %v2955
    %v2957 = vmul.f32 %v2947, %v2956
    %v2958 = vmul.f32 %v2951, %v2956
    %v2959 = vmul.f32 %v2942, %v2889
    %v2960 = vmul.f32 %v2944, %v2890
    %v2961 = vadd.f32 %v2959, %v2957
    %v2962 = vadd.f32 %v2960, %v2958
    %2963 = vset.pattern.permute.xlu0 28
    %2964 = vperm.xlu0 %2963, %v905
    %v2965 = vpop.permute.xlu0 %2964
    %2967 = vset.pattern.permute.xlu0 28
    %2968 = vperm.xlu0 %2967, %v910
    %v2969 = vpop.permute.xlu0 %2968
    %v2971 = vmul.f32 %v2965, %v2961
    %v2972 = vmul.f32 %v2969, %v2962
    %v2973 = vsel %vm280, %v2971, 0.0
    %v2974 = vsel %vm280, %v2972, 0.0
    %v2975 = vadd.f32 %v2973, %v2974
    %v2976 = vrot.slane %v2975, 4
    %v2977 = vadd.f32 %v2975, %v2976
    %v2978 = vrot.slane %v2977, 2
    %v2979 = vadd.f32 %v2977, %v2978
    %v2980 = vrot.slane %v2979, 1
    %v2981 = vadd.f32 %v2979, %v2980
    %vm2982 = vcmp.eq.s32.totalorder %v54, 28
    %vm2983 = vcmp.eq.s32.totalorder %v55, 28
    %vm2984 = vcmp.eq.s32.totalorder %v56, 28
    %vm2985 = vcmp.eq.s32.totalorder %v57, 28
    %vm2986 = vcmp.eq.s32.totalorder %v58, 28
    %v2987 = vsel %vm2982, 1, 0
    %v2988 = vsel %vm2983, 1, 0
    %v2989 = vsel %vm2984, 1, 0
    %v2990 = vsel %vm2985, 1, 0
    %v2991 = vsel %vm2986, 1, 0
    %vm2992 = vcmp.eq.s32.totalorder %v2987, 1
    %vm2993 = vcmp.eq.s32.totalorder %v2988, 1
    %vm2994 = vcmp.eq.s32.totalorder %v2989, 1
    %vm2995 = vcmp.eq.s32.totalorder %v2990, 1
    %vm2996 = vcmp.eq.s32.totalorder %v2991, 1
    %v2997 = vsel %vm2992, %v2981, 0.0
    %v2998 = vsel %vm2993, %v2981, 0.0
    %v2999 = vsel %vm2994, %v2981, 0.0
    %v3000 = vsel %vm2995, %v2981, 0.0
    %v3001 = vsel %vm2996, %v2981, 0.0
    %v3002 = vadd.f32 %v2930, %v2997
    %v3003 = vadd.f32 %v2931, %v2998
    %v3004 = vadd.f32 %v2932, %v2999
    %v3005 = vadd.f32 %v2933, %v3000
    %v3006 = vadd.f32 %v2934, %v3001
    %v3007 = vlaneseq
    %v3008 = vshrl.u32 %v3007, 7
    %v3009 = vsub.s32 5, %v3008
    %v3010 = vrot.slane %v740, %v3009
    %v3011 = vmul.f32 %v3010, %v913
    %v3012 = vmul.f32 %v3010, %v914
    %v3013 = vmul.f32 %v3011, 1.442695
    %v3014 = vpow.pop %v3013
    %v3015 = vmul.f32 %v3012, 1.442695
    %v3016 = vpow.pop %v3015
    %3017 = vset.pattern.permute.xlu0 29
    %3018 = vperm.xlu0 %3017, %v822
    %v3019 = vpop.permute.xlu0 %3018
    %3021 = vset.pattern.permute.xlu0 29
    %3022 = vperm.xlu0 %3021, %v827
    %v3023 = vpop.permute.xlu0 %3022
    %v3025 = vlaneseq
    %v3026 = vshrl.u32 %v3025, 7
    %v3027 = vsub.s32 5, %v3026
    %v3028 = vrot.slane %v745, %v3027
    %v3029 = vmul.f32 %v3019, %v3028
    %v3030 = vmul.f32 %v3023, %v3028
    %v3031 = vmul.f32 %v3014, %v2961
    %v3032 = vmul.f32 %v3016, %v2962
    %v3033 = vadd.f32 %v3031, %v3029
    %v3034 = vadd.f32 %v3032, %v3030
    %3035 = vset.pattern.permute.xlu0 29
    %3036 = vperm.xlu0 %3035, %v905
    %v3037 = vpop.permute.xlu0 %3036
    %3039 = vset.pattern.permute.xlu0 29
    %3040 = vperm.xlu0 %3039, %v910
    %v3041 = vpop.permute.xlu0 %3040
    %v3043 = vmul.f32 %v3037, %v3033
    %v3044 = vmul.f32 %v3041, %v3034
    %v3045 = vsel %vm280, %v3043, 0.0
    %v3046 = vsel %vm280, %v3044, 0.0
    %v3047 = vadd.f32 %v3045, %v3046
    %v3048 = vrot.slane %v3047, 4
    %v3049 = vadd.f32 %v3047, %v3048
    %v3050 = vrot.slane %v3049, 2
    %v3051 = vadd.f32 %v3049, %v3050
    %v3052 = vrot.slane %v3051, 1
    %v3053 = vadd.f32 %v3051, %v3052
    %vm3054 = vcmp.eq.s32.totalorder %v54, 29
    %vm3055 = vcmp.eq.s32.totalorder %v55, 29
    %vm3056 = vcmp.eq.s32.totalorder %v56, 29
    %vm3057 = vcmp.eq.s32.totalorder %v57, 29
    %vm3058 = vcmp.eq.s32.totalorder %v58, 29
    %v3059 = vsel %vm3054, 1, 0
    %v3060 = vsel %vm3055, 1, 0
    %v3061 = vsel %vm3056, 1, 0
    %v3062 = vsel %vm3057, 1, 0
    %v3063 = vsel %vm3058, 1, 0
    %vm3064 = vcmp.eq.s32.totalorder %v3059, 1
    %vm3065 = vcmp.eq.s32.totalorder %v3060, 1
    %vm3066 = vcmp.eq.s32.totalorder %v3061, 1
    %vm3067 = vcmp.eq.s32.totalorder %v3062, 1
    %vm3068 = vcmp.eq.s32.totalorder %v3063, 1
    %v3069 = vsel %vm3064, %v3053, 0.0
    %v3070 = vsel %vm3065, %v3053, 0.0
    %v3071 = vsel %vm3066, %v3053, 0.0
    %v3072 = vsel %vm3067, %v3053, 0.0
    %v3073 = vsel %vm3068, %v3053, 0.0
    %v3074 = vadd.f32 %v3002, %v3069
    %v3075 = vadd.f32 %v3003, %v3070
    %v3076 = vadd.f32 %v3004, %v3071
    %v3077 = vadd.f32 %v3005, %v3072
    %v3078 = vadd.f32 %v3006, %v3073
    %v3079 = vlaneseq
    %v3080 = vshrl.u32 %v3079, 7
    %v3081 = vsub.s32 6, %v3080
    %v3082 = vrot.slane %v740, %v3081
    %v3083 = vmul.f32 %v3082, %v913
    %v3084 = vmul.f32 %v3082, %v914
    %v3085 = vmul.f32 %v3083, 1.442695
    %v3086 = vpow.pop %v3085
    %v3087 = vmul.f32 %v3084, 1.442695
    %v3088 = vpow.pop %v3087
    %3089 = vset.pattern.permute.xlu0 30
    %3090 = vperm.xlu0 %3089, %v822
    %v3091 = vpop.permute.xlu0 %3090
    %3093 = vset.pattern.permute.xlu0 30
    %3094 = vperm.xlu0 %3093, %v827
    %v3095 = vpop.permute.xlu0 %3094
    %v3097 = vlaneseq
    %v3098 = vshrl.u32 %v3097, 7
    %v3099 = vsub.s32 6, %v3098
    %v3100 = vrot.slane %v745, %v3099
    %v3101 = vmul.f32 %v3091, %v3100
    %v3102 = vmul.f32 %v3095, %v3100
    %v3103 = vmul.f32 %v3086, %v3033
    %v3104 = vmul.f32 %v3088, %v3034
    %v3105 = vadd.f32 %v3103, %v3101
    %v3106 = vadd.f32 %v3104, %v3102
    %3107 = vset.pattern.permute.xlu0 30
    %3108 = vperm.xlu0 %3107, %v905
    %v3109 = vpop.permute.xlu0 %3108
    %3111 = vset.pattern.permute.xlu0 30
    %3112 = vperm.xlu0 %3111, %v910
    %v3113 = vpop.permute.xlu0 %3112
    %v3115 = vmul.f32 %v3109, %v3105
    %v3116 = vmul.f32 %v3113, %v3106
    %v3117 = vsel %vm280, %v3115, 0.0
    %v3118 = vsel %vm280, %v3116, 0.0
    %v3119 = vadd.f32 %v3117, %v3118
    %v3120 = vrot.slane %v3119, 4
    %v3121 = vadd.f32 %v3119, %v3120
    %v3122 = vrot.slane %v3121, 2
    %v3123 = vadd.f32 %v3121, %v3122
    %v3124 = vrot.slane %v3123, 1
    %v3125 = vadd.f32 %v3123, %v3124
    %vm3126 = vcmp.eq.s32.totalorder %v54, 30
    %vm3127 = vcmp.eq.s32.totalorder %v55, 30
    %vm3128 = vcmp.eq.s32.totalorder %v56, 30
    %vm3129 = vcmp.eq.s32.totalorder %v57, 30
    %vm3130 = vcmp.eq.s32.totalorder %v58, 30
    %v3131 = vsel %vm3126, 1, 0
    %v3132 = vsel %vm3127, 1, 0
    %v3133 = vsel %vm3128, 1, 0
    %v3134 = vsel %vm3129, 1, 0
    %v3135 = vsel %vm3130, 1, 0
    %vm3136 = vcmp.eq.s32.totalorder %v3131, 1
    %vm3137 = vcmp.eq.s32.totalorder %v3132, 1
    %vm3138 = vcmp.eq.s32.totalorder %v3133, 1
    %vm3139 = vcmp.eq.s32.totalorder %v3134, 1
    %vm3140 = vcmp.eq.s32.totalorder %v3135, 1
    %v3141 = vsel %vm3136, %v3125, 0.0
    %v3142 = vsel %vm3137, %v3125, 0.0
    %v3143 = vsel %vm3138, %v3125, 0.0
    %v3144 = vsel %vm3139, %v3125, 0.0
    %v3145 = vsel %vm3140, %v3125, 0.0
    %v3146 = vadd.f32 %v3074, %v3141
    %v3147 = vadd.f32 %v3075, %v3142
    %v3148 = vadd.f32 %v3076, %v3143
    %v3149 = vadd.f32 %v3077, %v3144
    %v3150 = vadd.f32 %v3078, %v3145
    %v3151 = vlaneseq
    %v3152 = vshrl.u32 %v3151, 7
    %v3153 = vsub.s32 7, %v3152
    %v3154 = vrot.slane %v740, %v3153
    %v3155 = vmul.f32 %v3154, %v913
    %v3156 = vmul.f32 %v3154, %v914
    %v3157 = vmul.f32 %v3155, 1.442695
    %v3158 = vpow.pop %v3157
    %v3159 = vmul.f32 %v3156, 1.442695
    %v3160 = vpow.pop %v3159
    %3161 = vset.pattern.permute.xlu0 31
    %3162 = vperm.xlu0 %3161, %v822
    %v3163 = vpop.permute.xlu0 %3162
    %3165 = vset.pattern.permute.xlu0 31
    %3166 = vperm.xlu0 %3165, %v827
    %v3167 = vpop.permute.xlu0 %3166
    %v3169 = vlaneseq
    %v3170 = vshrl.u32 %v3169, 7
    %v3171 = vsub.s32 7, %v3170
    %v3172 = vrot.slane %v745, %v3171
    %v3173 = vmul.f32 %v3163, %v3172
    %v3174 = vmul.f32 %v3167, %v3172
    %v3175 = vmul.f32 %v3158, %v3105
    %v3176 = vmul.f32 %v3160, %v3106
    %v3177 = vadd.f32 %v3175, %v3173
    %v3178 = vadd.f32 %v3176, %v3174
    %3179 = vset.pattern.permute.xlu0 31
    %3180 = vperm.xlu0 %3179, %v905
    %v3181 = vpop.permute.xlu0 %3180
    %3183 = vset.pattern.permute.xlu0 31
    %3184 = vperm.xlu0 %3183, %v910
    %v3185 = vpop.permute.xlu0 %3184
    %v3187 = vmul.f32 %v3181, %v3177
    %v3188 = vmul.f32 %v3185, %v3178
    %v3189 = vsel %vm280, %v3187, 0.0
    %v3190 = vsel %vm280, %v3188, 0.0
    %v3191 = vadd.f32 %v3189, %v3190
    %v3192 = vrot.slane %v3191, 4
    %v3193 = vadd.f32 %v3191, %v3192
    %v3194 = vrot.slane %v3193, 2
    %v3195 = vadd.f32 %v3193, %v3194
    %v3196 = vrot.slane %v3195, 1
    %v3197 = vadd.f32 %v3195, %v3196
    %vm3198 = vcmp.eq.s32.totalorder %v54, 31
    %vm3199 = vcmp.eq.s32.totalorder %v55, 31
    %vm3200 = vcmp.eq.s32.totalorder %v56, 31
    %vm3201 = vcmp.eq.s32.totalorder %v57, 31
    %vm3202 = vcmp.eq.s32.totalorder %v58, 31
    %v3203 = vsel %vm3198, 1, 0
    %v3204 = vsel %vm3199, 1, 0
    %v3205 = vsel %vm3200, 1, 0
    %v3206 = vsel %vm3201, 1, 0
    %v3207 = vsel %vm3202, 1, 0
    %vm3208 = vcmp.eq.s32.totalorder %v3203, 1
    %vm3209 = vcmp.eq.s32.totalorder %v3204, 1
    %vm3210 = vcmp.eq.s32.totalorder %v3205, 1
    %vm3211 = vcmp.eq.s32.totalorder %v3206, 1
    %vm3212 = vcmp.eq.s32.totalorder %v3207, 1
    %v3213 = vsel %vm3208, %v3197, 0.0
    %v3214 = vsel %vm3209, %v3197, 0.0
    %v3215 = vsel %vm3210, %v3197, 0.0
    %v3216 = vsel %vm3211, %v3197, 0.0
    %v3217 = vsel %vm3212, %v3197, 0.0
    %v3218 = vadd.f32 %v3146, %v3213
    %v3219 = vadd.f32 %v3147, %v3214
    %v3220 = vadd.f32 %v3148, %v3215
    %v3221 = vadd.f32 %v3149, %v3216
    %v3222 = vadd.f32 %v3150, %v3217
    %v3223 = vlaneseq
    %v3224 = vshrl.u32 %v3223, 7
    %v3225 = vsub.s32 0, %v3224
    %v3226 = vrot.slane %v741, %v3225
    %v3227 = vmul.f32 %v3226, %v913
    %v3228 = vmul.f32 %v3226, %v914
    %v3229 = vmul.f32 %v3227, 1.442695
    %v3230 = vpow.pop %v3229
    %v3231 = vmul.f32 %v3228, 1.442695
    %v3232 = vpow.pop %v3231
    %3233 = vset.pattern.permute.xlu0 32
    %3234 = vperm.xlu0 %3233, %v822
    %v3235 = vpop.permute.xlu0 %3234
    %3237 = vset.pattern.permute.xlu0 32
    %3238 = vperm.xlu0 %3237, %v827
    %v3239 = vpop.permute.xlu0 %3238
    %v3241 = vlaneseq
    %v3242 = vshrl.u32 %v3241, 7
    %v3243 = vsub.s32 0, %v3242
    %v3244 = vrot.slane %v746, %v3243
    %v3245 = vmul.f32 %v3235, %v3244
    %v3246 = vmul.f32 %v3239, %v3244
    %v3247 = vmul.f32 %v3230, %v3177
    %v3248 = vmul.f32 %v3232, %v3178
    %v3249 = vadd.f32 %v3247, %v3245
    %v3250 = vadd.f32 %v3248, %v3246
    %3251 = vset.pattern.permute.xlu0 32
    %3252 = vperm.xlu0 %3251, %v905
    %v3253 = vpop.permute.xlu0 %3252
    %3255 = vset.pattern.permute.xlu0 32
    %3256 = vperm.xlu0 %3255, %v910
    %v3257 = vpop.permute.xlu0 %3256
    %v3259 = vmul.f32 %v3253, %v3249
    %v3260 = vmul.f32 %v3257, %v3250
    %v3261 = vsel %vm280, %v3259, 0.0
    %v3262 = vsel %vm280, %v3260, 0.0
    %v3263 = vadd.f32 %v3261, %v3262
    %v3264 = vrot.slane %v3263, 4
    %v3265 = vadd.f32 %v3263, %v3264
    %v3266 = vrot.slane %v3265, 2
    %v3267 = vadd.f32 %v3265, %v3266
    %v3268 = vrot.slane %v3267, 1
    %v3269 = vadd.f32 %v3267, %v3268
    %vm3270 = vcmp.eq.s32.totalorder %v54, 32
    %vm3271 = vcmp.eq.s32.totalorder %v55, 32
    %vm3272 = vcmp.eq.s32.totalorder %v56, 32
    %vm3273 = vcmp.eq.s32.totalorder %v57, 32
    %vm3274 = vcmp.eq.s32.totalorder %v58, 32
    %v3275 = vsel %vm3270, 1, 0
    %v3276 = vsel %vm3271, 1, 0
    %v3277 = vsel %vm3272, 1, 0
    %v3278 = vsel %vm3273, 1, 0
    %v3279 = vsel %vm3274, 1, 0
    %vm3280 = vcmp.eq.s32.totalorder %v3275, 1
    %vm3281 = vcmp.eq.s32.totalorder %v3276, 1
    %vm3282 = vcmp.eq.s32.totalorder %v3277, 1
    %vm3283 = vcmp.eq.s32.totalorder %v3278, 1
    %vm3284 = vcmp.eq.s32.totalorder %v3279, 1
    %v3285 = vsel %vm3280, %v3269, 0.0
    %v3286 = vsel %vm3281, %v3269, 0.0
    %v3287 = vsel %vm3282, %v3269, 0.0
    %v3288 = vsel %vm3283, %v3269, 0.0
    %v3289 = vsel %vm3284, %v3269, 0.0
    %v3290 = vadd.f32 %v3218, %v3285
    %v3291 = vadd.f32 %v3219, %v3286
    %v3292 = vadd.f32 %v3220, %v3287
    %v3293 = vadd.f32 %v3221, %v3288
    %v3294 = vadd.f32 %v3222, %v3289
    %v3295 = vlaneseq
    %v3296 = vshrl.u32 %v3295, 7
    %v3297 = vsub.s32 1, %v3296
    %v3298 = vrot.slane %v741, %v3297
    %v3299 = vmul.f32 %v3298, %v913
    %v3300 = vmul.f32 %v3298, %v914
    %v3301 = vmul.f32 %v3299, 1.442695
    %v3302 = vpow.pop %v3301
    %v3303 = vmul.f32 %v3300, 1.442695
    %v3304 = vpow.pop %v3303
    %3305 = vset.pattern.permute.xlu0 33
    %3306 = vperm.xlu0 %3305, %v822
    %v3307 = vpop.permute.xlu0 %3306
    %3309 = vset.pattern.permute.xlu0 33
    %3310 = vperm.xlu0 %3309, %v827
    %v3311 = vpop.permute.xlu0 %3310
    %v3313 = vlaneseq
    %v3314 = vshrl.u32 %v3313, 7
    %v3315 = vsub.s32 1, %v3314
    %v3316 = vrot.slane %v746, %v3315
    %v3317 = vmul.f32 %v3307, %v3316
    %v3318 = vmul.f32 %v3311, %v3316
    %v3319 = vmul.f32 %v3302, %v3249
    %v3320 = vmul.f32 %v3304, %v3250
    %v3321 = vadd.f32 %v3319, %v3317
    %v3322 = vadd.f32 %v3320, %v3318
    %3323 = vset.pattern.permute.xlu0 33
    %3324 = vperm.xlu0 %3323, %v905
    %v3325 = vpop.permute.xlu0 %3324
    %3327 = vset.pattern.permute.xlu0 33
    %3328 = vperm.xlu0 %3327, %v910
    %v3329 = vpop.permute.xlu0 %3328
    %v3331 = vmul.f32 %v3325, %v3321
    %v3332 = vmul.f32 %v3329, %v3322
    %v3333 = vsel %vm280, %v3331, 0.0
    %v3334 = vsel %vm280, %v3332, 0.0
    %v3335 = vadd.f32 %v3333, %v3334
    %v3336 = vrot.slane %v3335, 4
    %v3337 = vadd.f32 %v3335, %v3336
    %v3338 = vrot.slane %v3337, 2
    %v3339 = vadd.f32 %v3337, %v3338
    %v3340 = vrot.slane %v3339, 1
    %v3341 = vadd.f32 %v3339, %v3340
    %vm3342 = vcmp.eq.s32.totalorder %v54, 33
    %vm3343 = vcmp.eq.s32.totalorder %v55, 33
    %vm3344 = vcmp.eq.s32.totalorder %v56, 33
    %vm3345 = vcmp.eq.s32.totalorder %v57, 33
    %vm3346 = vcmp.eq.s32.totalorder %v58, 33
    %v3347 = vsel %vm3342, 1, 0
    %v3348 = vsel %vm3343, 1, 0
    %v3349 = vsel %vm3344, 1, 0
    %v3350 = vsel %vm3345, 1, 0
    %v3351 = vsel %vm3346, 1, 0
    %vm3352 = vcmp.eq.s32.totalorder %v3347, 1
    %vm3353 = vcmp.eq.s32.totalorder %v3348, 1
    %vm3354 = vcmp.eq.s32.totalorder %v3349, 1
    %vm3355 = vcmp.eq.s32.totalorder %v3350, 1
    %vm3356 = vcmp.eq.s32.totalorder %v3351, 1
    %v3357 = vsel %vm3352, %v3341, 0.0
    %v3358 = vsel %vm3353, %v3341, 0.0
    %v3359 = vsel %vm3354, %v3341, 0.0
    %v3360 = vsel %vm3355, %v3341, 0.0
    %v3361 = vsel %vm3356, %v3341, 0.0
    %v3362 = vadd.f32 %v3290, %v3357
    %v3363 = vadd.f32 %v3291, %v3358
    %v3364 = vadd.f32 %v3292, %v3359
    %v3365 = vadd.f32 %v3293, %v3360
    %v3366 = vadd.f32 %v3294, %v3361
    %v3367 = vld [vmem:[%s11] sm:$0x1]
    %v3369 = vlaneseq
    %v3370 = vshrl.u32 %v3369, 7
    %v3371 = vsub.s32 0, %v3370
    %v3372 = vrot.slane %v3367, %v3371
    %v3374 = vmul.f32 %v461, %v3372
    %v3375 = vmul.f32 %v462, %v3372
    %v3376 = vmul.f32 %v463, %v3372
    %v3377 = vmul.f32 %v464, %v3372
    %v3378 = vmul.f32 %v465, %v3372
    %v3379 = vadd.f32 %v3362, %v3374
    %v3380 = vadd.f32 %v3363, %v3375
    %v3381 = vadd.f32 %v3364, %v3376
    %v3382 = vadd.f32 %v3365, %v3377
    %v3383 = vadd.f32 %v3366, %v3378
    %v3384 = vsub.f32 0.0, %v247
    %v3385 = vsub.f32 0.0, %v252
    %v3386 = vsub.f32 0.0, %v257
    %v3387 = vsub.f32 0.0, %v262
    %v3388 = vsub.f32 0.0, %v267
    %v3389 = vmul.f32 %v3384, 1.442695
    %v3390 = vpow.pop %v3389
    %v3391 = vmul.f32 %v3385, 1.442695
    %v3392 = vpow.pop %v3391
    %v3393 = vmul.f32 %v3386, 1.442695
    %v3394 = vpow.pop %v3393
    %v3395 = vmul.f32 %v3387, 1.442695
    %v3396 = vpow.pop %v3395
    %v3397 = vmul.f32 %v3388, 1.442695
    %v3398 = vpow.pop %v3397
    %v3399 = vadd.f32 %v3390, 1.0
    %v3400 = vadd.f32 %v3392, 1.0
    %v3401 = vadd.f32 %v3394, 1.0
    %v3402 = vadd.f32 %v3396, 1.0
    %v3403 = vadd.f32 %v3398, 1.0
    %v3404 = vrcp.pop %v3399
    %v3405 = vrcp.pop %v3400
    %v3406 = vrcp.pop %v3401
    %v3407 = vrcp.pop %v3402
    %v3408 = vrcp.pop %v3403
    %v3409 = vmul.f32 %v247, %v3404
    %v3410 = vmul.f32 %v252, %v3405
    %v3411 = vmul.f32 %v257, %v3406
    %v3412 = vmul.f32 %v262, %v3407
    %v3413 = vmul.f32 %v267, %v3408
    %v3414 = vmul.f32 %v3379, %v3409
    %v3415 = vmul.f32 %v3380, %v3410
    %v3416 = vmul.f32 %v3381, %v3411
    %v3417 = vmul.f32 %v3382, %v3412
    %v3418 = vmul.f32 %v3383, %v3413
    %v3419 = vld [vmem:[%s12] sm:$0xff]
    %v3420 = vld [vmem:[%s12 + $0x8] sm:$0xff]
    %v3421 = vld [vmem:[%s12 + $0x10] sm:$0xff]
    %v3422 = vld [vmem:[%s12 + $0x18] sm:$0xff]
    %v3423 = vld [vmem:[%s12 + $0x20] sm:$0xff]
    %v3424 = vld [vmem:[%s12 + $0x28] sm:$0xff]
    %v3425 = vld [vmem:[%s12 + $0x30] sm:$0xff]
    %v3426 = vld [vmem:[%s12 + $0x38] sm:$0xff]
    %v3428 = vsel %vm280, %v3414, 0
    %v3431 = vsel %vm280, %v3415, 0
    %v3434 = vsel %vm280, %v3416, 0
    %v3437 = vsel %vm280, %v3417, 0
    %v3440 = vsel %vm280, %v3418, 0
    %3442 = vmatprep.subr.mxu0 0.0
    %3443 = vmatpush1.msra.mxu0 0.0
    %3444 = vmatprep.subr.mxu0 0.0
    %3445 = vmatpush1.msra.mxu0 0.0
    %3446 = vmatprep.subr.mxu0 0.0
    %3447 = vmatpush1.msra.mxu0 0.0
    %3448 = vmatprep.subr.mxu0 0.0
    %3449 = vmatpush1.msra.mxu0 0.0
    %3450 = vmatprep.subr.mxu0 0.0
    %3451 = vmatpush1.msra.mxu0 0.0
    %3452 = vmatprep.subr.mxu0 0.0
    %3453 = vmatpush1.msra.mxu0 0.0
    %3454 = vmatprep.subr.mxu0 0.0
    %3455 = vmatpush1.msra.mxu0 0.0
    %3456 = vmatprep.subr.mxu0 0.0
    %3457 = vmatpush1.msra.mxu0 0.0
    %3458 = vmatprep.subr.mxu0 0.0
    %3459 = vmatpush1.msra.mxu0 %v3426
    %3460 = vmatprep.subr.mxu0 0.0
    %3461 = vmatpush1.msra.mxu0 %v3425
    %3462 = vmatprep.subr.mxu0 0.0
    %3463 = vmatpush1.msra.mxu0 %v3424
    %3464 = vmatprep.subr.mxu0 0.0
    %3465 = vmatpush1.msra.mxu0 %v3423
    %3466 = vmatprep.subr.mxu0 0.0
    %3467 = vmatpush1.msra.mxu0 %v3422
    %3468 = vmatprep.subr.mxu0 0.0
    %3469 = vmatpush1.msra.mxu0 %v3421
    %3470 = vmatprep.subr.mxu0 0.0
    %3471 = vmatpush1.msra.mxu0 %v3420
    %3472 = vmatprep.subr.mxu0 0.0
    %3473 = vmatpush1.msra.mxu0 %v3419
    %3474 = vmatprep.subr.mxu0 0.0
    %3475 = vmatpush2.msra.mxu0 0.0
    %3476 = vmatprep.subr.mxu0 0.0
    %3477 = vmatpush2.msra.mxu0 0.0
    %3478 = vmatprep.subr.mxu0 0.0
    %3479 = vmatpush2.msra.mxu0 0.0
    %3480 = vmatprep.subr.mxu0 0.0
    %3481 = vmatpush2.msra.mxu0 0.0
    %3482 = vmatprep.subr.mxu0 0.0
    %3483 = vmatpush2.msra.mxu0 0.0
    %3484 = vmatprep.subr.mxu0 0.0
    %3485 = vmatpush2.msra.mxu0 0.0
    %3486 = vmatprep.subr.mxu0 0.0
    %3487 = vmatpush2.msra.mxu0 0.0
    %3488 = vmatprep.subr.mxu0 0.0
    %3489 = vmatpush2.msra.mxu0 0.0
    %3490 = vmatprep.subr.mxu0 0.0
    %3491 = vmatpush2.msra.mxu0 0.0
    %3492 = vmatprep.subr.mxu0 0.0
    %3493 = vmatpush2.msra.mxu0 0.0
    %3494 = vmatprep.subr.mxu0 0.0
    %3495 = vmatpush2.msra.mxu0 0.0
    %3496 = vmatprep.subr.mxu0 0.0
    %3497 = vmatpush2.msra.mxu0 0.0
    %3498 = vmatprep.subr.mxu0 0.0
    %3499 = vmatpush2.msra.mxu0 0.0
    %3500 = vmatprep.subr.mxu0 0.0
    %3501 = vmatpush2.msra.mxu0 0.0
    %3502 = vmatprep.subr.mxu0 0.0
    %3503 = vmatpush2.msra.mxu0 0.0
    %3504 = vmatprep.subr.mxu0 0.0
    %3505 = vmatpush2.msra.mxu0 0.0
    %3506 = vmatprep.mubr.f32.mxu0 0.0
    %3507 = vmatmul.mubr.f32.gmra.mxu0 %v3428
    %v3508 = vpop.f32.mrf.mxu0
    %v3509 = vadd.f32 0.0, %v3508
    %v3510 = vpop.f32.mrf.mxu0
    %3511 = vmatprep.mubr.f32.mxu0 0.0
    %3512 = vmatmul.mubr.f32.gmra.mxu0 %v3431
    %v3513 = vpop.f32.mrf.mxu0
    %v3514 = vadd.f32 0.0, %v3513
    %v3515 = vpop.f32.mrf.mxu0
    %3516 = vmatprep.mubr.f32.mxu0 0.0
    %3517 = vmatmul.mubr.f32.gmra.mxu0 %v3434
    %v3518 = vpop.f32.mrf.mxu0
    %v3519 = vadd.f32 0.0, %v3518
    %v3520 = vpop.f32.mrf.mxu0
    %3521 = vmatprep.mubr.f32.mxu0 0.0
    %3522 = vmatmul.mubr.f32.gmra.mxu0 %v3437
    %v3523 = vpop.f32.mrf.mxu0
    %v3524 = vadd.f32 0.0, %v3523
    %v3525 = vpop.f32.mrf.mxu0
    %3526 = vmatprep.mubr.f32.mxu0 0.0
    %3527 = vmatmul.mubr.f32.gmra.mxu0 %v3440
    %v3528 = vpop.f32.mrf.mxu0
    %v3529 = vadd.f32 0.0, %v3528
    %v3530 = vpop.f32.mrf.mxu0
    %3531 = vdwg.mxu0
    %s3532 = scalar_lea.vmem %s1, 32
    %v3533 = vld [vmem:[%s3532] sm:$0xff]
    %v3534 = vld [vmem:[%s3532 + $0x8] sm:$0xff]
    %v3535 = vld [vmem:[%s3532 + $0x10] sm:$0xff]
    %v3536 = vld [vmem:[%s3532 + $0x18] sm:$0xff]
    %v3538 = vsel %vm70, %v3509, 0
    %v3541 = vsel %vm70, %v3514, 0
    %v3544 = vsel %vm70, %v3519, 0
    %v3547 = vsel %vm70, %v3524, 0
    %v3550 = vsel %vm70, %v3529, 0
    %3552 = vmatprep.subr.mxu0 0.0
    %3553 = vmatpush1.msra.mxu0 0.0
    %3554 = vmatprep.subr.mxu0 0.0
    %3555 = vmatpush1.msra.mxu0 0.0
    %3556 = vmatprep.subr.mxu0 0.0
    %3557 = vmatpush1.msra.mxu0 0.0
    %3558 = vmatprep.subr.mxu0 0.0
    %3559 = vmatpush1.msra.mxu0 0.0
    %3560 = vmatprep.subr.mxu0 0.0
    %3561 = vmatpush1.msra.mxu0 0.0
    %3562 = vmatprep.subr.mxu0 0.0
    %3563 = vmatpush1.msra.mxu0 0.0
    %3564 = vmatprep.subr.mxu0 0.0
    %3565 = vmatpush1.msra.mxu0 0.0
    %3566 = vmatprep.subr.mxu0 0.0
    %3567 = vmatpush1.msra.mxu0 0.0
    %3568 = vmatprep.subr.mxu0 0.0
    %3569 = vmatpush1.msra.mxu0 0.0
    %3570 = vmatprep.subr.mxu0 0.0
    %3571 = vmatpush1.msra.mxu0 0.0
    %3572 = vmatprep.subr.mxu0 0.0
    %3573 = vmatpush1.msra.mxu0 0.0
    %3574 = vmatprep.subr.mxu0 0.0
    %3575 = vmatpush1.msra.mxu0 0.0
    %3576 = vmatprep.subr.mxu0 0.0
    %3577 = vmatpush1.msra.mxu0 %v3536
    %3578 = vmatprep.subr.mxu0 0.0
    %3579 = vmatpush1.msra.mxu0 %v3535
    %3580 = vmatprep.subr.mxu0 0.0
    %3581 = vmatpush1.msra.mxu0 %v3534
    %3582 = vmatprep.subr.mxu0 0.0
    %3583 = vmatpush1.msra.mxu0 %v3533
    %3584 = vmatprep.subr.mxu0 0.0
    %3585 = vmatpush2.msra.mxu0 0.0
    %3586 = vmatprep.subr.mxu0 0.0
    %3587 = vmatpush2.msra.mxu0 0.0
    %3588 = vmatprep.subr.mxu0 0.0
    %3589 = vmatpush2.msra.mxu0 0.0
    %3590 = vmatprep.subr.mxu0 0.0
    %3591 = vmatpush2.msra.mxu0 0.0
    %3592 = vmatprep.subr.mxu0 0.0
    %3593 = vmatpush2.msra.mxu0 0.0
    %3594 = vmatprep.subr.mxu0 0.0
    %3595 = vmatpush2.msra.mxu0 0.0
    %3596 = vmatprep.subr.mxu0 0.0
    %3597 = vmatpush2.msra.mxu0 0.0
    %3598 = vmatprep.subr.mxu0 0.0
    %3599 = vmatpush2.msra.mxu0 0.0
    %3600 = vmatprep.subr.mxu0 0.0
    %3601 = vmatpush2.msra.mxu0 0.0
    %3602 = vmatprep.subr.mxu0 0.0
    %3603 = vmatpush2.msra.mxu0 0.0
    %3604 = vmatprep.subr.mxu0 0.0
    %3605 = vmatpush2.msra.mxu0 0.0
    %3606 = vmatprep.subr.mxu0 0.0
    %3607 = vmatpush2.msra.mxu0 0.0
    %3608 = vmatprep.subr.mxu0 0.0
    %3609 = vmatpush2.msra.mxu0 0.0
    %3610 = vmatprep.subr.mxu0 0.0
    %3611 = vmatpush2.msra.mxu0 0.0
    %3612 = vmatprep.subr.mxu0 0.0
    %3613 = vmatpush2.msra.mxu0 0.0
    %3614 = vmatprep.subr.mxu0 0.0
    %3615 = vmatpush2.msra.mxu0 0.0
    %3616 = vmatprep.mubr.f32.mxu0 0.0
    %3617 = vmatmul.mubr.f32.gmra.mxu0 %v3538
    %v3618 = vpop.f32.mrf.mxu0
    %v3619 = vadd.f32 0.0, %v3618
    %v3620 = vpop.f32.mrf.mxu0
    %3621 = vmatprep.mubr.f32.mxu0 0.0
    %3622 = vmatmul.mubr.f32.gmra.mxu0 %v3541
    %v3623 = vpop.f32.mrf.mxu0
    %v3624 = vadd.f32 0.0, %v3623
    %v3625 = vpop.f32.mrf.mxu0
    %3626 = vmatprep.mubr.f32.mxu0 0.0
    %3627 = vmatmul.mubr.f32.gmra.mxu0 %v3544
    %v3628 = vpop.f32.mrf.mxu0
    %v3629 = vadd.f32 0.0, %v3628
    %v3630 = vpop.f32.mrf.mxu0
    %3631 = vmatprep.mubr.f32.mxu0 0.0
    %3632 = vmatmul.mubr.f32.gmra.mxu0 %v3547
    %v3633 = vpop.f32.mrf.mxu0
    %v3634 = vadd.f32 0.0, %v3633
    %v3635 = vpop.f32.mrf.mxu0
    %3636 = vmatprep.mubr.f32.mxu0 0.0
    %3637 = vmatmul.mubr.f32.gmra.mxu0 %v3550
    %v3638 = vpop.f32.mrf.mxu0
    %v3639 = vadd.f32 0.0, %v3638
    %v3640 = vpop.f32.mrf.mxu0
    %3641 = vdwg.mxu0
    %s3642 = scalar_lea.vmem %s2, 32
    %v3643 = vld [vmem:[%s3642] sm:$0xff]
    %v3644 = vld [vmem:[%s3642 + $0x8] sm:$0xff]
    %v3645 = vld [vmem:[%s3642 + $0x10] sm:$0xff]
    %v3646 = vld [vmem:[%s3642 + $0x18] sm:$0xff]
    %3647 = vmatprep.subr.mxu0 0.0
    %3648 = vmatpush1.msra.mxu0 0.0
    %3649 = vmatprep.subr.mxu0 0.0
    %3650 = vmatpush1.msra.mxu0 0.0
    %3651 = vmatprep.subr.mxu0 0.0
    %3652 = vmatpush1.msra.mxu0 0.0
    %3653 = vmatprep.subr.mxu0 0.0
    %3654 = vmatpush1.msra.mxu0 0.0
    %3655 = vmatprep.subr.mxu0 0.0
    %3656 = vmatpush1.msra.mxu0 0.0
    %3657 = vmatprep.subr.mxu0 0.0
    %3658 = vmatpush1.msra.mxu0 0.0
    %3659 = vmatprep.subr.mxu0 0.0
    %3660 = vmatpush1.msra.mxu0 0.0
    %3661 = vmatprep.subr.mxu0 0.0
    %3662 = vmatpush1.msra.mxu0 0.0
    %3663 = vmatprep.subr.mxu0 0.0
    %3664 = vmatpush1.msra.mxu0 0.0
    %3665 = vmatprep.subr.mxu0 0.0
    %3666 = vmatpush1.msra.mxu0 0.0
    %3667 = vmatprep.subr.mxu0 0.0
    %3668 = vmatpush1.msra.mxu0 0.0
    %3669 = vmatprep.subr.mxu0 0.0
    %3670 = vmatpush1.msra.mxu0 0.0
    %3671 = vmatprep.subr.mxu0 0.0
    %3672 = vmatpush1.msra.mxu0 %v3646
    %3673 = vmatprep.subr.mxu0 0.0
    %3674 = vmatpush1.msra.mxu0 %v3645
    %3675 = vmatprep.subr.mxu0 0.0
    %3676 = vmatpush1.msra.mxu0 %v3644
    %3677 = vmatprep.subr.mxu0 0.0
    %3678 = vmatpush1.msra.mxu0 %v3643
    %3679 = vmatprep.subr.mxu0 0.0
    %3680 = vmatpush2.msra.mxu0 0.0
    %3681 = vmatprep.subr.mxu0 0.0
    %3682 = vmatpush2.msra.mxu0 0.0
    %3683 = vmatprep.subr.mxu0 0.0
    %3684 = vmatpush2.msra.mxu0 0.0
    %3685 = vmatprep.subr.mxu0 0.0
    %3686 = vmatpush2.msra.mxu0 0.0
    %3687 = vmatprep.subr.mxu0 0.0
    %3688 = vmatpush2.msra.mxu0 0.0
    %3689 = vmatprep.subr.mxu0 0.0
    %3690 = vmatpush2.msra.mxu0 0.0
    %3691 = vmatprep.subr.mxu0 0.0
    %3692 = vmatpush2.msra.mxu0 0.0
    %3693 = vmatprep.subr.mxu0 0.0
    %3694 = vmatpush2.msra.mxu0 0.0
    %3695 = vmatprep.subr.mxu0 0.0
    %3696 = vmatpush2.msra.mxu0 0.0
    %3697 = vmatprep.subr.mxu0 0.0
    %3698 = vmatpush2.msra.mxu0 0.0
    %3699 = vmatprep.subr.mxu0 0.0
    %3700 = vmatpush2.msra.mxu0 0.0
    %3701 = vmatprep.subr.mxu0 0.0
    %3702 = vmatpush2.msra.mxu0 0.0
    %3703 = vmatprep.subr.mxu0 0.0
    %3704 = vmatpush2.msra.mxu0 0.0
    %3705 = vmatprep.subr.mxu0 0.0
    %3706 = vmatpush2.msra.mxu0 0.0
    %3707 = vmatprep.subr.mxu0 0.0
    %3708 = vmatpush2.msra.mxu0 0.0
    %3709 = vmatprep.subr.mxu0 0.0
    %3710 = vmatpush2.msra.mxu0 0.0
    %3711 = vmatprep.mubr.f32.mxu0 0.0
    %3712 = vmatmul.mubr.f32.gmra.mxu0 %v3538
    %v3713 = vpop.f32.mrf.mxu0
    %v3714 = vadd.f32 0.0, %v3713
    %v3715 = vpop.f32.mrf.mxu0
    %3716 = vmatprep.mubr.f32.mxu0 0.0
    %3717 = vmatmul.mubr.f32.gmra.mxu0 %v3541
    %v3718 = vpop.f32.mrf.mxu0
    %v3719 = vadd.f32 0.0, %v3718
    %v3720 = vpop.f32.mrf.mxu0
    %3721 = vmatprep.mubr.f32.mxu0 0.0
    %3722 = vmatmul.mubr.f32.gmra.mxu0 %v3544
    %v3723 = vpop.f32.mrf.mxu0
    %v3724 = vadd.f32 0.0, %v3723
    %v3725 = vpop.f32.mrf.mxu0
    %3726 = vmatprep.mubr.f32.mxu0 0.0
    %3727 = vmatmul.mubr.f32.gmra.mxu0 %v3547
    %v3728 = vpop.f32.mrf.mxu0
    %v3729 = vadd.f32 0.0, %v3728
    %v3730 = vpop.f32.mrf.mxu0
    %3731 = vmatprep.mubr.f32.mxu0 0.0
    %3732 = vmatmul.mubr.f32.gmra.mxu0 %v3550
    %v3733 = vpop.f32.mrf.mxu0
    %v3734 = vadd.f32 0.0, %v3733
    %v3735 = vpop.f32.mrf.mxu0
    %3736 = vdwg.mxu0
    %s3737 = scalar_lea.vmem %s3, 4
    %v3738 = vld [vmem:[%s3737] sm:$0xf]
    %v3739 = vlaneseq
    %v3740 = vshrl.u32 %v3739, 7
    %v3741 = vsub.s32 3, %v3740
    %v3742 = vrot.slane %v3738, %v3741
    %v3743 = vmul.f32 %v3619, %v3742
    %v3744 = vmul.f32 %v3624, %v3742
    %v3745 = vmul.f32 %v3629, %v3742
    %v3746 = vmul.f32 %v3634, %v3742
    %v3747 = vmul.f32 %v3639, %v3742
    %3748 = vst.msk [vmem:[#allocation2 + $0x3] sm:$0xff] %vm280, %v3619
    %3749 = vst.msk [vmem:[#allocation2 + $0xb] sm:$0xff] %vm280, %v3624
    %3750 = vst.msk [vmem:[#allocation2 + $0x13] sm:$0xff] %vm280, %v3629
    %3751 = vst.msk [vmem:[#allocation2 + $0x1b] sm:$0xff] %vm280, %v3634
    %3752 = vst.msk [vmem:[#allocation2 + $0x23] sm:$0x3] %vm285, %v3639
    %v3753 = vld [vmem:[#allocation2 + $0x2] sm:$0xff]
    %v3754 = vld [vmem:[#allocation2 + $0xa] sm:$0xff]
    %v3755 = vld [vmem:[#allocation2 + $0x12] sm:$0xff]
    %v3756 = vld [vmem:[#allocation2 + $0x1a] sm:$0xff]
    %v3757 = vld [vmem:[#allocation2 + $0x22] sm:$0x3]
    %v3758 = vsel %vm312, 0.0, %v3753
    %v3759 = vsel %vm313, 0.0, %v3754
    %v3760 = vsel %vm314, 0.0, %v3755
    %v3761 = vsel %vm315, 0.0, %v3756
    %v3762 = vsel %vm316, 0.0, %v3757
    %v3763 = vlaneseq
    %v3764 = vshrl.u32 %v3763, 7
    %v3765 = vsub.s32 2, %v3764
    %v3766 = vrot.slane %v3738, %v3765
    %v3767 = vmul.f32 %v3758, %v3766
    %v3768 = vmul.f32 %v3759, %v3766
    %v3769 = vmul.f32 %v3760, %v3766
    %v3770 = vmul.f32 %v3761, %v3766
    %v3771 = vmul.f32 %v3762, %v3766
    %v3772 = vadd.f32 %v3743, %v3767
    %v3773 = vadd.f32 %v3744, %v3768
    %v3774 = vadd.f32 %v3745, %v3769
    %v3775 = vadd.f32 %v3746, %v3770
    %v3776 = vadd.f32 %v3747, %v3771
    %v3777 = vld [vmem:[#allocation2 + $0x1] sm:$0xff]
    %v3778 = vld [vmem:[#allocation2 + $0x9] sm:$0xff]
    %v3779 = vld [vmem:[#allocation2 + $0x11] sm:$0xff]
    %v3780 = vld [vmem:[#allocation2 + $0x19] sm:$0xff]
    %v3781 = vld [vmem:[#allocation2 + $0x21] sm:$0x3]
    %v3782 = vsel %vm356, 0.0, %v3777
    %v3783 = vsel %vm357, 0.0, %v3778
    %v3784 = vsel %vm358, 0.0, %v3779
    %v3785 = vsel %vm359, 0.0, %v3780
    %v3786 = vsel %vm360, 0.0, %v3781
    %v3787 = vlaneseq
    %v3788 = vshrl.u32 %v3787, 7
    %v3789 = vsub.s32 1, %v3788
    %v3790 = vrot.slane %v3738, %v3789
    %v3791 = vmul.f32 %v3782, %v3790
    %v3792 = vmul.f32 %v3783, %v3790
    %v3793 = vmul.f32 %v3784, %v3790
    %v3794 = vmul.f32 %v3785, %v3790
    %v3795 = vmul.f32 %v3786, %v3790
    %v3796 = vadd.f32 %v3772, %v3791
    %v3797 = vadd.f32 %v3773, %v3792
    %v3798 = vadd.f32 %v3774, %v3793
    %v3799 = vadd.f32 %v3775, %v3794
    %v3800 = vadd.f32 %v3776, %v3795
    %v3801 = vld [vmem:[#allocation2] sm:$0xff]
    %v3802 = vld [vmem:[#allocation2 + $0x8] sm:$0xff]
    %v3803 = vld [vmem:[#allocation2 + $0x10] sm:$0xff]
    %v3804 = vld [vmem:[#allocation2 + $0x18] sm:$0xff]
    %v3805 = vld [vmem:[#allocation2 + $0x20] sm:$0x3]
    %v3806 = vsel %vm400, 0.0, %v3801
    %v3807 = vsel %vm401, 0.0, %v3802
    %v3808 = vsel %vm402, 0.0, %v3803
    %v3809 = vsel %vm403, 0.0, %v3804
    %v3810 = vsel %vm404, 0.0, %v3805
    %v3811 = vlaneseq
    %v3812 = vshrl.u32 %v3811, 7
    %v3813 = vsub.s32 0, %v3812
    %v3814 = vrot.slane %v3738, %v3813
    %v3815 = vmul.f32 %v3806, %v3814
    %v3816 = vmul.f32 %v3807, %v3814
    %v3817 = vmul.f32 %v3808, %v3814
    %v3818 = vmul.f32 %v3809, %v3814
    %v3819 = vmul.f32 %v3810, %v3814
    %v3820 = vadd.f32 %v3796, %v3815
    %v3821 = vadd.f32 %v3797, %v3816
    %v3822 = vadd.f32 %v3798, %v3817
    %v3823 = vadd.f32 %v3799, %v3818
    %v3824 = vadd.f32 %v3800, %v3819
    %s3825 = scalar_lea.vmem %s4, 1
    %v3826 = vld [vmem:[%s3825] sm:$0x1]
    %v3828 = vlaneseq
    %v3829 = vshrl.u32 %v3828, 7
    %v3830 = vsub.s32 0, %v3829
    %v3831 = vrot.slane %v3826, %v3830
    %v3833 = vadd.f32 %v3820, %v3831
    %v3834 = vadd.f32 %v3821, %v3831
    %v3835 = vadd.f32 %v3822, %v3831
    %v3836 = vadd.f32 %v3823, %v3831
    %v3837 = vadd.f32 %v3824, %v3831
    %v3838 = vsub.f32 0.0, %v3833
    %v3839 = vsub.f32 0.0, %v3834
    %v3840 = vsub.f32 0.0, %v3835
    %v3841 = vsub.f32 0.0, %v3836
    %v3842 = vsub.f32 0.0, %v3837
    %v3843 = vmul.f32 %v3838, 1.442695
    %v3844 = vpow.pop %v3843
    %v3845 = vmul.f32 %v3839, 1.442695
    %v3846 = vpow.pop %v3845
    %v3847 = vmul.f32 %v3840, 1.442695
    %v3848 = vpow.pop %v3847
    %v3849 = vmul.f32 %v3841, 1.442695
    %v3850 = vpow.pop %v3849
    %v3851 = vmul.f32 %v3842, 1.442695
    %v3852 = vpow.pop %v3851
    %v3853 = vadd.f32 %v3844, 1.0
    %v3854 = vadd.f32 %v3846, 1.0
    %v3855 = vadd.f32 %v3848, 1.0
    %v3856 = vadd.f32 %v3850, 1.0
    %v3857 = vadd.f32 %v3852, 1.0
    %v3858 = vrcp.pop %v3853
    %v3859 = vrcp.pop %v3854
    %v3860 = vrcp.pop %v3855
    %v3861 = vrcp.pop %v3856
    %v3862 = vrcp.pop %v3857
    %v3863 = vmul.f32 %v3833, %v3858
    %v3864 = vmul.f32 %v3834, %v3859
    %v3865 = vmul.f32 %v3835, %v3860
    %v3866 = vmul.f32 %v3836, %v3861
    %v3867 = vmul.f32 %v3837, %v3862
    %s3868 = scalar_lea.vmem %s5, 64
    %v3869 = vld [vmem:[%s3868] sm:$0xff]
    %v3870 = vld [vmem:[%s3868 + $0x8] sm:$0xff]
    %v3871 = vld [vmem:[%s3868 + $0x10] sm:$0xff]
    %v3872 = vld [vmem:[%s3868 + $0x18] sm:$0xff]
    %v3873 = vld [vmem:[%s3868 + $0x20] sm:$0xff]
    %v3874 = vld [vmem:[%s3868 + $0x28] sm:$0xff]
    %v3875 = vld [vmem:[%s3868 + $0x30] sm:$0xff]
    %v3876 = vld [vmem:[%s3868 + $0x38] sm:$0xff]
    %v3878 = vsel %vm280, %v3863, 0
    %v3881 = vsel %vm280, %v3864, 0
    %v3884 = vsel %vm280, %v3865, 0
    %v3887 = vsel %vm280, %v3866, 0
    %v3890 = vsel %vm280, %v3867, 0
    %3892 = vmatprep.subr.mxu0 0.0
    %3893 = vmatpush1.msra.mxu0 0.0
    %3894 = vmatprep.subr.mxu0 0.0
    %3895 = vmatpush1.msra.mxu0 0.0
    %3896 = vmatprep.subr.mxu0 0.0
    %3897 = vmatpush1.msra.mxu0 0.0
    %3898 = vmatprep.subr.mxu0 0.0
    %3899 = vmatpush1.msra.mxu0 0.0
    %3900 = vmatprep.subr.mxu0 0.0
    %3901 = vmatpush1.msra.mxu0 0.0
    %3902 = vmatprep.subr.mxu0 0.0
    %3903 = vmatpush1.msra.mxu0 0.0
    %3904 = vmatprep.subr.mxu0 0.0
    %3905 = vmatpush1.msra.mxu0 0.0
    %3906 = vmatprep.subr.mxu0 0.0
    %3907 = vmatpush1.msra.mxu0 0.0
    %3908 = vmatprep.subr.mxu0 0.0
    %3909 = vmatpush1.msra.mxu0 %v3876
    %3910 = vmatprep.subr.mxu0 0.0
    %3911 = vmatpush1.msra.mxu0 %v3875
    %3912 = vmatprep.subr.mxu0 0.0
    %3913 = vmatpush1.msra.mxu0 %v3874
    %3914 = vmatprep.subr.mxu0 0.0
    %3915 = vmatpush1.msra.mxu0 %v3873
    %3916 = vmatprep.subr.mxu0 0.0
    %3917 = vmatpush1.msra.mxu0 %v3872
    %3918 = vmatprep.subr.mxu0 0.0
    %3919 = vmatpush1.msra.mxu0 %v3871
    %3920 = vmatprep.subr.mxu0 0.0
    %3921 = vmatpush1.msra.mxu0 %v3870
    %3922 = vmatprep.subr.mxu0 0.0
    %3923 = vmatpush1.msra.mxu0 %v3869
    %3924 = vmatprep.subr.mxu0 0.0
    %3925 = vmatpush2.msra.mxu0 0.0
    %3926 = vmatprep.subr.mxu0 0.0
    %3927 = vmatpush2.msra.mxu0 0.0
    %3928 = vmatprep.subr.mxu0 0.0
    %3929 = vmatpush2.msra.mxu0 0.0
    %3930 = vmatprep.subr.mxu0 0.0
    %3931 = vmatpush2.msra.mxu0 0.0
    %3932 = vmatprep.subr.mxu0 0.0
    %3933 = vmatpush2.msra.mxu0 0.0
    %3934 = vmatprep.subr.mxu0 0.0
    %3935 = vmatpush2.msra.mxu0 0.0
    %3936 = vmatprep.subr.mxu0 0.0
    %3937 = vmatpush2.msra.mxu0 0.0
    %3938 = vmatprep.subr.mxu0 0.0
    %3939 = vmatpush2.msra.mxu0 0.0
    %3940 = vmatprep.subr.mxu0 0.0
    %3941 = vmatpush2.msra.mxu0 0.0
    %3942 = vmatprep.subr.mxu0 0.0
    %3943 = vmatpush2.msra.mxu0 0.0
    %3944 = vmatprep.subr.mxu0 0.0
    %3945 = vmatpush2.msra.mxu0 0.0
    %3946 = vmatprep.subr.mxu0 0.0
    %3947 = vmatpush2.msra.mxu0 0.0
    %3948 = vmatprep.subr.mxu0 0.0
    %3949 = vmatpush2.msra.mxu0 0.0
    %3950 = vmatprep.subr.mxu0 0.0
    %3951 = vmatpush2.msra.mxu0 0.0
    %3952 = vmatprep.subr.mxu0 0.0
    %3953 = vmatpush2.msra.mxu0 0.0
    %3954 = vmatprep.subr.mxu0 0.0
    %3955 = vmatpush2.msra.mxu0 0.0
    %3956 = vmatprep.mubr.f32.mxu0 0.0
    %3957 = vmatmul.mubr.f32.gmra.mxu0 %v3878
    %v3958 = vpop.f32.mrf.mxu0
    %v3959 = vadd.f32 0.0, %v3958
    %v3960 = vpop.f32.mrf.mxu0
    %3961 = vmatprep.mubr.f32.mxu0 0.0
    %3962 = vmatmul.mubr.f32.gmra.mxu0 %v3881
    %v3963 = vpop.f32.mrf.mxu0
    %v3964 = vadd.f32 0.0, %v3963
    %v3965 = vpop.f32.mrf.mxu0
    %3966 = vmatprep.mubr.f32.mxu0 0.0
    %3967 = vmatmul.mubr.f32.gmra.mxu0 %v3884
    %v3968 = vpop.f32.mrf.mxu0
    %v3969 = vadd.f32 0.0, %v3968
    %v3970 = vpop.f32.mrf.mxu0
    %3971 = vmatprep.mubr.f32.mxu0 0.0
    %3972 = vmatmul.mubr.f32.gmra.mxu0 %v3887
    %v3973 = vpop.f32.mrf.mxu0
    %v3974 = vadd.f32 0.0, %v3973
    %v3975 = vpop.f32.mrf.mxu0
    %3976 = vmatprep.mubr.f32.mxu0 0.0
    %3977 = vmatmul.mubr.f32.gmra.mxu0 %v3890
    %v3978 = vpop.f32.mrf.mxu0
    %v3979 = vadd.f32 0.0, %v3978
    %v3980 = vpop.f32.mrf.mxu0
    %3981 = vdwg.mxu0
    %s3982 = scalar_lea.vmem %s8, 2
    %v3983 = vld [vmem:[%s3982] sm:$0x3]
    %s3984 = scalar_lea.vmem %s9, 1
    %v3985 = vld [vmem:[%s3984] sm:$0x1]
    %v3987 = vlaneseq
    %v3988 = vshrl.u32 %v3987, 7
    %v3989 = vsub.s32 0, %v3988
    %v3990 = vrot.slane %v3985, %v3989
    %v3993 = vsel %vm587, %v3959, 0
    %v3996 = vsel %vm587, %v3964, 0
    %v3999 = vsel %vm587, %v3969, 0
    %v4002 = vsel %vm587, %v3974, 0
    %v4005 = vsel %vm587, %v3979, 0
    %v4008 = vsel %vm603, %v3983, 0
    %4010 = vmatprep.subr.mxu0 0.0
    %4011 = vmatpush1.msra.mxu0 0.0
    %4012 = vmatprep.subr.mxu0 0.0
    %4013 = vmatpush1.msra.mxu0 0.0
    %4014 = vmatprep.subr.mxu0 0.0
    %4015 = vmatpush1.msra.mxu0 0.0
    %4016 = vmatprep.subr.mxu0 0.0
    %4017 = vmatpush1.msra.mxu0 0.0
    %4018 = vmatprep.subr.mxu0 0.0
    %4019 = vmatpush1.msra.mxu0 0.0
    %4020 = vmatprep.subr.mxu0 0.0
    %4021 = vmatpush1.msra.mxu0 0.0
    %4022 = vmatprep.subr.mxu0 0.0
    %4023 = vmatpush1.msra.mxu0 0.0
    %4024 = vmatprep.subr.mxu0 0.0
    %4025 = vmatpush1.msra.mxu0 0.0
    %4026 = vmatprep.subr.mxu0 0.0
    %4027 = vmatpush1.msra.mxu0 0.0
    %4028 = vmatprep.subr.mxu0 0.0
    %4029 = vmatpush1.msra.mxu0 0.0
    %4030 = vmatprep.subr.mxu0 0.0
    %4031 = vmatpush1.msra.mxu0 0.0
    %4032 = vmatprep.subr.mxu0 0.0
    %4033 = vmatpush1.msra.mxu0 0.0
    %4034 = vmatprep.subr.mxu0 0.0
    %4035 = vmatpush1.msra.mxu0 0.0
    %4036 = vmatprep.subr.mxu0 0.0
    %4037 = vmatpush1.msra.mxu0 0.0
    %4038 = vmatprep.subr.mxu0 0.0
    %4039 = vmatpush1.msra.mxu0 0.0
    %4040 = vmatprep.subr.mxu0 0.0
    %4041 = vmatpush1.msra.mxu0 %v4008
    %4042 = vmatprep.subr.mxu0 0.0
    %4043 = vmatpush2.msra.mxu0 0.0
    %4044 = vmatprep.subr.mxu0 0.0
    %4045 = vmatpush2.msra.mxu0 0.0
    %4046 = vmatprep.subr.mxu0 0.0
    %4047 = vmatpush2.msra.mxu0 0.0
    %4048 = vmatprep.subr.mxu0 0.0
    %4049 = vmatpush2.msra.mxu0 0.0
    %4050 = vmatprep.subr.mxu0 0.0
    %4051 = vmatpush2.msra.mxu0 0.0
    %4052 = vmatprep.subr.mxu0 0.0
    %4053 = vmatpush2.msra.mxu0 0.0
    %4054 = vmatprep.subr.mxu0 0.0
    %4055 = vmatpush2.msra.mxu0 0.0
    %4056 = vmatprep.subr.mxu0 0.0
    %4057 = vmatpush2.msra.mxu0 0.0
    %4058 = vmatprep.subr.mxu0 0.0
    %4059 = vmatpush2.msra.mxu0 0.0
    %4060 = vmatprep.subr.mxu0 0.0
    %4061 = vmatpush2.msra.mxu0 0.0
    %4062 = vmatprep.subr.mxu0 0.0
    %4063 = vmatpush2.msra.mxu0 0.0
    %4064 = vmatprep.subr.mxu0 0.0
    %4065 = vmatpush2.msra.mxu0 0.0
    %4066 = vmatprep.subr.mxu0 0.0
    %4067 = vmatpush2.msra.mxu0 0.0
    %4068 = vmatprep.subr.mxu0 0.0
    %4069 = vmatpush2.msra.mxu0 0.0
    %4070 = vmatprep.subr.mxu0 0.0
    %4071 = vmatpush2.msra.mxu0 0.0
    %4072 = vmatprep.subr.mxu0 0.0
    %4073 = vmatpush2.msra.mxu0 0.0
    %4074 = vmatprep.mubr.f32.mxu0 0.0
    %4075 = vmatmul.mubr.f32.gmra.mxu0 %v3993
    %v4076 = vpop.f32.mrf.mxu0
    %v4077 = vadd.f32 %v3990, %v4076
    %v4078 = vpop.f32.mrf.mxu0
    %4079 = vmatprep.mubr.f32.mxu0 0.0
    %4080 = vmatmul.mubr.f32.gmra.mxu0 %v3996
    %v4081 = vpop.f32.mrf.mxu0
    %v4082 = vadd.f32 %v3990, %v4081
    %v4083 = vpop.f32.mrf.mxu0
    %4084 = vmatprep.mubr.f32.mxu0 0.0
    %4085 = vmatmul.mubr.f32.gmra.mxu0 %v3999
    %v4086 = vpop.f32.mrf.mxu0
    %v4087 = vadd.f32 %v3990, %v4086
    %v4088 = vpop.f32.mrf.mxu0
    %4089 = vmatprep.mubr.f32.mxu0 0.0
    %4090 = vmatmul.mubr.f32.gmra.mxu0 %v4002
    %v4091 = vpop.f32.mrf.mxu0
    %v4092 = vadd.f32 %v3990, %v4091
    %v4093 = vpop.f32.mrf.mxu0
    %4094 = vmatprep.mubr.f32.mxu0 0.0
    %4095 = vmatmul.mubr.f32.gmra.mxu0 %v4005
    %v4096 = vpop.f32.mrf.mxu0
    %v4097 = vadd.f32 %v3990, %v4096
    %v4098 = vpop.f32.mrf.mxu0
    %4099 = vdwg.mxu0
    %v4100 = vmax.f32 %v4077, 0.0
    %v4101 = vmax.f32 %v4082, 0.0
    %v4102 = vmax.f32 %v4087, 0.0
    %v4103 = vmax.f32 %v4092, 0.0
    %v4104 = vmax.f32 %v4097, 0.0
    %v4105 = vand.u32 2147483647, %v4077
    %v4106 = vand.u32 2147483647, %v4082
    %v4107 = vand.u32 2147483647, %v4087
    %v4108 = vand.u32 2147483647, %v4092
    %v4109 = vand.u32 2147483647, %v4097
    %v4110 = vsub.f32 0.0, %v4105
    %v4111 = vsub.f32 0.0, %v4106
    %v4112 = vsub.f32 0.0, %v4107
    %v4113 = vsub.f32 0.0, %v4108
    %v4114 = vsub.f32 0.0, %v4109
    %v4115 = vmul.f32 %v4110, 1.442695
    %v4116 = vpow.pop %v4115
    %v4117 = vmul.f32 %v4111, 1.442695
    %v4118 = vpow.pop %v4117
    %v4119 = vmul.f32 %v4112, 1.442695
    %v4120 = vpow.pop %v4119
    %v4121 = vmul.f32 %v4113, 1.442695
    %v4122 = vpow.pop %v4121
    %v4123 = vmul.f32 %v4114, 1.442695
    %v4124 = vpow.pop %v4123
    %v4125 = vadd.f32 %v4116, 1.0
    %v4126 = vadd.f32 %v4118, 1.0
    %v4127 = vadd.f32 %v4120, 1.0
    %v4128 = vadd.f32 %v4122, 1.0
    %v4129 = vadd.f32 %v4124, 1.0
    %v4130 = vlog2.pop %v4125
    %v4131 = vmul.f32 %v4130, 0.6931472
    %v4132 = vlog2.pop %v4126
    %v4133 = vmul.f32 %v4132, 0.6931472
    %v4134 = vlog2.pop %v4127
    %v4135 = vmul.f32 %v4134, 0.6931472
    %v4136 = vlog2.pop %v4128
    %v4137 = vmul.f32 %v4136, 0.6931472
    %v4138 = vlog2.pop %v4129
    %v4139 = vmul.f32 %v4138, 0.6931472
    %v4140 = vadd.f32 %v4100, %v4131
    %v4141 = vadd.f32 %v4101, %v4133
    %v4142 = vadd.f32 %v4102, %v4135
    %v4143 = vadd.f32 %v4103, %v4137
    %v4144 = vadd.f32 %v4104, %v4139
    %v4145 = vmul.f32 %v4140, %v3863
    %v4146 = vmul.f32 %v4141, %v3864
    %v4147 = vmul.f32 %v4142, %v3865
    %v4148 = vmul.f32 %v4143, %v3866
    %v4149 = vmul.f32 %v4144, %v3867
    %s4150 = scalar_lea.vmem %s6, 16
    %v4151 = vld [vmem:[%s4150] sm:$0xff]
    %v4152 = vld [vmem:[%s4150 + $0x8] sm:$0xff]
    %v4154 = vsel %vm280, %v4151, 0
    %v4157 = vsel %vm280, %v4152, 0
    %4159 = vmatprep.subr.mxu0 0.0
    %4160 = vmatpush1.xpose.msra.mxu0 0.0
    %4161 = vmatprep.subr.mxu0 0.0
    %4162 = vmatpush1.xpose.msra.mxu0 0.0
    %4163 = vmatprep.subr.mxu0 0.0
    %4164 = vmatpush1.xpose.msra.mxu0 0.0
    %4165 = vmatprep.subr.mxu0 0.0
    %4166 = vmatpush1.xpose.msra.mxu0 0.0
    %4167 = vmatprep.subr.mxu0 0.0
    %4168 = vmatpush1.xpose.msra.mxu0 0.0
    %4169 = vmatprep.subr.mxu0 0.0
    %4170 = vmatpush1.xpose.msra.mxu0 0.0
    %4171 = vmatprep.subr.mxu0 0.0
    %4172 = vmatpush1.xpose.msra.mxu0 0.0
    %4173 = vmatprep.subr.mxu0 0.0
    %4174 = vmatpush1.xpose.msra.mxu0 0.0
    %4175 = vmatprep.subr.mxu0 0.0
    %4176 = vmatpush1.xpose.msra.mxu0 0.0
    %4177 = vmatprep.subr.mxu0 0.0
    %4178 = vmatpush1.xpose.msra.mxu0 0.0
    %4179 = vmatprep.subr.mxu0 0.0
    %4180 = vmatpush1.xpose.msra.mxu0 0.0
    %4181 = vmatprep.subr.mxu0 0.0
    %4182 = vmatpush1.xpose.msra.mxu0 %v3890
    %4183 = vmatprep.subr.mxu0 0.0
    %4184 = vmatpush1.xpose.msra.mxu0 %v3887
    %4185 = vmatprep.subr.mxu0 0.0
    %4186 = vmatpush1.xpose.msra.mxu0 %v3884
    %4187 = vmatprep.subr.mxu0 0.0
    %4188 = vmatpush1.xpose.msra.mxu0 %v3881
    %4189 = vmatprep.subr.mxu0 0.0
    %4190 = vmatpush1.xpose.msra.mxu0 %v3878
    %4191 = vmatprep.subr.mxu0 0.0
    %4192 = vmatpush2.xpose.msra.mxu0 0.0
    %4193 = vmatprep.subr.mxu0 0.0
    %4194 = vmatpush2.xpose.msra.mxu0 0.0
    %4195 = vmatprep.subr.mxu0 0.0
    %4196 = vmatpush2.xpose.msra.mxu0 0.0
    %4197 = vmatprep.subr.mxu0 0.0
    %4198 = vmatpush2.xpose.msra.mxu0 0.0
    %4199 = vmatprep.subr.mxu0 0.0
    %4200 = vmatpush2.xpose.msra.mxu0 0.0
    %4201 = vmatprep.subr.mxu0 0.0
    %4202 = vmatpush2.xpose.msra.mxu0 0.0
    %4203 = vmatprep.subr.mxu0 0.0
    %4204 = vmatpush2.xpose.msra.mxu0 0.0
    %4205 = vmatprep.subr.mxu0 0.0
    %4206 = vmatpush2.xpose.msra.mxu0 0.0
    %4207 = vmatprep.subr.mxu0 0.0
    %4208 = vmatpush2.xpose.msra.mxu0 0.0
    %4209 = vmatprep.subr.mxu0 0.0
    %4210 = vmatpush2.xpose.msra.mxu0 0.0
    %4211 = vmatprep.subr.mxu0 0.0
    %4212 = vmatpush2.xpose.msra.mxu0 0.0
    %4213 = vmatprep.subr.mxu0 0.0
    %4214 = vmatpush2.xpose.msra.mxu0 0.0
    %4215 = vmatprep.subr.mxu0 0.0
    %4216 = vmatpush2.xpose.msra.mxu0 0.0
    %4217 = vmatprep.subr.mxu0 0.0
    %4218 = vmatpush2.xpose.msra.mxu0 0.0
    %4219 = vmatprep.subr.mxu0 0.0
    %4220 = vmatpush2.xpose.msra.mxu0 0.0
    %4221 = vmatprep.subr.mxu0 0.0
    %4222 = vmatpush2.xpose.msra.mxu0 0.0
    %4223 = vmatprep.mubr.f32.mxu0 0.0
    %4224 = vmatmul.mubr.f32.gmra.mxu0 %v4154
    %v4225 = vpop.f32.mrf.mxu0
    %v4226 = vadd.f32 0.0, %v4225
    %v4227 = vpop.f32.mrf.mxu0
    %4228 = vmatprep.mubr.f32.mxu0 0.0
    %4229 = vmatmul.mubr.f32.gmra.mxu0 %v4157
    %v4230 = vpop.f32.mrf.mxu0
    %v4231 = vadd.f32 0.0, %v4230
    %v4232 = vpop.f32.mrf.mxu0
    %4233 = vdwg.mxu0
    %s4234 = scalar_lea.vmem %s7, 16
    %v4235 = vld [vmem:[%s4234] sm:$0xff]
    %v4236 = vld [vmem:[%s4234 + $0x8] sm:$0xff]
    %v4238 = vsel %vm280, %v4235, 0
    %v4241 = vsel %vm280, %v4236, 0
    %4243 = vmatprep.subr.mxu0 0.0
    %4244 = vmatpush1.xpose.msra.mxu0 0.0
    %4245 = vmatprep.subr.mxu0 0.0
    %4246 = vmatpush1.xpose.msra.mxu0 0.0
    %4247 = vmatprep.subr.mxu0 0.0
    %4248 = vmatpush1.xpose.msra.mxu0 0.0
    %4249 = vmatprep.subr.mxu0 0.0
    %4250 = vmatpush1.xpose.msra.mxu0 0.0
    %4251 = vmatprep.subr.mxu0 0.0
    %4252 = vmatpush1.xpose.msra.mxu0 0.0
    %4253 = vmatprep.subr.mxu0 0.0
    %4254 = vmatpush1.xpose.msra.mxu0 0.0
    %4255 = vmatprep.subr.mxu0 0.0
    %4256 = vmatpush1.xpose.msra.mxu0 0.0
    %4257 = vmatprep.subr.mxu0 0.0
    %4258 = vmatpush1.xpose.msra.mxu0 0.0
    %4259 = vmatprep.subr.mxu0 0.0
    %4260 = vmatpush1.xpose.msra.mxu0 0.0
    %4261 = vmatprep.subr.mxu0 0.0
    %4262 = vmatpush1.xpose.msra.mxu0 0.0
    %4263 = vmatprep.subr.mxu0 0.0
    %4264 = vmatpush1.xpose.msra.mxu0 0.0
    %4265 = vmatprep.subr.mxu0 0.0
    %4266 = vmatpush1.xpose.msra.mxu0 %v3890
    %4267 = vmatprep.subr.mxu0 0.0
    %4268 = vmatpush1.xpose.msra.mxu0 %v3887
    %4269 = vmatprep.subr.mxu0 0.0
    %4270 = vmatpush1.xpose.msra.mxu0 %v3884
    %4271 = vmatprep.subr.mxu0 0.0
    %4272 = vmatpush1.xpose.msra.mxu0 %v3881
    %4273 = vmatprep.subr.mxu0 0.0
    %4274 = vmatpush1.xpose.msra.mxu0 %v3878
    %4275 = vmatprep.subr.mxu0 0.0
    %4276 = vmatpush2.xpose.msra.mxu0 0.0
    %4277 = vmatprep.subr.mxu0 0.0
    %4278 = vmatpush2.xpose.msra.mxu0 0.0
    %4279 = vmatprep.subr.mxu0 0.0
    %4280 = vmatpush2.xpose.msra.mxu0 0.0
    %4281 = vmatprep.subr.mxu0 0.0
    %4282 = vmatpush2.xpose.msra.mxu0 0.0
    %4283 = vmatprep.subr.mxu0 0.0
    %4284 = vmatpush2.xpose.msra.mxu0 0.0
    %4285 = vmatprep.subr.mxu0 0.0
    %4286 = vmatpush2.xpose.msra.mxu0 0.0
    %4287 = vmatprep.subr.mxu0 0.0
    %4288 = vmatpush2.xpose.msra.mxu0 0.0
    %4289 = vmatprep.subr.mxu0 0.0
    %4290 = vmatpush2.xpose.msra.mxu0 0.0
    %4291 = vmatprep.subr.mxu0 0.0
    %4292 = vmatpush2.xpose.msra.mxu0 0.0
    %4293 = vmatprep.subr.mxu0 0.0
    %4294 = vmatpush2.xpose.msra.mxu0 0.0
    %4295 = vmatprep.subr.mxu0 0.0
    %4296 = vmatpush2.xpose.msra.mxu0 0.0
    %4297 = vmatprep.subr.mxu0 0.0
    %4298 = vmatpush2.xpose.msra.mxu0 0.0
    %4299 = vmatprep.subr.mxu0 0.0
    %4300 = vmatpush2.xpose.msra.mxu0 0.0
    %4301 = vmatprep.subr.mxu0 0.0
    %4302 = vmatpush2.xpose.msra.mxu0 0.0
    %4303 = vmatprep.subr.mxu0 0.0
    %4304 = vmatpush2.xpose.msra.mxu0 0.0
    %4305 = vmatprep.subr.mxu0 0.0
    %4306 = vmatpush2.xpose.msra.mxu0 0.0
    %4307 = vmatprep.mubr.f32.mxu0 0.0
    %4308 = vmatmul.mubr.f32.gmra.mxu0 %v4238
    %v4309 = vpop.f32.mrf.mxu0
    %v4310 = vadd.f32 0.0, %v4309
    %v4311 = vpop.f32.mrf.mxu0
    %4312 = vmatprep.mubr.f32.mxu0 0.0
    %4313 = vmatmul.mubr.f32.gmra.mxu0 %v4241
    %v4314 = vpop.f32.mrf.mxu0
    %v4315 = vadd.f32 0.0, %v4314
    %v4316 = vpop.f32.mrf.mxu0
    %4317 = vdwg.mxu0
    %s4318 = scalar_lea.vmem %s10, 16
    %v4319 = vld [vmem:[%s4318] sm:$0xff]
    %v4320 = vld [vmem:[%s4318 + $0x8] sm:$0xff]
    %v4321 = vlaneseq
    %v4322 = vshrl.u32 %v4321, 7
    %v4323 = vsub.s32 0, %v4322
    %v4324 = vrot.slane %v4140, %v4323
    %v4325 = vmul.f32 %v4324, %v4319
    %v4326 = vmul.f32 %v4324, %v4320
    %v4327 = vmul.f32 %v4325, 1.442695
    %v4328 = vpow.pop %v4327
    %v4329 = vmul.f32 %v4326, 1.442695
    %v4330 = vpow.pop %v4329
    %4332 = vset.pattern.permute.xlu0 0
    %4333 = vperm.xlu0 %4332, %v4226
    %v4334 = vpop.permute.xlu0 %4333
    %4337 = vset.pattern.permute.xlu0 0
    %4338 = vperm.xlu0 %4337, %v4231
    %v4339 = vpop.permute.xlu0 %4338
    %v4341 = vlaneseq
    %v4342 = vshrl.u32 %v4341, 7
    %v4343 = vsub.s32 0, %v4342
    %v4344 = vrot.slane %v4145, %v4343
    %v4345 = vmul.f32 %v4334, %v4344
    %v4346 = vmul.f32 %v4339, %v4344
    %v4347 = vmul.f32 %v4328, 0.0
    %v4348 = vmul.f32 %v4330, 0.0
    %v4349 = vadd.f32 %v4347, %v4345
    %v4350 = vadd.f32 %v4348, %v4346
    %4352 = vset.pattern.permute.xlu0 0
    %4353 = vperm.xlu0 %4352, %v4310
    %v4354 = vpop.permute.xlu0 %4353
    %4357 = vset.pattern.permute.xlu0 0
    %4358 = vperm.xlu0 %4357, %v4315
    %v4359 = vpop.permute.xlu0 %4358
    %v4361 = vmul.f32 %v4354, %v4349
    %v4362 = vmul.f32 %v4359, %v4350
    %v4363 = vsel %vm280, %v4361, 0.0
    %v4364 = vsel %vm280, %v4362, 0.0
    %v4365 = vadd.f32 %v4363, %v4364
    %v4366 = vrot.slane %v4365, 4
    %v4367 = vadd.f32 %v4365, %v4366
    %v4368 = vrot.slane %v4367, 2
    %v4369 = vadd.f32 %v4367, %v4368
    %v4370 = vrot.slane %v4369, 1
    %v4371 = vadd.f32 %v4369, %v4370
    %v4372 = vsel %vm976, %v4371, 0.0
    %v4373 = vsel %vm977, %v4371, 0.0
    %v4374 = vsel %vm978, %v4371, 0.0
    %v4375 = vsel %vm979, %v4371, 0.0
    %v4376 = vsel %vm980, %v4371, 0.0
    %v4377 = vadd.f32 %v4372, 0.0
    %v4378 = vadd.f32 %v4373, 0.0
    %v4379 = vadd.f32 %v4374, 0.0
    %v4380 = vadd.f32 %v4375, 0.0
    %v4381 = vadd.f32 %v4376, 0.0
    %v4382 = vlaneseq
    %v4383 = vshrl.u32 %v4382, 7
    %v4384 = vsub.s32 1, %v4383
    %v4385 = vrot.slane %v4140, %v4384
    %v4386 = vmul.f32 %v4385, %v4319
    %v4387 = vmul.f32 %v4385, %v4320
    %v4388 = vmul.f32 %v4386, 1.442695
    %v4389 = vpow.pop %v4388
    %v4390 = vmul.f32 %v4387, 1.442695
    %v4391 = vpow.pop %v4390
    %4392 = vset.pattern.permute.xlu0 1
    %4393 = vperm.xlu0 %4392, %v4226
    %v4394 = vpop.permute.xlu0 %4393
    %4396 = vset.pattern.permute.xlu0 1
    %4397 = vperm.xlu0 %4396, %v4231
    %v4398 = vpop.permute.xlu0 %4397
    %v4400 = vlaneseq
    %v4401 = vshrl.u32 %v4400, 7
    %v4402 = vsub.s32 1, %v4401
    %v4403 = vrot.slane %v4145, %v4402
    %v4404 = vmul.f32 %v4394, %v4403
    %v4405 = vmul.f32 %v4398, %v4403
    %v4406 = vmul.f32 %v4389, %v4349
    %v4407 = vmul.f32 %v4391, %v4350
    %v4408 = vadd.f32 %v4406, %v4404
    %v4409 = vadd.f32 %v4407, %v4405
    %4410 = vset.pattern.permute.xlu0 1
    %4411 = vperm.xlu0 %4410, %v4310
    %v4412 = vpop.permute.xlu0 %4411
    %4414 = vset.pattern.permute.xlu0 1
    %4415 = vperm.xlu0 %4414, %v4315
    %v4416 = vpop.permute.xlu0 %4415
    %v4418 = vmul.f32 %v4412, %v4408
    %v4419 = vmul.f32 %v4416, %v4409
    %v4420 = vsel %vm280, %v4418, 0.0
    %v4421 = vsel %vm280, %v4419, 0.0
    %v4422 = vadd.f32 %v4420, %v4421
    %v4423 = vrot.slane %v4422, 4
    %v4424 = vadd.f32 %v4422, %v4423
    %v4425 = vrot.slane %v4424, 2
    %v4426 = vadd.f32 %v4424, %v4425
    %v4427 = vrot.slane %v4426, 1
    %v4428 = vadd.f32 %v4426, %v4427
    %v4429 = vsel %vm1048, %v4428, 0.0
    %v4430 = vsel %vm1049, %v4428, 0.0
    %v4431 = vsel %vm1050, %v4428, 0.0
    %v4432 = vsel %vm1051, %v4428, 0.0
    %v4433 = vsel %vm1052, %v4428, 0.0
    %v4434 = vadd.f32 %v4377, %v4429
    %v4435 = vadd.f32 %v4378, %v4430
    %v4436 = vadd.f32 %v4379, %v4431
    %v4437 = vadd.f32 %v4380, %v4432
    %v4438 = vadd.f32 %v4381, %v4433
    %v4439 = vlaneseq
    %v4440 = vshrl.u32 %v4439, 7
    %v4441 = vsub.s32 2, %v4440
    %v4442 = vrot.slane %v4140, %v4441
    %v4443 = vmul.f32 %v4442, %v4319
    %v4444 = vmul.f32 %v4442, %v4320
    %v4445 = vmul.f32 %v4443, 1.442695
    %v4446 = vpow.pop %v4445
    %v4447 = vmul.f32 %v4444, 1.442695
    %v4448 = vpow.pop %v4447
    %4449 = vset.pattern.permute.xlu0 2
    %4450 = vperm.xlu0 %4449, %v4226
    %v4451 = vpop.permute.xlu0 %4450
    %4453 = vset.pattern.permute.xlu0 2
    %4454 = vperm.xlu0 %4453, %v4231
    %v4455 = vpop.permute.xlu0 %4454
    %v4457 = vlaneseq
    %v4458 = vshrl.u32 %v4457, 7
    %v4459 = vsub.s32 2, %v4458
    %v4460 = vrot.slane %v4145, %v4459
    %v4461 = vmul.f32 %v4451, %v4460
    %v4462 = vmul.f32 %v4455, %v4460
    %v4463 = vmul.f32 %v4446, %v4408
    %v4464 = vmul.f32 %v4448, %v4409
    %v4465 = vadd.f32 %v4463, %v4461
    %v4466 = vadd.f32 %v4464, %v4462
    %4467 = vset.pattern.permute.xlu0 2
    %4468 = vperm.xlu0 %4467, %v4310
    %v4469 = vpop.permute.xlu0 %4468
    %4471 = vset.pattern.permute.xlu0 2
    %4472 = vperm.xlu0 %4471, %v4315
    %v4473 = vpop.permute.xlu0 %4472
    %v4475 = vmul.f32 %v4469, %v4465
    %v4476 = vmul.f32 %v4473, %v4466
    %v4477 = vsel %vm280, %v4475, 0.0
    %v4478 = vsel %vm280, %v4476, 0.0
    %v4479 = vadd.f32 %v4477, %v4478
    %v4480 = vrot.slane %v4479, 4
    %v4481 = vadd.f32 %v4479, %v4480
    %v4482 = vrot.slane %v4481, 2
    %v4483 = vadd.f32 %v4481, %v4482
    %v4484 = vrot.slane %v4483, 1
    %v4485 = vadd.f32 %v4483, %v4484
    %v4486 = vsel %vm1120, %v4485, 0.0
    %v4487 = vsel %vm1121, %v4485, 0.0
    %v4488 = vsel %vm1122, %v4485, 0.0
    %v4489 = vsel %vm1123, %v4485, 0.0
    %v4490 = vsel %vm1124, %v4485, 0.0
    %v4491 = vadd.f32 %v4434, %v4486
    %v4492 = vadd.f32 %v4435, %v4487
    %v4493 = vadd.f32 %v4436, %v4488
    %v4494 = vadd.f32 %v4437, %v4489
    %v4495 = vadd.f32 %v4438, %v4490
    %v4496 = vlaneseq
    %v4497 = vshrl.u32 %v4496, 7
    %v4498 = vsub.s32 3, %v4497
    %v4499 = vrot.slane %v4140, %v4498
    %v4500 = vmul.f32 %v4499, %v4319
    %v4501 = vmul.f32 %v4499, %v4320
    %v4502 = vmul.f32 %v4500, 1.442695
    %v4503 = vpow.pop %v4502
    %v4504 = vmul.f32 %v4501, 1.442695
    %v4505 = vpow.pop %v4504
    %4506 = vset.pattern.permute.xlu0 3
    %4507 = vperm.xlu0 %4506, %v4226
    %v4508 = vpop.permute.xlu0 %4507
    %4510 = vset.pattern.permute.xlu0 3
    %4511 = vperm.xlu0 %4510, %v4231
    %v4512 = vpop.permute.xlu0 %4511
    %v4514 = vlaneseq
    %v4515 = vshrl.u32 %v4514, 7
    %v4516 = vsub.s32 3, %v4515
    %v4517 = vrot.slane %v4145, %v4516
    %v4518 = vmul.f32 %v4508, %v4517
    %v4519 = vmul.f32 %v4512, %v4517
    %v4520 = vmul.f32 %v4503, %v4465
    %v4521 = vmul.f32 %v4505, %v4466
    %v4522 = vadd.f32 %v4520, %v4518
    %v4523 = vadd.f32 %v4521, %v4519
    %4524 = vset.pattern.permute.xlu0 3
    %4525 = vperm.xlu0 %4524, %v4310
    %v4526 = vpop.permute.xlu0 %4525
    %4528 = vset.pattern.permute.xlu0 3
    %4529 = vperm.xlu0 %4528, %v4315
    %v4530 = vpop.permute.xlu0 %4529
    %v4532 = vmul.f32 %v4526, %v4522
    %v4533 = vmul.f32 %v4530, %v4523
    %v4534 = vsel %vm280, %v4532, 0.0
    %v4535 = vsel %vm280, %v4533, 0.0
    %v4536 = vadd.f32 %v4534, %v4535
    %v4537 = vrot.slane %v4536, 4
    %v4538 = vadd.f32 %v4536, %v4537
    %v4539 = vrot.slane %v4538, 2
    %v4540 = vadd.f32 %v4538, %v4539
    %v4541 = vrot.slane %v4540, 1
    %v4542 = vadd.f32 %v4540, %v4541
    %v4543 = vsel %vm1192, %v4542, 0.0
    %v4544 = vsel %vm1193, %v4542, 0.0
    %v4545 = vsel %vm1194, %v4542, 0.0
    %v4546 = vsel %vm1195, %v4542, 0.0
    %v4547 = vsel %vm1196, %v4542, 0.0
    %v4548 = vadd.f32 %v4491, %v4543
    %v4549 = vadd.f32 %v4492, %v4544
    %v4550 = vadd.f32 %v4493, %v4545
    %v4551 = vadd.f32 %v4494, %v4546
    %v4552 = vadd.f32 %v4495, %v4547
    %v4553 = vlaneseq
    %v4554 = vshrl.u32 %v4553, 7
    %v4555 = vsub.s32 4, %v4554
    %v4556 = vrot.slane %v4140, %v4555
    %v4557 = vmul.f32 %v4556, %v4319
    %v4558 = vmul.f32 %v4556, %v4320
    %v4559 = vmul.f32 %v4557, 1.442695
    %v4560 = vpow.pop %v4559
    %v4561 = vmul.f32 %v4558, 1.442695
    %v4562 = vpow.pop %v4561
    %4563 = vset.pattern.permute.xlu0 4
    %4564 = vperm.xlu0 %4563, %v4226
    %v4565 = vpop.permute.xlu0 %4564
    %4567 = vset.pattern.permute.xlu0 4
    %4568 = vperm.xlu0 %4567, %v4231
    %v4569 = vpop.permute.xlu0 %4568
    %v4571 = vlaneseq
    %v4572 = vshrl.u32 %v4571, 7
    %v4573 = vsub.s32 4, %v4572
    %v4574 = vrot.slane %v4145, %v4573
    %v4575 = vmul.f32 %v4565, %v4574
    %v4576 = vmul.f32 %v4569, %v4574
    %v4577 = vmul.f32 %v4560, %v4522
    %v4578 = vmul.f32 %v4562, %v4523
    %v4579 = vadd.f32 %v4577, %v4575
    %v4580 = vadd.f32 %v4578, %v4576
    %4581 = vset.pattern.permute.xlu0 4
    %4582 = vperm.xlu0 %4581, %v4310
    %v4583 = vpop.permute.xlu0 %4582
    %4585 = vset.pattern.permute.xlu0 4
    %4586 = vperm.xlu0 %4585, %v4315
    %v4587 = vpop.permute.xlu0 %4586
    %v4589 = vmul.f32 %v4583, %v4579
    %v4590 = vmul.f32 %v4587, %v4580
    %v4591 = vsel %vm280, %v4589, 0.0
    %v4592 = vsel %vm280, %v4590, 0.0
    %v4593 = vadd.f32 %v4591, %v4592
    %v4594 = vrot.slane %v4593, 4
    %v4595 = vadd.f32 %v4593, %v4594
    %v4596 = vrot.slane %v4595, 2
    %v4597 = vadd.f32 %v4595, %v4596
    %v4598 = vrot.slane %v4597, 1
    %v4599 = vadd.f32 %v4597, %v4598
    %v4600 = vsel %vm1264, %v4599, 0.0
    %v4601 = vsel %vm1265, %v4599, 0.0
    %v4602 = vsel %vm1266, %v4599, 0.0
    %v4603 = vsel %vm1267, %v4599, 0.0
    %v4604 = vsel %vm1268, %v4599, 0.0
    %v4605 = vadd.f32 %v4548, %v4600
    %v4606 = vadd.f32 %v4549, %v4601
    %v4607 = vadd.f32 %v4550, %v4602
    %v4608 = vadd.f32 %v4551, %v4603
    %v4609 = vadd.f32 %v4552, %v4604
    %v4610 = vlaneseq
    %v4611 = vshrl.u32 %v4610, 7
    %v4612 = vsub.s32 5, %v4611
    %v4613 = vrot.slane %v4140, %v4612
    %v4614 = vmul.f32 %v4613, %v4319
    %v4615 = vmul.f32 %v4613, %v4320
    %v4616 = vmul.f32 %v4614, 1.442695
    %v4617 = vpow.pop %v4616
    %v4618 = vmul.f32 %v4615, 1.442695
    %v4619 = vpow.pop %v4618
    %4620 = vset.pattern.permute.xlu0 5
    %4621 = vperm.xlu0 %4620, %v4226
    %v4622 = vpop.permute.xlu0 %4621
    %4624 = vset.pattern.permute.xlu0 5
    %4625 = vperm.xlu0 %4624, %v4231
    %v4626 = vpop.permute.xlu0 %4625
    %v4628 = vlaneseq
    %v4629 = vshrl.u32 %v4628, 7
    %v4630 = vsub.s32 5, %v4629
    %v4631 = vrot.slane %v4145, %v4630
    %v4632 = vmul.f32 %v4622, %v4631
    %v4633 = vmul.f32 %v4626, %v4631
    %v4634 = vmul.f32 %v4617, %v4579
    %v4635 = vmul.f32 %v4619, %v4580
    %v4636 = vadd.f32 %v4634, %v4632
    %v4637 = vadd.f32 %v4635, %v4633
    %4638 = vset.pattern.permute.xlu0 5
    %4639 = vperm.xlu0 %4638, %v4310
    %v4640 = vpop.permute.xlu0 %4639
    %4642 = vset.pattern.permute.xlu0 5
    %4643 = vperm.xlu0 %4642, %v4315
    %v4644 = vpop.permute.xlu0 %4643
    %v4646 = vmul.f32 %v4640, %v4636
    %v4647 = vmul.f32 %v4644, %v4637
    %v4648 = vsel %vm280, %v4646, 0.0
    %v4649 = vsel %vm280, %v4647, 0.0
    %v4650 = vadd.f32 %v4648, %v4649
    %v4651 = vrot.slane %v4650, 4
    %v4652 = vadd.f32 %v4650, %v4651
    %v4653 = vrot.slane %v4652, 2
    %v4654 = vadd.f32 %v4652, %v4653
    %v4655 = vrot.slane %v4654, 1
    %v4656 = vadd.f32 %v4654, %v4655
    %v4657 = vsel %vm1336, %v4656, 0.0
    %v4658 = vsel %vm1337, %v4656, 0.0
    %v4659 = vsel %vm1338, %v4656, 0.0
    %v4660 = vsel %vm1339, %v4656, 0.0
    %v4661 = vsel %vm1340, %v4656, 0.0
    %v4662 = vadd.f32 %v4605, %v4657
    %v4663 = vadd.f32 %v4606, %v4658
    %v4664 = vadd.f32 %v4607, %v4659
    %v4665 = vadd.f32 %v4608, %v4660
    %v4666 = vadd.f32 %v4609, %v4661
    %v4667 = vlaneseq
    %v4668 = vshrl.u32 %v4667, 7
    %v4669 = vsub.s32 6, %v4668
    %v4670 = vrot.slane %v4140, %v4669
    %v4671 = vmul.f32 %v4670, %v4319
    %v4672 = vmul.f32 %v4670, %v4320
    %v4673 = vmul.f32 %v4671, 1.442695
    %v4674 = vpow.pop %v4673
    %v4675 = vmul.f32 %v4672, 1.442695
    %v4676 = vpow.pop %v4675
    %4677 = vset.pattern.permute.xlu0 6
    %4678 = vperm.xlu0 %4677, %v4226
    %v4679 = vpop.permute.xlu0 %4678
    %4681 = vset.pattern.permute.xlu0 6
    %4682 = vperm.xlu0 %4681, %v4231
    %v4683 = vpop.permute.xlu0 %4682
    %v4685 = vlaneseq
    %v4686 = vshrl.u32 %v4685, 7
    %v4687 = vsub.s32 6, %v4686
    %v4688 = vrot.slane %v4145, %v4687
    %v4689 = vmul.f32 %v4679, %v4688
    %v4690 = vmul.f32 %v4683, %v4688
    %v4691 = vmul.f32 %v4674, %v4636
    %v4692 = vmul.f32 %v4676, %v4637
    %v4693 = vadd.f32 %v4691, %v4689
    %v4694 = vadd.f32 %v4692, %v4690
    %4695 = vset.pattern.permute.xlu0 6
    %4696 = vperm.xlu0 %4695, %v4310
    %v4697 = vpop.permute.xlu0 %4696
    %4699 = vset.pattern.permute.xlu0 6
    %4700 = vperm.xlu0 %4699, %v4315
    %v4701 = vpop.permute.xlu0 %4700
    %v4703 = vmul.f32 %v4697, %v4693
    %v4704 = vmul.f32 %v4701, %v4694
    %v4705 = vsel %vm280, %v4703, 0.0
    %v4706 = vsel %vm280, %v4704, 0.0
    %v4707 = vadd.f32 %v4705, %v4706
    %v4708 = vrot.slane %v4707, 4
    %v4709 = vadd.f32 %v4707, %v4708
    %v4710 = vrot.slane %v4709, 2
    %v4711 = vadd.f32 %v4709, %v4710
    %v4712 = vrot.slane %v4711, 1
    %v4713 = vadd.f32 %v4711, %v4712
    %v4714 = vsel %vm1408, %v4713, 0.0
    %v4715 = vsel %vm1409, %v4713, 0.0
    %v4716 = vsel %vm1410, %v4713, 0.0
    %v4717 = vsel %vm1411, %v4713, 0.0
    %v4718 = vsel %vm1412, %v4713, 0.0
    %v4719 = vadd.f32 %v4662, %v4714
    %v4720 = vadd.f32 %v4663, %v4715
    %v4721 = vadd.f32 %v4664, %v4716
    %v4722 = vadd.f32 %v4665, %v4717
    %v4723 = vadd.f32 %v4666, %v4718
    %v4724 = vlaneseq
    %v4725 = vshrl.u32 %v4724, 7
    %v4726 = vsub.s32 7, %v4725
    %v4727 = vrot.slane %v4140, %v4726
    %v4728 = vmul.f32 %v4727, %v4319
    %v4729 = vmul.f32 %v4727, %v4320
    %v4730 = vmul.f32 %v4728, 1.442695
    %v4731 = vpow.pop %v4730
    %v4732 = vmul.f32 %v4729, 1.442695
    %v4733 = vpow.pop %v4732
    %4734 = vset.pattern.permute.xlu0 7
    %4735 = vperm.xlu0 %4734, %v4226
    %v4736 = vpop.permute.xlu0 %4735
    %4738 = vset.pattern.permute.xlu0 7
    %4739 = vperm.xlu0 %4738, %v4231
    %v4740 = vpop.permute.xlu0 %4739
    %v4742 = vlaneseq
    %v4743 = vshrl.u32 %v4742, 7
    %v4744 = vsub.s32 7, %v4743
    %v4745 = vrot.slane %v4145, %v4744
    %v4746 = vmul.f32 %v4736, %v4745
    %v4747 = vmul.f32 %v4740, %v4745
    %v4748 = vmul.f32 %v4731, %v4693
    %v4749 = vmul.f32 %v4733, %v4694
    %v4750 = vadd.f32 %v4748, %v4746
    %v4751 = vadd.f32 %v4749, %v4747
    %4752 = vset.pattern.permute.xlu0 7
    %4753 = vperm.xlu0 %4752, %v4310
    %v4754 = vpop.permute.xlu0 %4753
    %4756 = vset.pattern.permute.xlu0 7
    %4757 = vperm.xlu0 %4756, %v4315
    %v4758 = vpop.permute.xlu0 %4757
    %v4760 = vmul.f32 %v4754, %v4750
    %v4761 = vmul.f32 %v4758, %v4751
    %v4762 = vsel %vm280, %v4760, 0.0
    %v4763 = vsel %vm280, %v4761, 0.0
    %v4764 = vadd.f32 %v4762, %v4763
    %v4765 = vrot.slane %v4764, 4
    %v4766 = vadd.f32 %v4764, %v4765
    %v4767 = vrot.slane %v4766, 2
    %v4768 = vadd.f32 %v4766, %v4767
    %v4769 = vrot.slane %v4768, 1
    %v4770 = vadd.f32 %v4768, %v4769
    %v4771 = vsel %vm1480, %v4770, 0.0
    %v4772 = vsel %vm1481, %v4770, 0.0
    %v4773 = vsel %vm1482, %v4770, 0.0
    %v4774 = vsel %vm1483, %v4770, 0.0
    %v4775 = vsel %vm1484, %v4770, 0.0
    %v4776 = vadd.f32 %v4719, %v4771
    %v4777 = vadd.f32 %v4720, %v4772
    %v4778 = vadd.f32 %v4721, %v4773
    %v4779 = vadd.f32 %v4722, %v4774
    %v4780 = vadd.f32 %v4723, %v4775
    %v4781 = vlaneseq
    %v4782 = vshrl.u32 %v4781, 7
    %v4783 = vsub.s32 0, %v4782
    %v4784 = vrot.slane %v4141, %v4783
    %v4785 = vmul.f32 %v4784, %v4319
    %v4786 = vmul.f32 %v4784, %v4320
    %v4787 = vmul.f32 %v4785, 1.442695
    %v4788 = vpow.pop %v4787
    %v4789 = vmul.f32 %v4786, 1.442695
    %v4790 = vpow.pop %v4789
    %4791 = vset.pattern.permute.xlu0 8
    %4792 = vperm.xlu0 %4791, %v4226
    %v4793 = vpop.permute.xlu0 %4792
    %4795 = vset.pattern.permute.xlu0 8
    %4796 = vperm.xlu0 %4795, %v4231
    %v4797 = vpop.permute.xlu0 %4796
    %v4799 = vlaneseq
    %v4800 = vshrl.u32 %v4799, 7
    %v4801 = vsub.s32 0, %v4800
    %v4802 = vrot.slane %v4146, %v4801
    %v4803 = vmul.f32 %v4793, %v4802
    %v4804 = vmul.f32 %v4797, %v4802
    %v4805 = vmul.f32 %v4788, %v4750
    %v4806 = vmul.f32 %v4790, %v4751
    %v4807 = vadd.f32 %v4805, %v4803
    %v4808 = vadd.f32 %v4806, %v4804
    %4809 = vset.pattern.permute.xlu0 8
    %4810 = vperm.xlu0 %4809, %v4310
    %v4811 = vpop.permute.xlu0 %4810
    %4813 = vset.pattern.permute.xlu0 8
    %4814 = vperm.xlu0 %4813, %v4315
    %v4815 = vpop.permute.xlu0 %4814
    %v4817 = vmul.f32 %v4811, %v4807
    %v4818 = vmul.f32 %v4815, %v4808
    %v4819 = vsel %vm280, %v4817, 0.0
    %v4820 = vsel %vm280, %v4818, 0.0
    %v4821 = vadd.f32 %v4819, %v4820
    %v4822 = vrot.slane %v4821, 4
    %v4823 = vadd.f32 %v4821, %v4822
    %v4824 = vrot.slane %v4823, 2
    %v4825 = vadd.f32 %v4823, %v4824
    %v4826 = vrot.slane %v4825, 1
    %v4827 = vadd.f32 %v4825, %v4826
    %v4828 = vsel %vm1552, %v4827, 0.0
    %v4829 = vsel %vm1553, %v4827, 0.0
    %v4830 = vsel %vm1554, %v4827, 0.0
    %v4831 = vsel %vm1555, %v4827, 0.0
    %v4832 = vsel %vm1556, %v4827, 0.0
    %v4833 = vadd.f32 %v4776, %v4828
    %v4834 = vadd.f32 %v4777, %v4829
    %v4835 = vadd.f32 %v4778, %v4830
    %v4836 = vadd.f32 %v4779, %v4831
    %v4837 = vadd.f32 %v4780, %v4832
    %v4838 = vlaneseq
    %v4839 = vshrl.u32 %v4838, 7
    %v4840 = vsub.s32 1, %v4839
    %v4841 = vrot.slane %v4141, %v4840
    %v4842 = vmul.f32 %v4841, %v4319
    %v4843 = vmul.f32 %v4841, %v4320
    %v4844 = vmul.f32 %v4842, 1.442695
    %v4845 = vpow.pop %v4844
    %v4846 = vmul.f32 %v4843, 1.442695
    %v4847 = vpow.pop %v4846
    %4848 = vset.pattern.permute.xlu0 9
    %4849 = vperm.xlu0 %4848, %v4226
    %v4850 = vpop.permute.xlu0 %4849
    %4852 = vset.pattern.permute.xlu0 9
    %4853 = vperm.xlu0 %4852, %v4231
    %v4854 = vpop.permute.xlu0 %4853
    %v4856 = vlaneseq
    %v4857 = vshrl.u32 %v4856, 7
    %v4858 = vsub.s32 1, %v4857
    %v4859 = vrot.slane %v4146, %v4858
    %v4860 = vmul.f32 %v4850, %v4859
    %v4861 = vmul.f32 %v4854, %v4859
    %v4862 = vmul.f32 %v4845, %v4807
    %v4863 = vmul.f32 %v4847, %v4808
    %v4864 = vadd.f32 %v4862, %v4860
    %v4865 = vadd.f32 %v4863, %v4861
    %4866 = vset.pattern.permute.xlu0 9
    %4867 = vperm.xlu0 %4866, %v4310
    %v4868 = vpop.permute.xlu0 %4867
    %4870 = vset.pattern.permute.xlu0 9
    %4871 = vperm.xlu0 %4870, %v4315
    %v4872 = vpop.permute.xlu0 %4871
    %v4874 = vmul.f32 %v4868, %v4864
    %v4875 = vmul.f32 %v4872, %v4865
    %v4876 = vsel %vm280, %v4874, 0.0
    %v4877 = vsel %vm280, %v4875, 0.0
    %v4878 = vadd.f32 %v4876, %v4877
    %v4879 = vrot.slane %v4878, 4
    %v4880 = vadd.f32 %v4878, %v4879
    %v4881 = vrot.slane %v4880, 2
    %v4882 = vadd.f32 %v4880, %v4881
    %v4883 = vrot.slane %v4882, 1
    %v4884 = vadd.f32 %v4882, %v4883
    %v4885 = vsel %vm1624, %v4884, 0.0
    %v4886 = vsel %vm1625, %v4884, 0.0
    %v4887 = vsel %vm1626, %v4884, 0.0
    %v4888 = vsel %vm1627, %v4884, 0.0
    %v4889 = vsel %vm1628, %v4884, 0.0
    %v4890 = vadd.f32 %v4833, %v4885
    %v4891 = vadd.f32 %v4834, %v4886
    %v4892 = vadd.f32 %v4835, %v4887
    %v4893 = vadd.f32 %v4836, %v4888
    %v4894 = vadd.f32 %v4837, %v4889
    %v4895 = vlaneseq
    %v4896 = vshrl.u32 %v4895, 7
    %v4897 = vsub.s32 2, %v4896
    %v4898 = vrot.slane %v4141, %v4897
    %v4899 = vmul.f32 %v4898, %v4319
    %v4900 = vmul.f32 %v4898, %v4320
    %v4901 = vmul.f32 %v4899, 1.442695
    %v4902 = vpow.pop %v4901
    %v4903 = vmul.f32 %v4900, 1.442695
    %v4904 = vpow.pop %v4903
    %4905 = vset.pattern.permute.xlu0 10
    %4906 = vperm.xlu0 %4905, %v4226
    %v4907 = vpop.permute.xlu0 %4906
    %4909 = vset.pattern.permute.xlu0 10
    %4910 = vperm.xlu0 %4909, %v4231
    %v4911 = vpop.permute.xlu0 %4910
    %v4913 = vlaneseq
    %v4914 = vshrl.u32 %v4913, 7
    %v4915 = vsub.s32 2, %v4914
    %v4916 = vrot.slane %v4146, %v4915
    %v4917 = vmul.f32 %v4907, %v4916
    %v4918 = vmul.f32 %v4911, %v4916
    %v4919 = vmul.f32 %v4902, %v4864
    %v4920 = vmul.f32 %v4904, %v4865
    %v4921 = vadd.f32 %v4919, %v4917
    %v4922 = vadd.f32 %v4920, %v4918
    %4923 = vset.pattern.permute.xlu0 10
    %4924 = vperm.xlu0 %4923, %v4310
    %v4925 = vpop.permute.xlu0 %4924
    %4927 = vset.pattern.permute.xlu0 10
    %4928 = vperm.xlu0 %4927, %v4315
    %v4929 = vpop.permute.xlu0 %4928
    %v4931 = vmul.f32 %v4925, %v4921
    %v4932 = vmul.f32 %v4929, %v4922
    %v4933 = vsel %vm280, %v4931, 0.0
    %v4934 = vsel %vm280, %v4932, 0.0
    %v4935 = vadd.f32 %v4933, %v4934
    %v4936 = vrot.slane %v4935, 4
    %v4937 = vadd.f32 %v4935, %v4936
    %v4938 = vrot.slane %v4937, 2
    %v4939 = vadd.f32 %v4937, %v4938
    %v4940 = vrot.slane %v4939, 1
    %v4941 = vadd.f32 %v4939, %v4940
    %v4942 = vsel %vm1696, %v4941, 0.0
    %v4943 = vsel %vm1697, %v4941, 0.0
    %v4944 = vsel %vm1698, %v4941, 0.0
    %v4945 = vsel %vm1699, %v4941, 0.0
    %v4946 = vsel %vm1700, %v4941, 0.0
    %v4947 = vadd.f32 %v4890, %v4942
    %v4948 = vadd.f32 %v4891, %v4943
    %v4949 = vadd.f32 %v4892, %v4944
    %v4950 = vadd.f32 %v4893, %v4945
    %v4951 = vadd.f32 %v4894, %v4946
    %v4952 = vlaneseq
    %v4953 = vshrl.u32 %v4952, 7
    %v4954 = vsub.s32 3, %v4953
    %v4955 = vrot.slane %v4141, %v4954
    %v4956 = vmul.f32 %v4955, %v4319
    %v4957 = vmul.f32 %v4955, %v4320
    %v4958 = vmul.f32 %v4956, 1.442695
    %v4959 = vpow.pop %v4958
    %v4960 = vmul.f32 %v4957, 1.442695
    %v4961 = vpow.pop %v4960
    %4962 = vset.pattern.permute.xlu0 11
    %4963 = vperm.xlu0 %4962, %v4226
    %v4964 = vpop.permute.xlu0 %4963
    %4966 = vset.pattern.permute.xlu0 11
    %4967 = vperm.xlu0 %4966, %v4231
    %v4968 = vpop.permute.xlu0 %4967
    %v4970 = vlaneseq
    %v4971 = vshrl.u32 %v4970, 7
    %v4972 = vsub.s32 3, %v4971
    %v4973 = vrot.slane %v4146, %v4972
    %v4974 = vmul.f32 %v4964, %v4973
    %v4975 = vmul.f32 %v4968, %v4973
    %v4976 = vmul.f32 %v4959, %v4921
    %v4977 = vmul.f32 %v4961, %v4922
    %v4978 = vadd.f32 %v4976, %v4974
    %v4979 = vadd.f32 %v4977, %v4975
    %4980 = vset.pattern.permute.xlu0 11
    %4981 = vperm.xlu0 %4980, %v4310
    %v4982 = vpop.permute.xlu0 %4981
    %4984 = vset.pattern.permute.xlu0 11
    %4985 = vperm.xlu0 %4984, %v4315
    %v4986 = vpop.permute.xlu0 %4985
    %v4988 = vmul.f32 %v4982, %v4978
    %v4989 = vmul.f32 %v4986, %v4979
    %v4990 = vsel %vm280, %v4988, 0.0
    %v4991 = vsel %vm280, %v4989, 0.0
    %v4992 = vadd.f32 %v4990, %v4991
    %v4993 = vrot.slane %v4992, 4
    %v4994 = vadd.f32 %v4992, %v4993
    %v4995 = vrot.slane %v4994, 2
    %v4996 = vadd.f32 %v4994, %v4995
    %v4997 = vrot.slane %v4996, 1
    %v4998 = vadd.f32 %v4996, %v4997
    %v4999 = vsel %vm1768, %v4998, 0.0
    %v5000 = vsel %vm1769, %v4998, 0.0
    %v5001 = vsel %vm1770, %v4998, 0.0
    %v5002 = vsel %vm1771, %v4998, 0.0
    %v5003 = vsel %vm1772, %v4998, 0.0
    %v5004 = vadd.f32 %v4947, %v4999
    %v5005 = vadd.f32 %v4948, %v5000
    %v5006 = vadd.f32 %v4949, %v5001
    %v5007 = vadd.f32 %v4950, %v5002
    %v5008 = vadd.f32 %v4951, %v5003
    %v5009 = vlaneseq
    %v5010 = vshrl.u32 %v5009, 7
    %v5011 = vsub.s32 4, %v5010
    %v5012 = vrot.slane %v4141, %v5011
    %v5013 = vmul.f32 %v5012, %v4319
    %v5014 = vmul.f32 %v5012, %v4320
    %v5015 = vmul.f32 %v5013, 1.442695
    %v5016 = vpow.pop %v5015
    %v5017 = vmul.f32 %v5014, 1.442695
    %v5018 = vpow.pop %v5017
    %5019 = vset.pattern.permute.xlu0 12
    %5020 = vperm.xlu0 %5019, %v4226
    %v5021 = vpop.permute.xlu0 %5020
    %5023 = vset.pattern.permute.xlu0 12
    %5024 = vperm.xlu0 %5023, %v4231
    %v5025 = vpop.permute.xlu0 %5024
    %v5027 = vlaneseq
    %v5028 = vshrl.u32 %v5027, 7
    %v5029 = vsub.s32 4, %v5028
    %v5030 = vrot.slane %v4146, %v5029
    %v5031 = vmul.f32 %v5021, %v5030
    %v5032 = vmul.f32 %v5025, %v5030
    %v5033 = vmul.f32 %v5016, %v4978
    %v5034 = vmul.f32 %v5018, %v4979
    %v5035 = vadd.f32 %v5033, %v5031
    %v5036 = vadd.f32 %v5034, %v5032
    %5037 = vset.pattern.permute.xlu0 12
    %5038 = vperm.xlu0 %5037, %v4310
    %v5039 = vpop.permute.xlu0 %5038
    %5041 = vset.pattern.permute.xlu0 12
    %5042 = vperm.xlu0 %5041, %v4315
    %v5043 = vpop.permute.xlu0 %5042
    %v5045 = vmul.f32 %v5039, %v5035
    %v5046 = vmul.f32 %v5043, %v5036
    %v5047 = vsel %vm280, %v5045, 0.0
    %v5048 = vsel %vm280, %v5046, 0.0
    %v5049 = vadd.f32 %v5047, %v5048
    %v5050 = vrot.slane %v5049, 4
    %v5051 = vadd.f32 %v5049, %v5050
    %v5052 = vrot.slane %v5051, 2
    %v5053 = vadd.f32 %v5051, %v5052
    %v5054 = vrot.slane %v5053, 1
    %v5055 = vadd.f32 %v5053, %v5054
    %v5056 = vsel %vm1840, %v5055, 0.0
    %v5057 = vsel %vm1841, %v5055, 0.0
    %v5058 = vsel %vm1842, %v5055, 0.0
    %v5059 = vsel %vm1843, %v5055, 0.0
    %v5060 = vsel %vm1844, %v5055, 0.0
    %v5061 = vadd.f32 %v5004, %v5056
    %v5062 = vadd.f32 %v5005, %v5057
    %v5063 = vadd.f32 %v5006, %v5058
    %v5064 = vadd.f32 %v5007, %v5059
    %v5065 = vadd.f32 %v5008, %v5060
    %v5066 = vlaneseq
    %v5067 = vshrl.u32 %v5066, 7
    %v5068 = vsub.s32 5, %v5067
    %v5069 = vrot.slane %v4141, %v5068
    %v5070 = vmul.f32 %v5069, %v4319
    %v5071 = vmul.f32 %v5069, %v4320
    %v5072 = vmul.f32 %v5070, 1.442695
    %v5073 = vpow.pop %v5072
    %v5074 = vmul.f32 %v5071, 1.442695
    %v5075 = vpow.pop %v5074
    %5076 = vset.pattern.permute.xlu0 13
    %5077 = vperm.xlu0 %5076, %v4226
    %v5078 = vpop.permute.xlu0 %5077
    %5080 = vset.pattern.permute.xlu0 13
    %5081 = vperm.xlu0 %5080, %v4231
    %v5082 = vpop.permute.xlu0 %5081
    %v5084 = vlaneseq
    %v5085 = vshrl.u32 %v5084, 7
    %v5086 = vsub.s32 5, %v5085
    %v5087 = vrot.slane %v4146, %v5086
    %v5088 = vmul.f32 %v5078, %v5087
    %v5089 = vmul.f32 %v5082, %v5087
    %v5090 = vmul.f32 %v5073, %v5035
    %v5091 = vmul.f32 %v5075, %v5036
    %v5092 = vadd.f32 %v5090, %v5088
    %v5093 = vadd.f32 %v5091, %v5089
    %5094 = vset.pattern.permute.xlu0 13
    %5095 = vperm.xlu0 %5094, %v4310
    %v5096 = vpop.permute.xlu0 %5095
    %5098 = vset.pattern.permute.xlu0 13
    %5099 = vperm.xlu0 %5098, %v4315
    %v5100 = vpop.permute.xlu0 %5099
    %v5102 = vmul.f32 %v5096, %v5092
    %v5103 = vmul.f32 %v5100, %v5093
    %v5104 = vsel %vm280, %v5102, 0.0
    %v5105 = vsel %vm280, %v5103, 0.0
    %v5106 = vadd.f32 %v5104, %v5105
    %v5107 = vrot.slane %v5106, 4
    %v5108 = vadd.f32 %v5106, %v5107
    %v5109 = vrot.slane %v5108, 2
    %v5110 = vadd.f32 %v5108, %v5109
    %v5111 = vrot.slane %v5110, 1
    %v5112 = vadd.f32 %v5110, %v5111
    %v5113 = vsel %vm1912, %v5112, 0.0
    %v5114 = vsel %vm1913, %v5112, 0.0
    %v5115 = vsel %vm1914, %v5112, 0.0
    %v5116 = vsel %vm1915, %v5112, 0.0
    %v5117 = vsel %vm1916, %v5112, 0.0
    %v5118 = vadd.f32 %v5061, %v5113
    %v5119 = vadd.f32 %v5062, %v5114
    %v5120 = vadd.f32 %v5063, %v5115
    %v5121 = vadd.f32 %v5064, %v5116
    %v5122 = vadd.f32 %v5065, %v5117
    %v5123 = vlaneseq
    %v5124 = vshrl.u32 %v5123, 7
    %v5125 = vsub.s32 6, %v5124
    %v5126 = vrot.slane %v4141, %v5125
    %v5127 = vmul.f32 %v5126, %v4319
    %v5128 = vmul.f32 %v5126, %v4320
    %v5129 = vmul.f32 %v5127, 1.442695
    %v5130 = vpow.pop %v5129
    %v5131 = vmul.f32 %v5128, 1.442695
    %v5132 = vpow.pop %v5131
    %5133 = vset.pattern.permute.xlu0 14
    %5134 = vperm.xlu0 %5133, %v4226
    %v5135 = vpop.permute.xlu0 %5134
    %5137 = vset.pattern.permute.xlu0 14
    %5138 = vperm.xlu0 %5137, %v4231
    %v5139 = vpop.permute.xlu0 %5138
    %v5141 = vlaneseq
    %v5142 = vshrl.u32 %v5141, 7
    %v5143 = vsub.s32 6, %v5142
    %v5144 = vrot.slane %v4146, %v5143
    %v5145 = vmul.f32 %v5135, %v5144
    %v5146 = vmul.f32 %v5139, %v5144
    %v5147 = vmul.f32 %v5130, %v5092
    %v5148 = vmul.f32 %v5132, %v5093
    %v5149 = vadd.f32 %v5147, %v5145
    %v5150 = vadd.f32 %v5148, %v5146
    %5151 = vset.pattern.permute.xlu0 14
    %5152 = vperm.xlu0 %5151, %v4310
    %v5153 = vpop.permute.xlu0 %5152
    %5155 = vset.pattern.permute.xlu0 14
    %5156 = vperm.xlu0 %5155, %v4315
    %v5157 = vpop.permute.xlu0 %5156
    %v5159 = vmul.f32 %v5153, %v5149
    %v5160 = vmul.f32 %v5157, %v5150
    %v5161 = vsel %vm280, %v5159, 0.0
    %v5162 = vsel %vm280, %v5160, 0.0
    %v5163 = vadd.f32 %v5161, %v5162
    %v5164 = vrot.slane %v5163, 4
    %v5165 = vadd.f32 %v5163, %v5164
    %v5166 = vrot.slane %v5165, 2
    %v5167 = vadd.f32 %v5165, %v5166
    %v5168 = vrot.slane %v5167, 1
    %v5169 = vadd.f32 %v5167, %v5168
    %v5170 = vsel %vm1984, %v5169, 0.0
    %v5171 = vsel %vm1985, %v5169, 0.0
    %v5172 = vsel %vm1986, %v5169, 0.0
    %v5173 = vsel %vm1987, %v5169, 0.0
    %v5174 = vsel %vm1988, %v5169, 0.0
    %v5175 = vadd.f32 %v5118, %v5170
    %v5176 = vadd.f32 %v5119, %v5171
    %v5177 = vadd.f32 %v5120, %v5172
    %v5178 = vadd.f32 %v5121, %v5173
    %v5179 = vadd.f32 %v5122, %v5174
    %v5180 = vlaneseq
    %v5181 = vshrl.u32 %v5180, 7
    %v5182 = vsub.s32 7, %v5181
    %v5183 = vrot.slane %v4141, %v5182
    %v5184 = vmul.f32 %v5183, %v4319
    %v5185 = vmul.f32 %v5183, %v4320
    %v5186 = vmul.f32 %v5184, 1.442695
    %v5187 = vpow.pop %v5186
    %v5188 = vmul.f32 %v5185, 1.442695
    %v5189 = vpow.pop %v5188
    %5190 = vset.pattern.permute.xlu0 15
    %5191 = vperm.xlu0 %5190, %v4226
    %v5192 = vpop.permute.xlu0 %5191
    %5194 = vset.pattern.permute.xlu0 15
    %5195 = vperm.xlu0 %5194, %v4231
    %v5196 = vpop.permute.xlu0 %5195
    %v5198 = vlaneseq
    %v5199 = vshrl.u32 %v5198, 7
    %v5200 = vsub.s32 7, %v5199
    %v5201 = vrot.slane %v4146, %v5200
    %v5202 = vmul.f32 %v5192, %v5201
    %v5203 = vmul.f32 %v5196, %v5201
    %v5204 = vmul.f32 %v5187, %v5149
    %v5205 = vmul.f32 %v5189, %v5150
    %v5206 = vadd.f32 %v5204, %v5202
    %v5207 = vadd.f32 %v5205, %v5203
    %5208 = vset.pattern.permute.xlu0 15
    %5209 = vperm.xlu0 %5208, %v4310
    %v5210 = vpop.permute.xlu0 %5209
    %5212 = vset.pattern.permute.xlu0 15
    %5213 = vperm.xlu0 %5212, %v4315
    %v5214 = vpop.permute.xlu0 %5213
    %v5216 = vmul.f32 %v5210, %v5206
    %v5217 = vmul.f32 %v5214, %v5207
    %v5218 = vsel %vm280, %v5216, 0.0
    %v5219 = vsel %vm280, %v5217, 0.0
    %v5220 = vadd.f32 %v5218, %v5219
    %v5221 = vrot.slane %v5220, 4
    %v5222 = vadd.f32 %v5220, %v5221
    %v5223 = vrot.slane %v5222, 2
    %v5224 = vadd.f32 %v5222, %v5223
    %v5225 = vrot.slane %v5224, 1
    %v5226 = vadd.f32 %v5224, %v5225
    %v5227 = vsel %vm2056, %v5226, 0.0
    %v5228 = vsel %vm2057, %v5226, 0.0
    %v5229 = vsel %vm2058, %v5226, 0.0
    %v5230 = vsel %vm2059, %v5226, 0.0
    %v5231 = vsel %vm2060, %v5226, 0.0
    %v5232 = vadd.f32 %v5175, %v5227
    %v5233 = vadd.f32 %v5176, %v5228
    %v5234 = vadd.f32 %v5177, %v5229
    %v5235 = vadd.f32 %v5178, %v5230
    %v5236 = vadd.f32 %v5179, %v5231
    %v5237 = vlaneseq
    %v5238 = vshrl.u32 %v5237, 7
    %v5239 = vsub.s32 0, %v5238
    %v5240 = vrot.slane %v4142, %v5239
    %v5241 = vmul.f32 %v5240, %v4319
    %v5242 = vmul.f32 %v5240, %v4320
    %v5243 = vmul.f32 %v5241, 1.442695
    %v5244 = vpow.pop %v5243
    %v5245 = vmul.f32 %v5242, 1.442695
    %v5246 = vpow.pop %v5245
    %5247 = vset.pattern.permute.xlu0 16
    %5248 = vperm.xlu0 %5247, %v4226
    %v5249 = vpop.permute.xlu0 %5248
    %5251 = vset.pattern.permute.xlu0 16
    %5252 = vperm.xlu0 %5251, %v4231
    %v5253 = vpop.permute.xlu0 %5252
    %v5255 = vlaneseq
    %v5256 = vshrl.u32 %v5255, 7
    %v5257 = vsub.s32 0, %v5256
    %v5258 = vrot.slane %v4147, %v5257
    %v5259 = vmul.f32 %v5249, %v5258
    %v5260 = vmul.f32 %v5253, %v5258
    %v5261 = vmul.f32 %v5244, %v5206
    %v5262 = vmul.f32 %v5246, %v5207
    %v5263 = vadd.f32 %v5261, %v5259
    %v5264 = vadd.f32 %v5262, %v5260
    %5265 = vset.pattern.permute.xlu0 16
    %5266 = vperm.xlu0 %5265, %v4310
    %v5267 = vpop.permute.xlu0 %5266
    %5269 = vset.pattern.permute.xlu0 16
    %5270 = vperm.xlu0 %5269, %v4315
    %v5271 = vpop.permute.xlu0 %5270
    %v5273 = vmul.f32 %v5267, %v5263
    %v5274 = vmul.f32 %v5271, %v5264
    %v5275 = vsel %vm280, %v5273, 0.0
    %v5276 = vsel %vm280, %v5274, 0.0
    %v5277 = vadd.f32 %v5275, %v5276
    %v5278 = vrot.slane %v5277, 4
    %v5279 = vadd.f32 %v5277, %v5278
    %v5280 = vrot.slane %v5279, 2
    %v5281 = vadd.f32 %v5279, %v5280
    %v5282 = vrot.slane %v5281, 1
    %v5283 = vadd.f32 %v5281, %v5282
    %v5284 = vsel %vm2128, %v5283, 0.0
    %v5285 = vsel %vm2129, %v5283, 0.0
    %v5286 = vsel %vm2130, %v5283, 0.0
    %v5287 = vsel %vm2131, %v5283, 0.0
    %v5288 = vsel %vm2132, %v5283, 0.0
    %v5289 = vadd.f32 %v5232, %v5284
    %v5290 = vadd.f32 %v5233, %v5285
    %v5291 = vadd.f32 %v5234, %v5286
    %v5292 = vadd.f32 %v5235, %v5287
    %v5293 = vadd.f32 %v5236, %v5288
    %v5294 = vlaneseq
    %v5295 = vshrl.u32 %v5294, 7
    %v5296 = vsub.s32 1, %v5295
    %v5297 = vrot.slane %v4142, %v5296
    %v5298 = vmul.f32 %v5297, %v4319
    %v5299 = vmul.f32 %v5297, %v4320
    %v5300 = vmul.f32 %v5298, 1.442695
    %v5301 = vpow.pop %v5300
    %v5302 = vmul.f32 %v5299, 1.442695
    %v5303 = vpow.pop %v5302
    %5304 = vset.pattern.permute.xlu0 17
    %5305 = vperm.xlu0 %5304, %v4226
    %v5306 = vpop.permute.xlu0 %5305
    %5308 = vset.pattern.permute.xlu0 17
    %5309 = vperm.xlu0 %5308, %v4231
    %v5310 = vpop.permute.xlu0 %5309
    %v5312 = vlaneseq
    %v5313 = vshrl.u32 %v5312, 7
    %v5314 = vsub.s32 1, %v5313
    %v5315 = vrot.slane %v4147, %v5314
    %v5316 = vmul.f32 %v5306, %v5315
    %v5317 = vmul.f32 %v5310, %v5315
    %v5318 = vmul.f32 %v5301, 0.0
    %v5319 = vmul.f32 %v5303, 0.0
    %v5320 = vadd.f32 %v5318, %v5316
    %v5321 = vadd.f32 %v5319, %v5317
    %5322 = vset.pattern.permute.xlu0 17
    %5323 = vperm.xlu0 %5322, %v4310
    %v5324 = vpop.permute.xlu0 %5323
    %5326 = vset.pattern.permute.xlu0 17
    %5327 = vperm.xlu0 %5326, %v4315
    %v5328 = vpop.permute.xlu0 %5327
    %v5330 = vmul.f32 %v5324, %v5320
    %v5331 = vmul.f32 %v5328, %v5321
    %v5332 = vsel %vm280, %v5330, 0.0
    %v5333 = vsel %vm280, %v5331, 0.0
    %v5334 = vadd.f32 %v5332, %v5333
    %v5335 = vrot.slane %v5334, 4
    %v5336 = vadd.f32 %v5334, %v5335
    %v5337 = vrot.slane %v5336, 2
    %v5338 = vadd.f32 %v5336, %v5337
    %v5339 = vrot.slane %v5338, 1
    %v5340 = vadd.f32 %v5338, %v5339
    %v5341 = vsel %vm2200, %v5340, 0.0
    %v5342 = vsel %vm2201, %v5340, 0.0
    %v5343 = vsel %vm2202, %v5340, 0.0
    %v5344 = vsel %vm2203, %v5340, 0.0
    %v5345 = vsel %vm2204, %v5340, 0.0
    %v5346 = vadd.f32 %v5289, %v5341
    %v5347 = vadd.f32 %v5290, %v5342
    %v5348 = vadd.f32 %v5291, %v5343
    %v5349 = vadd.f32 %v5292, %v5344
    %v5350 = vadd.f32 %v5293, %v5345
    %v5351 = vlaneseq
    %v5352 = vshrl.u32 %v5351, 7
    %v5353 = vsub.s32 2, %v5352
    %v5354 = vrot.slane %v4142, %v5353
    %v5355 = vmul.f32 %v5354, %v4319
    %v5356 = vmul.f32 %v5354, %v4320
    %v5357 = vmul.f32 %v5355, 1.442695
    %v5358 = vpow.pop %v5357
    %v5359 = vmul.f32 %v5356, 1.442695
    %v5360 = vpow.pop %v5359
    %5361 = vset.pattern.permute.xlu0 18
    %5362 = vperm.xlu0 %5361, %v4226
    %v5363 = vpop.permute.xlu0 %5362
    %5365 = vset.pattern.permute.xlu0 18
    %5366 = vperm.xlu0 %5365, %v4231
    %v5367 = vpop.permute.xlu0 %5366
    %v5369 = vlaneseq
    %v5370 = vshrl.u32 %v5369, 7
    %v5371 = vsub.s32 2, %v5370
    %v5372 = vrot.slane %v4147, %v5371
    %v5373 = vmul.f32 %v5363, %v5372
    %v5374 = vmul.f32 %v5367, %v5372
    %v5375 = vmul.f32 %v5358, %v5320
    %v5376 = vmul.f32 %v5360, %v5321
    %v5377 = vadd.f32 %v5375, %v5373
    %v5378 = vadd.f32 %v5376, %v5374
    %5379 = vset.pattern.permute.xlu0 18
    %5380 = vperm.xlu0 %5379, %v4310
    %v5381 = vpop.permute.xlu0 %5380
    %5383 = vset.pattern.permute.xlu0 18
    %5384 = vperm.xlu0 %5383, %v4315
    %v5385 = vpop.permute.xlu0 %5384
    %v5387 = vmul.f32 %v5381, %v5377
    %v5388 = vmul.f32 %v5385, %v5378
    %v5389 = vsel %vm280, %v5387, 0.0
    %v5390 = vsel %vm280, %v5388, 0.0
    %v5391 = vadd.f32 %v5389, %v5390
    %v5392 = vrot.slane %v5391, 4
    %v5393 = vadd.f32 %v5391, %v5392
    %v5394 = vrot.slane %v5393, 2
    %v5395 = vadd.f32 %v5393, %v5394
    %v5396 = vrot.slane %v5395, 1
    %v5397 = vadd.f32 %v5395, %v5396
    %v5398 = vsel %vm2272, %v5397, 0.0
    %v5399 = vsel %vm2273, %v5397, 0.0
    %v5400 = vsel %vm2274, %v5397, 0.0
    %v5401 = vsel %vm2275, %v5397, 0.0
    %v5402 = vsel %vm2276, %v5397, 0.0
    %v5403 = vadd.f32 %v5346, %v5398
    %v5404 = vadd.f32 %v5347, %v5399
    %v5405 = vadd.f32 %v5348, %v5400
    %v5406 = vadd.f32 %v5349, %v5401
    %v5407 = vadd.f32 %v5350, %v5402
    %v5408 = vlaneseq
    %v5409 = vshrl.u32 %v5408, 7
    %v5410 = vsub.s32 3, %v5409
    %v5411 = vrot.slane %v4142, %v5410
    %v5412 = vmul.f32 %v5411, %v4319
    %v5413 = vmul.f32 %v5411, %v4320
    %v5414 = vmul.f32 %v5412, 1.442695
    %v5415 = vpow.pop %v5414
    %v5416 = vmul.f32 %v5413, 1.442695
    %v5417 = vpow.pop %v5416
    %5418 = vset.pattern.permute.xlu0 19
    %5419 = vperm.xlu0 %5418, %v4226
    %v5420 = vpop.permute.xlu0 %5419
    %5422 = vset.pattern.permute.xlu0 19
    %5423 = vperm.xlu0 %5422, %v4231
    %v5424 = vpop.permute.xlu0 %5423
    %v5426 = vlaneseq
    %v5427 = vshrl.u32 %v5426, 7
    %v5428 = vsub.s32 3, %v5427
    %v5429 = vrot.slane %v4147, %v5428
    %v5430 = vmul.f32 %v5420, %v5429
    %v5431 = vmul.f32 %v5424, %v5429
    %v5432 = vmul.f32 %v5415, %v5377
    %v5433 = vmul.f32 %v5417, %v5378
    %v5434 = vadd.f32 %v5432, %v5430
    %v5435 = vadd.f32 %v5433, %v5431
    %5436 = vset.pattern.permute.xlu0 19
    %5437 = vperm.xlu0 %5436, %v4310
    %v5438 = vpop.permute.xlu0 %5437
    %5440 = vset.pattern.permute.xlu0 19
    %5441 = vperm.xlu0 %5440, %v4315
    %v5442 = vpop.permute.xlu0 %5441
    %v5444 = vmul.f32 %v5438, %v5434
    %v5445 = vmul.f32 %v5442, %v5435
    %v5446 = vsel %vm280, %v5444, 0.0
    %v5447 = vsel %vm280, %v5445, 0.0
    %v5448 = vadd.f32 %v5446, %v5447
    %v5449 = vrot.slane %v5448, 4
    %v5450 = vadd.f32 %v5448, %v5449
    %v5451 = vrot.slane %v5450, 2
    %v5452 = vadd.f32 %v5450, %v5451
    %v5453 = vrot.slane %v5452, 1
    %v5454 = vadd.f32 %v5452, %v5453
    %v5455 = vsel %vm2344, %v5454, 0.0
    %v5456 = vsel %vm2345, %v5454, 0.0
    %v5457 = vsel %vm2346, %v5454, 0.0
    %v5458 = vsel %vm2347, %v5454, 0.0
    %v5459 = vsel %vm2348, %v5454, 0.0
    %v5460 = vadd.f32 %v5403, %v5455
    %v5461 = vadd.f32 %v5404, %v5456
    %v5462 = vadd.f32 %v5405, %v5457
    %v5463 = vadd.f32 %v5406, %v5458
    %v5464 = vadd.f32 %v5407, %v5459
    %v5465 = vlaneseq
    %v5466 = vshrl.u32 %v5465, 7
    %v5467 = vsub.s32 4, %v5466
    %v5468 = vrot.slane %v4142, %v5467
    %v5469 = vmul.f32 %v5468, %v4319
    %v5470 = vmul.f32 %v5468, %v4320
    %v5471 = vmul.f32 %v5469, 1.442695
    %v5472 = vpow.pop %v5471
    %v5473 = vmul.f32 %v5470, 1.442695
    %v5474 = vpow.pop %v5473
    %5475 = vset.pattern.permute.xlu0 20
    %5476 = vperm.xlu0 %5475, %v4226
    %v5477 = vpop.permute.xlu0 %5476
    %5479 = vset.pattern.permute.xlu0 20
    %5480 = vperm.xlu0 %5479, %v4231
    %v5481 = vpop.permute.xlu0 %5480
    %v5483 = vlaneseq
    %v5484 = vshrl.u32 %v5483, 7
    %v5485 = vsub.s32 4, %v5484
    %v5486 = vrot.slane %v4147, %v5485
    %v5487 = vmul.f32 %v5477, %v5486
    %v5488 = vmul.f32 %v5481, %v5486
    %v5489 = vmul.f32 %v5472, %v5434
    %v5490 = vmul.f32 %v5474, %v5435
    %v5491 = vadd.f32 %v5489, %v5487
    %v5492 = vadd.f32 %v5490, %v5488
    %5493 = vset.pattern.permute.xlu0 20
    %5494 = vperm.xlu0 %5493, %v4310
    %v5495 = vpop.permute.xlu0 %5494
    %5497 = vset.pattern.permute.xlu0 20
    %5498 = vperm.xlu0 %5497, %v4315
    %v5499 = vpop.permute.xlu0 %5498
    %v5501 = vmul.f32 %v5495, %v5491
    %v5502 = vmul.f32 %v5499, %v5492
    %v5503 = vsel %vm280, %v5501, 0.0
    %v5504 = vsel %vm280, %v5502, 0.0
    %v5505 = vadd.f32 %v5503, %v5504
    %v5506 = vrot.slane %v5505, 4
    %v5507 = vadd.f32 %v5505, %v5506
    %v5508 = vrot.slane %v5507, 2
    %v5509 = vadd.f32 %v5507, %v5508
    %v5510 = vrot.slane %v5509, 1
    %v5511 = vadd.f32 %v5509, %v5510
    %v5512 = vsel %vm2416, %v5511, 0.0
    %v5513 = vsel %vm2417, %v5511, 0.0
    %v5514 = vsel %vm2418, %v5511, 0.0
    %v5515 = vsel %vm2419, %v5511, 0.0
    %v5516 = vsel %vm2420, %v5511, 0.0
    %v5517 = vadd.f32 %v5460, %v5512
    %v5518 = vadd.f32 %v5461, %v5513
    %v5519 = vadd.f32 %v5462, %v5514
    %v5520 = vadd.f32 %v5463, %v5515
    %v5521 = vadd.f32 %v5464, %v5516
    %v5522 = vlaneseq
    %v5523 = vshrl.u32 %v5522, 7
    %v5524 = vsub.s32 5, %v5523
    %v5525 = vrot.slane %v4142, %v5524
    %v5526 = vmul.f32 %v5525, %v4319
    %v5527 = vmul.f32 %v5525, %v4320
    %v5528 = vmul.f32 %v5526, 1.442695
    %v5529 = vpow.pop %v5528
    %v5530 = vmul.f32 %v5527, 1.442695
    %v5531 = vpow.pop %v5530
    %5532 = vset.pattern.permute.xlu0 21
    %5533 = vperm.xlu0 %5532, %v4226
    %v5534 = vpop.permute.xlu0 %5533
    %5536 = vset.pattern.permute.xlu0 21
    %5537 = vperm.xlu0 %5536, %v4231
    %v5538 = vpop.permute.xlu0 %5537
    %v5540 = vlaneseq
    %v5541 = vshrl.u32 %v5540, 7
    %v5542 = vsub.s32 5, %v5541
    %v5543 = vrot.slane %v4147, %v5542
    %v5544 = vmul.f32 %v5534, %v5543
    %v5545 = vmul.f32 %v5538, %v5543
    %v5546 = vmul.f32 %v5529, %v5491
    %v5547 = vmul.f32 %v5531, %v5492
    %v5548 = vadd.f32 %v5546, %v5544
    %v5549 = vadd.f32 %v5547, %v5545
    %5550 = vset.pattern.permute.xlu0 21
    %5551 = vperm.xlu0 %5550, %v4310
    %v5552 = vpop.permute.xlu0 %5551
    %5554 = vset.pattern.permute.xlu0 21
    %5555 = vperm.xlu0 %5554, %v4315
    %v5556 = vpop.permute.xlu0 %5555
    %v5558 = vmul.f32 %v5552, %v5548
    %v5559 = vmul.f32 %v5556, %v5549
    %v5560 = vsel %vm280, %v5558, 0.0
    %v5561 = vsel %vm280, %v5559, 0.0
    %v5562 = vadd.f32 %v5560, %v5561
    %v5563 = vrot.slane %v5562, 4
    %v5564 = vadd.f32 %v5562, %v5563
    %v5565 = vrot.slane %v5564, 2
    %v5566 = vadd.f32 %v5564, %v5565
    %v5567 = vrot.slane %v5566, 1
    %v5568 = vadd.f32 %v5566, %v5567
    %v5569 = vsel %vm2488, %v5568, 0.0
    %v5570 = vsel %vm2489, %v5568, 0.0
    %v5571 = vsel %vm2490, %v5568, 0.0
    %v5572 = vsel %vm2491, %v5568, 0.0
    %v5573 = vsel %vm2492, %v5568, 0.0
    %v5574 = vadd.f32 %v5517, %v5569
    %v5575 = vadd.f32 %v5518, %v5570
    %v5576 = vadd.f32 %v5519, %v5571
    %v5577 = vadd.f32 %v5520, %v5572
    %v5578 = vadd.f32 %v5521, %v5573
    %v5579 = vlaneseq
    %v5580 = vshrl.u32 %v5579, 7
    %v5581 = vsub.s32 6, %v5580
    %v5582 = vrot.slane %v4142, %v5581
    %v5583 = vmul.f32 %v5582, %v4319
    %v5584 = vmul.f32 %v5582, %v4320
    %v5585 = vmul.f32 %v5583, 1.442695
    %v5586 = vpow.pop %v5585
    %v5587 = vmul.f32 %v5584, 1.442695
    %v5588 = vpow.pop %v5587
    %5589 = vset.pattern.permute.xlu0 22
    %5590 = vperm.xlu0 %5589, %v4226
    %v5591 = vpop.permute.xlu0 %5590
    %5593 = vset.pattern.permute.xlu0 22
    %5594 = vperm.xlu0 %5593, %v4231
    %v5595 = vpop.permute.xlu0 %5594
    %v5597 = vlaneseq
    %v5598 = vshrl.u32 %v5597, 7
    %v5599 = vsub.s32 6, %v5598
    %v5600 = vrot.slane %v4147, %v5599
    %v5601 = vmul.f32 %v5591, %v5600
    %v5602 = vmul.f32 %v5595, %v5600
    %v5603 = vmul.f32 %v5586, %v5548
    %v5604 = vmul.f32 %v5588, %v5549
    %v5605 = vadd.f32 %v5603, %v5601
    %v5606 = vadd.f32 %v5604, %v5602
    %5607 = vset.pattern.permute.xlu0 22
    %5608 = vperm.xlu0 %5607, %v4310
    %v5609 = vpop.permute.xlu0 %5608
    %5611 = vset.pattern.permute.xlu0 22
    %5612 = vperm.xlu0 %5611, %v4315
    %v5613 = vpop.permute.xlu0 %5612
    %v5615 = vmul.f32 %v5609, %v5605
    %v5616 = vmul.f32 %v5613, %v5606
    %v5617 = vsel %vm280, %v5615, 0.0
    %v5618 = vsel %vm280, %v5616, 0.0
    %v5619 = vadd.f32 %v5617, %v5618
    %v5620 = vrot.slane %v5619, 4
    %v5621 = vadd.f32 %v5619, %v5620
    %v5622 = vrot.slane %v5621, 2
    %v5623 = vadd.f32 %v5621, %v5622
    %v5624 = vrot.slane %v5623, 1
    %v5625 = vadd.f32 %v5623, %v5624
    %v5626 = vsel %vm2560, %v5625, 0.0
    %v5627 = vsel %vm2561, %v5625, 0.0
    %v5628 = vsel %vm2562, %v5625, 0.0
    %v5629 = vsel %vm2563, %v5625, 0.0
    %v5630 = vsel %vm2564, %v5625, 0.0
    %v5631 = vadd.f32 %v5574, %v5626
    %v5632 = vadd.f32 %v5575, %v5627
    %v5633 = vadd.f32 %v5576, %v5628
    %v5634 = vadd.f32 %v5577, %v5629
    %v5635 = vadd.f32 %v5578, %v5630
    %v5636 = vlaneseq
    %v5637 = vshrl.u32 %v5636, 7
    %v5638 = vsub.s32 7, %v5637
    %v5639 = vrot.slane %v4142, %v5638
    %v5640 = vmul.f32 %v5639, %v4319
    %v5641 = vmul.f32 %v5639, %v4320
    %v5642 = vmul.f32 %v5640, 1.442695
    %v5643 = vpow.pop %v5642
    %v5644 = vmul.f32 %v5641, 1.442695
    %v5645 = vpow.pop %v5644
    %5646 = vset.pattern.permute.xlu0 23
    %5647 = vperm.xlu0 %5646, %v4226
    %v5648 = vpop.permute.xlu0 %5647
    %5650 = vset.pattern.permute.xlu0 23
    %5651 = vperm.xlu0 %5650, %v4231
    %v5652 = vpop.permute.xlu0 %5651
    %v5654 = vlaneseq
    %v5655 = vshrl.u32 %v5654, 7
    %v5656 = vsub.s32 7, %v5655
    %v5657 = vrot.slane %v4147, %v5656
    %v5658 = vmul.f32 %v5648, %v5657
    %v5659 = vmul.f32 %v5652, %v5657
    %v5660 = vmul.f32 %v5643, %v5605
    %v5661 = vmul.f32 %v5645, %v5606
    %v5662 = vadd.f32 %v5660, %v5658
    %v5663 = vadd.f32 %v5661, %v5659
    %5664 = vset.pattern.permute.xlu0 23
    %5665 = vperm.xlu0 %5664, %v4310
    %v5666 = vpop.permute.xlu0 %5665
    %5668 = vset.pattern.permute.xlu0 23
    %5669 = vperm.xlu0 %5668, %v4315
    %v5670 = vpop.permute.xlu0 %5669
    %v5672 = vmul.f32 %v5666, %v5662
    %v5673 = vmul.f32 %v5670, %v5663
    %v5674 = vsel %vm280, %v5672, 0.0
    %v5675 = vsel %vm280, %v5673, 0.0
    %v5676 = vadd.f32 %v5674, %v5675
    %v5677 = vrot.slane %v5676, 4
    %v5678 = vadd.f32 %v5676, %v5677
    %v5679 = vrot.slane %v5678, 2
    %v5680 = vadd.f32 %v5678, %v5679
    %v5681 = vrot.slane %v5680, 1
    %v5682 = vadd.f32 %v5680, %v5681
    %v5683 = vsel %vm2632, %v5682, 0.0
    %v5684 = vsel %vm2633, %v5682, 0.0
    %v5685 = vsel %vm2634, %v5682, 0.0
    %v5686 = vsel %vm2635, %v5682, 0.0
    %v5687 = vsel %vm2636, %v5682, 0.0
    %v5688 = vadd.f32 %v5631, %v5683
    %v5689 = vadd.f32 %v5632, %v5684
    %v5690 = vadd.f32 %v5633, %v5685
    %v5691 = vadd.f32 %v5634, %v5686
    %v5692 = vadd.f32 %v5635, %v5687
    %v5693 = vlaneseq
    %v5694 = vshrl.u32 %v5693, 7
    %v5695 = vsub.s32 0, %v5694
    %v5696 = vrot.slane %v4143, %v5695
    %v5697 = vmul.f32 %v5696, %v4319
    %v5698 = vmul.f32 %v5696, %v4320
    %v5699 = vmul.f32 %v5697, 1.442695
    %v5700 = vpow.pop %v5699
    %v5701 = vmul.f32 %v5698, 1.442695
    %v5702 = vpow.pop %v5701
    %5703 = vset.pattern.permute.xlu0 24
    %5704 = vperm.xlu0 %5703, %v4226
    %v5705 = vpop.permute.xlu0 %5704
    %5707 = vset.pattern.permute.xlu0 24
    %5708 = vperm.xlu0 %5707, %v4231
    %v5709 = vpop.permute.xlu0 %5708
    %v5711 = vlaneseq
    %v5712 = vshrl.u32 %v5711, 7
    %v5713 = vsub.s32 0, %v5712
    %v5714 = vrot.slane %v4148, %v5713
    %v5715 = vmul.f32 %v5705, %v5714
    %v5716 = vmul.f32 %v5709, %v5714
    %v5717 = vmul.f32 %v5700, %v5662
    %v5718 = vmul.f32 %v5702, %v5663
    %v5719 = vadd.f32 %v5717, %v5715
    %v5720 = vadd.f32 %v5718, %v5716
    %5721 = vset.pattern.permute.xlu0 24
    %5722 = vperm.xlu0 %5721, %v4310
    %v5723 = vpop.permute.xlu0 %5722
    %5725 = vset.pattern.permute.xlu0 24
    %5726 = vperm.xlu0 %5725, %v4315
    %v5727 = vpop.permute.xlu0 %5726
    %v5729 = vmul.f32 %v5723, %v5719
    %v5730 = vmul.f32 %v5727, %v5720
    %v5731 = vsel %vm280, %v5729, 0.0
    %v5732 = vsel %vm280, %v5730, 0.0
    %v5733 = vadd.f32 %v5731, %v5732
    %v5734 = vrot.slane %v5733, 4
    %v5735 = vadd.f32 %v5733, %v5734
    %v5736 = vrot.slane %v5735, 2
    %v5737 = vadd.f32 %v5735, %v5736
    %v5738 = vrot.slane %v5737, 1
    %v5739 = vadd.f32 %v5737, %v5738
    %v5740 = vsel %vm2704, %v5739, 0.0
    %v5741 = vsel %vm2705, %v5739, 0.0
    %v5742 = vsel %vm2706, %v5739, 0.0
    %v5743 = vsel %vm2707, %v5739, 0.0
    %v5744 = vsel %vm2708, %v5739, 0.0
    %v5745 = vadd.f32 %v5688, %v5740
    %v5746 = vadd.f32 %v5689, %v5741
    %v5747 = vadd.f32 %v5690, %v5742
    %v5748 = vadd.f32 %v5691, %v5743
    %v5749 = vadd.f32 %v5692, %v5744
    %v5750 = vlaneseq
    %v5751 = vshrl.u32 %v5750, 7
    %v5752 = vsub.s32 1, %v5751
    %v5753 = vrot.slane %v4143, %v5752
    %v5754 = vmul.f32 %v5753, %v4319
    %v5755 = vmul.f32 %v5753, %v4320
    %v5756 = vmul.f32 %v5754, 1.442695
    %v5757 = vpow.pop %v5756
    %v5758 = vmul.f32 %v5755, 1.442695
    %v5759 = vpow.pop %v5758
    %5760 = vset.pattern.permute.xlu0 25
    %5761 = vperm.xlu0 %5760, %v4226
    %v5762 = vpop.permute.xlu0 %5761
    %5764 = vset.pattern.permute.xlu0 25
    %5765 = vperm.xlu0 %5764, %v4231
    %v5766 = vpop.permute.xlu0 %5765
    %v5768 = vlaneseq
    %v5769 = vshrl.u32 %v5768, 7
    %v5770 = vsub.s32 1, %v5769
    %v5771 = vrot.slane %v4148, %v5770
    %v5772 = vmul.f32 %v5762, %v5771
    %v5773 = vmul.f32 %v5766, %v5771
    %v5774 = vmul.f32 %v5757, %v5719
    %v5775 = vmul.f32 %v5759, %v5720
    %v5776 = vadd.f32 %v5774, %v5772
    %v5777 = vadd.f32 %v5775, %v5773
    %5778 = vset.pattern.permute.xlu0 25
    %5779 = vperm.xlu0 %5778, %v4310
    %v5780 = vpop.permute.xlu0 %5779
    %5782 = vset.pattern.permute.xlu0 25
    %5783 = vperm.xlu0 %5782, %v4315
    %v5784 = vpop.permute.xlu0 %5783
    %v5786 = vmul.f32 %v5780, %v5776
    %v5787 = vmul.f32 %v5784, %v5777
    %v5788 = vsel %vm280, %v5786, 0.0
    %v5789 = vsel %vm280, %v5787, 0.0
    %v5790 = vadd.f32 %v5788, %v5789
    %v5791 = vrot.slane %v5790, 4
    %v5792 = vadd.f32 %v5790, %v5791
    %v5793 = vrot.slane %v5792, 2
    %v5794 = vadd.f32 %v5792, %v5793
    %v5795 = vrot.slane %v5794, 1
    %v5796 = vadd.f32 %v5794, %v5795
    %v5797 = vsel %vm2776, %v5796, 0.0
    %v5798 = vsel %vm2777, %v5796, 0.0
    %v5799 = vsel %vm2778, %v5796, 0.0
    %v5800 = vsel %vm2779, %v5796, 0.0
    %v5801 = vsel %vm2780, %v5796, 0.0
    %v5802 = vadd.f32 %v5745, %v5797
    %v5803 = vadd.f32 %v5746, %v5798
    %v5804 = vadd.f32 %v5747, %v5799
    %v5805 = vadd.f32 %v5748, %v5800
    %v5806 = vadd.f32 %v5749, %v5801
    %v5807 = vlaneseq
    %v5808 = vshrl.u32 %v5807, 7
    %v5809 = vsub.s32 2, %v5808
    %v5810 = vrot.slane %v4143, %v5809
    %v5811 = vmul.f32 %v5810, %v4319
    %v5812 = vmul.f32 %v5810, %v4320
    %v5813 = vmul.f32 %v5811, 1.442695
    %v5814 = vpow.pop %v5813
    %v5815 = vmul.f32 %v5812, 1.442695
    %v5816 = vpow.pop %v5815
    %5817 = vset.pattern.permute.xlu0 26
    %5818 = vperm.xlu0 %5817, %v4226
    %v5819 = vpop.permute.xlu0 %5818
    %5821 = vset.pattern.permute.xlu0 26
    %5822 = vperm.xlu0 %5821, %v4231
    %v5823 = vpop.permute.xlu0 %5822
    %v5825 = vlaneseq
    %v5826 = vshrl.u32 %v5825, 7
    %v5827 = vsub.s32 2, %v5826
    %v5828 = vrot.slane %v4148, %v5827
    %v5829 = vmul.f32 %v5819, %v5828
    %v5830 = vmul.f32 %v5823, %v5828
    %v5831 = vmul.f32 %v5814, %v5776
    %v5832 = vmul.f32 %v5816, %v5777
    %v5833 = vadd.f32 %v5831, %v5829
    %v5834 = vadd.f32 %v5832, %v5830
    %5835 = vset.pattern.permute.xlu0 26
    %5836 = vperm.xlu0 %5835, %v4310
    %v5837 = vpop.permute.xlu0 %5836
    %5839 = vset.pattern.permute.xlu0 26
    %5840 = vperm.xlu0 %5839, %v4315
    %v5841 = vpop.permute.xlu0 %5840
    %v5843 = vmul.f32 %v5837, %v5833
    %v5844 = vmul.f32 %v5841, %v5834
    %v5845 = vsel %vm280, %v5843, 0.0
    %v5846 = vsel %vm280, %v5844, 0.0
    %v5847 = vadd.f32 %v5845, %v5846
    %v5848 = vrot.slane %v5847, 4
    %v5849 = vadd.f32 %v5847, %v5848
    %v5850 = vrot.slane %v5849, 2
    %v5851 = vadd.f32 %v5849, %v5850
    %v5852 = vrot.slane %v5851, 1
    %v5853 = vadd.f32 %v5851, %v5852
    %v5854 = vsel %vm2848, %v5853, 0.0
    %v5855 = vsel %vm2849, %v5853, 0.0
    %v5856 = vsel %vm2850, %v5853, 0.0
    %v5857 = vsel %vm2851, %v5853, 0.0
    %v5858 = vsel %vm2852, %v5853, 0.0
    %v5859 = vadd.f32 %v5802, %v5854
    %v5860 = vadd.f32 %v5803, %v5855
    %v5861 = vadd.f32 %v5804, %v5856
    %v5862 = vadd.f32 %v5805, %v5857
    %v5863 = vadd.f32 %v5806, %v5858
    %v5864 = vlaneseq
    %v5865 = vshrl.u32 %v5864, 7
    %v5866 = vsub.s32 3, %v5865
    %v5867 = vrot.slane %v4143, %v5866
    %v5868 = vmul.f32 %v5867, %v4319
    %v5869 = vmul.f32 %v5867, %v4320
    %v5870 = vmul.f32 %v5868, 1.442695
    %v5871 = vpow.pop %v5870
    %v5872 = vmul.f32 %v5869, 1.442695
    %v5873 = vpow.pop %v5872
    %5874 = vset.pattern.permute.xlu0 27
    %5875 = vperm.xlu0 %5874, %v4226
    %v5876 = vpop.permute.xlu0 %5875
    %5878 = vset.pattern.permute.xlu0 27
    %5879 = vperm.xlu0 %5878, %v4231
    %v5880 = vpop.permute.xlu0 %5879
    %v5882 = vlaneseq
    %v5883 = vshrl.u32 %v5882, 7
    %v5884 = vsub.s32 3, %v5883
    %v5885 = vrot.slane %v4148, %v5884
    %v5886 = vmul.f32 %v5876, %v5885
    %v5887 = vmul.f32 %v5880, %v5885
    %v5888 = vmul.f32 %v5871, %v5833
    %v5889 = vmul.f32 %v5873, %v5834
    %v5890 = vadd.f32 %v5888, %v5886
    %v5891 = vadd.f32 %v5889, %v5887
    %5892 = vset.pattern.permute.xlu0 27
    %5893 = vperm.xlu0 %5892, %v4310
    %v5894 = vpop.permute.xlu0 %5893
    %5896 = vset.pattern.permute.xlu0 27
    %5897 = vperm.xlu0 %5896, %v4315
    %v5898 = vpop.permute.xlu0 %5897
    %v5900 = vmul.f32 %v5894, %v5890
    %v5901 = vmul.f32 %v5898, %v5891
    %v5902 = vsel %vm280, %v5900, 0.0
    %v5903 = vsel %vm280, %v5901, 0.0
    %v5904 = vadd.f32 %v5902, %v5903
    %v5905 = vrot.slane %v5904, 4
    %v5906 = vadd.f32 %v5904, %v5905
    %v5907 = vrot.slane %v5906, 2
    %v5908 = vadd.f32 %v5906, %v5907
    %v5909 = vrot.slane %v5908, 1
    %v5910 = vadd.f32 %v5908, %v5909
    %v5911 = vsel %vm2920, %v5910, 0.0
    %v5912 = vsel %vm2921, %v5910, 0.0
    %v5913 = vsel %vm2922, %v5910, 0.0
    %v5914 = vsel %vm2923, %v5910, 0.0
    %v5915 = vsel %vm2924, %v5910, 0.0
    %v5916 = vadd.f32 %v5859, %v5911
    %v5917 = vadd.f32 %v5860, %v5912
    %v5918 = vadd.f32 %v5861, %v5913
    %v5919 = vadd.f32 %v5862, %v5914
    %v5920 = vadd.f32 %v5863, %v5915
    %v5921 = vlaneseq
    %v5922 = vshrl.u32 %v5921, 7
    %v5923 = vsub.s32 4, %v5922
    %v5924 = vrot.slane %v4143, %v5923
    %v5925 = vmul.f32 %v5924, %v4319
    %v5926 = vmul.f32 %v5924, %v4320
    %v5927 = vmul.f32 %v5925, 1.442695
    %v5928 = vpow.pop %v5927
    %v5929 = vmul.f32 %v5926, 1.442695
    %v5930 = vpow.pop %v5929
    %5931 = vset.pattern.permute.xlu0 28
    %5932 = vperm.xlu0 %5931, %v4226
    %v5933 = vpop.permute.xlu0 %5932
    %5935 = vset.pattern.permute.xlu0 28
    %5936 = vperm.xlu0 %5935, %v4231
    %v5937 = vpop.permute.xlu0 %5936
    %v5939 = vlaneseq
    %v5940 = vshrl.u32 %v5939, 7
    %v5941 = vsub.s32 4, %v5940
    %v5942 = vrot.slane %v4148, %v5941
    %v5943 = vmul.f32 %v5933, %v5942
    %v5944 = vmul.f32 %v5937, %v5942
    %v5945 = vmul.f32 %v5928, %v5890
    %v5946 = vmul.f32 %v5930, %v5891
    %v5947 = vadd.f32 %v5945, %v5943
    %v5948 = vadd.f32 %v5946, %v5944
    %5949 = vset.pattern.permute.xlu0 28
    %5950 = vperm.xlu0 %5949, %v4310
    %v5951 = vpop.permute.xlu0 %5950
    %5953 = vset.pattern.permute.xlu0 28
    %5954 = vperm.xlu0 %5953, %v4315
    %v5955 = vpop.permute.xlu0 %5954
    %v5957 = vmul.f32 %v5951, %v5947
    %v5958 = vmul.f32 %v5955, %v5948
    %v5959 = vsel %vm280, %v5957, 0.0
    %v5960 = vsel %vm280, %v5958, 0.0
    %v5961 = vadd.f32 %v5959, %v5960
    %v5962 = vrot.slane %v5961, 4
    %v5963 = vadd.f32 %v5961, %v5962
    %v5964 = vrot.slane %v5963, 2
    %v5965 = vadd.f32 %v5963, %v5964
    %v5966 = vrot.slane %v5965, 1
    %v5967 = vadd.f32 %v5965, %v5966
    %v5968 = vsel %vm2992, %v5967, 0.0
    %v5969 = vsel %vm2993, %v5967, 0.0
    %v5970 = vsel %vm2994, %v5967, 0.0
    %v5971 = vsel %vm2995, %v5967, 0.0
    %v5972 = vsel %vm2996, %v5967, 0.0
    %v5973 = vadd.f32 %v5916, %v5968
    %v5974 = vadd.f32 %v5917, %v5969
    %v5975 = vadd.f32 %v5918, %v5970
    %v5976 = vadd.f32 %v5919, %v5971
    %v5977 = vadd.f32 %v5920, %v5972
    %v5978 = vlaneseq
    %v5979 = vshrl.u32 %v5978, 7
    %v5980 = vsub.s32 5, %v5979
    %v5981 = vrot.slane %v4143, %v5980
    %v5982 = vmul.f32 %v5981, %v4319
    %v5983 = vmul.f32 %v5981, %v4320
    %v5984 = vmul.f32 %v5982, 1.442695
    %v5985 = vpow.pop %v5984
    %v5986 = vmul.f32 %v5983, 1.442695
    %v5987 = vpow.pop %v5986
    %5988 = vset.pattern.permute.xlu0 29
    %5989 = vperm.xlu0 %5988, %v4226
    %v5990 = vpop.permute.xlu0 %5989
    %5992 = vset.pattern.permute.xlu0 29
    %5993 = vperm.xlu0 %5992, %v4231
    %v5994 = vpop.permute.xlu0 %5993
    %v5996 = vlaneseq
    %v5997 = vshrl.u32 %v5996, 7
    %v5998 = vsub.s32 5, %v5997
    %v5999 = vrot.slane %v4148, %v5998
    %v6000 = vmul.f32 %v5990, %v5999
    %v6001 = vmul.f32 %v5994, %v5999
    %v6002 = vmul.f32 %v5985, %v5947
    %v6003 = vmul.f32 %v5987, %v5948
    %v6004 = vadd.f32 %v6002, %v6000
    %v6005 = vadd.f32 %v6003, %v6001
    %6006 = vset.pattern.permute.xlu0 29
    %6007 = vperm.xlu0 %6006, %v4310
    %v6008 = vpop.permute.xlu0 %6007
    %6010 = vset.pattern.permute.xlu0 29
    %6011 = vperm.xlu0 %6010, %v4315
    %v6012 = vpop.permute.xlu0 %6011
    %v6014 = vmul.f32 %v6008, %v6004
    %v6015 = vmul.f32 %v6012, %v6005
    %v6016 = vsel %vm280, %v6014, 0.0
    %v6017 = vsel %vm280, %v6015, 0.0
    %v6018 = vadd.f32 %v6016, %v6017
    %v6019 = vrot.slane %v6018, 4
    %v6020 = vadd.f32 %v6018, %v6019
    %v6021 = vrot.slane %v6020, 2
    %v6022 = vadd.f32 %v6020, %v6021
    %v6023 = vrot.slane %v6022, 1
    %v6024 = vadd.f32 %v6022, %v6023
    %v6025 = vsel %vm3064, %v6024, 0.0
    %v6026 = vsel %vm3065, %v6024, 0.0
    %v6027 = vsel %vm3066, %v6024, 0.0
    %v6028 = vsel %vm3067, %v6024, 0.0
    %v6029 = vsel %vm3068, %v6024, 0.0
    %v6030 = vadd.f32 %v5973, %v6025
    %v6031 = vadd.f32 %v5974, %v6026
    %v6032 = vadd.f32 %v5975, %v6027
    %v6033 = vadd.f32 %v5976, %v6028
    %v6034 = vadd.f32 %v5977, %v6029
    %v6035 = vlaneseq
    %v6036 = vshrl.u32 %v6035, 7
    %v6037 = vsub.s32 6, %v6036
    %v6038 = vrot.slane %v4143, %v6037
    %v6039 = vmul.f32 %v6038, %v4319
    %v6040 = vmul.f32 %v6038, %v4320
    %v6041 = vmul.f32 %v6039, 1.442695
    %v6042 = vpow.pop %v6041
    %v6043 = vmul.f32 %v6040, 1.442695
    %v6044 = vpow.pop %v6043
    %6045 = vset.pattern.permute.xlu0 30
    %6046 = vperm.xlu0 %6045, %v4226
    %v6047 = vpop.permute.xlu0 %6046
    %6049 = vset.pattern.permute.xlu0 30
    %6050 = vperm.xlu0 %6049, %v4231
    %v6051 = vpop.permute.xlu0 %6050
    %v6053 = vlaneseq
    %v6054 = vshrl.u32 %v6053, 7
    %v6055 = vsub.s32 6, %v6054
    %v6056 = vrot.slane %v4148, %v6055
    %v6057 = vmul.f32 %v6047, %v6056
    %v6058 = vmul.f32 %v6051, %v6056
    %v6059 = vmul.f32 %v6042, %v6004
    %v6060 = vmul.f32 %v6044, %v6005
    %v6061 = vadd.f32 %v6059, %v6057
    %v6062 = vadd.f32 %v6060, %v6058
    %6063 = vset.pattern.permute.xlu0 30
    %6064 = vperm.xlu0 %6063, %v4310
    %v6065 = vpop.permute.xlu0 %6064
    %6067 = vset.pattern.permute.xlu0 30
    %6068 = vperm.xlu0 %6067, %v4315
    %v6069 = vpop.permute.xlu0 %6068
    %v6071 = vmul.f32 %v6065, %v6061
    %v6072 = vmul.f32 %v6069, %v6062
    %v6073 = vsel %vm280, %v6071, 0.0
    %v6074 = vsel %vm280, %v6072, 0.0
    %v6075 = vadd.f32 %v6073, %v6074
    %v6076 = vrot.slane %v6075, 4
    %v6077 = vadd.f32 %v6075, %v6076
    %v6078 = vrot.slane %v6077, 2
    %v6079 = vadd.f32 %v6077, %v6078
    %v6080 = vrot.slane %v6079, 1
    %v6081 = vadd.f32 %v6079, %v6080
    %v6082 = vsel %vm3136, %v6081, 0.0
    %v6083 = vsel %vm3137, %v6081, 0.0
    %v6084 = vsel %vm3138, %v6081, 0.0
    %v6085 = vsel %vm3139, %v6081, 0.0
    %v6086 = vsel %vm3140, %v6081, 0.0
    %v6087 = vadd.f32 %v6030, %v6082
    %v6088 = vadd.f32 %v6031, %v6083
    %v6089 = vadd.f32 %v6032, %v6084
    %v6090 = vadd.f32 %v6033, %v6085
    %v6091 = vadd.f32 %v6034, %v6086
    %v6092 = vlaneseq
    %v6093 = vshrl.u32 %v6092, 7
    %v6094 = vsub.s32 7, %v6093
    %v6095 = vrot.slane %v4143, %v6094
    %v6096 = vmul.f32 %v6095, %v4319
    %v6097 = vmul.f32 %v6095, %v4320
    %v6098 = vmul.f32 %v6096, 1.442695
    %v6099 = vpow.pop %v6098
    %v6100 = vmul.f32 %v6097, 1.442695
    %v6101 = vpow.pop %v6100
    %6102 = vset.pattern.permute.xlu0 31
    %6103 = vperm.xlu0 %6102, %v4226
    %v6104 = vpop.permute.xlu0 %6103
    %6106 = vset.pattern.permute.xlu0 31
    %6107 = vperm.xlu0 %6106, %v4231
    %v6108 = vpop.permute.xlu0 %6107
    %v6110 = vlaneseq
    %v6111 = vshrl.u32 %v6110, 7
    %v6112 = vsub.s32 7, %v6111
    %v6113 = vrot.slane %v4148, %v6112
    %v6114 = vmul.f32 %v6104, %v6113
    %v6115 = vmul.f32 %v6108, %v6113
    %v6116 = vmul.f32 %v6099, %v6061
    %v6117 = vmul.f32 %v6101, %v6062
    %v6118 = vadd.f32 %v6116, %v6114
    %v6119 = vadd.f32 %v6117, %v6115
    %6120 = vset.pattern.permute.xlu0 31
    %6121 = vperm.xlu0 %6120, %v4310
    %v6122 = vpop.permute.xlu0 %6121
    %6124 = vset.pattern.permute.xlu0 31
    %6125 = vperm.xlu0 %6124, %v4315
    %v6126 = vpop.permute.xlu0 %6125
    %v6128 = vmul.f32 %v6122, %v6118
    %v6129 = vmul.f32 %v6126, %v6119
    %v6130 = vsel %vm280, %v6128, 0.0
    %v6131 = vsel %vm280, %v6129, 0.0
    %v6132 = vadd.f32 %v6130, %v6131
    %v6133 = vrot.slane %v6132, 4
    %v6134 = vadd.f32 %v6132, %v6133
    %v6135 = vrot.slane %v6134, 2
    %v6136 = vadd.f32 %v6134, %v6135
    %v6137 = vrot.slane %v6136, 1
    %v6138 = vadd.f32 %v6136, %v6137
    %v6139 = vsel %vm3208, %v6138, 0.0
    %v6140 = vsel %vm3209, %v6138, 0.0
    %v6141 = vsel %vm3210, %v6138, 0.0
    %v6142 = vsel %vm3211, %v6138, 0.0
    %v6143 = vsel %vm3212, %v6138, 0.0
    %v6144 = vadd.f32 %v6087, %v6139
    %v6145 = vadd.f32 %v6088, %v6140
    %v6146 = vadd.f32 %v6089, %v6141
    %v6147 = vadd.f32 %v6090, %v6142
    %v6148 = vadd.f32 %v6091, %v6143
    %v6149 = vlaneseq
    %v6150 = vshrl.u32 %v6149, 7
    %v6151 = vsub.s32 0, %v6150
    %v6152 = vrot.slane %v4144, %v6151
    %v6153 = vmul.f32 %v6152, %v4319
    %v6154 = vmul.f32 %v6152, %v4320
    %v6155 = vmul.f32 %v6153, 1.442695
    %v6156 = vpow.pop %v6155
    %v6157 = vmul.f32 %v6154, 1.442695
    %v6158 = vpow.pop %v6157
    %6159 = vset.pattern.permute.xlu0 32
    %6160 = vperm.xlu0 %6159, %v4226
    %v6161 = vpop.permute.xlu0 %6160
    %6163 = vset.pattern.permute.xlu0 32
    %6164 = vperm.xlu0 %6163, %v4231
    %v6165 = vpop.permute.xlu0 %6164
    %v6167 = vlaneseq
    %v6168 = vshrl.u32 %v6167, 7
    %v6169 = vsub.s32 0, %v6168
    %v6170 = vrot.slane %v4149, %v6169
    %v6171 = vmul.f32 %v6161, %v6170
    %v6172 = vmul.f32 %v6165, %v6170
    %v6173 = vmul.f32 %v6156, %v6118
    %v6174 = vmul.f32 %v6158, %v6119
    %v6175 = vadd.f32 %v6173, %v6171
    %v6176 = vadd.f32 %v6174, %v6172
    %6177 = vset.pattern.permute.xlu0 32
    %6178 = vperm.xlu0 %6177, %v4310
    %v6179 = vpop.permute.xlu0 %6178
    %6181 = vset.pattern.permute.xlu0 32
    %6182 = vperm.xlu0 %6181, %v4315
    %v6183 = vpop.permute.xlu0 %6182
    %v6185 = vmul.f32 %v6179, %v6175
    %v6186 = vmul.f32 %v6183, %v6176
    %v6187 = vsel %vm280, %v6185, 0.0
    %v6188 = vsel %vm280, %v6186, 0.0
    %v6189 = vadd.f32 %v6187, %v6188
    %v6190 = vrot.slane %v6189, 4
    %v6191 = vadd.f32 %v6189, %v6190
    %v6192 = vrot.slane %v6191, 2
    %v6193 = vadd.f32 %v6191, %v6192
    %v6194 = vrot.slane %v6193, 1
    %v6195 = vadd.f32 %v6193, %v6194
    %v6196 = vsel %vm3280, %v6195, 0.0
    %v6197 = vsel %vm3281, %v6195, 0.0
    %v6198 = vsel %vm3282, %v6195, 0.0
    %v6199 = vsel %vm3283, %v6195, 0.0
    %v6200 = vsel %vm3284, %v6195, 0.0
    %v6201 = vadd.f32 %v6144, %v6196
    %v6202 = vadd.f32 %v6145, %v6197
    %v6203 = vadd.f32 %v6146, %v6198
    %v6204 = vadd.f32 %v6147, %v6199
    %v6205 = vadd.f32 %v6148, %v6200
    %v6206 = vlaneseq
    %v6207 = vshrl.u32 %v6206, 7
    %v6208 = vsub.s32 1, %v6207
    %v6209 = vrot.slane %v4144, %v6208
    %v6210 = vmul.f32 %v6209, %v4319
    %v6211 = vmul.f32 %v6209, %v4320
    %v6212 = vmul.f32 %v6210, 1.442695
    %v6213 = vpow.pop %v6212
    %v6214 = vmul.f32 %v6211, 1.442695
    %v6215 = vpow.pop %v6214
    %6216 = vset.pattern.permute.xlu0 33
    %6217 = vperm.xlu0 %6216, %v4226
    %v6218 = vpop.permute.xlu0 %6217
    %6220 = vset.pattern.permute.xlu0 33
    %6221 = vperm.xlu0 %6220, %v4231
    %v6222 = vpop.permute.xlu0 %6221
    %v6224 = vlaneseq
    %v6225 = vshrl.u32 %v6224, 7
    %v6226 = vsub.s32 1, %v6225
    %v6227 = vrot.slane %v4149, %v6226
    %v6228 = vmul.f32 %v6218, %v6227
    %v6229 = vmul.f32 %v6222, %v6227
    %v6230 = vmul.f32 %v6213, %v6175
    %v6231 = vmul.f32 %v6215, %v6176
    %v6232 = vadd.f32 %v6230, %v6228
    %v6233 = vadd.f32 %v6231, %v6229
    %6234 = vset.pattern.permute.xlu0 33
    %6235 = vperm.xlu0 %6234, %v4310
    %v6236 = vpop.permute.xlu0 %6235
    %6238 = vset.pattern.permute.xlu0 33
    %6239 = vperm.xlu0 %6238, %v4315
    %v6240 = vpop.permute.xlu0 %6239
    %v6242 = vmul.f32 %v6236, %v6232
    %v6243 = vmul.f32 %v6240, %v6233
    %v6244 = vsel %vm280, %v6242, 0.0
    %v6245 = vsel %vm280, %v6243, 0.0
    %v6246 = vadd.f32 %v6244, %v6245
    %v6247 = vrot.slane %v6246, 4
    %v6248 = vadd.f32 %v6246, %v6247
    %v6249 = vrot.slane %v6248, 2
    %v6250 = vadd.f32 %v6248, %v6249
    %v6251 = vrot.slane %v6250, 1
    %v6252 = vadd.f32 %v6250, %v6251
    %v6253 = vsel %vm3352, %v6252, 0.0
    %v6254 = vsel %vm3353, %v6252, 0.0
    %v6255 = vsel %vm3354, %v6252, 0.0
    %v6256 = vsel %vm3355, %v6252, 0.0
    %v6257 = vsel %vm3356, %v6252, 0.0
    %v6258 = vadd.f32 %v6201, %v6253
    %v6259 = vadd.f32 %v6202, %v6254
    %v6260 = vadd.f32 %v6203, %v6255
    %v6261 = vadd.f32 %v6204, %v6256
    %v6262 = vadd.f32 %v6205, %v6257
    %s6263 = scalar_lea.vmem %s11, 1
    %v6264 = vld [vmem:[%s6263] sm:$0x1]
    %v6266 = vlaneseq
    %v6267 = vshrl.u32 %v6266, 7
    %v6268 = vsub.s32 0, %v6267
    %v6269 = vrot.slane %v6264, %v6268
    %v6271 = vmul.f32 %v3863, %v6269
    %v6272 = vmul.f32 %v3864, %v6269
    %v6273 = vmul.f32 %v3865, %v6269
    %v6274 = vmul.f32 %v3866, %v6269
    %v6275 = vmul.f32 %v3867, %v6269
    %v6276 = vadd.f32 %v6258, %v6271
    %v6277 = vadd.f32 %v6259, %v6272
    %v6278 = vadd.f32 %v6260, %v6273
    %v6279 = vadd.f32 %v6261, %v6274
    %v6280 = vadd.f32 %v6262, %v6275
    %v6281 = vsub.f32 0.0, %v3714
    %v6282 = vsub.f32 0.0, %v3719
    %v6283 = vsub.f32 0.0, %v3724
    %v6284 = vsub.f32 0.0, %v3729
    %v6285 = vsub.f32 0.0, %v3734
    %v6286 = vmul.f32 %v6281, 1.442695
    %v6287 = vpow.pop %v6286
    %v6288 = vmul.f32 %v6282, 1.442695
    %v6289 = vpow.pop %v6288
    %v6290 = vmul.f32 %v6283, 1.442695
    %v6291 = vpow.pop %v6290
    %v6292 = vmul.f32 %v6284, 1.442695
    %v6293 = vpow.pop %v6292
    %v6294 = vmul.f32 %v6285, 1.442695
    %v6295 = vpow.pop %v6294
    %v6296 = vadd.f32 %v6287, 1.0
    %v6297 = vadd.f32 %v6289, 1.0
    %v6298 = vadd.f32 %v6291, 1.0
    %v6299 = vadd.f32 %v6293, 1.0
    %v6300 = vadd.f32 %v6295, 1.0
    %v6301 = vrcp.pop %v6296
    %v6302 = vrcp.pop %v6297
    %v6303 = vrcp.pop %v6298
    %v6304 = vrcp.pop %v6299
    %v6305 = vrcp.pop %v6300
    %v6306 = vmul.f32 %v3714, %v6301
    %v6307 = vmul.f32 %v3719, %v6302
    %v6308 = vmul.f32 %v3724, %v6303
    %v6309 = vmul.f32 %v3729, %v6304
    %v6310 = vmul.f32 %v3734, %v6305
    %v6311 = vmul.f32 %v6276, %v6306
    %v6312 = vmul.f32 %v6277, %v6307
    %v6313 = vmul.f32 %v6278, %v6308
    %v6314 = vmul.f32 %v6279, %v6309
    %v6315 = vmul.f32 %v6280, %v6310
    %s6316 = scalar_lea.vmem %s12, 64
    %v6317 = vld [vmem:[%s6316] sm:$0xff]
    %v6318 = vld [vmem:[%s6316 + $0x8] sm:$0xff]
    %v6319 = vld [vmem:[%s6316 + $0x10] sm:$0xff]
    %v6320 = vld [vmem:[%s6316 + $0x18] sm:$0xff]
    %v6321 = vld [vmem:[%s6316 + $0x20] sm:$0xff]
    %v6322 = vld [vmem:[%s6316 + $0x28] sm:$0xff]
    %v6323 = vld [vmem:[%s6316 + $0x30] sm:$0xff]
    %v6324 = vld [vmem:[%s6316 + $0x38] sm:$0xff]
    %v6326 = vsel %vm280, %v6311, 0
    %v6329 = vsel %vm280, %v6312, 0
    %v6332 = vsel %vm280, %v6313, 0
    %v6335 = vsel %vm280, %v6314, 0
    %v6338 = vsel %vm280, %v6315, 0
    %6340 = vmatprep.subr.mxu0 0.0
    %6341 = vmatpush1.msra.mxu0 0.0
    %6342 = vmatprep.subr.mxu0 0.0
    %6343 = vmatpush1.msra.mxu0 0.0
    %6344 = vmatprep.subr.mxu0 0.0
    %6345 = vmatpush1.msra.mxu0 0.0
    %6346 = vmatprep.subr.mxu0 0.0
    %6347 = vmatpush1.msra.mxu0 0.0
    %6348 = vmatprep.subr.mxu0 0.0
    %6349 = vmatpush1.msra.mxu0 0.0
    %6350 = vmatprep.subr.mxu0 0.0
    %6351 = vmatpush1.msra.mxu0 0.0
    %6352 = vmatprep.subr.mxu0 0.0
    %6353 = vmatpush1.msra.mxu0 0.0
    %6354 = vmatprep.subr.mxu0 0.0
    %6355 = vmatpush1.msra.mxu0 0.0
    %6356 = vmatprep.subr.mxu0 0.0
    %6357 = vmatpush1.msra.mxu0 %v6324
    %6358 = vmatprep.subr.mxu0 0.0
    %6359 = vmatpush1.msra.mxu0 %v6323
    %6360 = vmatprep.subr.mxu0 0.0
    %6361 = vmatpush1.msra.mxu0 %v6322
    %6362 = vmatprep.subr.mxu0 0.0
    %6363 = vmatpush1.msra.mxu0 %v6321
    %6364 = vmatprep.subr.mxu0 0.0
    %6365 = vmatpush1.msra.mxu0 %v6320
    %6366 = vmatprep.subr.mxu0 0.0
    %6367 = vmatpush1.msra.mxu0 %v6319
    %6368 = vmatprep.subr.mxu0 0.0
    %6369 = vmatpush1.msra.mxu0 %v6318
    %6370 = vmatprep.subr.mxu0 0.0
    %6371 = vmatpush1.msra.mxu0 %v6317
    %6372 = vmatprep.subr.mxu0 0.0
    %6373 = vmatpush2.msra.mxu0 0.0
    %6374 = vmatprep.subr.mxu0 0.0
    %6375 = vmatpush2.msra.mxu0 0.0
    %6376 = vmatprep.subr.mxu0 0.0
    %6377 = vmatpush2.msra.mxu0 0.0
    %6378 = vmatprep.subr.mxu0 0.0
    %6379 = vmatpush2.msra.mxu0 0.0
    %6380 = vmatprep.subr.mxu0 0.0
    %6381 = vmatpush2.msra.mxu0 0.0
    %6382 = vmatprep.subr.mxu0 0.0
    %6383 = vmatpush2.msra.mxu0 0.0
    %6384 = vmatprep.subr.mxu0 0.0
    %6385 = vmatpush2.msra.mxu0 0.0
    %6386 = vmatprep.subr.mxu0 0.0
    %6387 = vmatpush2.msra.mxu0 0.0
    %6388 = vmatprep.subr.mxu0 0.0
    %6389 = vmatpush2.msra.mxu0 0.0
    %6390 = vmatprep.subr.mxu0 0.0
    %6391 = vmatpush2.msra.mxu0 0.0
    %6392 = vmatprep.subr.mxu0 0.0
    %6393 = vmatpush2.msra.mxu0 0.0
    %6394 = vmatprep.subr.mxu0 0.0
    %6395 = vmatpush2.msra.mxu0 0.0
    %6396 = vmatprep.subr.mxu0 0.0
    %6397 = vmatpush2.msra.mxu0 0.0
    %6398 = vmatprep.subr.mxu0 0.0
    %6399 = vmatpush2.msra.mxu0 0.0
    %6400 = vmatprep.subr.mxu0 0.0
    %6401 = vmatpush2.msra.mxu0 0.0
    %6402 = vmatprep.subr.mxu0 0.0
    %6403 = vmatpush2.msra.mxu0 0.0
    %6404 = vmatprep.mubr.f32.mxu0 0.0
    %6405 = vmatmul.mubr.f32.gmra.mxu0 %v6326
    %v6406 = vpop.f32.mrf.mxu0
    %v6407 = vadd.f32 0.0, %v6406
    %v6408 = vpop.f32.mrf.mxu0
    %6409 = vmatprep.mubr.f32.mxu0 0.0
    %6410 = vmatmul.mubr.f32.gmra.mxu0 %v6329
    %v6411 = vpop.f32.mrf.mxu0
    %v6412 = vadd.f32 0.0, %v6411
    %v6413 = vpop.f32.mrf.mxu0
    %6414 = vmatprep.mubr.f32.mxu0 0.0
    %6415 = vmatmul.mubr.f32.gmra.mxu0 %v6332
    %v6416 = vpop.f32.mrf.mxu0
    %v6417 = vadd.f32 0.0, %v6416
    %v6418 = vpop.f32.mrf.mxu0
    %6419 = vmatprep.mubr.f32.mxu0 0.0
    %6420 = vmatmul.mubr.f32.gmra.mxu0 %v6335
    %v6421 = vpop.f32.mrf.mxu0
    %v6422 = vadd.f32 0.0, %v6421
    %v6423 = vpop.f32.mrf.mxu0
    %6424 = vmatprep.mubr.f32.mxu0 0.0
    %6425 = vmatmul.mubr.f32.gmra.mxu0 %v6338
    %v6426 = vpop.f32.mrf.mxu0
    %v6427 = vadd.f32 0.0, %v6426
    %v6428 = vpop.f32.mrf.mxu0
    %6429 = vdwg.mxu0
    %v6430 = vld [vmem:[%s13] sm:$0xff]
    %v6431 = vld [vmem:[%s13 + $0x8] sm:$0xff]
    %v6432 = vld [vmem:[%s13 + $0x10] sm:$0xff]
    %v6433 = vld [vmem:[%s13 + $0x18] sm:$0xff]
    %v6434 = vld [vmem:[%s14] sm:$0x1]
    %v6436 = vlaneseq
    %v6437 = vshrl.u32 %v6436, 7
    %v6438 = vsub.s32 0, %v6437
    %v6439 = vrot.slane %v6434, %v6438
    %v6442 = vsel %vm70, %v6407, 0
    %v6445 = vsel %vm70, %v6412, 0
    %v6448 = vsel %vm70, %v6417, 0
    %v6451 = vsel %vm70, %v6422, 0
    %v6454 = vsel %vm70, %v6427, 0
    %6456 = vmatprep.subr.mxu0 0.0
    %6457 = vmatpush1.msra.mxu0 0.0
    %6458 = vmatprep.subr.mxu0 0.0
    %6459 = vmatpush1.msra.mxu0 0.0
    %6460 = vmatprep.subr.mxu0 0.0
    %6461 = vmatpush1.msra.mxu0 0.0
    %6462 = vmatprep.subr.mxu0 0.0
    %6463 = vmatpush1.msra.mxu0 0.0
    %6464 = vmatprep.subr.mxu0 0.0
    %6465 = vmatpush1.msra.mxu0 0.0
    %6466 = vmatprep.subr.mxu0 0.0
    %6467 = vmatpush1.msra.mxu0 0.0
    %6468 = vmatprep.subr.mxu0 0.0
    %6469 = vmatpush1.msra.mxu0 0.0
    %6470 = vmatprep.subr.mxu0 0.0
    %6471 = vmatpush1.msra.mxu0 0.0
    %6472 = vmatprep.subr.mxu0 0.0
    %6473 = vmatpush1.msra.mxu0 0.0
    %6474 = vmatprep.subr.mxu0 0.0
    %6475 = vmatpush1.msra.mxu0 0.0
    %6476 = vmatprep.subr.mxu0 0.0
    %6477 = vmatpush1.msra.mxu0 0.0
    %6478 = vmatprep.subr.mxu0 0.0
    %6479 = vmatpush1.msra.mxu0 0.0
    %6480 = vmatprep.subr.mxu0 0.0
    %6481 = vmatpush1.msra.mxu0 %v6433
    %6482 = vmatprep.subr.mxu0 0.0
    %6483 = vmatpush1.msra.mxu0 %v6432
    %6484 = vmatprep.subr.mxu0 0.0
    %6485 = vmatpush1.msra.mxu0 %v6431
    %6486 = vmatprep.subr.mxu0 0.0
    %6487 = vmatpush1.msra.mxu0 %v6430
    %6488 = vmatprep.subr.mxu0 0.0
    %6489 = vmatpush2.msra.mxu0 0.0
    %6490 = vmatprep.subr.mxu0 0.0
    %6491 = vmatpush2.msra.mxu0 0.0
    %6492 = vmatprep.subr.mxu0 0.0
    %6493 = vmatpush2.msra.mxu0 0.0
    %6494 = vmatprep.subr.mxu0 0.0
    %6495 = vmatpush2.msra.mxu0 0.0
    %6496 = vmatprep.subr.mxu0 0.0
    %6497 = vmatpush2.msra.mxu0 0.0
    %6498 = vmatprep.subr.mxu0 0.0
    %6499 = vmatpush2.msra.mxu0 0.0
    %6500 = vmatprep.subr.mxu0 0.0
    %6501 = vmatpush2.msra.mxu0 0.0
    %6502 = vmatprep.subr.mxu0 0.0
    %6503 = vmatpush2.msra.mxu0 0.0
    %6504 = vmatprep.subr.mxu0 0.0
    %6505 = vmatpush2.msra.mxu0 0.0
    %6506 = vmatprep.subr.mxu0 0.0
    %6507 = vmatpush2.msra.mxu0 0.0
    %6508 = vmatprep.subr.mxu0 0.0
    %6509 = vmatpush2.msra.mxu0 0.0
    %6510 = vmatprep.subr.mxu0 0.0
    %6511 = vmatpush2.msra.mxu0 0.0
    %6512 = vmatprep.subr.mxu0 0.0
    %6513 = vmatpush2.msra.mxu0 0.0
    %6514 = vmatprep.subr.mxu0 0.0
    %6515 = vmatpush2.msra.mxu0 0.0
    %6516 = vmatprep.subr.mxu0 0.0
    %6517 = vmatpush2.msra.mxu0 0.0
    %6518 = vmatprep.subr.mxu0 0.0
    %6519 = vmatpush2.msra.mxu0 0.0
    %6520 = vmatprep.mubr.f32.mxu0 0.0
    %6521 = vmatmul.mubr.f32.gmra.mxu0 %v6442
    %v6522 = vpop.f32.mrf.mxu0
    %v6523 = vadd.f32 %v6439, %v6522
    %v6524 = vpop.f32.mrf.mxu0
    %6525 = vmatprep.mubr.f32.mxu0 0.0
    %6526 = vmatmul.mubr.f32.gmra.mxu0 %v6445
    %v6527 = vpop.f32.mrf.mxu0
    %v6528 = vadd.f32 %v6439, %v6527
    %v6529 = vpop.f32.mrf.mxu0
    %6530 = vmatprep.mubr.f32.mxu0 0.0
    %6531 = vmatmul.mubr.f32.gmra.mxu0 %v6448
    %v6532 = vpop.f32.mrf.mxu0
    %v6533 = vadd.f32 %v6439, %v6532
    %v6534 = vpop.f32.mrf.mxu0
    %6535 = vmatprep.mubr.f32.mxu0 0.0
    %6536 = vmatmul.mubr.f32.gmra.mxu0 %v6451
    %v6537 = vpop.f32.mrf.mxu0
    %v6538 = vadd.f32 %v6439, %v6537
    %v6539 = vpop.f32.mrf.mxu0
    %6540 = vmatprep.mubr.f32.mxu0 0.0
    %6541 = vmatmul.mubr.f32.gmra.mxu0 %v6454
    %v6542 = vpop.f32.mrf.mxu0
    %v6543 = vadd.f32 %v6439, %v6542
    %v6544 = vpop.f32.mrf.mxu0
    %6545 = vdwg.mxu0
    %vm6546 = vcmask 253952
    %6547 = vst.msk [vmem:[#allocation3] sm:$0x1] %vm6546, %v6407
    %vm6548 = vcmask 64513
    %6549 = vst.msk [vmem:[%s16 - $0x1] sm:$0xfe] %vm6548, %v6523
    %vm6550 = vcmask 64512
    %6551 = vst.msk [vmem:[%s16 + $0x7] sm:$0xff] %vm6550, %v6528
    %vm6552 = vcmask 57344
    %6553 = vst.msk [vmem:[%s16 + $0xf] sm:$0x1] %vm6552, %v6533
    %vm6554 = vcmask 254977
    %6555 = vst.msk [vmem:[#allocation3] sm:$0x2] %vm6554, %v6417
    %vm6556 = vcmask 64514
    %6557 = vst.msk [vmem:[%s16 + $0xe] sm:$0xfc] %vm6556, %v6533
    %6558 = vst.msk [vmem:[%s16 + $0x16] sm:$0xff] %vm6550, %v6538
    %vm6559 = vcmask 58368
    %6560 = vst.msk [vmem:[%s16 + $0x1e] sm:$0x3] %vm6559, %v6543
    // Predicated region
    $region62: #{tpu_custom_call.1} parent=1 // pred_check
      _
    $region63: #{tpu_custom_call.1} parent=1 // pred_check_branch
      %6562 = sbr.rel (0) target = $region65
    $region64: #{tpu_custom_call.1} parent=1 // pred_region
      %s6564 = ssub.s32 32, 32
      %6565 = vsyncadd [#allocation4], %s6564
      %s6567 = sshll.u32 [#allocation3], 4
      %s6568 = int_to_ptr.vmem [resolvable:$true] %s6567
      %6570 = dma.vmem_to_hbm [thread:$0]  %s6568, 32, %s15, [#allocation4]
    $region65: #{tpu_custom_call.1} parent=1 // pred_fallthru
      _
    // Predicated region
    $region66: #{tpu_custom_call.1} parent=1 // pred_check
      _
    $region67: #{tpu_custom_call.1} parent=1 // pred_check_branch
      %6572 = sbr.rel (0) target = $region69
    $region68: #{tpu_custom_call.1} parent=1 // pred_region
      _
    $region69: #{tpu_custom_call.1} parent=1 // pred_fallthru
      _
    // Predicated region
    $region70: #{tpu_custom_call.1} parent=1 // pred_check
      _
    $region71: #{tpu_custom_call.1} parent=1 // pred_check_branch
      %6574 = sbr.rel (0) target = $region73
    $region72: #{tpu_custom_call.1} parent=1 // pred_region
      %6575 = dma.done [#allocation4], 32
    $region73: #{tpu_custom_call.1} parent=1 // pred_fallthru
      _
    // Predicated region
    $region74: #{tpu_custom_call.1} parent=1 // pred_check
      _
    $region75: #{tpu_custom_call.1} parent=1 // pred_check_branch
      %6577 = sbr.rel (0) target = $region77
    $region76: #{tpu_custom_call.1} parent=1 // pred_region
      _
    $region77: #{tpu_custom_call.1} parent=1 // pred_fallthru
      _
    %6578 = vsyncpa [#allocation4], 1

</llo_original>
